<compile_context>
chip_gen: v6e
topology: v6e:2x2x1
jax: 0.10.0
libtpu: 0.0.40
codegen_flags: <defaults>
</compile_context>

<pallas_src>
import functools

import jax
import jax.numpy as jnp
import numpy as np
from jax.experimental import pallas as pl
from jax.experimental.pallas import tpu as pltpu

IN_FEATURES = 3 * 300 * 300        # 270000
H1 = 128
H2 = 64
NUM_CLASSES = 3


def _tpu_generation():
    try:
        kind = jax.devices()[0].device_kind.lower()
    except Exception:
        return "unknown"
    if "v7" in kind:
        return "v7x"
    if "v6" in kind:
        return "v6e"
    if "v5" in kind:
        return "v5e"
    return "unknown"


_GEN = _tpu_generation()

if _GEN == "v7x":
    # 64 MiB VMEM, 2 TensorCores: split the K reduction across cores,
    # 4 K steps per core; 2 x 8.65 MiB bf16 W1 buffers (default double-buffer).
    TK = 128 * 264                 # 33792
    NUM_SPLIT = 2
    VMEM_LIMIT = 48 * 1024 * 1024
elif _GEN in ("v6e", "v5e"):
    # 128 MiB VMEM, single TensorCore: 4 big K steps, bias+ReLU fused in-kernel.
    TK = 128 * 528                 # 67584 -> 2 x 16.5 MiB bf16 W1 buffers
    NUM_SPLIT = 1
    VMEM_LIMIT = 64 * 1024 * 1024
else:
    # Conservative fallback for unknown parts.
    TK = 128 * 132                 # 16896
    NUM_SPLIT = 1
    VMEM_LIMIT = 32 * 1024 * 1024

K_STEPS = pl.cdiv(IN_FEATURES, TK)
assert K_STEPS % NUM_SPLIT == 0
K_STEPS_PER_SPLIT = K_STEPS // NUM_SPLIT
K_PAD = K_STEPS * TK               # zero pad; padded rows/cols contribute 0 to the dot


def _fc1_fused_kernel(x_ref, w1_ref, b1_ref, out_ref):
    """Single-TC path: fc1 over a K-reduction grid, bias+ReLU fused into the
    last K step.  bf16 operands feed the MXU directly (f32 accumulation)."""
    k = pl.program_id(0)

    @pl.when(k == 0)
    def _():
        out_ref[...] = jnp.zeros_like(out_ref)

    out_ref[...] += jnp.dot(
        x_ref[...], w1_ref[...], preferred_element_type=jnp.float32)

    @pl.when(k == pl.num_programs(0) - 1)
    def _():
        out_ref[...] = jnp.maximum(out_ref[...] + b1_ref[...], 0.0)


def _fc1_partial_kernel(x_ref, w1_ref, out_ref):
    """v7x split path: each leading-axis split accumulates its half of the K
    reduction into its own (B, H1) f32 block; bias+ReLU done in the epilogue."""
    k = pl.program_id(1)

    @pl.when(k == 0)
    def _():
        out_ref[...] = jnp.zeros_like(out_ref)

    out_ref[...] += jnp.dot(
        x_ref[...], w1_ref[...], preferred_element_type=jnp.float32)


def prepare_fc1_weight(w1):
    """One-time weight prep (call once at load time, OUTSIDE the forward jit):
    pad the K dim to K_PAD and cast to bf16 (halves the dominant HBM stream)."""
    w1 = jnp.asarray(w1, jnp.float32)
    w1_p = jnp.pad(w1, ((0, K_PAD - IN_FEATURES), (0, 0)))
    return w1_p.astype(jnp.bfloat16)


@functools.lru_cache(maxsize=None)
def _make_fc1_call(B):
    cost = pl.CostEstimate(
        flops=2 * B * K_PAD * H1,
        transcendentals=0,
        bytes_accessed=K_PAD * H1 * 2 + B * K_PAD * 2 + NUM_SPLIT * B * H1 * 4,
    )

    if NUM_SPLIT == 1:
        return pl.pallas_call(
            _fc1_fused_kernel,
            out_shape=jax.ShapeDtypeStruct((B, H1), jnp.float32),
            grid_spec=pltpu.PrefetchScalarGridSpec(
                num_scalar_prefetch=0,
                grid=(K_STEPS,),
                in_specs=[
                    pl.BlockSpec((B, TK), lambda k: (0, k)),
                    pl.BlockSpec((TK, H1), lambda k: (k, 0)),
                    pl.BlockSpec((1, H1), lambda k: (0, 0)),
                ],
                out_specs=pl.BlockSpec((B, H1), lambda k: (0, 0)),
            ),
            compiler_params=pltpu.CompilerParams(
                dimension_semantics=("arbitrary",),
                vmem_limit_bytes=VMEM_LIMIT,
            ),
            cost_estimate=cost,
        )

    # NUM_SPLIT == 2 (v7x): leading 'parallel' axis splits the K reduction.
    # TODO(synk): verify on v7x hardware that Mosaic core-shards this axis; if it
    #             lowers to an ordinary loop, switch it to pltpu.CORE_PARALLEL.
    x_spec = pl.BlockSpec((B, TK), lambda c, k: (0, c * K_STEPS_PER_SPLIT + k))
    w1_spec = pl.BlockSpec((TK, H1), lambda c, k: (c * K_STEPS_PER_SPLIT + k, 0))
    out_spec = pl.BlockSpec((None, B, H1), lambda c, k: (c, 0, 0))
    return pl.pallas_call(
        _fc1_partial_kernel,
        out_shape=jax.ShapeDtypeStruct((NUM_SPLIT, B, H1), jnp.float32),
        grid_spec=pltpu.PrefetchScalarGridSpec(
            num_scalar_prefetch=0,
            grid=(NUM_SPLIT, K_STEPS_PER_SPLIT),
            in_specs=[x_spec, w1_spec],
            out_specs=out_spec,
        ),
        compiler_params=pltpu.CompilerParams(
            dimension_semantics=("parallel", "arbitrary"),
            vmem_limit_bytes=VMEM_LIMIT,
        ),
        cost_estimate=cost,
    )


@jax.jit
def fc_only_forward(x_nchw, w1_p_bf16, b1, w2, b2, w3, b3):
    """x_nchw: (B, 3, 300, 300); w1_p_bf16 = prepare_fc1_weight(w1); -> (B, 3) f32."""
    B = x_nchw.shape[0]
    x = x_nchw.reshape(B, IN_FEATURES)
    # Cast x to bf16 (the MXU consumes it directly) and pad K; x traffic is tiny
    # vs. the pre-padded W1 stream.
    x_p = jnp.pad(x.astype(jnp.bfloat16), ((0, 0), (0, K_PAD - IN_FEATURES)))

    if NUM_SPLIT == 1:
        # Bias + ReLU fused into the last K step inside the kernel.
        h1 = _make_fc1_call(B)(x_p, w1_p_bf16, b1.reshape(1, H1).astype(jnp.float32))
    else:
        partials = _make_fc1_call(B)(x_p, w1_p_bf16)       # (NUM_SPLIT, B, H1) f32
        h1 = jnp.maximum(partials.sum(axis=0) + b1, 0.0)

    # TODO(synk): nn.Dropout(0.5) is identity here (eval/inference mode);
    #             training-mode stochastic masking is not implemented.
    h2 = jnp.maximum(h1 @ w2 + b2, 0.0)                    # fc2 + relu (tiny)
    return h2 @ w3 + b3                                    # fc3 logits (tiny)


def _init_linear(key, fan_in, fan_out):
    """nn.Linear-style init; weight stored transposed as (fan_in, fan_out)."""
    kw, kb = jax.random.split(key)
    bound = 1.0 / np.sqrt(fan_in)
    w = jax.random.uniform(kw, (fan_in, fan_out), jnp.float32, -bound, bound)
    b = jax.random.uniform(kb, (fan_out,), jnp.float32, -bound, bound)
    return w, b


def _reference(x_nchw, w1_p_bf16, b1, w2, b2, w3, b3):
    """Pure-JAX reference mirroring the kernel's bf16 x / bf16 W1, f32 accumulation."""
    x = x_nchw.reshape(x_nchw.shape[0], IN_FEATURES)
    x_bf = x.astype(jnp.bfloat16).astype(jnp.float32)
    w1 = w1_p_bf16[:IN_FEATURES].astype(jnp.float32)
    h = jnp.maximum(x_bf @ w1 + b1, 0.0)
    h = jnp.maximum(h @ w2 + b2, 0.0)
    return h @ w3 + b3


if __name__ == "__main__":
    key = jax.random.PRNGKey(0)
    k_x, k_fc1, k_fc2, k_fc3 = jax.random.split(key, 4)

    B = 2
    x = jax.random.normal(k_x, (B, 3, 300, 300), jnp.float32)

    w1, b1 = _init_linear(k_fc1, IN_FEATURES, H1)
    w2, b2 = _init_linear(k_fc2, H1, H2)
    w3, b3 = _init_linear(k_fc3, H2, NUM_CLASSES)

    # One-time weight prep (pad + bf16 cast) hoisted out of the forward pass.
    w1_p = jax.block_until_ready(prepare_fc1_weight(w1))

    out = jax.block_until_ready(fc_only_forward(x, w1_p, b1, w2, b2, w3, b3))

    ref = jax.block_until_ready(_reference(x, w1_p, b1, w2, b2, w3, b3))
    np.testing.assert_allclose(np.asarray(out), np.asarray(ref),
                               rtol=1e-3, atol=1e-2)

    assert out.shape == (B, NUM_CLASSES) and out.dtype == jnp.float32
    print("KERNEL_OK")
</pallas_src>

<mosaic_0001>
module attributes {stable_mosaic.version = 11 : i64} {
  func.func @_fc1_fused_kernel(%arg0: i32, %arg1: memref<2x16896xbf16, #tpu.memory_space<vmem>>, %arg2: memref<16896x128xbf16, #tpu.memory_space<vmem>>, %arg3: memref<1x128xf32, #tpu.memory_space<vmem>>, %arg4: memref<2x128xf32, #tpu.memory_space<vmem>>) attributes {dimension_semantics = [#tpu.dimension_semantics<arbitrary>], iteration_bounds = array<i64: 16>, scalar_prefetch = 0 : i64, scratch_operands = 0 : i64, tpu.core_type = #tpu.core_type<tc>, window_params = [{transform_indices = @transform_0, window_bounds = array<i64: 2, 16896>}, {transform_indices = @transform_1, window_bounds = array<i64: 16896, 128>}, {pipeline_mode = #tpu.pipeline_mode<synchronous>, transform_indices = @transform_2, window_bounds = array<i64: 1, 128>}, {pipeline_mode = #tpu.pipeline_mode<synchronous>, transform_indices = @transform_3, window_bounds = array<i64: 2, 128>}]} {
    %c0_i32 = arith.constant 0 : i32
    %0 = arith.cmpi eq, %arg0, %c0_i32 : i32
    %1 = arith.extui %0 : i1 to i32
    %c0_i32_0 = arith.constant 0 : i32
    %2 = arith.cmpi ne, %1, %c0_i32_0 : i32
    scf.if %2 {
      %cst_9 = arith.constant 0.000000e+00 : f32
      %12 = vector.broadcast %cst_9 : f32 to vector<2x128xf32>
      %c0_10 = arith.constant 0 : index
      %c0_11 = arith.constant 0 : index
      %13 = vector.load %arg4[%c0_10, %c0_11] : memref<2x128xf32, #tpu.memory_space<vmem>>, vector<2x128xf32>
      tpu.vector_store %arg4[%c0_10, %c0_11], %12 {strides = array<i32>} : memref<2x128xf32, #tpu.memory_space<vmem>>, vector<2x128xf32>,
    } else {
    }
    %c0 = arith.constant 0 : index
    %c0_1 = arith.constant 0 : index
    %3 = vector.load %arg4[%c0, %c0_1] : memref<2x128xf32, #tpu.memory_space<vmem>>, vector<2x128xf32>
    %c0_2 = arith.constant 0 : index
    %c0_3 = arith.constant 0 : index
    %4 = vector.load %arg1[%c0_2, %c0_3] : memref<2x16896xbf16, #tpu.memory_space<vmem>>, vector<2x16896xbf16>
    %c0_4 = arith.constant 0 : index
    %c0_5 = arith.constant 0 : index
    %5 = vector.load %arg2[%c0_4, %c0_5] : memref<16896x128xbf16, #tpu.memory_space<vmem>>, vector<16896x128xbf16>
    %cst = arith.constant dense<0.000000e+00> : vector<2x128xf32>
    %6 = tpu.matmul %4, %5, %cst {dimension_numbers = #tpu.dot_dimension_numbers<[1], [0], [0], [1], [0, 0, 1, 1], [], []>} : vector<2x16896xbf16>, vector<16896x128xbf16>, vector<2x128xf32> -> vector<2x128xf32>
    %7 = arith.addf %3, %6 : vector<2x128xf32>
    %c0_6 = arith.constant 0 : index
    %c0_7 = arith.constant 0 : index
    %8 = vector.load %arg4[%c0_6, %c0_7] : memref<2x128xf32, #tpu.memory_space<vmem>>, vector<2x128xf32>
    tpu.vector_store %arg4[%c0_6, %c0_7], %7 {strides = array<i32>} : memref<2x128xf32, #tpu.memory_space<vmem>>, vector<2x128xf32>,
    %c15_i32 = arith.constant 15 : i32
    %9 = arith.cmpi eq, %arg0, %c15_i32 : i32
    %10 = arith.extui %9 : i1 to i32
    %c0_i32_8 = arith.constant 0 : i32
    %11 = arith.cmpi ne, %10, %c0_i32_8 : i32
    scf.if %11 {
      %c0_9 = arith.constant 0 : index
      %c0_10 = arith.constant 0 : index
      %12 = vector.load %arg4[%c0_9, %c0_10] : memref<2x128xf32, #tpu.memory_space<vmem>>, vector<2x128xf32>
      %c0_11 = arith.constant 0 : index
      %c0_12 = arith.constant 0 : index
      %13 = vector.load %arg3[%c0_11, %c0_12] : memref<1x128xf32, #tpu.memory_space<vmem>>, vector<1x128xf32>
      %14 = vector.broadcast %13 : vector<1x128xf32> to vector<2x128xf32>
      %15 = arith.addf %12, %14 : vector<2x128xf32>
      %cst_13 = arith.constant 0.000000e+00 : f32
      %16 = vector.broadcast %cst_13 : f32 to vector<2x128xf32>
      %17 = arith.maximumf %15, %16 : vector<2x128xf32>
      %c0_14 = arith.constant 0 : index
      %c0_15 = arith.constant 0 : index
      %18 = vector.load %arg4[%c0_14, %c0_15] : memref<2x128xf32, #tpu.memory_space<vmem>>, vector<2x128xf32>
      tpu.vector_store %arg4[%c0_14, %c0_15], %17 {strides = array<i32>} : memref<2x128xf32, #tpu.memory_space<vmem>>, vector<2x128xf32>,
    } else {
    }
    return
  }
  func.func @transform_0(%arg0: i32) -> (i32, i32) {
    %c0_i32 = arith.constant 0 : i32
    %c0_i32_0 = arith.constant 0 : i32
    return %c0_i32, %arg0 : i32, i32
  }
  func.func @transform_1(%arg0: i32) -> (i32, i32) {
    %c0_i32 = arith.constant 0 : i32
    %c0_i32_0 = arith.constant 0 : i32
    return %arg0, %c0_i32 : i32, i32
  }
  func.func @transform_2(%arg0: i32) -> (i32, i32) {
    %c0_i32 = arith.constant 0 : i32
    %c0_i32_0 = arith.constant 0 : i32
    %c0_i32_1 = arith.constant 0 : i32
    return %c0_i32, %c0_i32_0 : i32, i32
  }
  func.func @transform_3(%arg0: i32) -> (i32, i32) {
    %c0_i32 = arith.constant 0 : i32
    %c0_i32_0 = arith.constant 0 : i32
    %c0_i32_1 = arith.constant 0 : i32
    return %c0_i32, %c0_i32_0 : i32, i32
  }
}

</mosaic_0001>

<llo_original>
// kernel: fc_only_forward.1
$region0: #{fc_only_forward.1}
  #allocation0 [shape = 'u32[]', space=smem, size = 0x4, offset = 0x4, fixed_abs, tag = 'smem constant byte address 0x4 - core index']
  #allocation1 [shape = 'u32[144,128]{1,0:T(1,128)}', space=vmem, size = 0x12000, scoped, tag = 'internal scratch']
  %s0 = inlined_call_operand.vmem [shape: bf16[2,270336], index: 0, kind: input, shape index: {}]
  %s1 = inlined_call_operand.hbm [shape: bf16[270336,128], index: 1, kind: input, shape index: {}]
  %s2 = inlined_call_operand.vmem [shape: f32[1,128], index: 2, kind: input, shape index: {}]
  %s3 = inlined_call_operand.vmem [shape: f32[2,128], index: 3, kind: output, shape index: {}]
  %s4 = sld [smem:[#allocation0]]
  $region57: #{fc_only_forward.1} parent=0
    _
  %s6 = ssub.s32 1, %s4
  %s7 = scalar_select 0, %s6, %s4
  $region1: #{fc_only_forward.1} parent=0
    #allocation2 [shape = 'u8[8650752]{0}', space=vmem, size = 0x840000, scoped, tag = 'input window, operand 1']
    #allocation3 [shape = 's32[2]{0}', space=sflag, size = 0x8, scoped, tag = 'scoped memory for fc_only_forward.1']
    %8 = vsyncpa [#allocation3], 0
    %s9 = scalar_lea.sflag [#allocation3], 1
    %10 = vsyncpa %s9, 0
    loop: start=0, step=1, limit=18
    $region2: #{fc_only_forward.1} parent=1 // loop_pre_header
      _
    $region3: #{fc_only_forward.1} parent=1 // loop_header
      %s12 = sphi 0, %s16
      %p13 = scmp.ge.s32.totalorder %s12, 18
      %s22 = sphi 0, %s24
      %s25 = sphi 0, %s22
      %s26 = sphi 0, %s25
      %s42 = sphi 0, %s26
      %s48 = sphi 0, %s50
      %s51 = sphi 0, %s48
      %s52 = sphi 0, %s51
      %s68 = sphi 0, %s52
      %s72 = sphi 0, %s72
      %s74 = sphi 0, %s72
      %s75 = sphi 0, %s74
      %s89 = sphi 0, %s75
      %s93 = sphi 0, %s93
      %s95 = sphi 0, %s93
      %s96 = sphi 0, %s95
      %s110 = sphi 0, %s96
    $region4: #{fc_only_forward.1} parent=1 // loop_header_branch
      %15 = sbr.rel (%p13) target = $region8
    $region5: #{fc_only_forward.1} parent=1 // loop_body
      %s17 = ssub.s32 %s12, 1
      %s18 = ssub.s32 %s12, 2
      %s19 = sadd.s32 %s12, 1
      %s20 = ssub.s32 %s12, %s19
      %p21 = scmp.eq.s32.totalorder %s20, 0
      %s23 = sadd.s32 %s22, 1
      %s24 = scalar_select %p21, %s22, %s23
      %p27 = pneg %p21
      %p28 = scmp.eq.s32.totalorder %s12, 15
      %p29 = por %p27, %p28
      %p30 = scmp.ne.s32.totalorder %s22, %s25
      %p31 = scmp.eq.s32.totalorder %s12, 0
      %p32 = por %p30, %p31
      %p33 = scmp.ne.s32.totalorder %s22, %s25
      %p34 = scmp.eq.s32.totalorder %s17, 15
      %p35 = por %p33, %p34
      %p36 = scmp.ne.s32.totalorder %s25, %s26
      %p37 = scmp.eq.s32.totalorder %s17, 0
      %p38 = por %p36, %p37
      %p39 = scmp.ne.s32.totalorder %s25, %s26
      %p40 = scmp.eq.s32.totalorder %s18, 15
      %p41 = por %p39, %p40
      %p43 = scmp.ne.s32.totalorder %s26, %s42
      %p44 = scmp.eq.s32.totalorder %s18, 0
      %p45 = por %p43, %p44
      %s46 = ssub.s32 %s12, %s19
      %p47 = scmp.eq.s32.totalorder %s46, 0
      %s49 = sadd.s32 %s48, 1
      %s50 = scalar_select %p47, %s48, %s49
      %p53 = pneg %p47
      %p54 = scmp.eq.s32.totalorder %s12, 15
      %p55 = por %p53, %p54
      %p56 = scmp.ne.s32.totalorder %s48, %s51
      %p57 = scmp.eq.s32.totalorder %s12, 0
      %p58 = por %p56, %p57
      %p59 = scmp.ne.s32.totalorder %s48, %s51
      %p60 = scmp.eq.s32.totalorder %s17, 15
      %p61 = por %p59, %p60
      %p62 = scmp.ne.s32.totalorder %s51, %s52
      %p63 = scmp.eq.s32.totalorder %s17, 0
      %p64 = por %p62, %p63
      %p65 = scmp.ne.s32.totalorder %s51, %s52
      %p66 = scmp.eq.s32.totalorder %s18, 15
      %p67 = por %p65, %p66
      %p69 = scmp.ne.s32.totalorder %s52, %s68
      %p70 = scmp.eq.s32.totalorder %s18, 0
      %p71 = por %p69, %p70
      %s73 = sadd.s32 %s72, 1
      %p76 = scmp.eq.s32.totalorder %s12, 15
      %p77 = scmp.ne.s32.totalorder %s72, %s74
      %p78 = scmp.eq.s32.totalorder %s12, 0
      %p79 = por %p77, %p78
      %p80 = scmp.ne.s32.totalorder %s72, %s74
      %p81 = scmp.eq.s32.totalorder %s17, 15
      %p82 = por %p80, %p81
      %p83 = scmp.ne.s32.totalorder %s74, %s75
      %p84 = scmp.eq.s32.totalorder %s17, 0
      %p85 = por %p83, %p84
      %p86 = scmp.ne.s32.totalorder %s74, %s75
      %p87 = scmp.eq.s32.totalorder %s18, 15
      %p88 = por %p86, %p87
      %p90 = scmp.ne.s32.totalorder %s75, %s89
      %p91 = scmp.eq.s32.totalorder %s18, 0
      %p92 = por %p90, %p91
      %s94 = sadd.s32 %s93, 1
      %p97 = scmp.eq.s32.totalorder %s12, 15
      %p98 = scmp.ne.s32.totalorder %s93, %s95
      %p99 = scmp.eq.s32.totalorder %s12, 0
      %p100 = por %p98, %p99
      %p101 = scmp.ne.s32.totalorder %s93, %s95
      %p102 = scmp.eq.s32.totalorder %s17, 15
      %p103 = por %p101, %p102
      %p104 = scmp.ne.s32.totalorder %s95, %s96
      %p105 = scmp.eq.s32.totalorder %s17, 0
      %p106 = por %p104, %p105
      %p107 = scmp.ne.s32.totalorder %s95, %s96
      %p108 = scmp.eq.s32.totalorder %s18, 15
      %p109 = por %p107, %p108
      %p111 = scmp.ne.s32.totalorder %s96, %s110
      %p112 = scmp.eq.s32.totalorder %s18, 0
      %p113 = por %p111, %p112
      %p114 = scmp.le.s32.totalorder 1, %s12
      %p115 = scmp.lt.s32.totalorder %s12, 17
      %p116 = pnand %p114, %p115
      %p117 = pneg %p116
      // Predicated region
      $region9: #{fc_only_forward.1} parent=5 // pred_check
        _
      $region10: #{fc_only_forward.1} parent=5 // pred_check_branch
        %119 = sbr.rel (%p116) target = $region12
      $region11: #{fc_only_forward.1} parent=5 // pred_region
        %s120 = ssub.s32 %s12, 1
        // Predicated region
        $region13: #{fc_only_forward.1} parent=11 // pred_check
          %p121 = pneg %p85
        $region14: #{fc_only_forward.1} parent=11 // pred_check_branch
          %123 = sbr.rel (%p121) target = $region16
        $region15: #{fc_only_forward.1} parent=11 // pred_region
          _
        $region16: #{fc_only_forward.1} parent=11 // pred_fallthru
          _
      $region12: #{fc_only_forward.1} parent=5 // pred_fallthru
        _
      %p124 = scmp.lt.s32.totalorder %s12, 16
      // Predicated region
      $region17: #{fc_only_forward.1} parent=5 // pred_check
        %p125 = pneg %p124
      $region18: #{fc_only_forward.1} parent=5 // pred_check_branch
        %127 = sbr.rel (%p125) target = $region20
      $region19: #{fc_only_forward.1} parent=5 // pred_region
        // Predicated region
        $region21: #{fc_only_forward.1} parent=19 // pred_check
          %p128 = pneg %p32
        $region22: #{fc_only_forward.1} parent=19 // pred_check_branch
          %130 = sbr.rel (%p128) target = $region24
        $region23: #{fc_only_forward.1} parent=19 // pred_region
          %s131 = smul.u32 132, %s12
          %p132 = scmp.lt.s32.totalorder %s131, 2111
          %s133 = scalar_select %p132, %s131, 2111
          %s134 = scalar_lea.vmem %s0, %s133
          %s135 = smul.u32 132, %s12
        $region24: #{fc_only_forward.1} parent=19 // pred_fallthru
          _
        // Predicated region
        $region25: #{fc_only_forward.1} parent=19 // pred_check
          %p136 = pneg %p58
        $region26: #{fc_only_forward.1} parent=19 // pred_check_branch
          %138 = sbr.rel (%p136) target = $region28
        $region27: #{fc_only_forward.1} parent=19 // pred_region
          %s139 = sand.u32 %s48, 1
          %s140 = scalar_lea.sflag [#allocation3], %s139
          %s141 = sand.u32 %s48, 1
          %s142 = smul.addr %s141, 8448
          %s143 = scalar_lea.vmem [#allocation2], %s142
          %s144 = smul.u32 2112, %s12
          %s146 = ssub.s32 135168, 135168
          %147 = vsyncadd %s140, %s146
          %s148 = smul.addr %s144, 64
          %s149 = scalar_lea.hbm %s1, %s148
          %s150 = sshll.u32 %s143, 4
          %s151 = int_to_ptr.vmem [resolvable:$true] %s150
          %156 = dma.hbm_to_vmem [thread:$0]  %s149, 135168, %s151, %s140, 64, 64, 4
        $region28: #{fc_only_forward.1} parent=19 // pred_fallthru
          _
      $region20: #{fc_only_forward.1} parent=5 // pred_fallthru
        _
      %p157 = scmp.le.s32.totalorder 1, %s12
      %p158 = scmp.lt.s32.totalorder %s12, 17
      %p159 = pnand %p157, %p158
      %p160 = pneg %p159
      // Predicated region
      $region29: #{fc_only_forward.1} parent=5 // pred_check
        _
      $region30: #{fc_only_forward.1} parent=5 // pred_check_branch
        %162 = sbr.rel (%p159) target = $region32
      $region31: #{fc_only_forward.1} parent=5 // pred_region
        %s163 = ssub.s32 %s12, 1
        %s164 = sand.u32 %s51, 1
        %s165 = scalar_lea.sflag [#allocation3], %s164
        %s166 = sand.u32 %s51, 1
        %s167 = smul.addr %s166, 8448
        %s168 = scalar_lea.vmem [#allocation2], %s167
        // Predicated region
        $region33: #{fc_only_forward.1} parent=31 // pred_check
          %p169 = pneg %p64
        $region34: #{fc_only_forward.1} parent=31 // pred_check_branch
          %171 = sbr.rel (%p169) target = $region36
        $region35: #{fc_only_forward.1} parent=31 // pred_region
          %172 = dma.done %s165, 135168
        $region36: #{fc_only_forward.1} parent=31 // pred_fallthru
          _
        %s173 = smul.u32 132, %s17
        %p174 = scmp.lt.s32.totalorder %s173, 2111
        %s175 = scalar_select %p174, %s173, 2111
        %s176 = scalar_lea.vmem %s0, %s175
        %p177 = pneg %p38
        %p178 = pneg %p35
        %s179 = sand.u32 %s51, 1
        %s180 = scalar_lea.sflag [#allocation3], %s179
        %s181 = sand.u32 %s51, 1
        %s182 = smul.addr %s181, 8448
        %s183 = scalar_lea.vmem [#allocation2], %s182
        %p184 = pneg %p64
        %p185 = pneg %p61
        %p186 = pneg %p85
        %p187 = pneg %p82
        %p188 = pneg %p106
        %p189 = pneg %p103
        %s190 = smul.u32 132, %s17
        %p191 = scmp.lt.s32.totalorder %s190, 2111
        %s192 = scalar_select %p191, %s190, 2111
        %s193 = scalar_lea.vmem %s0, %s192
        %s194 = smul.u32 132, %s17
        %s195 = smul.u32 2112, %s17
        %p197 = scmp.eq.s32.totalorder %s17, 0
        // Predicated region
        $region37: #{fc_only_forward.1} parent=31 // pred_check
          %p198 = pneg %p197
        $region38: #{fc_only_forward.1} parent=31 // pred_check_branch
          %200 = sbr.rel (%p198) target = $region40
        $region39: #{fc_only_forward.1} parent=31 // pred_region
          %201 = vst [vmem:[%s3] sm:$0x3] 0.0
        $region40: #{fc_only_forward.1} parent=31 // pred_fallthru
          _
        %v202 = vld [vmem:[%s3] sm:$0x3]
        %v203 = vld [vmem:[%s193] sm:$0xff]
        %v204 = vld [vmem:[%s193 + $0x8] sm:$0xff]
        %v205 = vld [vmem:[%s193 + $0x10] sm:$0xff]
        %v206 = vld [vmem:[%s193 + $0x18] sm:$0xff]
        %v207 = vld [vmem:[%s193 + $0x20] sm:$0xff]
        %v208 = vld [vmem:[%s193 + $0x28] sm:$0xff]
        %v209 = vld [vmem:[%s193 + $0x30] sm:$0xff]
        %v210 = vld [vmem:[%s193 + $0x38] sm:$0xff]
        %v211 = vld [vmem:[%s193 + $0x40] sm:$0xff]
        %v212 = vld [vmem:[%s193 + $0x48] sm:$0xff]
        %v213 = vld [vmem:[%s193 + $0x50] sm:$0xff]
        %v214 = vld [vmem:[%s193 + $0x58] sm:$0xff]
        %v215 = vld [vmem:[%s193 + $0x60] sm:$0xff]
        %v216 = vld [vmem:[%s193 + $0x68] sm:$0xff]
        %v217 = vld [vmem:[%s193 + $0x70] sm:$0xff]
        %v218 = vld [vmem:[%s193 + $0x78] sm:$0xff]
        %v219 = vld [vmem:[%s193 + $0x80] sm:$0xf]
        %v220 = vld [vmem:[%s168] sm:$0xf]
        %v221 = vld [vmem:[%s168 + $0x4] sm:$0xf]
        %v222 = vld [vmem:[%s168 + $0x8] sm:$0xf]
        %v223 = vld [vmem:[%s168 + $0xc] sm:$0xf]
        %v224 = vld [vmem:[%s168 + $0x10] sm:$0xf]
        %v225 = vld [vmem:[%s168 + $0x14] sm:$0xf]
        %v226 = vld [vmem:[%s168 + $0x18] sm:$0xf]
        %v227 = vld [vmem:[%s168 + $0x1c] sm:$0xf]
        %v228 = vld [vmem:[%s168 + $0x20] sm:$0xf]
        %v229 = vld [vmem:[%s168 + $0x24] sm:$0xf]
        %v230 = vld [vmem:[%s168 + $0x28] sm:$0xf]
        %v231 = vld [vmem:[%s168 + $0x2c] sm:$0xf]
        %v232 = vld [vmem:[%s168 + $0x30] sm:$0xf]
        %v233 = vld [vmem:[%s168 + $0x34] sm:$0xf]
        %v234 = vld [vmem:[%s168 + $0x38] sm:$0xf]
        %v235 = vld [vmem:[%s168 + $0x3c] sm:$0xf]
        %v236 = vld [vmem:[%s168 + $0x40] sm:$0xf]
        %v237 = vld [vmem:[%s168 + $0x44] sm:$0xf]
        %v238 = vld [vmem:[%s168 + $0x48] sm:$0xf]
        %v239 = vld [vmem:[%s168 + $0x4c] sm:$0xf]
        %v240 = vld [vmem:[%s168 + $0x50] sm:$0xf]
        %v241 = vld [vmem:[%s168 + $0x54] sm:$0xf]
        %v242 = vld [vmem:[%s168 + $0x58] sm:$0xf]
        %v243 = vld [vmem:[%s168 + $0x5c] sm:$0xf]
        %v244 = vld [vmem:[%s168 + $0x60] sm:$0xf]
        %v245 = vld [vmem:[%s168 + $0x64] sm:$0xf]
        %v246 = vld [vmem:[%s168 + $0x68] sm:$0xf]
        %v247 = vld [vmem:[%s168 + $0x6c] sm:$0xf]
        %v248 = vld [vmem:[%s168 + $0x70] sm:$0xf]
        %v249 = vld [vmem:[%s168 + $0x74] sm:$0xf]
        %v250 = vld [vmem:[%s168 + $0x78] sm:$0xf]
        %v251 = vld [vmem:[%s168 + $0x7c] sm:$0xf]
        %v252 = vld [vmem:[%s168 + $0x80] sm:$0xf]
        %v253 = vld [vmem:[%s168 + $0x84] sm:$0xf]
        %v254 = vld [vmem:[%s168 + $0x88] sm:$0xf]
        %v255 = vld [vmem:[%s168 + $0x8c] sm:$0xf]
        %v256 = vld [vmem:[%s168 + $0x90] sm:$0xf]
        %v257 = vld [vmem:[%s168 + $0x94] sm:$0xf]
        %v258 = vld [vmem:[%s168 + $0x98] sm:$0xf]
        %v259 = vld [vmem:[%s168 + $0x9c] sm:$0xf]
        %v260 = vld [vmem:[%s168 + $0xa0] sm:$0xf]
        %v261 = vld [vmem:[%s168 + $0xa4] sm:$0xf]
        %v262 = vld [vmem:[%s168 + $0xa8] sm:$0xf]
        %v263 = vld [vmem:[%s168 + $0xac] sm:$0xf]
        %v264 = vld [vmem:[%s168 + $0xb0] sm:$0xf]
        %v265 = vld [vmem:[%s168 + $0xb4] sm:$0xf]
        %v266 = vld [vmem:[%s168 + $0xb8] sm:$0xf]
        %v267 = vld [vmem:[%s168 + $0xbc] sm:$0xf]
        %v268 = vld [vmem:[%s168 + $0xc0] sm:$0xf]
        %v269 = vld [vmem:[%s168 + $0xc4] sm:$0xf]
        %v270 = vld [vmem:[%s168 + $0xc8] sm:$0xf]
        %v271 = vld [vmem:[%s168 + $0xcc] sm:$0xf]
        %v272 = vld [vmem:[%s168 + $0xd0] sm:$0xf]
        %v273 = vld [vmem:[%s168 + $0xd4] sm:$0xf]
        %v274 = vld [vmem:[%s168 + $0xd8] sm:$0xf]
        %v275 = vld [vmem:[%s168 + $0xdc] sm:$0xf]
        %v276 = vld [vmem:[%s168 + $0xe0] sm:$0xf]
        %v277 = vld [vmem:[%s168 + $0xe4] sm:$0xf]
        %v278 = vld [vmem:[%s168 + $0xe8] sm:$0xf]
        %v279 = vld [vmem:[%s168 + $0xec] sm:$0xf]
        %v280 = vld [vmem:[%s168 + $0xf0] sm:$0xf]
        %v281 = vld [vmem:[%s168 + $0xf4] sm:$0xf]
        %v282 = vld [vmem:[%s168 + $0xf8] sm:$0xf]
        %v283 = vld [vmem:[%s168 + $0xfc] sm:$0xf]
        %v284 = vld [vmem:[%s168 + $0x100] sm:$0xf]
        %v285 = vld [vmem:[%s168 + $0x104] sm:$0xf]
        %v286 = vld [vmem:[%s168 + $0x108] sm:$0xf]
        %v287 = vld [vmem:[%s168 + $0x10c] sm:$0xf]
        %v288 = vld [vmem:[%s168 + $0x110] sm:$0xf]
        %v289 = vld [vmem:[%s168 + $0x114] sm:$0xf]
        %v290 = vld [vmem:[%s168 + $0x118] sm:$0xf]
        %v291 = vld [vmem:[%s168 + $0x11c] sm:$0xf]
        %v292 = vld [vmem:[%s168 + $0x120] sm:$0xf]
        %v293 = vld [vmem:[%s168 + $0x124] sm:$0xf]
        %v294 = vld [vmem:[%s168 + $0x128] sm:$0xf]
        %v295 = vld [vmem:[%s168 + $0x12c] sm:$0xf]
        %v296 = vld [vmem:[%s168 + $0x130] sm:$0xf]
        %v297 = vld [vmem:[%s168 + $0x134] sm:$0xf]
        %v298 = vld [vmem:[%s168 + $0x138] sm:$0xf]
        %v299 = vld [vmem:[%s168 + $0x13c] sm:$0xf]
        %v300 = vld [vmem:[%s168 + $0x140] sm:$0xf]
        %v301 = vld [vmem:[%s168 + $0x144] sm:$0xf]
        %v302 = vld [vmem:[%s168 + $0x148] sm:$0xf]
        %v303 = vld [vmem:[%s168 + $0x14c] sm:$0xf]
        %v304 = vld [vmem:[%s168 + $0x150] sm:$0xf]
        %v305 = vld [vmem:[%s168 + $0x154] sm:$0xf]
        %v306 = vld [vmem:[%s168 + $0x158] sm:$0xf]
        %v307 = vld [vmem:[%s168 + $0x15c] sm:$0xf]
        %v308 = vld [vmem:[%s168 + $0x160] sm:$0xf]
        %v309 = vld [vmem:[%s168 + $0x164] sm:$0xf]
        %v310 = vld [vmem:[%s168 + $0x168] sm:$0xf]
        %v311 = vld [vmem:[%s168 + $0x16c] sm:$0xf]
        %v312 = vld [vmem:[%s168 + $0x170] sm:$0xf]
        %v313 = vld [vmem:[%s168 + $0x174] sm:$0xf]
        %v314 = vld [vmem:[%s168 + $0x178] sm:$0xf]
        %v315 = vld [vmem:[%s168 + $0x17c] sm:$0xf]
        %v316 = vld [vmem:[%s168 + $0x180] sm:$0xf]
        %v317 = vld [vmem:[%s168 + $0x184] sm:$0xf]
        %v318 = vld [vmem:[%s168 + $0x188] sm:$0xf]
        %v319 = vld [vmem:[%s168 + $0x18c] sm:$0xf]
        %v320 = vld [vmem:[%s168 + $0x190] sm:$0xf]
        %v321 = vld [vmem:[%s168 + $0x194] sm:$0xf]
        %v322 = vld [vmem:[%s168 + $0x198] sm:$0xf]
        %v323 = vld [vmem:[%s168 + $0x19c] sm:$0xf]
        %v324 = vld [vmem:[%s168 + $0x1a0] sm:$0xf]
        %v325 = vld [vmem:[%s168 + $0x1a4] sm:$0xf]
        %v326 = vld [vmem:[%s168 + $0x1a8] sm:$0xf]
        %v327 = vld [vmem:[%s168 + $0x1ac] sm:$0xf]
        %v328 = vld [vmem:[%s168 + $0x1b0] sm:$0xf]
        %v329 = vld [vmem:[%s168 + $0x1b4] sm:$0xf]
        %v330 = vld [vmem:[%s168 + $0x1b8] sm:$0xf]
        %v331 = vld [vmem:[%s168 + $0x1bc] sm:$0xf]
        %v332 = vld [vmem:[%s168 + $0x1c0] sm:$0xf]
        %v333 = vld [vmem:[%s168 + $0x1c4] sm:$0xf]
        %v334 = vld [vmem:[%s168 + $0x1c8] sm:$0xf]
        %v335 = vld [vmem:[%s168 + $0x1cc] sm:$0xf]
        %v336 = vld [vmem:[%s168 + $0x1d0] sm:$0xf]
        %v337 = vld [vmem:[%s168 + $0x1d4] sm:$0xf]
        %v338 = vld [vmem:[%s168 + $0x1d8] sm:$0xf]
        %v339 = vld [vmem:[%s168 + $0x1dc] sm:$0xf]
        %v340 = vld [vmem:[%s168 + $0x1e0] sm:$0xf]
        %v341 = vld [vmem:[%s168 + $0x1e4] sm:$0xf]
        %v342 = vld [vmem:[%s168 + $0x1e8] sm:$0xf]
        %v343 = vld [vmem:[%s168 + $0x1ec] sm:$0xf]
        %v344 = vld [vmem:[%s168 + $0x1f0] sm:$0xf]
        %v345 = vld [vmem:[%s168 + $0x1f4] sm:$0xf]
        %v346 = vld [vmem:[%s168 + $0x1f8] sm:$0xf]
        %v347 = vld [vmem:[%s168 + $0x1fc] sm:$0xf]
        %v348 = vld [vmem:[%s168 + $0x200] sm:$0xf]
        %v349 = vld [vmem:[%s168 + $0x204] sm:$0xf]
        %v350 = vld [vmem:[%s168 + $0x208] sm:$0xf]
        %v351 = vld [vmem:[%s168 + $0x20c] sm:$0xf]
        %v352 = vld [vmem:[%s168 + $0x210] sm:$0xf]
        %v353 = vld [vmem:[%s168 + $0x214] sm:$0xf]
        %v354 = vld [vmem:[%s168 + $0x218] sm:$0xf]
        %v355 = vld [vmem:[%s168 + $0x21c] sm:$0xf]
        %v356 = vld [vmem:[%s168 + $0x220] sm:$0xf]
        %v357 = vld [vmem:[%s168 + $0x224] sm:$0xf]
        %v358 = vld [vmem:[%s168 + $0x228] sm:$0xf]
        %v359 = vld [vmem:[%s168 + $0x22c] sm:$0xf]
        %v360 = vld [vmem:[%s168 + $0x230] sm:$0xf]
        %v361 = vld [vmem:[%s168 + $0x234] sm:$0xf]
        %v362 = vld [vmem:[%s168 + $0x238] sm:$0xf]
        %v363 = vld [vmem:[%s168 + $0x23c] sm:$0xf]
        %v364 = vld [vmem:[%s168 + $0x240] sm:$0xf]
        %v365 = vld [vmem:[%s168 + $0x244] sm:$0xf]
        %v366 = vld [vmem:[%s168 + $0x248] sm:$0xf]
        %v367 = vld [vmem:[%s168 + $0x24c] sm:$0xf]
        %v368 = vld [vmem:[%s168 + $0x250] sm:$0xf]
        %v369 = vld [vmem:[%s168 + $0x254] sm:$0xf]
        %v370 = vld [vmem:[%s168 + $0x258] sm:$0xf]
        %v371 = vld [vmem:[%s168 + $0x25c] sm:$0xf]
        %v372 = vld [vmem:[%s168 + $0x260] sm:$0xf]
        %v373 = vld [vmem:[%s168 + $0x264] sm:$0xf]
        %v374 = vld [vmem:[%s168 + $0x268] sm:$0xf]
        %v375 = vld [vmem:[%s168 + $0x26c] sm:$0xf]
        %v376 = vld [vmem:[%s168 + $0x270] sm:$0xf]
        %v377 = vld [vmem:[%s168 + $0x274] sm:$0xf]
        %v378 = vld [vmem:[%s168 + $0x278] sm:$0xf]
        %v379 = vld [vmem:[%s168 + $0x27c] sm:$0xf]
        %v380 = vld [vmem:[%s168 + $0x280] sm:$0xf]
        %v381 = vld [vmem:[%s168 + $0x284] sm:$0xf]
        %v382 = vld [vmem:[%s168 + $0x288] sm:$0xf]
        %v383 = vld [vmem:[%s168 + $0x28c] sm:$0xf]
        %v384 = vld [vmem:[%s168 + $0x290] sm:$0xf]
        %v385 = vld [vmem:[%s168 + $0x294] sm:$0xf]
        %v386 = vld [vmem:[%s168 + $0x298] sm:$0xf]
        %v387 = vld [vmem:[%s168 + $0x29c] sm:$0xf]
        %v388 = vld [vmem:[%s168 + $0x2a0] sm:$0xf]
        %v389 = vld [vmem:[%s168 + $0x2a4] sm:$0xf]
        %v390 = vld [vmem:[%s168 + $0x2a8] sm:$0xf]
        %v391 = vld [vmem:[%s168 + $0x2ac] sm:$0xf]
        %v392 = vld [vmem:[%s168 + $0x2b0] sm:$0xf]
        %v393 = vld [vmem:[%s168 + $0x2b4] sm:$0xf]
        %v394 = vld [vmem:[%s168 + $0x2b8] sm:$0xf]
        %v395 = vld [vmem:[%s168 + $0x2bc] sm:$0xf]
        %v396 = vld [vmem:[%s168 + $0x2c0] sm:$0xf]
        %v397 = vld [vmem:[%s168 + $0x2c4] sm:$0xf]
        %v398 = vld [vmem:[%s168 + $0x2c8] sm:$0xf]
        %v399 = vld [vmem:[%s168 + $0x2cc] sm:$0xf]
        %v400 = vld [vmem:[%s168 + $0x2d0] sm:$0xf]
        %v401 = vld [vmem:[%s168 + $0x2d4] sm:$0xf]
        %v402 = vld [vmem:[%s168 + $0x2d8] sm:$0xf]
        %v403 = vld [vmem:[%s168 + $0x2dc] sm:$0xf]
        %v404 = vld [vmem:[%s168 + $0x2e0] sm:$0xf]
        %v405 = vld [vmem:[%s168 + $0x2e4] sm:$0xf]
        %v406 = vld [vmem:[%s168 + $0x2e8] sm:$0xf]
        %v407 = vld [vmem:[%s168 + $0x2ec] sm:$0xf]
        %v408 = vld [vmem:[%s168 + $0x2f0] sm:$0xf]
        %v409 = vld [vmem:[%s168 + $0x2f4] sm:$0xf]
        %v410 = vld [vmem:[%s168 + $0x2f8] sm:$0xf]
        %v411 = vld [vmem:[%s168 + $0x2fc] sm:$0xf]
        %v412 = vld [vmem:[%s168 + $0x300] sm:$0xf]
        %v413 = vld [vmem:[%s168 + $0x304] sm:$0xf]
        %v414 = vld [vmem:[%s168 + $0x308] sm:$0xf]
        %v415 = vld [vmem:[%s168 + $0x30c] sm:$0xf]
        %v416 = vld [vmem:[%s168 + $0x310] sm:$0xf]
        %v417 = vld [vmem:[%s168 + $0x314] sm:$0xf]
        %v418 = vld [vmem:[%s168 + $0x318] sm:$0xf]
        %v419 = vld [vmem:[%s168 + $0x31c] sm:$0xf]
        %v420 = vld [vmem:[%s168 + $0x320] sm:$0xf]
        %v421 = vld [vmem:[%s168 + $0x324] sm:$0xf]
        %v422 = vld [vmem:[%s168 + $0x328] sm:$0xf]
        %v423 = vld [vmem:[%s168 + $0x32c] sm:$0xf]
        %v424 = vld [vmem:[%s168 + $0x330] sm:$0xf]
        %v425 = vld [vmem:[%s168 + $0x334] sm:$0xf]
        %v426 = vld [vmem:[%s168 + $0x338] sm:$0xf]
        %v427 = vld [vmem:[%s168 + $0x33c] sm:$0xf]
        %v428 = vld [vmem:[%s168 + $0x340] sm:$0xf]
        %v429 = vld [vmem:[%s168 + $0x344] sm:$0xf]
        %v430 = vld [vmem:[%s168 + $0x348] sm:$0xf]
        %v431 = vld [vmem:[%s168 + $0x34c] sm:$0xf]
        %v432 = vld [vmem:[%s168 + $0x350] sm:$0xf]
        %v433 = vld [vmem:[%s168 + $0x354] sm:$0xf]
        %v434 = vld [vmem:[%s168 + $0x358] sm:$0xf]
        %v435 = vld [vmem:[%s168 + $0x35c] sm:$0xf]
        %v436 = vld [vmem:[%s168 + $0x360] sm:$0xf]
        %v437 = vld [vmem:[%s168 + $0x364] sm:$0xf]
        %v438 = vld [vmem:[%s168 + $0x368] sm:$0xf]
        %v439 = vld [vmem:[%s168 + $0x36c] sm:$0xf]
        %v440 = vld [vmem:[%s168 + $0x370] sm:$0xf]
        %v441 = vld [vmem:[%s168 + $0x374] sm:$0xf]
        %v442 = vld [vmem:[%s168 + $0x378] sm:$0xf]
        %v443 = vld [vmem:[%s168 + $0x37c] sm:$0xf]
        %v444 = vld [vmem:[%s168 + $0x380] sm:$0xf]
        %v445 = vld [vmem:[%s168 + $0x384] sm:$0xf]
        %v446 = vld [vmem:[%s168 + $0x388] sm:$0xf]
        %v447 = vld [vmem:[%s168 + $0x38c] sm:$0xf]
        %v448 = vld [vmem:[%s168 + $0x390] sm:$0xf]
        %v449 = vld [vmem:[%s168 + $0x394] sm:$0xf]
        %v450 = vld [vmem:[%s168 + $0x398] sm:$0xf]
        %v451 = vld [vmem:[%s168 + $0x39c] sm:$0xf]
        %v452 = vld [vmem:[%s168 + $0x3a0] sm:$0xf]
        %v453 = vld [vmem:[%s168 + $0x3a4] sm:$0xf]
        %v454 = vld [vmem:[%s168 + $0x3a8] sm:$0xf]
        %v455 = vld [vmem:[%s168 + $0x3ac] sm:$0xf]
        %v456 = vld [vmem:[%s168 + $0x3b0] sm:$0xf]
        %v457 = vld [vmem:[%s168 + $0x3b4] sm:$0xf]
        %v458 = vld [vmem:[%s168 + $0x3b8] sm:$0xf]
        %v459 = vld [vmem:[%s168 + $0x3bc] sm:$0xf]
        %v460 = vld [vmem:[%s168 + $0x3c0] sm:$0xf]
        %v461 = vld [vmem:[%s168 + $0x3c4] sm:$0xf]
        %v462 = vld [vmem:[%s168 + $0x3c8] sm:$0xf]
        %v463 = vld [vmem:[%s168 + $0x3cc] sm:$0xf]
        %v464 = vld [vmem:[%s168 + $0x3d0] sm:$0xf]
        %v465 = vld [vmem:[%s168 + $0x3d4] sm:$0xf]
        %v466 = vld [vmem:[%s168 + $0x3d8] sm:$0xf]
        %v467 = vld [vmem:[%s168 + $0x3dc] sm:$0xf]
        %v468 = vld [vmem:[%s168 + $0x3e0] sm:$0xf]
        %v469 = vld [vmem:[%s168 + $0x3e4] sm:$0xf]
        %v470 = vld [vmem:[%s168 + $0x3e8] sm:$0xf]
        %v471 = vld [vmem:[%s168 + $0x3ec] sm:$0xf]
        %v472 = vld [vmem:[%s168 + $0x3f0] sm:$0xf]
        %v473 = vld [vmem:[%s168 + $0x3f4] sm:$0xf]
        %v474 = vld [vmem:[%s168 + $0x3f8] sm:$0xf]
        %v475 = vld [vmem:[%s168 + $0x3fc] sm:$0xf]
        %v476 = vld [vmem:[%s168 + $0x400] sm:$0xf]
        %v477 = vld [vmem:[%s168 + $0x404] sm:$0xf]
        %v478 = vld [vmem:[%s168 + $0x408] sm:$0xf]
        %v479 = vld [vmem:[%s168 + $0x40c] sm:$0xf]
        %v480 = vld [vmem:[%s168 + $0x410] sm:$0xf]
        %v481 = vld [vmem:[%s168 + $0x414] sm:$0xf]
        %v482 = vld [vmem:[%s168 + $0x418] sm:$0xf]
        %v483 = vld [vmem:[%s168 + $0x41c] sm:$0xf]
        %v484 = vld [vmem:[%s168 + $0x420] sm:$0xf]
        %v485 = vld [vmem:[%s168 + $0x424] sm:$0xf]
        %v486 = vld [vmem:[%s168 + $0x428] sm:$0xf]
        %v487 = vld [vmem:[%s168 + $0x42c] sm:$0xf]
        %v488 = vld [vmem:[%s168 + $0x430] sm:$0xf]
        %v489 = vld [vmem:[%s168 + $0x434] sm:$0xf]
        %v490 = vld [vmem:[%s168 + $0x438] sm:$0xf]
        %v491 = vld [vmem:[%s168 + $0x43c] sm:$0xf]
        %v492 = vld [vmem:[%s168 + $0x440] sm:$0xf]
        %v493 = vld [vmem:[%s168 + $0x444] sm:$0xf]
        %v494 = vld [vmem:[%s168 + $0x448] sm:$0xf]
        %v495 = vld [vmem:[%s168 + $0x44c] sm:$0xf]
        %v496 = vld [vmem:[%s168 + $0x450] sm:$0xf]
        %v497 = vld [vmem:[%s168 + $0x454] sm:$0xf]
        %v498 = vld [vmem:[%s168 + $0x458] sm:$0xf]
        %v499 = vld [vmem:[%s168 + $0x45c] sm:$0xf]
        %v500 = vld [vmem:[%s168 + $0x460] sm:$0xf]
        %v501 = vld [vmem:[%s168 + $0x464] sm:$0xf]
        %v502 = vld [vmem:[%s168 + $0x468] sm:$0xf]
        %v503 = vld [vmem:[%s168 + $0x46c] sm:$0xf]
        %v504 = vld [vmem:[%s168 + $0x470] sm:$0xf]
        %v505 = vld [vmem:[%s168 + $0x474] sm:$0xf]
        %v506 = vld [vmem:[%s168 + $0x478] sm:$0xf]
        %v507 = vld [vmem:[%s168 + $0x47c] sm:$0xf]
        %v508 = vld [vmem:[%s168 + $0x480] sm:$0xf]
        %v509 = vld [vmem:[%s168 + $0x484] sm:$0xf]
        %v510 = vld [vmem:[%s168 + $0x488] sm:$0xf]
        %v511 = vld [vmem:[%s168 + $0x48c] sm:$0xf]
        %v512 = vld [vmem:[%s168 + $0x490] sm:$0xf]
        %v513 = vld [vmem:[%s168 + $0x494] sm:$0xf]
        %v514 = vld [vmem:[%s168 + $0x498] sm:$0xf]
        %v515 = vld [vmem:[%s168 + $0x49c] sm:$0xf]
        %v516 = vld [vmem:[%s168 + $0x4a0] sm:$0xf]
        %v517 = vld [vmem:[%s168 + $0x4a4] sm:$0xf]
        %v518 = vld [vmem:[%s168 + $0x4a8] sm:$0xf]
        %v519 = vld [vmem:[%s168 + $0x4ac] sm:$0xf]
        %v520 = vld [vmem:[%s168 + $0x4b0] sm:$0xf]
        %v521 = vld [vmem:[%s168 + $0x4b4] sm:$0xf]
        %v522 = vld [vmem:[%s168 + $0x4b8] sm:$0xf]
        %v523 = vld [vmem:[%s168 + $0x4bc] sm:$0xf]
        %v524 = vld [vmem:[%s168 + $0x4c0] sm:$0xf]
        %v525 = vld [vmem:[%s168 + $0x4c4] sm:$0xf]
        %v526 = vld [vmem:[%s168 + $0x4c8] sm:$0xf]
        %v527 = vld [vmem:[%s168 + $0x4cc] sm:$0xf]
        %v528 = vld [vmem:[%s168 + $0x4d0] sm:$0xf]
        %v529 = vld [vmem:[%s168 + $0x4d4] sm:$0xf]
        %v530 = vld [vmem:[%s168 + $0x4d8] sm:$0xf]
        %v531 = vld [vmem:[%s168 + $0x4dc] sm:$0xf]
        %v532 = vld [vmem:[%s168 + $0x4e0] sm:$0xf]
        %v533 = vld [vmem:[%s168 + $0x4e4] sm:$0xf]
        %v534 = vld [vmem:[%s168 + $0x4e8] sm:$0xf]
        %v535 = vld [vmem:[%s168 + $0x4ec] sm:$0xf]
        %v536 = vld [vmem:[%s168 + $0x4f0] sm:$0xf]
        %v537 = vld [vmem:[%s168 + $0x4f4] sm:$0xf]
        %v538 = vld [vmem:[%s168 + $0x4f8] sm:$0xf]
        %v539 = vld [vmem:[%s168 + $0x4fc] sm:$0xf]
        %v540 = vld [vmem:[%s168 + $0x500] sm:$0xf]
        %v541 = vld [vmem:[%s168 + $0x504] sm:$0xf]
        %v542 = vld [vmem:[%s168 + $0x508] sm:$0xf]
        %v543 = vld [vmem:[%s168 + $0x50c] sm:$0xf]
        %v544 = vld [vmem:[%s168 + $0x510] sm:$0xf]
        %v545 = vld [vmem:[%s168 + $0x514] sm:$0xf]
        %v546 = vld [vmem:[%s168 + $0x518] sm:$0xf]
        %v547 = vld [vmem:[%s168 + $0x51c] sm:$0xf]
        %v548 = vld [vmem:[%s168 + $0x520] sm:$0xf]
        %v549 = vld [vmem:[%s168 + $0x524] sm:$0xf]
        %v550 = vld [vmem:[%s168 + $0x528] sm:$0xf]
        %v551 = vld [vmem:[%s168 + $0x52c] sm:$0xf]
        %v552 = vld [vmem:[%s168 + $0x530] sm:$0xf]
        %v553 = vld [vmem:[%s168 + $0x534] sm:$0xf]
        %v554 = vld [vmem:[%s168 + $0x538] sm:$0xf]
        %v555 = vld [vmem:[%s168 + $0x53c] sm:$0xf]
        %v556 = vld [vmem:[%s168 + $0x540] sm:$0xf]
        %v557 = vld [vmem:[%s168 + $0x544] sm:$0xf]
        %v558 = vld [vmem:[%s168 + $0x548] sm:$0xf]
        %v559 = vld [vmem:[%s168 + $0x54c] sm:$0xf]
        %v560 = vld [vmem:[%s168 + $0x550] sm:$0xf]
        %v561 = vld [vmem:[%s168 + $0x554] sm:$0xf]
        %v562 = vld [vmem:[%s168 + $0x558] sm:$0xf]
        %v563 = vld [vmem:[%s168 + $0x55c] sm:$0xf]
        %v564 = vld [vmem:[%s168 + $0x560] sm:$0xf]
        %v565 = vld [vmem:[%s168 + $0x564] sm:$0xf]
        %v566 = vld [vmem:[%s168 + $0x568] sm:$0xf]
        %v567 = vld [vmem:[%s168 + $0x56c] sm:$0xf]
        %v568 = vld [vmem:[%s168 + $0x570] sm:$0xf]
        %v569 = vld [vmem:[%s168 + $0x574] sm:$0xf]
        %v570 = vld [vmem:[%s168 + $0x578] sm:$0xf]
        %v571 = vld [vmem:[%s168 + $0x57c] sm:$0xf]
        %v572 = vld [vmem:[%s168 + $0x580] sm:$0xf]
        %v573 = vld [vmem:[%s168 + $0x584] sm:$0xf]
        %v574 = vld [vmem:[%s168 + $0x588] sm:$0xf]
        %v575 = vld [vmem:[%s168 + $0x58c] sm:$0xf]
        %v576 = vld [vmem:[%s168 + $0x590] sm:$0xf]
        %v577 = vld [vmem:[%s168 + $0x594] sm:$0xf]
        %v578 = vld [vmem:[%s168 + $0x598] sm:$0xf]
        %v579 = vld [vmem:[%s168 + $0x59c] sm:$0xf]
        %v580 = vld [vmem:[%s168 + $0x5a0] sm:$0xf]
        %v581 = vld [vmem:[%s168 + $0x5a4] sm:$0xf]
        %v582 = vld [vmem:[%s168 + $0x5a8] sm:$0xf]
        %v583 = vld [vmem:[%s168 + $0x5ac] sm:$0xf]
        %v584 = vld [vmem:[%s168 + $0x5b0] sm:$0xf]
        %v585 = vld [vmem:[%s168 + $0x5b4] sm:$0xf]
        %v586 = vld [vmem:[%s168 + $0x5b8] sm:$0xf]
        %v587 = vld [vmem:[%s168 + $0x5bc] sm:$0xf]
        %v588 = vld [vmem:[%s168 + $0x5c0] sm:$0xf]
        %v589 = vld [vmem:[%s168 + $0x5c4] sm:$0xf]
        %v590 = vld [vmem:[%s168 + $0x5c8] sm:$0xf]
        %v591 = vld [vmem:[%s168 + $0x5cc] sm:$0xf]
        %v592 = vld [vmem:[%s168 + $0x5d0] sm:$0xf]
        %v593 = vld [vmem:[%s168 + $0x5d4] sm:$0xf]
        %v594 = vld [vmem:[%s168 + $0x5d8] sm:$0xf]
        %v595 = vld [vmem:[%s168 + $0x5dc] sm:$0xf]
        %v596 = vld [vmem:[%s168 + $0x5e0] sm:$0xf]
        %v597 = vld [vmem:[%s168 + $0x5e4] sm:$0xf]
        %v598 = vld [vmem:[%s168 + $0x5e8] sm:$0xf]
        %v599 = vld [vmem:[%s168 + $0x5ec] sm:$0xf]
        %v600 = vld [vmem:[%s168 + $0x5f0] sm:$0xf]
        %v601 = vld [vmem:[%s168 + $0x5f4] sm:$0xf]
        %v602 = vld [vmem:[%s168 + $0x5f8] sm:$0xf]
        %v603 = vld [vmem:[%s168 + $0x5fc] sm:$0xf]
        %v604 = vld [vmem:[%s168 + $0x600] sm:$0xf]
        %v605 = vld [vmem:[%s168 + $0x604] sm:$0xf]
        %v606 = vld [vmem:[%s168 + $0x608] sm:$0xf]
        %v607 = vld [vmem:[%s168 + $0x60c] sm:$0xf]
        %v608 = vld [vmem:[%s168 + $0x610] sm:$0xf]
        %v609 = vld [vmem:[%s168 + $0x614] sm:$0xf]
        %v610 = vld [vmem:[%s168 + $0x618] sm:$0xf]
        %v611 = vld [vmem:[%s168 + $0x61c] sm:$0xf]
        %v612 = vld [vmem:[%s168 + $0x620] sm:$0xf]
        %v613 = vld [vmem:[%s168 + $0x624] sm:$0xf]
        %v614 = vld [vmem:[%s168 + $0x628] sm:$0xf]
        %v615 = vld [vmem:[%s168 + $0x62c] sm:$0xf]
        %v616 = vld [vmem:[%s168 + $0x630] sm:$0xf]
        %v617 = vld [vmem:[%s168 + $0x634] sm:$0xf]
        %v618 = vld [vmem:[%s168 + $0x638] sm:$0xf]
        %v619 = vld [vmem:[%s168 + $0x63c] sm:$0xf]
        %v620 = vld [vmem:[%s168 + $0x640] sm:$0xf]
        %v621 = vld [vmem:[%s168 + $0x644] sm:$0xf]
        %v622 = vld [vmem:[%s168 + $0x648] sm:$0xf]
        %v623 = vld [vmem:[%s168 + $0x64c] sm:$0xf]
        %v624 = vld [vmem:[%s168 + $0x650] sm:$0xf]
        %v625 = vld [vmem:[%s168 + $0x654] sm:$0xf]
        %v626 = vld [vmem:[%s168 + $0x658] sm:$0xf]
        %v627 = vld [vmem:[%s168 + $0x65c] sm:$0xf]
        %v628 = vld [vmem:[%s168 + $0x660] sm:$0xf]
        %v629 = vld [vmem:[%s168 + $0x664] sm:$0xf]
        %v630 = vld [vmem:[%s168 + $0x668] sm:$0xf]
        %v631 = vld [vmem:[%s168 + $0x66c] sm:$0xf]
        %v632 = vld [vmem:[%s168 + $0x670] sm:$0xf]
        %v633 = vld [vmem:[%s168 + $0x674] sm:$0xf]
        %v634 = vld [vmem:[%s168 + $0x678] sm:$0xf]
        %v635 = vld [vmem:[%s168 + $0x67c] sm:$0xf]
        %v636 = vld [vmem:[%s168 + $0x680] sm:$0xf]
        %v637 = vld [vmem:[%s168 + $0x684] sm:$0xf]
        %v638 = vld [vmem:[%s168 + $0x688] sm:$0xf]
        %v639 = vld [vmem:[%s168 + $0x68c] sm:$0xf]
        %v640 = vld [vmem:[%s168 + $0x690] sm:$0xf]
        %v641 = vld [vmem:[%s168 + $0x694] sm:$0xf]
        %v642 = vld [vmem:[%s168 + $0x698] sm:$0xf]
        %v643 = vld [vmem:[%s168 + $0x69c] sm:$0xf]
        %v644 = vld [vmem:[%s168 + $0x6a0] sm:$0xf]
        %v645 = vld [vmem:[%s168 + $0x6a4] sm:$0xf]
        %v646 = vld [vmem:[%s168 + $0x6a8] sm:$0xf]
        %v647 = vld [vmem:[%s168 + $0x6ac] sm:$0xf]
        %v648 = vld [vmem:[%s168 + $0x6b0] sm:$0xf]
        %v649 = vld [vmem:[%s168 + $0x6b4] sm:$0xf]
        %v650 = vld [vmem:[%s168 + $0x6b8] sm:$0xf]
        %v651 = vld [vmem:[%s168 + $0x6bc] sm:$0xf]
        %v652 = vld [vmem:[%s168 + $0x6c0] sm:$0xf]
        %v653 = vld [vmem:[%s168 + $0x6c4] sm:$0xf]
        %v654 = vld [vmem:[%s168 + $0x6c8] sm:$0xf]
        %v655 = vld [vmem:[%s168 + $0x6cc] sm:$0xf]
        %v656 = vld [vmem:[%s168 + $0x6d0] sm:$0xf]
        %v657 = vld [vmem:[%s168 + $0x6d4] sm:$0xf]
        %v658 = vld [vmem:[%s168 + $0x6d8] sm:$0xf]
        %v659 = vld [vmem:[%s168 + $0x6dc] sm:$0xf]
        %v660 = vld [vmem:[%s168 + $0x6e0] sm:$0xf]
        %v661 = vld [vmem:[%s168 + $0x6e4] sm:$0xf]
        %v662 = vld [vmem:[%s168 + $0x6e8] sm:$0xf]
        %v663 = vld [vmem:[%s168 + $0x6ec] sm:$0xf]
        %v664 = vld [vmem:[%s168 + $0x6f0] sm:$0xf]
        %v665 = vld [vmem:[%s168 + $0x6f4] sm:$0xf]
        %v666 = vld [vmem:[%s168 + $0x6f8] sm:$0xf]
        %v667 = vld [vmem:[%s168 + $0x6fc] sm:$0xf]
        %v668 = vld [vmem:[%s168 + $0x700] sm:$0xf]
        %v669 = vld [vmem:[%s168 + $0x704] sm:$0xf]
        %v670 = vld [vmem:[%s168 + $0x708] sm:$0xf]
        %v671 = vld [vmem:[%s168 + $0x70c] sm:$0xf]
        %v672 = vld [vmem:[%s168 + $0x710] sm:$0xf]
        %v673 = vld [vmem:[%s168 + $0x714] sm:$0xf]
        %v674 = vld [vmem:[%s168 + $0x718] sm:$0xf]
        %v675 = vld [vmem:[%s168 + $0x71c] sm:$0xf]
        %v676 = vld [vmem:[%s168 + $0x720] sm:$0xf]
        %v677 = vld [vmem:[%s168 + $0x724] sm:$0xf]
        %v678 = vld [vmem:[%s168 + $0x728] sm:$0xf]
        %v679 = vld [vmem:[%s168 + $0x72c] sm:$0xf]
        %v680 = vld [vmem:[%s168 + $0x730] sm:$0xf]
        %v681 = vld [vmem:[%s168 + $0x734] sm:$0xf]
        %v682 = vld [vmem:[%s168 + $0x738] sm:$0xf]
        %v683 = vld [vmem:[%s168 + $0x73c] sm:$0xf]
        %v684 = vld [vmem:[%s168 + $0x740] sm:$0xf]
        %v685 = vld [vmem:[%s168 + $0x744] sm:$0xf]
        %v686 = vld [vmem:[%s168 + $0x748] sm:$0xf]
        %v687 = vld [vmem:[%s168 + $0x74c] sm:$0xf]
        %v688 = vld [vmem:[%s168 + $0x750] sm:$0xf]
        %v689 = vld [vmem:[%s168 + $0x754] sm:$0xf]
        %v690 = vld [vmem:[%s168 + $0x758] sm:$0xf]
        %v691 = vld [vmem:[%s168 + $0x75c] sm:$0xf]
        %v692 = vld [vmem:[%s168 + $0x760] sm:$0xf]
        %v693 = vld [vmem:[%s168 + $0x764] sm:$0xf]
        %v694 = vld [vmem:[%s168 + $0x768] sm:$0xf]
        %v695 = vld [vmem:[%s168 + $0x76c] sm:$0xf]
        %v696 = vld [vmem:[%s168 + $0x770] sm:$0xf]
        %v697 = vld [vmem:[%s168 + $0x774] sm:$0xf]
        %v698 = vld [vmem:[%s168 + $0x778] sm:$0xf]
        %v699 = vld [vmem:[%s168 + $0x77c] sm:$0xf]
        %v700 = vld [vmem:[%s168 + $0x780] sm:$0xf]
        %v701 = vld [vmem:[%s168 + $0x784] sm:$0xf]
        %v702 = vld [vmem:[%s168 + $0x788] sm:$0xf]
        %v703 = vld [vmem:[%s168 + $0x78c] sm:$0xf]
        %v704 = vld [vmem:[%s168 + $0x790] sm:$0xf]
        %v705 = vld [vmem:[%s168 + $0x794] sm:$0xf]
        %v706 = vld [vmem:[%s168 + $0x798] sm:$0xf]
        %v707 = vld [vmem:[%s168 + $0x79c] sm:$0xf]
        %v708 = vld [vmem:[%s168 + $0x7a0] sm:$0xf]
        %v709 = vld [vmem:[%s168 + $0x7a4] sm:$0xf]
        %v710 = vld [vmem:[%s168 + $0x7a8] sm:$0xf]
        %v711 = vld [vmem:[%s168 + $0x7ac] sm:$0xf]
        %v712 = vld [vmem:[%s168 + $0x7b0] sm:$0xf]
        %v713 = vld [vmem:[%s168 + $0x7b4] sm:$0xf]
        %v714 = vld [vmem:[%s168 + $0x7b8] sm:$0xf]
        %v715 = vld [vmem:[%s168 + $0x7bc] sm:$0xf]
        %v716 = vld [vmem:[%s168 + $0x7c0] sm:$0xf]
        %v717 = vld [vmem:[%s168 + $0x7c4] sm:$0xf]
        %v718 = vld [vmem:[%s168 + $0x7c8] sm:$0xf]
        %v719 = vld [vmem:[%s168 + $0x7cc] sm:$0xf]
        %v720 = vld [vmem:[%s168 + $0x7d0] sm:$0xf]
        %v721 = vld [vmem:[%s168 + $0x7d4] sm:$0xf]
        %v722 = vld [vmem:[%s168 + $0x7d8] sm:$0xf]
        %v723 = vld [vmem:[%s168 + $0x7dc] sm:$0xf]
        %v724 = vld [vmem:[%s168 + $0x7e0] sm:$0xf]
        %v725 = vld [vmem:[%s168 + $0x7e4] sm:$0xf]
        %v726 = vld [vmem:[%s168 + $0x7e8] sm:$0xf]
        %v727 = vld [vmem:[%s168 + $0x7ec] sm:$0xf]
        %v728 = vld [vmem:[%s168 + $0x7f0] sm:$0xf]
        %v729 = vld [vmem:[%s168 + $0x7f4] sm:$0xf]
        %v730 = vld [vmem:[%s168 + $0x7f8] sm:$0xf]
        %v731 = vld [vmem:[%s168 + $0x7fc] sm:$0xf]
        %v732 = vld [vmem:[%s168 + $0x800] sm:$0xf]
        %v733 = vld [vmem:[%s168 + $0x804] sm:$0xf]
        %v734 = vld [vmem:[%s168 + $0x808] sm:$0xf]
        %v735 = vld [vmem:[%s168 + $0x80c] sm:$0xf]
        %v736 = vld [vmem:[%s168 + $0x810] sm:$0xf]
        %v737 = vld [vmem:[%s168 + $0x814] sm:$0xf]
        %v738 = vld [vmem:[%s168 + $0x818] sm:$0xf]
        %v739 = vld [vmem:[%s168 + $0x81c] sm:$0xf]
        %v740 = vld [vmem:[%s168 + $0x820] sm:$0xf]
        %v741 = vld [vmem:[%s168 + $0x824] sm:$0xf]
        %v742 = vld [vmem:[%s168 + $0x828] sm:$0xf]
        %v743 = vld [vmem:[%s168 + $0x82c] sm:$0xf]
        %v744 = vld [vmem:[%s168 + $0x830] sm:$0xf]
        %v745 = vld [vmem:[%s168 + $0x834] sm:$0xf]
        %v746 = vld [vmem:[%s168 + $0x838] sm:$0xf]
        %v747 = vld [vmem:[%s168 + $0x83c] sm:$0xf]
        %v748 = vld [vmem:[%s168 + $0x840] sm:$0xf]
        %v749 = vld [vmem:[%s168 + $0x844] sm:$0xf]
        %v750 = vld [vmem:[%s168 + $0x848] sm:$0xf]
        %v751 = vld [vmem:[%s168 + $0x84c] sm:$0xf]
        %v752 = vld [vmem:[%s168 + $0x850] sm:$0xf]
        %v753 = vld [vmem:[%s168 + $0x854] sm:$0xf]
        %v754 = vld [vmem:[%s168 + $0x858] sm:$0xf]
        %v755 = vld [vmem:[%s168 + $0x85c] sm:$0xf]
        %v756 = vld [vmem:[%s168 + $0x860] sm:$0xf]
        %v757 = vld [vmem:[%s168 + $0x864] sm:$0xf]
        %v758 = vld [vmem:[%s168 + $0x868] sm:$0xf]
        %v759 = vld [vmem:[%s168 + $0x86c] sm:$0xf]
        %v760 = vld [vmem:[%s168 + $0x870] sm:$0xf]
        %v761 = vld [vmem:[%s168 + $0x874] sm:$0xf]
        %v762 = vld [vmem:[%s168 + $0x878] sm:$0xf]
        %v763 = vld [vmem:[%s168 + $0x87c] sm:$0xf]
        %v764 = vld [vmem:[%s168 + $0x880] sm:$0xf]
        %v765 = vld [vmem:[%s168 + $0x884] sm:$0xf]
        %v766 = vld [vmem:[%s168 + $0x888] sm:$0xf]
        %v767 = vld [vmem:[%s168 + $0x88c] sm:$0xf]
        %v768 = vld [vmem:[%s168 + $0x890] sm:$0xf]
        %v769 = vld [vmem:[%s168 + $0x894] sm:$0xf]
        %v770 = vld [vmem:[%s168 + $0x898] sm:$0xf]
        %v771 = vld [vmem:[%s168 + $0x89c] sm:$0xf]
        %v772 = vld [vmem:[%s168 + $0x8a0] sm:$0xf]
        %v773 = vld [vmem:[%s168 + $0x8a4] sm:$0xf]
        %v774 = vld [vmem:[%s168 + $0x8a8] sm:$0xf]
        %v775 = vld [vmem:[%s168 + $0x8ac] sm:$0xf]
        %v776 = vld [vmem:[%s168 + $0x8b0] sm:$0xf]
        %v777 = vld [vmem:[%s168 + $0x8b4] sm:$0xf]
        %v778 = vld [vmem:[%s168 + $0x8b8] sm:$0xf]
        %v779 = vld [vmem:[%s168 + $0x8bc] sm:$0xf]
        %v780 = vld [vmem:[%s168 + $0x8c0] sm:$0xf]
        %v781 = vld [vmem:[%s168 + $0x8c4] sm:$0xf]
        %v782 = vld [vmem:[%s168 + $0x8c8] sm:$0xf]
        %v783 = vld [vmem:[%s168 + $0x8cc] sm:$0xf]
        %v784 = vld [vmem:[%s168 + $0x8d0] sm:$0xf]
        %v785 = vld [vmem:[%s168 + $0x8d4] sm:$0xf]
        %v786 = vld [vmem:[%s168 + $0x8d8] sm:$0xf]
        %v787 = vld [vmem:[%s168 + $0x8dc] sm:$0xf]
        %v788 = vld [vmem:[%s168 + $0x8e0] sm:$0xf]
        %v789 = vld [vmem:[%s168 + $0x8e4] sm:$0xf]
        %v790 = vld [vmem:[%s168 + $0x8e8] sm:$0xf]
        %v791 = vld [vmem:[%s168 + $0x8ec] sm:$0xf]
        %v792 = vld [vmem:[%s168 + $0x8f0] sm:$0xf]
        %v793 = vld [vmem:[%s168 + $0x8f4] sm:$0xf]
        %v794 = vld [vmem:[%s168 + $0x8f8] sm:$0xf]
        %v795 = vld [vmem:[%s168 + $0x8fc] sm:$0xf]
        %v796 = vld [vmem:[%s168 + $0x900] sm:$0xf]
        %v797 = vld [vmem:[%s168 + $0x904] sm:$0xf]
        %v798 = vld [vmem:[%s168 + $0x908] sm:$0xf]
        %v799 = vld [vmem:[%s168 + $0x90c] sm:$0xf]
        %v800 = vld [vmem:[%s168 + $0x910] sm:$0xf]
        %v801 = vld [vmem:[%s168 + $0x914] sm:$0xf]
        %v802 = vld [vmem:[%s168 + $0x918] sm:$0xf]
        %v803 = vld [vmem:[%s168 + $0x91c] sm:$0xf]
        %v804 = vld [vmem:[%s168 + $0x920] sm:$0xf]
        %v805 = vld [vmem:[%s168 + $0x924] sm:$0xf]
        %v806 = vld [vmem:[%s168 + $0x928] sm:$0xf]
        %v807 = vld [vmem:[%s168 + $0x92c] sm:$0xf]
        %v808 = vld [vmem:[%s168 + $0x930] sm:$0xf]
        %v809 = vld [vmem:[%s168 + $0x934] sm:$0xf]
        %v810 = vld [vmem:[%s168 + $0x938] sm:$0xf]
        %v811 = vld [vmem:[%s168 + $0x93c] sm:$0xf]
        %v812 = vld [vmem:[%s168 + $0x940] sm:$0xf]
        %v813 = vld [vmem:[%s168 + $0x944] sm:$0xf]
        %v814 = vld [vmem:[%s168 + $0x948] sm:$0xf]
        %v815 = vld [vmem:[%s168 + $0x94c] sm:$0xf]
        %v816 = vld [vmem:[%s168 + $0x950] sm:$0xf]
        %v817 = vld [vmem:[%s168 + $0x954] sm:$0xf]
        %v818 = vld [vmem:[%s168 + $0x958] sm:$0xf]
        %v819 = vld [vmem:[%s168 + $0x95c] sm:$0xf]
        %v820 = vld [vmem:[%s168 + $0x960] sm:$0xf]
        %v821 = vld [vmem:[%s168 + $0x964] sm:$0xf]
        %v822 = vld [vmem:[%s168 + $0x968] sm:$0xf]
        %v823 = vld [vmem:[%s168 + $0x96c] sm:$0xf]
        %v824 = vld [vmem:[%s168 + $0x970] sm:$0xf]
        %v825 = vld [vmem:[%s168 + $0x974] sm:$0xf]
        %v826 = vld [vmem:[%s168 + $0x978] sm:$0xf]
        %v827 = vld [vmem:[%s168 + $0x97c] sm:$0xf]
        %v828 = vld [vmem:[%s168 + $0x980] sm:$0xf]
        %v829 = vld [vmem:[%s168 + $0x984] sm:$0xf]
        %v830 = vld [vmem:[%s168 + $0x988] sm:$0xf]
        %v831 = vld [vmem:[%s168 + $0x98c] sm:$0xf]
        %v832 = vld [vmem:[%s168 + $0x990] sm:$0xf]
        %v833 = vld [vmem:[%s168 + $0x994] sm:$0xf]
        %v834 = vld [vmem:[%s168 + $0x998] sm:$0xf]
        %v835 = vld [vmem:[%s168 + $0x99c] sm:$0xf]
        %v836 = vld [vmem:[%s168 + $0x9a0] sm:$0xf]
        %v837 = vld [vmem:[%s168 + $0x9a4] sm:$0xf]
        %v838 = vld [vmem:[%s168 + $0x9a8] sm:$0xf]
        %v839 = vld [vmem:[%s168 + $0x9ac] sm:$0xf]
        %v840 = vld [vmem:[%s168 + $0x9b0] sm:$0xf]
        %v841 = vld [vmem:[%s168 + $0x9b4] sm:$0xf]
        %v842 = vld [vmem:[%s168 + $0x9b8] sm:$0xf]
        %v843 = vld [vmem:[%s168 + $0x9bc] sm:$0xf]
        %v844 = vld [vmem:[%s168 + $0x9c0] sm:$0xf]
        %v845 = vld [vmem:[%s168 + $0x9c4] sm:$0xf]
        %v846 = vld [vmem:[%s168 + $0x9c8] sm:$0xf]
        %v847 = vld [vmem:[%s168 + $0x9cc] sm:$0xf]
        %v848 = vld [vmem:[%s168 + $0x9d0] sm:$0xf]
        %v849 = vld [vmem:[%s168 + $0x9d4] sm:$0xf]
        %v850 = vld [vmem:[%s168 + $0x9d8] sm:$0xf]
        %v851 = vld [vmem:[%s168 + $0x9dc] sm:$0xf]
        %v852 = vld [vmem:[%s168 + $0x9e0] sm:$0xf]
        %v853 = vld [vmem:[%s168 + $0x9e4] sm:$0xf]
        %v854 = vld [vmem:[%s168 + $0x9e8] sm:$0xf]
        %v855 = vld [vmem:[%s168 + $0x9ec] sm:$0xf]
        %v856 = vld [vmem:[%s168 + $0x9f0] sm:$0xf]
        %v857 = vld [vmem:[%s168 + $0x9f4] sm:$0xf]
        %v858 = vld [vmem:[%s168 + $0x9f8] sm:$0xf]
        %v859 = vld [vmem:[%s168 + $0x9fc] sm:$0xf]
        %v860 = vld [vmem:[%s168 + $0xa00] sm:$0xf]
        %v861 = vld [vmem:[%s168 + $0xa04] sm:$0xf]
        %v862 = vld [vmem:[%s168 + $0xa08] sm:$0xf]
        %v863 = vld [vmem:[%s168 + $0xa0c] sm:$0xf]
        %v864 = vld [vmem:[%s168 + $0xa10] sm:$0xf]
        %v865 = vld [vmem:[%s168 + $0xa14] sm:$0xf]
        %v866 = vld [vmem:[%s168 + $0xa18] sm:$0xf]
        %v867 = vld [vmem:[%s168 + $0xa1c] sm:$0xf]
        %v868 = vld [vmem:[%s168 + $0xa20] sm:$0xf]
        %v869 = vld [vmem:[%s168 + $0xa24] sm:$0xf]
        %v870 = vld [vmem:[%s168 + $0xa28] sm:$0xf]
        %v871 = vld [vmem:[%s168 + $0xa2c] sm:$0xf]
        %v872 = vld [vmem:[%s168 + $0xa30] sm:$0xf]
        %v873 = vld [vmem:[%s168 + $0xa34] sm:$0xf]
        %v874 = vld [vmem:[%s168 + $0xa38] sm:$0xf]
        %v875 = vld [vmem:[%s168 + $0xa3c] sm:$0xf]
        %v876 = vld [vmem:[%s168 + $0xa40] sm:$0xf]
        %v877 = vld [vmem:[%s168 + $0xa44] sm:$0xf]
        %v878 = vld [vmem:[%s168 + $0xa48] sm:$0xf]
        %v879 = vld [vmem:[%s168 + $0xa4c] sm:$0xf]
        %v880 = vld [vmem:[%s168 + $0xa50] sm:$0xf]
        %v881 = vld [vmem:[%s168 + $0xa54] sm:$0xf]
        %v882 = vld [vmem:[%s168 + $0xa58] sm:$0xf]
        %v883 = vld [vmem:[%s168 + $0xa5c] sm:$0xf]
        %v884 = vld [vmem:[%s168 + $0xa60] sm:$0xf]
        %v885 = vld [vmem:[%s168 + $0xa64] sm:$0xf]
        %v886 = vld [vmem:[%s168 + $0xa68] sm:$0xf]
        %v887 = vld [vmem:[%s168 + $0xa6c] sm:$0xf]
        %v888 = vld [vmem:[%s168 + $0xa70] sm:$0xf]
        %v889 = vld [vmem:[%s168 + $0xa74] sm:$0xf]
        %v890 = vld [vmem:[%s168 + $0xa78] sm:$0xf]
        %v891 = vld [vmem:[%s168 + $0xa7c] sm:$0xf]
        %v892 = vld [vmem:[%s168 + $0xa80] sm:$0xf]
        %v893 = vld [vmem:[%s168 + $0xa84] sm:$0xf]
        %v894 = vld [vmem:[%s168 + $0xa88] sm:$0xf]
        %v895 = vld [vmem:[%s168 + $0xa8c] sm:$0xf]
        %v896 = vld [vmem:[%s168 + $0xa90] sm:$0xf]
        %v897 = vld [vmem:[%s168 + $0xa94] sm:$0xf]
        %v898 = vld [vmem:[%s168 + $0xa98] sm:$0xf]
        %v899 = vld [vmem:[%s168 + $0xa9c] sm:$0xf]
        %v900 = vld [vmem:[%s168 + $0xaa0] sm:$0xf]
        %v901 = vld [vmem:[%s168 + $0xaa4] sm:$0xf]
        %v902 = vld [vmem:[%s168 + $0xaa8] sm:$0xf]
        %v903 = vld [vmem:[%s168 + $0xaac] sm:$0xf]
        %v904 = vld [vmem:[%s168 + $0xab0] sm:$0xf]
        %v905 = vld [vmem:[%s168 + $0xab4] sm:$0xf]
        %v906 = vld [vmem:[%s168 + $0xab8] sm:$0xf]
        %v907 = vld [vmem:[%s168 + $0xabc] sm:$0xf]
        %v908 = vld [vmem:[%s168 + $0xac0] sm:$0xf]
        %v909 = vld [vmem:[%s168 + $0xac4] sm:$0xf]
        %v910 = vld [vmem:[%s168 + $0xac8] sm:$0xf]
        %v911 = vld [vmem:[%s168 + $0xacc] sm:$0xf]
        %v912 = vld [vmem:[%s168 + $0xad0] sm:$0xf]
        %v913 = vld [vmem:[%s168 + $0xad4] sm:$0xf]
        %v914 = vld [vmem:[%s168 + $0xad8] sm:$0xf]
        %v915 = vld [vmem:[%s168 + $0xadc] sm:$0xf]
        %v916 = vld [vmem:[%s168 + $0xae0] sm:$0xf]
        %v917 = vld [vmem:[%s168 + $0xae4] sm:$0xf]
        %v918 = vld [vmem:[%s168 + $0xae8] sm:$0xf]
        %v919 = vld [vmem:[%s168 + $0xaec] sm:$0xf]
        %v920 = vld [vmem:[%s168 + $0xaf0] sm:$0xf]
        %v921 = vld [vmem:[%s168 + $0xaf4] sm:$0xf]
        %v922 = vld [vmem:[%s168 + $0xaf8] sm:$0xf]
        %v923 = vld [vmem:[%s168 + $0xafc] sm:$0xf]
        %v924 = vld [vmem:[%s168 + $0xb00] sm:$0xf]
        %v925 = vld [vmem:[%s168 + $0xb04] sm:$0xf]
        %v926 = vld [vmem:[%s168 + $0xb08] sm:$0xf]
        %v927 = vld [vmem:[%s168 + $0xb0c] sm:$0xf]
        %v928 = vld [vmem:[%s168 + $0xb10] sm:$0xf]
        %v929 = vld [vmem:[%s168 + $0xb14] sm:$0xf]
        %v930 = vld [vmem:[%s168 + $0xb18] sm:$0xf]
        %v931 = vld [vmem:[%s168 + $0xb1c] sm:$0xf]
        %v932 = vld [vmem:[%s168 + $0xb20] sm:$0xf]
        %v933 = vld [vmem:[%s168 + $0xb24] sm:$0xf]
        %v934 = vld [vmem:[%s168 + $0xb28] sm:$0xf]
        %v935 = vld [vmem:[%s168 + $0xb2c] sm:$0xf]
        %v936 = vld [vmem:[%s168 + $0xb30] sm:$0xf]
        %v937 = vld [vmem:[%s168 + $0xb34] sm:$0xf]
        %v938 = vld [vmem:[%s168 + $0xb38] sm:$0xf]
        %v939 = vld [vmem:[%s168 + $0xb3c] sm:$0xf]
        %v940 = vld [vmem:[%s168 + $0xb40] sm:$0xf]
        %v941 = vld [vmem:[%s168 + $0xb44] sm:$0xf]
        %v942 = vld [vmem:[%s168 + $0xb48] sm:$0xf]
        %v943 = vld [vmem:[%s168 + $0xb4c] sm:$0xf]
        %v944 = vld [vmem:[%s168 + $0xb50] sm:$0xf]
        %v945 = vld [vmem:[%s168 + $0xb54] sm:$0xf]
        %v946 = vld [vmem:[%s168 + $0xb58] sm:$0xf]
        %v947 = vld [vmem:[%s168 + $0xb5c] sm:$0xf]
        %v948 = vld [vmem:[%s168 + $0xb60] sm:$0xf]
        %v949 = vld [vmem:[%s168 + $0xb64] sm:$0xf]
        %v950 = vld [vmem:[%s168 + $0xb68] sm:$0xf]
        %v951 = vld [vmem:[%s168 + $0xb6c] sm:$0xf]
        %v952 = vld [vmem:[%s168 + $0xb70] sm:$0xf]
        %v953 = vld [vmem:[%s168 + $0xb74] sm:$0xf]
        %v954 = vld [vmem:[%s168 + $0xb78] sm:$0xf]
        %v955 = vld [vmem:[%s168 + $0xb7c] sm:$0xf]
        %v956 = vld [vmem:[%s168 + $0xb80] sm:$0xf]
        %v957 = vld [vmem:[%s168 + $0xb84] sm:$0xf]
        %v958 = vld [vmem:[%s168 + $0xb88] sm:$0xf]
        %v959 = vld [vmem:[%s168 + $0xb8c] sm:$0xf]
        %v960 = vld [vmem:[%s168 + $0xb90] sm:$0xf]
        %v961 = vld [vmem:[%s168 + $0xb94] sm:$0xf]
        %v962 = vld [vmem:[%s168 + $0xb98] sm:$0xf]
        %v963 = vld [vmem:[%s168 + $0xb9c] sm:$0xf]
        %v964 = vld [vmem:[%s168 + $0xba0] sm:$0xf]
        %v965 = vld [vmem:[%s168 + $0xba4] sm:$0xf]
        %v966 = vld [vmem:[%s168 + $0xba8] sm:$0xf]
        %v967 = vld [vmem:[%s168 + $0xbac] sm:$0xf]
        %v968 = vld [vmem:[%s168 + $0xbb0] sm:$0xf]
        %v969 = vld [vmem:[%s168 + $0xbb4] sm:$0xf]
        %v970 = vld [vmem:[%s168 + $0xbb8] sm:$0xf]
        %v971 = vld [vmem:[%s168 + $0xbbc] sm:$0xf]
        %v972 = vld [vmem:[%s168 + $0xbc0] sm:$0xf]
        %v973 = vld [vmem:[%s168 + $0xbc4] sm:$0xf]
        %v974 = vld [vmem:[%s168 + $0xbc8] sm:$0xf]
        %v975 = vld [vmem:[%s168 + $0xbcc] sm:$0xf]
        %v976 = vld [vmem:[%s168 + $0xbd0] sm:$0xf]
        %v977 = vld [vmem:[%s168 + $0xbd4] sm:$0xf]
        %v978 = vld [vmem:[%s168 + $0xbd8] sm:$0xf]
        %v979 = vld [vmem:[%s168 + $0xbdc] sm:$0xf]
        %v980 = vld [vmem:[%s168 + $0xbe0] sm:$0xf]
        %v981 = vld [vmem:[%s168 + $0xbe4] sm:$0xf]
        %v982 = vld [vmem:[%s168 + $0xbe8] sm:$0xf]
        %v983 = vld [vmem:[%s168 + $0xbec] sm:$0xf]
        %v984 = vld [vmem:[%s168 + $0xbf0] sm:$0xf]
        %v985 = vld [vmem:[%s168 + $0xbf4] sm:$0xf]
        %v986 = vld [vmem:[%s168 + $0xbf8] sm:$0xf]
        %v987 = vld [vmem:[%s168 + $0xbfc] sm:$0xf]
        %v988 = vld [vmem:[%s168 + $0xc00] sm:$0xf]
        %v989 = vld [vmem:[%s168 + $0xc04] sm:$0xf]
        %v990 = vld [vmem:[%s168 + $0xc08] sm:$0xf]
        %v991 = vld [vmem:[%s168 + $0xc0c] sm:$0xf]
        %v992 = vld [vmem:[%s168 + $0xc10] sm:$0xf]
        %v993 = vld [vmem:[%s168 + $0xc14] sm:$0xf]
        %v994 = vld [vmem:[%s168 + $0xc18] sm:$0xf]
        %v995 = vld [vmem:[%s168 + $0xc1c] sm:$0xf]
        %v996 = vld [vmem:[%s168 + $0xc20] sm:$0xf]
        %v997 = vld [vmem:[%s168 + $0xc24] sm:$0xf]
        %v998 = vld [vmem:[%s168 + $0xc28] sm:$0xf]
        %v999 = vld [vmem:[%s168 + $0xc2c] sm:$0xf]
        %v1000 = vld [vmem:[%s168 + $0xc30] sm:$0xf]
        %v1001 = vld [vmem:[%s168 + $0xc34] sm:$0xf]
        %v1002 = vld [vmem:[%s168 + $0xc38] sm:$0xf]
        %v1003 = vld [vmem:[%s168 + $0xc3c] sm:$0xf]
        %v1004 = vld [vmem:[%s168 + $0xc40] sm:$0xf]
        %v1005 = vld [vmem:[%s168 + $0xc44] sm:$0xf]
        %v1006 = vld [vmem:[%s168 + $0xc48] sm:$0xf]
        %v1007 = vld [vmem:[%s168 + $0xc4c] sm:$0xf]
        %v1008 = vld [vmem:[%s168 + $0xc50] sm:$0xf]
        %v1009 = vld [vmem:[%s168 + $0xc54] sm:$0xf]
        %v1010 = vld [vmem:[%s168 + $0xc58] sm:$0xf]
        %v1011 = vld [vmem:[%s168 + $0xc5c] sm:$0xf]
        %v1012 = vld [vmem:[%s168 + $0xc60] sm:$0xf]
        %v1013 = vld [vmem:[%s168 + $0xc64] sm:$0xf]
        %v1014 = vld [vmem:[%s168 + $0xc68] sm:$0xf]
        %v1015 = vld [vmem:[%s168 + $0xc6c] sm:$0xf]
        %v1016 = vld [vmem:[%s168 + $0xc70] sm:$0xf]
        %v1017 = vld [vmem:[%s168 + $0xc74] sm:$0xf]
        %v1018 = vld [vmem:[%s168 + $0xc78] sm:$0xf]
        %v1019 = vld [vmem:[%s168 + $0xc7c] sm:$0xf]
        %v1020 = vld [vmem:[%s168 + $0xc80] sm:$0xf]
        %v1021 = vld [vmem:[%s168 + $0xc84] sm:$0xf]
        %v1022 = vld [vmem:[%s168 + $0xc88] sm:$0xf]
        %v1023 = vld [vmem:[%s168 + $0xc8c] sm:$0xf]
        %v1024 = vld [vmem:[%s168 + $0xc90] sm:$0xf]
        %v1025 = vld [vmem:[%s168 + $0xc94] sm:$0xf]
        %v1026 = vld [vmem:[%s168 + $0xc98] sm:$0xf]
        %v1027 = vld [vmem:[%s168 + $0xc9c] sm:$0xf]
        %v1028 = vld [vmem:[%s168 + $0xca0] sm:$0xf]
        %v1029 = vld [vmem:[%s168 + $0xca4] sm:$0xf]
        %v1030 = vld [vmem:[%s168 + $0xca8] sm:$0xf]
        %v1031 = vld [vmem:[%s168 + $0xcac] sm:$0xf]
        %v1032 = vld [vmem:[%s168 + $0xcb0] sm:$0xf]
        %v1033 = vld [vmem:[%s168 + $0xcb4] sm:$0xf]
        %v1034 = vld [vmem:[%s168 + $0xcb8] sm:$0xf]
        %v1035 = vld [vmem:[%s168 + $0xcbc] sm:$0xf]
        %v1036 = vld [vmem:[%s168 + $0xcc0] sm:$0xf]
        %v1037 = vld [vmem:[%s168 + $0xcc4] sm:$0xf]
        %v1038 = vld [vmem:[%s168 + $0xcc8] sm:$0xf]
        %v1039 = vld [vmem:[%s168 + $0xccc] sm:$0xf]
        %v1040 = vld [vmem:[%s168 + $0xcd0] sm:$0xf]
        %v1041 = vld [vmem:[%s168 + $0xcd4] sm:$0xf]
        %v1042 = vld [vmem:[%s168 + $0xcd8] sm:$0xf]
        %v1043 = vld [vmem:[%s168 + $0xcdc] sm:$0xf]
        %v1044 = vld [vmem:[%s168 + $0xce0] sm:$0xf]
        %v1045 = vld [vmem:[%s168 + $0xce4] sm:$0xf]
        %v1046 = vld [vmem:[%s168 + $0xce8] sm:$0xf]
        %v1047 = vld [vmem:[%s168 + $0xcec] sm:$0xf]
        %v1048 = vld [vmem:[%s168 + $0xcf0] sm:$0xf]
        %v1049 = vld [vmem:[%s168 + $0xcf4] sm:$0xf]
        %v1050 = vld [vmem:[%s168 + $0xcf8] sm:$0xf]
        %v1051 = vld [vmem:[%s168 + $0xcfc] sm:$0xf]
        %v1052 = vld [vmem:[%s168 + $0xd00] sm:$0xf]
        %v1053 = vld [vmem:[%s168 + $0xd04] sm:$0xf]
        %v1054 = vld [vmem:[%s168 + $0xd08] sm:$0xf]
        %v1055 = vld [vmem:[%s168 + $0xd0c] sm:$0xf]
        %v1056 = vld [vmem:[%s168 + $0xd10] sm:$0xf]
        %v1057 = vld [vmem:[%s168 + $0xd14] sm:$0xf]
        %v1058 = vld [vmem:[%s168 + $0xd18] sm:$0xf]
        %v1059 = vld [vmem:[%s168 + $0xd1c] sm:$0xf]
        %v1060 = vld [vmem:[%s168 + $0xd20] sm:$0xf]
        %v1061 = vld [vmem:[%s168 + $0xd24] sm:$0xf]
        %v1062 = vld [vmem:[%s168 + $0xd28] sm:$0xf]
        %v1063 = vld [vmem:[%s168 + $0xd2c] sm:$0xf]
        %v1064 = vld [vmem:[%s168 + $0xd30] sm:$0xf]
        %v1065 = vld [vmem:[%s168 + $0xd34] sm:$0xf]
        %v1066 = vld [vmem:[%s168 + $0xd38] sm:$0xf]
        %v1067 = vld [vmem:[%s168 + $0xd3c] sm:$0xf]
        %v1068 = vld [vmem:[%s168 + $0xd40] sm:$0xf]
        %v1069 = vld [vmem:[%s168 + $0xd44] sm:$0xf]
        %v1070 = vld [vmem:[%s168 + $0xd48] sm:$0xf]
        %v1071 = vld [vmem:[%s168 + $0xd4c] sm:$0xf]
        %v1072 = vld [vmem:[%s168 + $0xd50] sm:$0xf]
        %v1073 = vld [vmem:[%s168 + $0xd54] sm:$0xf]
        %v1074 = vld [vmem:[%s168 + $0xd58] sm:$0xf]
        %v1075 = vld [vmem:[%s168 + $0xd5c] sm:$0xf]
        %v1076 = vld [vmem:[%s168 + $0xd60] sm:$0xf]
        %v1077 = vld [vmem:[%s168 + $0xd64] sm:$0xf]
        %v1078 = vld [vmem:[%s168 + $0xd68] sm:$0xf]
        %v1079 = vld [vmem:[%s168 + $0xd6c] sm:$0xf]
        %v1080 = vld [vmem:[%s168 + $0xd70] sm:$0xf]
        %v1081 = vld [vmem:[%s168 + $0xd74] sm:$0xf]
        %v1082 = vld [vmem:[%s168 + $0xd78] sm:$0xf]
        %v1083 = vld [vmem:[%s168 + $0xd7c] sm:$0xf]
        %v1084 = vld [vmem:[%s168 + $0xd80] sm:$0xf]
        %v1085 = vld [vmem:[%s168 + $0xd84] sm:$0xf]
        %v1086 = vld [vmem:[%s168 + $0xd88] sm:$0xf]
        %v1087 = vld [vmem:[%s168 + $0xd8c] sm:$0xf]
        %v1088 = vld [vmem:[%s168 + $0xd90] sm:$0xf]
        %v1089 = vld [vmem:[%s168 + $0xd94] sm:$0xf]
        %v1090 = vld [vmem:[%s168 + $0xd98] sm:$0xf]
        %v1091 = vld [vmem:[%s168 + $0xd9c] sm:$0xf]
        %v1092 = vld [vmem:[%s168 + $0xda0] sm:$0xf]
        %v1093 = vld [vmem:[%s168 + $0xda4] sm:$0xf]
        %v1094 = vld [vmem:[%s168 + $0xda8] sm:$0xf]
        %v1095 = vld [vmem:[%s168 + $0xdac] sm:$0xf]
        %v1096 = vld [vmem:[%s168 + $0xdb0] sm:$0xf]
        %v1097 = vld [vmem:[%s168 + $0xdb4] sm:$0xf]
        %v1098 = vld [vmem:[%s168 + $0xdb8] sm:$0xf]
        %v1099 = vld [vmem:[%s168 + $0xdbc] sm:$0xf]
        %v1100 = vld [vmem:[%s168 + $0xdc0] sm:$0xf]
        %v1101 = vld [vmem:[%s168 + $0xdc4] sm:$0xf]
        %v1102 = vld [vmem:[%s168 + $0xdc8] sm:$0xf]
        %v1103 = vld [vmem:[%s168 + $0xdcc] sm:$0xf]
        %v1104 = vld [vmem:[%s168 + $0xdd0] sm:$0xf]
        %v1105 = vld [vmem:[%s168 + $0xdd4] sm:$0xf]
        %v1106 = vld [vmem:[%s168 + $0xdd8] sm:$0xf]
        %v1107 = vld [vmem:[%s168 + $0xddc] sm:$0xf]
        %v1108 = vld [vmem:[%s168 + $0xde0] sm:$0xf]
        %v1109 = vld [vmem:[%s168 + $0xde4] sm:$0xf]
        %v1110 = vld [vmem:[%s168 + $0xde8] sm:$0xf]
        %v1111 = vld [vmem:[%s168 + $0xdec] sm:$0xf]
        %v1112 = vld [vmem:[%s168 + $0xdf0] sm:$0xf]
        %v1113 = vld [vmem:[%s168 + $0xdf4] sm:$0xf]
        %v1114 = vld [vmem:[%s168 + $0xdf8] sm:$0xf]
        %v1115 = vld [vmem:[%s168 + $0xdfc] sm:$0xf]
        %v1116 = vld [vmem:[%s168 + $0xe00] sm:$0xf]
        %v1117 = vld [vmem:[%s168 + $0xe04] sm:$0xf]
        %v1118 = vld [vmem:[%s168 + $0xe08] sm:$0xf]
        %v1119 = vld [vmem:[%s168 + $0xe0c] sm:$0xf]
        %v1120 = vld [vmem:[%s168 + $0xe10] sm:$0xf]
        %v1121 = vld [vmem:[%s168 + $0xe14] sm:$0xf]
        %v1122 = vld [vmem:[%s168 + $0xe18] sm:$0xf]
        %v1123 = vld [vmem:[%s168 + $0xe1c] sm:$0xf]
        %v1124 = vld [vmem:[%s168 + $0xe20] sm:$0xf]
        %v1125 = vld [vmem:[%s168 + $0xe24] sm:$0xf]
        %v1126 = vld [vmem:[%s168 + $0xe28] sm:$0xf]
        %v1127 = vld [vmem:[%s168 + $0xe2c] sm:$0xf]
        %v1128 = vld [vmem:[%s168 + $0xe30] sm:$0xf]
        %v1129 = vld [vmem:[%s168 + $0xe34] sm:$0xf]
        %v1130 = vld [vmem:[%s168 + $0xe38] sm:$0xf]
        %v1131 = vld [vmem:[%s168 + $0xe3c] sm:$0xf]
        %v1132 = vld [vmem:[%s168 + $0xe40] sm:$0xf]
        %v1133 = vld [vmem:[%s168 + $0xe44] sm:$0xf]
        %v1134 = vld [vmem:[%s168 + $0xe48] sm:$0xf]
        %v1135 = vld [vmem:[%s168 + $0xe4c] sm:$0xf]
        %v1136 = vld [vmem:[%s168 + $0xe50] sm:$0xf]
        %v1137 = vld [vmem:[%s168 + $0xe54] sm:$0xf]
        %v1138 = vld [vmem:[%s168 + $0xe58] sm:$0xf]
        %v1139 = vld [vmem:[%s168 + $0xe5c] sm:$0xf]
        %v1140 = vld [vmem:[%s168 + $0xe60] sm:$0xf]
        %v1141 = vld [vmem:[%s168 + $0xe64] sm:$0xf]
        %v1142 = vld [vmem:[%s168 + $0xe68] sm:$0xf]
        %v1143 = vld [vmem:[%s168 + $0xe6c] sm:$0xf]
        %v1144 = vld [vmem:[%s168 + $0xe70] sm:$0xf]
        %v1145 = vld [vmem:[%s168 + $0xe74] sm:$0xf]
        %v1146 = vld [vmem:[%s168 + $0xe78] sm:$0xf]
        %v1147 = vld [vmem:[%s168 + $0xe7c] sm:$0xf]
        %v1148 = vld [vmem:[%s168 + $0xe80] sm:$0xf]
        %v1149 = vld [vmem:[%s168 + $0xe84] sm:$0xf]
        %v1150 = vld [vmem:[%s168 + $0xe88] sm:$0xf]
        %v1151 = vld [vmem:[%s168 + $0xe8c] sm:$0xf]
        %v1152 = vld [vmem:[%s168 + $0xe90] sm:$0xf]
        %v1153 = vld [vmem:[%s168 + $0xe94] sm:$0xf]
        %v1154 = vld [vmem:[%s168 + $0xe98] sm:$0xf]
        %v1155 = vld [vmem:[%s168 + $0xe9c] sm:$0xf]
        %v1156 = vld [vmem:[%s168 + $0xea0] sm:$0xf]
        %v1157 = vld [vmem:[%s168 + $0xea4] sm:$0xf]
        %v1158 = vld [vmem:[%s168 + $0xea8] sm:$0xf]
        %v1159 = vld [vmem:[%s168 + $0xeac] sm:$0xf]
        %v1160 = vld [vmem:[%s168 + $0xeb0] sm:$0xf]
        %v1161 = vld [vmem:[%s168 + $0xeb4] sm:$0xf]
        %v1162 = vld [vmem:[%s168 + $0xeb8] sm:$0xf]
        %v1163 = vld [vmem:[%s168 + $0xebc] sm:$0xf]
        %v1164 = vld [vmem:[%s168 + $0xec0] sm:$0xf]
        %v1165 = vld [vmem:[%s168 + $0xec4] sm:$0xf]
        %v1166 = vld [vmem:[%s168 + $0xec8] sm:$0xf]
        %v1167 = vld [vmem:[%s168 + $0xecc] sm:$0xf]
        %v1168 = vld [vmem:[%s168 + $0xed0] sm:$0xf]
        %v1169 = vld [vmem:[%s168 + $0xed4] sm:$0xf]
        %v1170 = vld [vmem:[%s168 + $0xed8] sm:$0xf]
        %v1171 = vld [vmem:[%s168 + $0xedc] sm:$0xf]
        %v1172 = vld [vmem:[%s168 + $0xee0] sm:$0xf]
        %v1173 = vld [vmem:[%s168 + $0xee4] sm:$0xf]
        %v1174 = vld [vmem:[%s168 + $0xee8] sm:$0xf]
        %v1175 = vld [vmem:[%s168 + $0xeec] sm:$0xf]
        %v1176 = vld [vmem:[%s168 + $0xef0] sm:$0xf]
        %v1177 = vld [vmem:[%s168 + $0xef4] sm:$0xf]
        %v1178 = vld [vmem:[%s168 + $0xef8] sm:$0xf]
        %v1179 = vld [vmem:[%s168 + $0xefc] sm:$0xf]
        %v1180 = vld [vmem:[%s168 + $0xf00] sm:$0xf]
        %v1181 = vld [vmem:[%s168 + $0xf04] sm:$0xf]
        %v1182 = vld [vmem:[%s168 + $0xf08] sm:$0xf]
        %v1183 = vld [vmem:[%s168 + $0xf0c] sm:$0xf]
        %v1184 = vld [vmem:[%s168 + $0xf10] sm:$0xf]
        %v1185 = vld [vmem:[%s168 + $0xf14] sm:$0xf]
        %v1186 = vld [vmem:[%s168 + $0xf18] sm:$0xf]
        %v1187 = vld [vmem:[%s168 + $0xf1c] sm:$0xf]
        %v1188 = vld [vmem:[%s168 + $0xf20] sm:$0xf]
        %v1189 = vld [vmem:[%s168 + $0xf24] sm:$0xf]
        %v1190 = vld [vmem:[%s168 + $0xf28] sm:$0xf]
        %v1191 = vld [vmem:[%s168 + $0xf2c] sm:$0xf]
        %v1192 = vld [vmem:[%s168 + $0xf30] sm:$0xf]
        %v1193 = vld [vmem:[%s168 + $0xf34] sm:$0xf]
        %v1194 = vld [vmem:[%s168 + $0xf38] sm:$0xf]
        %v1195 = vld [vmem:[%s168 + $0xf3c] sm:$0xf]
        %v1196 = vld [vmem:[%s168 + $0xf40] sm:$0xf]
        %v1197 = vld [vmem:[%s168 + $0xf44] sm:$0xf]
        %v1198 = vld [vmem:[%s168 + $0xf48] sm:$0xf]
        %v1199 = vld [vmem:[%s168 + $0xf4c] sm:$0xf]
        %v1200 = vld [vmem:[%s168 + $0xf50] sm:$0xf]
        %v1201 = vld [vmem:[%s168 + $0xf54] sm:$0xf]
        %v1202 = vld [vmem:[%s168 + $0xf58] sm:$0xf]
        %v1203 = vld [vmem:[%s168 + $0xf5c] sm:$0xf]
        %v1204 = vld [vmem:[%s168 + $0xf60] sm:$0xf]
        %v1205 = vld [vmem:[%s168 + $0xf64] sm:$0xf]
        %v1206 = vld [vmem:[%s168 + $0xf68] sm:$0xf]
        %v1207 = vld [vmem:[%s168 + $0xf6c] sm:$0xf]
        %v1208 = vld [vmem:[%s168 + $0xf70] sm:$0xf]
        %v1209 = vld [vmem:[%s168 + $0xf74] sm:$0xf]
        %v1210 = vld [vmem:[%s168 + $0xf78] sm:$0xf]
        %v1211 = vld [vmem:[%s168 + $0xf7c] sm:$0xf]
        %v1212 = vld [vmem:[%s168 + $0xf80] sm:$0xf]
        %v1213 = vld [vmem:[%s168 + $0xf84] sm:$0xf]
        %v1214 = vld [vmem:[%s168 + $0xf88] sm:$0xf]
        %v1215 = vld [vmem:[%s168 + $0xf8c] sm:$0xf]
        %v1216 = vld [vmem:[%s168 + $0xf90] sm:$0xf]
        %v1217 = vld [vmem:[%s168 + $0xf94] sm:$0xf]
        %v1218 = vld [vmem:[%s168 + $0xf98] sm:$0xf]
        %v1219 = vld [vmem:[%s168 + $0xf9c] sm:$0xf]
        %v1220 = vld [vmem:[%s168 + $0xfa0] sm:$0xf]
        %v1221 = vld [vmem:[%s168 + $0xfa4] sm:$0xf]
        %v1222 = vld [vmem:[%s168 + $0xfa8] sm:$0xf]
        %v1223 = vld [vmem:[%s168 + $0xfac] sm:$0xf]
        %v1224 = vld [vmem:[%s168 + $0xfb0] sm:$0xf]
        %v1225 = vld [vmem:[%s168 + $0xfb4] sm:$0xf]
        %v1226 = vld [vmem:[%s168 + $0xfb8] sm:$0xf]
        %v1227 = vld [vmem:[%s168 + $0xfbc] sm:$0xf]
        %v1228 = vld [vmem:[%s168 + $0xfc0] sm:$0xf]
        %v1229 = vld [vmem:[%s168 + $0xfc4] sm:$0xf]
        %v1230 = vld [vmem:[%s168 + $0xfc8] sm:$0xf]
        %v1231 = vld [vmem:[%s168 + $0xfcc] sm:$0xf]
        %v1232 = vld [vmem:[%s168 + $0xfd0] sm:$0xf]
        %v1233 = vld [vmem:[%s168 + $0xfd4] sm:$0xf]
        %v1234 = vld [vmem:[%s168 + $0xfd8] sm:$0xf]
        %v1235 = vld [vmem:[%s168 + $0xfdc] sm:$0xf]
        %v1236 = vld [vmem:[%s168 + $0xfe0] sm:$0xf]
        %v1237 = vld [vmem:[%s168 + $0xfe4] sm:$0xf]
        %v1238 = vld [vmem:[%s168 + $0xfe8] sm:$0xf]
        %v1239 = vld [vmem:[%s168 + $0xfec] sm:$0xf]
        %v1240 = vld [vmem:[%s168 + $0xff0] sm:$0xf]
        %v1241 = vld [vmem:[%s168 + $0xff4] sm:$0xf]
        %v1242 = vld [vmem:[%s168 + $0xff8] sm:$0xf]
        %v1243 = vld [vmem:[%s168 + $0xffc] sm:$0xf]
        %v1244 = vld [vmem:[%s168 + $0x1000] sm:$0xf]
        %v1245 = vld [vmem:[%s168 + $0x1004] sm:$0xf]
        %v1246 = vld [vmem:[%s168 + $0x1008] sm:$0xf]
        %v1247 = vld [vmem:[%s168 + $0x100c] sm:$0xf]
        %v1248 = vld [vmem:[%s168 + $0x1010] sm:$0xf]
        %v1249 = vld [vmem:[%s168 + $0x1014] sm:$0xf]
        %v1250 = vld [vmem:[%s168 + $0x1018] sm:$0xf]
        %v1251 = vld [vmem:[%s168 + $0x101c] sm:$0xf]
        %v1252 = vld [vmem:[%s168 + $0x1020] sm:$0xf]
        %v1253 = vld [vmem:[%s168 + $0x1024] sm:$0xf]
        %v1254 = vld [vmem:[%s168 + $0x1028] sm:$0xf]
        %v1255 = vld [vmem:[%s168 + $0x102c] sm:$0xf]
        %v1256 = vld [vmem:[%s168 + $0x1030] sm:$0xf]
        %v1257 = vld [vmem:[%s168 + $0x1034] sm:$0xf]
        %v1258 = vld [vmem:[%s168 + $0x1038] sm:$0xf]
        %v1259 = vld [vmem:[%s168 + $0x103c] sm:$0xf]
        %v1260 = vld [vmem:[%s168 + $0x1040] sm:$0xf]
        %v1261 = vld [vmem:[%s168 + $0x1044] sm:$0xf]
        %v1262 = vld [vmem:[%s168 + $0x1048] sm:$0xf]
        %v1263 = vld [vmem:[%s168 + $0x104c] sm:$0xf]
        %v1264 = vld [vmem:[%s168 + $0x1050] sm:$0xf]
        %v1265 = vld [vmem:[%s168 + $0x1054] sm:$0xf]
        %v1266 = vld [vmem:[%s168 + $0x1058] sm:$0xf]
        %v1267 = vld [vmem:[%s168 + $0x105c] sm:$0xf]
        %v1268 = vld [vmem:[%s168 + $0x1060] sm:$0xf]
        %v1269 = vld [vmem:[%s168 + $0x1064] sm:$0xf]
        %v1270 = vld [vmem:[%s168 + $0x1068] sm:$0xf]
        %v1271 = vld [vmem:[%s168 + $0x106c] sm:$0xf]
        %v1272 = vld [vmem:[%s168 + $0x1070] sm:$0xf]
        %v1273 = vld [vmem:[%s168 + $0x1074] sm:$0xf]
        %v1274 = vld [vmem:[%s168 + $0x1078] sm:$0xf]
        %v1275 = vld [vmem:[%s168 + $0x107c] sm:$0xf]
        %v1276 = vld [vmem:[%s168 + $0x1080] sm:$0xf]
        %v1277 = vld [vmem:[%s168 + $0x1084] sm:$0xf]
        %v1278 = vld [vmem:[%s168 + $0x1088] sm:$0xf]
        %v1279 = vld [vmem:[%s168 + $0x108c] sm:$0xf]
        %v1280 = vld [vmem:[%s168 + $0x1090] sm:$0xf]
        %v1281 = vld [vmem:[%s168 + $0x1094] sm:$0xf]
        %v1282 = vld [vmem:[%s168 + $0x1098] sm:$0xf]
        %v1283 = vld [vmem:[%s168 + $0x109c] sm:$0xf]
        %v1284 = vld [vmem:[%s168 + $0x10a0] sm:$0xf]
        %v1285 = vld [vmem:[%s168 + $0x10a4] sm:$0xf]
        %v1286 = vld [vmem:[%s168 + $0x10a8] sm:$0xf]
        %v1287 = vld [vmem:[%s168 + $0x10ac] sm:$0xf]
        %v1288 = vld [vmem:[%s168 + $0x10b0] sm:$0xf]
        %v1289 = vld [vmem:[%s168 + $0x10b4] sm:$0xf]
        %v1290 = vld [vmem:[%s168 + $0x10b8] sm:$0xf]
        %v1291 = vld [vmem:[%s168 + $0x10bc] sm:$0xf]
        %v1292 = vld [vmem:[%s168 + $0x10c0] sm:$0xf]
        %v1293 = vld [vmem:[%s168 + $0x10c4] sm:$0xf]
        %v1294 = vld [vmem:[%s168 + $0x10c8] sm:$0xf]
        %v1295 = vld [vmem:[%s168 + $0x10cc] sm:$0xf]
        %v1296 = vld [vmem:[%s168 + $0x10d0] sm:$0xf]
        %v1297 = vld [vmem:[%s168 + $0x10d4] sm:$0xf]
        %v1298 = vld [vmem:[%s168 + $0x10d8] sm:$0xf]
        %v1299 = vld [vmem:[%s168 + $0x10dc] sm:$0xf]
        %v1300 = vld [vmem:[%s168 + $0x10e0] sm:$0xf]
        %v1301 = vld [vmem:[%s168 + $0x10e4] sm:$0xf]
        %v1302 = vld [vmem:[%s168 + $0x10e8] sm:$0xf]
        %v1303 = vld [vmem:[%s168 + $0x10ec] sm:$0xf]
        %v1304 = vld [vmem:[%s168 + $0x10f0] sm:$0xf]
        %v1305 = vld [vmem:[%s168 + $0x10f4] sm:$0xf]
        %v1306 = vld [vmem:[%s168 + $0x10f8] sm:$0xf]
        %v1307 = vld [vmem:[%s168 + $0x10fc] sm:$0xf]
        %v1308 = vld [vmem:[%s168 + $0x1100] sm:$0xf]
        %v1309 = vld [vmem:[%s168 + $0x1104] sm:$0xf]
        %v1310 = vld [vmem:[%s168 + $0x1108] sm:$0xf]
        %v1311 = vld [vmem:[%s168 + $0x110c] sm:$0xf]
        %v1312 = vld [vmem:[%s168 + $0x1110] sm:$0xf]
        %v1313 = vld [vmem:[%s168 + $0x1114] sm:$0xf]
        %v1314 = vld [vmem:[%s168 + $0x1118] sm:$0xf]
        %v1315 = vld [vmem:[%s168 + $0x111c] sm:$0xf]
        %v1316 = vld [vmem:[%s168 + $0x1120] sm:$0xf]
        %v1317 = vld [vmem:[%s168 + $0x1124] sm:$0xf]
        %v1318 = vld [vmem:[%s168 + $0x1128] sm:$0xf]
        %v1319 = vld [vmem:[%s168 + $0x112c] sm:$0xf]
        %v1320 = vld [vmem:[%s168 + $0x1130] sm:$0xf]
        %v1321 = vld [vmem:[%s168 + $0x1134] sm:$0xf]
        %v1322 = vld [vmem:[%s168 + $0x1138] sm:$0xf]
        %v1323 = vld [vmem:[%s168 + $0x113c] sm:$0xf]
        %v1324 = vld [vmem:[%s168 + $0x1140] sm:$0xf]
        %v1325 = vld [vmem:[%s168 + $0x1144] sm:$0xf]
        %v1326 = vld [vmem:[%s168 + $0x1148] sm:$0xf]
        %v1327 = vld [vmem:[%s168 + $0x114c] sm:$0xf]
        %v1328 = vld [vmem:[%s168 + $0x1150] sm:$0xf]
        %v1329 = vld [vmem:[%s168 + $0x1154] sm:$0xf]
        %v1330 = vld [vmem:[%s168 + $0x1158] sm:$0xf]
        %v1331 = vld [vmem:[%s168 + $0x115c] sm:$0xf]
        %v1332 = vld [vmem:[%s168 + $0x1160] sm:$0xf]
        %v1333 = vld [vmem:[%s168 + $0x1164] sm:$0xf]
        %v1334 = vld [vmem:[%s168 + $0x1168] sm:$0xf]
        %v1335 = vld [vmem:[%s168 + $0x116c] sm:$0xf]
        %v1336 = vld [vmem:[%s168 + $0x1170] sm:$0xf]
        %v1337 = vld [vmem:[%s168 + $0x1174] sm:$0xf]
        %v1338 = vld [vmem:[%s168 + $0x1178] sm:$0xf]
        %v1339 = vld [vmem:[%s168 + $0x117c] sm:$0xf]
        %v1340 = vld [vmem:[%s168 + $0x1180] sm:$0xf]
        %v1341 = vld [vmem:[%s168 + $0x1184] sm:$0xf]
        %v1342 = vld [vmem:[%s168 + $0x1188] sm:$0xf]
        %v1343 = vld [vmem:[%s168 + $0x118c] sm:$0xf]
        %v1344 = vld [vmem:[%s168 + $0x1190] sm:$0xf]
        %v1345 = vld [vmem:[%s168 + $0x1194] sm:$0xf]
        %v1346 = vld [vmem:[%s168 + $0x1198] sm:$0xf]
        %v1347 = vld [vmem:[%s168 + $0x119c] sm:$0xf]
        %v1348 = vld [vmem:[%s168 + $0x11a0] sm:$0xf]
        %v1349 = vld [vmem:[%s168 + $0x11a4] sm:$0xf]
        %v1350 = vld [vmem:[%s168 + $0x11a8] sm:$0xf]
        %v1351 = vld [vmem:[%s168 + $0x11ac] sm:$0xf]
        %v1352 = vld [vmem:[%s168 + $0x11b0] sm:$0xf]
        %v1353 = vld [vmem:[%s168 + $0x11b4] sm:$0xf]
        %v1354 = vld [vmem:[%s168 + $0x11b8] sm:$0xf]
        %v1355 = vld [vmem:[%s168 + $0x11bc] sm:$0xf]
        %v1356 = vld [vmem:[%s168 + $0x11c0] sm:$0xf]
        %v1357 = vld [vmem:[%s168 + $0x11c4] sm:$0xf]
        %v1358 = vld [vmem:[%s168 + $0x11c8] sm:$0xf]
        %v1359 = vld [vmem:[%s168 + $0x11cc] sm:$0xf]
        %v1360 = vld [vmem:[%s168 + $0x11d0] sm:$0xf]
        %v1361 = vld [vmem:[%s168 + $0x11d4] sm:$0xf]
        %v1362 = vld [vmem:[%s168 + $0x11d8] sm:$0xf]
        %v1363 = vld [vmem:[%s168 + $0x11dc] sm:$0xf]
        %v1364 = vld [vmem:[%s168 + $0x11e0] sm:$0xf]
        %v1365 = vld [vmem:[%s168 + $0x11e4] sm:$0xf]
        %v1366 = vld [vmem:[%s168 + $0x11e8] sm:$0xf]
        %v1367 = vld [vmem:[%s168 + $0x11ec] sm:$0xf]
        %v1368 = vld [vmem:[%s168 + $0x11f0] sm:$0xf]
        %v1369 = vld [vmem:[%s168 + $0x11f4] sm:$0xf]
        %v1370 = vld [vmem:[%s168 + $0x11f8] sm:$0xf]
        %v1371 = vld [vmem:[%s168 + $0x11fc] sm:$0xf]
        %v1372 = vld [vmem:[%s168 + $0x1200] sm:$0xf]
        %v1373 = vld [vmem:[%s168 + $0x1204] sm:$0xf]
        %v1374 = vld [vmem:[%s168 + $0x1208] sm:$0xf]
        %v1375 = vld [vmem:[%s168 + $0x120c] sm:$0xf]
        %v1376 = vld [vmem:[%s168 + $0x1210] sm:$0xf]
        %v1377 = vld [vmem:[%s168 + $0x1214] sm:$0xf]
        %v1378 = vld [vmem:[%s168 + $0x1218] sm:$0xf]
        %v1379 = vld [vmem:[%s168 + $0x121c] sm:$0xf]
        %v1380 = vld [vmem:[%s168 + $0x1220] sm:$0xf]
        %v1381 = vld [vmem:[%s168 + $0x1224] sm:$0xf]
        %v1382 = vld [vmem:[%s168 + $0x1228] sm:$0xf]
        %v1383 = vld [vmem:[%s168 + $0x122c] sm:$0xf]
        %v1384 = vld [vmem:[%s168 + $0x1230] sm:$0xf]
        %v1385 = vld [vmem:[%s168 + $0x1234] sm:$0xf]
        %v1386 = vld [vmem:[%s168 + $0x1238] sm:$0xf]
        %v1387 = vld [vmem:[%s168 + $0x123c] sm:$0xf]
        %v1388 = vld [vmem:[%s168 + $0x1240] sm:$0xf]
        %v1389 = vld [vmem:[%s168 + $0x1244] sm:$0xf]
        %v1390 = vld [vmem:[%s168 + $0x1248] sm:$0xf]
        %v1391 = vld [vmem:[%s168 + $0x124c] sm:$0xf]
        %v1392 = vld [vmem:[%s168 + $0x1250] sm:$0xf]
        %v1393 = vld [vmem:[%s168 + $0x1254] sm:$0xf]
        %v1394 = vld [vmem:[%s168 + $0x1258] sm:$0xf]
        %v1395 = vld [vmem:[%s168 + $0x125c] sm:$0xf]
        %v1396 = vld [vmem:[%s168 + $0x1260] sm:$0xf]
        %v1397 = vld [vmem:[%s168 + $0x1264] sm:$0xf]
        %v1398 = vld [vmem:[%s168 + $0x1268] sm:$0xf]
        %v1399 = vld [vmem:[%s168 + $0x126c] sm:$0xf]
        %v1400 = vld [vmem:[%s168 + $0x1270] sm:$0xf]
        %v1401 = vld [vmem:[%s168 + $0x1274] sm:$0xf]
        %v1402 = vld [vmem:[%s168 + $0x1278] sm:$0xf]
        %v1403 = vld [vmem:[%s168 + $0x127c] sm:$0xf]
        %v1404 = vld [vmem:[%s168 + $0x1280] sm:$0xf]
        %v1405 = vld [vmem:[%s168 + $0x1284] sm:$0xf]
        %v1406 = vld [vmem:[%s168 + $0x1288] sm:$0xf]
        %v1407 = vld [vmem:[%s168 + $0x128c] sm:$0xf]
        %v1408 = vld [vmem:[%s168 + $0x1290] sm:$0xf]
        %v1409 = vld [vmem:[%s168 + $0x1294] sm:$0xf]
        %v1410 = vld [vmem:[%s168 + $0x1298] sm:$0xf]
        %v1411 = vld [vmem:[%s168 + $0x129c] sm:$0xf]
        %v1412 = vld [vmem:[%s168 + $0x12a0] sm:$0xf]
        %v1413 = vld [vmem:[%s168 + $0x12a4] sm:$0xf]
        %v1414 = vld [vmem:[%s168 + $0x12a8] sm:$0xf]
        %v1415 = vld [vmem:[%s168 + $0x12ac] sm:$0xf]
        %v1416 = vld [vmem:[%s168 + $0x12b0] sm:$0xf]
        %v1417 = vld [vmem:[%s168 + $0x12b4] sm:$0xf]
        %v1418 = vld [vmem:[%s168 + $0x12b8] sm:$0xf]
        %v1419 = vld [vmem:[%s168 + $0x12bc] sm:$0xf]
        %v1420 = vld [vmem:[%s168 + $0x12c0] sm:$0xf]
        %v1421 = vld [vmem:[%s168 + $0x12c4] sm:$0xf]
        %v1422 = vld [vmem:[%s168 + $0x12c8] sm:$0xf]
        %v1423 = vld [vmem:[%s168 + $0x12cc] sm:$0xf]
        %v1424 = vld [vmem:[%s168 + $0x12d0] sm:$0xf]
        %v1425 = vld [vmem:[%s168 + $0x12d4] sm:$0xf]
        %v1426 = vld [vmem:[%s168 + $0x12d8] sm:$0xf]
        %v1427 = vld [vmem:[%s168 + $0x12dc] sm:$0xf]
        %v1428 = vld [vmem:[%s168 + $0x12e0] sm:$0xf]
        %v1429 = vld [vmem:[%s168 + $0x12e4] sm:$0xf]
        %v1430 = vld [vmem:[%s168 + $0x12e8] sm:$0xf]
        %v1431 = vld [vmem:[%s168 + $0x12ec] sm:$0xf]
        %v1432 = vld [vmem:[%s168 + $0x12f0] sm:$0xf]
        %v1433 = vld [vmem:[%s168 + $0x12f4] sm:$0xf]
        %v1434 = vld [vmem:[%s168 + $0x12f8] sm:$0xf]
        %v1435 = vld [vmem:[%s168 + $0x12fc] sm:$0xf]
        %v1436 = vld [vmem:[%s168 + $0x1300] sm:$0xf]
        %v1437 = vld [vmem:[%s168 + $0x1304] sm:$0xf]
        %v1438 = vld [vmem:[%s168 + $0x1308] sm:$0xf]
        %v1439 = vld [vmem:[%s168 + $0x130c] sm:$0xf]
        %v1440 = vld [vmem:[%s168 + $0x1310] sm:$0xf]
        %v1441 = vld [vmem:[%s168 + $0x1314] sm:$0xf]
        %v1442 = vld [vmem:[%s168 + $0x1318] sm:$0xf]
        %v1443 = vld [vmem:[%s168 + $0x131c] sm:$0xf]
        %v1444 = vld [vmem:[%s168 + $0x1320] sm:$0xf]
        %v1445 = vld [vmem:[%s168 + $0x1324] sm:$0xf]
        %v1446 = vld [vmem:[%s168 + $0x1328] sm:$0xf]
        %v1447 = vld [vmem:[%s168 + $0x132c] sm:$0xf]
        %v1448 = vld [vmem:[%s168 + $0x1330] sm:$0xf]
        %v1449 = vld [vmem:[%s168 + $0x1334] sm:$0xf]
        %v1450 = vld [vmem:[%s168 + $0x1338] sm:$0xf]
        %v1451 = vld [vmem:[%s168 + $0x133c] sm:$0xf]
        %v1452 = vld [vmem:[%s168 + $0x1340] sm:$0xf]
        %v1453 = vld [vmem:[%s168 + $0x1344] sm:$0xf]
        %v1454 = vld [vmem:[%s168 + $0x1348] sm:$0xf]
        %v1455 = vld [vmem:[%s168 + $0x134c] sm:$0xf]
        %v1456 = vld [vmem:[%s168 + $0x1350] sm:$0xf]
        %v1457 = vld [vmem:[%s168 + $0x1354] sm:$0xf]
        %v1458 = vld [vmem:[%s168 + $0x1358] sm:$0xf]
        %v1459 = vld [vmem:[%s168 + $0x135c] sm:$0xf]
        %v1460 = vld [vmem:[%s168 + $0x1360] sm:$0xf]
        %v1461 = vld [vmem:[%s168 + $0x1364] sm:$0xf]
        %v1462 = vld [vmem:[%s168 + $0x1368] sm:$0xf]
        %v1463 = vld [vmem:[%s168 + $0x136c] sm:$0xf]
        %v1464 = vld [vmem:[%s168 + $0x1370] sm:$0xf]
        %v1465 = vld [vmem:[%s168 + $0x1374] sm:$0xf]
        %v1466 = vld [vmem:[%s168 + $0x1378] sm:$0xf]
        %v1467 = vld [vmem:[%s168 + $0x137c] sm:$0xf]
        %v1468 = vld [vmem:[%s168 + $0x1380] sm:$0xf]
        %v1469 = vld [vmem:[%s168 + $0x1384] sm:$0xf]
        %v1470 = vld [vmem:[%s168 + $0x1388] sm:$0xf]
        %v1471 = vld [vmem:[%s168 + $0x138c] sm:$0xf]
        %v1472 = vld [vmem:[%s168 + $0x1390] sm:$0xf]
        %v1473 = vld [vmem:[%s168 + $0x1394] sm:$0xf]
        %v1474 = vld [vmem:[%s168 + $0x1398] sm:$0xf]
        %v1475 = vld [vmem:[%s168 + $0x139c] sm:$0xf]
        %v1476 = vld [vmem:[%s168 + $0x13a0] sm:$0xf]
        %v1477 = vld [vmem:[%s168 + $0x13a4] sm:$0xf]
        %v1478 = vld [vmem:[%s168 + $0x13a8] sm:$0xf]
        %v1479 = vld [vmem:[%s168 + $0x13ac] sm:$0xf]
        %v1480 = vld [vmem:[%s168 + $0x13b0] sm:$0xf]
        %v1481 = vld [vmem:[%s168 + $0x13b4] sm:$0xf]
        %v1482 = vld [vmem:[%s168 + $0x13b8] sm:$0xf]
        %v1483 = vld [vmem:[%s168 + $0x13bc] sm:$0xf]
        %v1484 = vld [vmem:[%s168 + $0x13c0] sm:$0xf]
        %v1485 = vld [vmem:[%s168 + $0x13c4] sm:$0xf]
        %v1486 = vld [vmem:[%s168 + $0x13c8] sm:$0xf]
        %v1487 = vld [vmem:[%s168 + $0x13cc] sm:$0xf]
        %v1488 = vld [vmem:[%s168 + $0x13d0] sm:$0xf]
        %v1489 = vld [vmem:[%s168 + $0x13d4] sm:$0xf]
        %v1490 = vld [vmem:[%s168 + $0x13d8] sm:$0xf]
        %v1491 = vld [vmem:[%s168 + $0x13dc] sm:$0xf]
        %v1492 = vld [vmem:[%s168 + $0x13e0] sm:$0xf]
        %v1493 = vld [vmem:[%s168 + $0x13e4] sm:$0xf]
        %v1494 = vld [vmem:[%s168 + $0x13e8] sm:$0xf]
        %v1495 = vld [vmem:[%s168 + $0x13ec] sm:$0xf]
        %v1496 = vld [vmem:[%s168 + $0x13f0] sm:$0xf]
        %v1497 = vld [vmem:[%s168 + $0x13f4] sm:$0xf]
        %v1498 = vld [vmem:[%s168 + $0x13f8] sm:$0xf]
        %v1499 = vld [vmem:[%s168 + $0x13fc] sm:$0xf]
        %v1500 = vld [vmem:[%s168 + $0x1400] sm:$0xf]
        %v1501 = vld [vmem:[%s168 + $0x1404] sm:$0xf]
        %v1502 = vld [vmem:[%s168 + $0x1408] sm:$0xf]
        %v1503 = vld [vmem:[%s168 + $0x140c] sm:$0xf]
        %v1504 = vld [vmem:[%s168 + $0x1410] sm:$0xf]
        %v1505 = vld [vmem:[%s168 + $0x1414] sm:$0xf]
        %v1506 = vld [vmem:[%s168 + $0x1418] sm:$0xf]
        %v1507 = vld [vmem:[%s168 + $0x141c] sm:$0xf]
        %v1508 = vld [vmem:[%s168 + $0x1420] sm:$0xf]
        %v1509 = vld [vmem:[%s168 + $0x1424] sm:$0xf]
        %v1510 = vld [vmem:[%s168 + $0x1428] sm:$0xf]
        %v1511 = vld [vmem:[%s168 + $0x142c] sm:$0xf]
        %v1512 = vld [vmem:[%s168 + $0x1430] sm:$0xf]
        %v1513 = vld [vmem:[%s168 + $0x1434] sm:$0xf]
        %v1514 = vld [vmem:[%s168 + $0x1438] sm:$0xf]
        %v1515 = vld [vmem:[%s168 + $0x143c] sm:$0xf]
        %v1516 = vld [vmem:[%s168 + $0x1440] sm:$0xf]
        %v1517 = vld [vmem:[%s168 + $0x1444] sm:$0xf]
        %v1518 = vld [vmem:[%s168 + $0x1448] sm:$0xf]
        %v1519 = vld [vmem:[%s168 + $0x144c] sm:$0xf]
        %v1520 = vld [vmem:[%s168 + $0x1450] sm:$0xf]
        %v1521 = vld [vmem:[%s168 + $0x1454] sm:$0xf]
        %v1522 = vld [vmem:[%s168 + $0x1458] sm:$0xf]
        %v1523 = vld [vmem:[%s168 + $0x145c] sm:$0xf]
        %v1524 = vld [vmem:[%s168 + $0x1460] sm:$0xf]
        %v1525 = vld [vmem:[%s168 + $0x1464] sm:$0xf]
        %v1526 = vld [vmem:[%s168 + $0x1468] sm:$0xf]
        %v1527 = vld [vmem:[%s168 + $0x146c] sm:$0xf]
        %v1528 = vld [vmem:[%s168 + $0x1470] sm:$0xf]
        %v1529 = vld [vmem:[%s168 + $0x1474] sm:$0xf]
        %v1530 = vld [vmem:[%s168 + $0x1478] sm:$0xf]
        %v1531 = vld [vmem:[%s168 + $0x147c] sm:$0xf]
        %v1532 = vld [vmem:[%s168 + $0x1480] sm:$0xf]
        %v1533 = vld [vmem:[%s168 + $0x1484] sm:$0xf]
        %v1534 = vld [vmem:[%s168 + $0x1488] sm:$0xf]
        %v1535 = vld [vmem:[%s168 + $0x148c] sm:$0xf]
        %v1536 = vld [vmem:[%s168 + $0x1490] sm:$0xf]
        %v1537 = vld [vmem:[%s168 + $0x1494] sm:$0xf]
        %v1538 = vld [vmem:[%s168 + $0x1498] sm:$0xf]
        %v1539 = vld [vmem:[%s168 + $0x149c] sm:$0xf]
        %v1540 = vld [vmem:[%s168 + $0x14a0] sm:$0xf]
        %v1541 = vld [vmem:[%s168 + $0x14a4] sm:$0xf]
        %v1542 = vld [vmem:[%s168 + $0x14a8] sm:$0xf]
        %v1543 = vld [vmem:[%s168 + $0x14ac] sm:$0xf]
        %v1544 = vld [vmem:[%s168 + $0x14b0] sm:$0xf]
        %v1545 = vld [vmem:[%s168 + $0x14b4] sm:$0xf]
        %v1546 = vld [vmem:[%s168 + $0x14b8] sm:$0xf]
        %v1547 = vld [vmem:[%s168 + $0x14bc] sm:$0xf]
        %v1548 = vld [vmem:[%s168 + $0x14c0] sm:$0xf]
        %v1549 = vld [vmem:[%s168 + $0x14c4] sm:$0xf]
        %v1550 = vld [vmem:[%s168 + $0x14c8] sm:$0xf]
        %v1551 = vld [vmem:[%s168 + $0x14cc] sm:$0xf]
        %v1552 = vld [vmem:[%s168 + $0x14d0] sm:$0xf]
        %v1553 = vld [vmem:[%s168 + $0x14d4] sm:$0xf]
        %v1554 = vld [vmem:[%s168 + $0x14d8] sm:$0xf]
        %v1555 = vld [vmem:[%s168 + $0x14dc] sm:$0xf]
        %v1556 = vld [vmem:[%s168 + $0x14e0] sm:$0xf]
        %v1557 = vld [vmem:[%s168 + $0x14e4] sm:$0xf]
        %v1558 = vld [vmem:[%s168 + $0x14e8] sm:$0xf]
        %v1559 = vld [vmem:[%s168 + $0x14ec] sm:$0xf]
        %v1560 = vld [vmem:[%s168 + $0x14f0] sm:$0xf]
        %v1561 = vld [vmem:[%s168 + $0x14f4] sm:$0xf]
        %v1562 = vld [vmem:[%s168 + $0x14f8] sm:$0xf]
        %v1563 = vld [vmem:[%s168 + $0x14fc] sm:$0xf]
        %v1564 = vld [vmem:[%s168 + $0x1500] sm:$0xf]
        %v1565 = vld [vmem:[%s168 + $0x1504] sm:$0xf]
        %v1566 = vld [vmem:[%s168 + $0x1508] sm:$0xf]
        %v1567 = vld [vmem:[%s168 + $0x150c] sm:$0xf]
        %v1568 = vld [vmem:[%s168 + $0x1510] sm:$0xf]
        %v1569 = vld [vmem:[%s168 + $0x1514] sm:$0xf]
        %v1570 = vld [vmem:[%s168 + $0x1518] sm:$0xf]
        %v1571 = vld [vmem:[%s168 + $0x151c] sm:$0xf]
        %v1572 = vld [vmem:[%s168 + $0x1520] sm:$0xf]
        %v1573 = vld [vmem:[%s168 + $0x1524] sm:$0xf]
        %v1574 = vld [vmem:[%s168 + $0x1528] sm:$0xf]
        %v1575 = vld [vmem:[%s168 + $0x152c] sm:$0xf]
        %v1576 = vld [vmem:[%s168 + $0x1530] sm:$0xf]
        %v1577 = vld [vmem:[%s168 + $0x1534] sm:$0xf]
        %v1578 = vld [vmem:[%s168 + $0x1538] sm:$0xf]
        %v1579 = vld [vmem:[%s168 + $0x153c] sm:$0xf]
        %v1580 = vld [vmem:[%s168 + $0x1540] sm:$0xf]
        %v1581 = vld [vmem:[%s168 + $0x1544] sm:$0xf]
        %v1582 = vld [vmem:[%s168 + $0x1548] sm:$0xf]
        %v1583 = vld [vmem:[%s168 + $0x154c] sm:$0xf]
        %v1584 = vld [vmem:[%s168 + $0x1550] sm:$0xf]
        %v1585 = vld [vmem:[%s168 + $0x1554] sm:$0xf]
        %v1586 = vld [vmem:[%s168 + $0x1558] sm:$0xf]
        %v1587 = vld [vmem:[%s168 + $0x155c] sm:$0xf]
        %v1588 = vld [vmem:[%s168 + $0x1560] sm:$0xf]
        %v1589 = vld [vmem:[%s168 + $0x1564] sm:$0xf]
        %v1590 = vld [vmem:[%s168 + $0x1568] sm:$0xf]
        %v1591 = vld [vmem:[%s168 + $0x156c] sm:$0xf]
        %v1592 = vld [vmem:[%s168 + $0x1570] sm:$0xf]
        %v1593 = vld [vmem:[%s168 + $0x1574] sm:$0xf]
        %v1594 = vld [vmem:[%s168 + $0x1578] sm:$0xf]
        %v1595 = vld [vmem:[%s168 + $0x157c] sm:$0xf]
        %v1596 = vld [vmem:[%s168 + $0x1580] sm:$0xf]
        %v1597 = vld [vmem:[%s168 + $0x1584] sm:$0xf]
        %v1598 = vld [vmem:[%s168 + $0x1588] sm:$0xf]
        %v1599 = vld [vmem:[%s168 + $0x158c] sm:$0xf]
        %v1600 = vld [vmem:[%s168 + $0x1590] sm:$0xf]
        %v1601 = vld [vmem:[%s168 + $0x1594] sm:$0xf]
        %v1602 = vld [vmem:[%s168 + $0x1598] sm:$0xf]
        %v1603 = vld [vmem:[%s168 + $0x159c] sm:$0xf]
        %v1604 = vld [vmem:[%s168 + $0x15a0] sm:$0xf]
        %v1605 = vld [vmem:[%s168 + $0x15a4] sm:$0xf]
        %v1606 = vld [vmem:[%s168 + $0x15a8] sm:$0xf]
        %v1607 = vld [vmem:[%s168 + $0x15ac] sm:$0xf]
        %v1608 = vld [vmem:[%s168 + $0x15b0] sm:$0xf]
        %v1609 = vld [vmem:[%s168 + $0x15b4] sm:$0xf]
        %v1610 = vld [vmem:[%s168 + $0x15b8] sm:$0xf]
        %v1611 = vld [vmem:[%s168 + $0x15bc] sm:$0xf]
        %v1612 = vld [vmem:[%s168 + $0x15c0] sm:$0xf]
        %v1613 = vld [vmem:[%s168 + $0x15c4] sm:$0xf]
        %v1614 = vld [vmem:[%s168 + $0x15c8] sm:$0xf]
        %v1615 = vld [vmem:[%s168 + $0x15cc] sm:$0xf]
        %v1616 = vld [vmem:[%s168 + $0x15d0] sm:$0xf]
        %v1617 = vld [vmem:[%s168 + $0x15d4] sm:$0xf]
        %v1618 = vld [vmem:[%s168 + $0x15d8] sm:$0xf]
        %v1619 = vld [vmem:[%s168 + $0x15dc] sm:$0xf]
        %v1620 = vld [vmem:[%s168 + $0x15e0] sm:$0xf]
        %v1621 = vld [vmem:[%s168 + $0x15e4] sm:$0xf]
        %v1622 = vld [vmem:[%s168 + $0x15e8] sm:$0xf]
        %v1623 = vld [vmem:[%s168 + $0x15ec] sm:$0xf]
        %v1624 = vld [vmem:[%s168 + $0x15f0] sm:$0xf]
        %v1625 = vld [vmem:[%s168 + $0x15f4] sm:$0xf]
        %v1626 = vld [vmem:[%s168 + $0x15f8] sm:$0xf]
        %v1627 = vld [vmem:[%s168 + $0x15fc] sm:$0xf]
        %v1628 = vld [vmem:[%s168 + $0x1600] sm:$0xf]
        %v1629 = vld [vmem:[%s168 + $0x1604] sm:$0xf]
        %v1630 = vld [vmem:[%s168 + $0x1608] sm:$0xf]
        %v1631 = vld [vmem:[%s168 + $0x160c] sm:$0xf]
        %v1632 = vld [vmem:[%s168 + $0x1610] sm:$0xf]
        %v1633 = vld [vmem:[%s168 + $0x1614] sm:$0xf]
        %v1634 = vld [vmem:[%s168 + $0x1618] sm:$0xf]
        %v1635 = vld [vmem:[%s168 + $0x161c] sm:$0xf]
        %v1636 = vld [vmem:[%s168 + $0x1620] sm:$0xf]
        %v1637 = vld [vmem:[%s168 + $0x1624] sm:$0xf]
        %v1638 = vld [vmem:[%s168 + $0x1628] sm:$0xf]
        %v1639 = vld [vmem:[%s168 + $0x162c] sm:$0xf]
        %v1640 = vld [vmem:[%s168 + $0x1630] sm:$0xf]
        %v1641 = vld [vmem:[%s168 + $0x1634] sm:$0xf]
        %v1642 = vld [vmem:[%s168 + $0x1638] sm:$0xf]
        %v1643 = vld [vmem:[%s168 + $0x163c] sm:$0xf]
        %v1644 = vld [vmem:[%s168 + $0x1640] sm:$0xf]
        %v1645 = vld [vmem:[%s168 + $0x1644] sm:$0xf]
        %v1646 = vld [vmem:[%s168 + $0x1648] sm:$0xf]
        %v1647 = vld [vmem:[%s168 + $0x164c] sm:$0xf]
        %v1648 = vld [vmem:[%s168 + $0x1650] sm:$0xf]
        %v1649 = vld [vmem:[%s168 + $0x1654] sm:$0xf]
        %v1650 = vld [vmem:[%s168 + $0x1658] sm:$0xf]
        %v1651 = vld [vmem:[%s168 + $0x165c] sm:$0xf]
        %v1652 = vld [vmem:[%s168 + $0x1660] sm:$0xf]
        %v1653 = vld [vmem:[%s168 + $0x1664] sm:$0xf]
        %v1654 = vld [vmem:[%s168 + $0x1668] sm:$0xf]
        %v1655 = vld [vmem:[%s168 + $0x166c] sm:$0xf]
        %v1656 = vld [vmem:[%s168 + $0x1670] sm:$0xf]
        %v1657 = vld [vmem:[%s168 + $0x1674] sm:$0xf]
        %v1658 = vld [vmem:[%s168 + $0x1678] sm:$0xf]
        %v1659 = vld [vmem:[%s168 + $0x167c] sm:$0xf]
        %v1660 = vld [vmem:[%s168 + $0x1680] sm:$0xf]
        %v1661 = vld [vmem:[%s168 + $0x1684] sm:$0xf]
        %v1662 = vld [vmem:[%s168 + $0x1688] sm:$0xf]
        %v1663 = vld [vmem:[%s168 + $0x168c] sm:$0xf]
        %v1664 = vld [vmem:[%s168 + $0x1690] sm:$0xf]
        %v1665 = vld [vmem:[%s168 + $0x1694] sm:$0xf]
        %v1666 = vld [vmem:[%s168 + $0x1698] sm:$0xf]
        %v1667 = vld [vmem:[%s168 + $0x169c] sm:$0xf]
        %v1668 = vld [vmem:[%s168 + $0x16a0] sm:$0xf]
        %v1669 = vld [vmem:[%s168 + $0x16a4] sm:$0xf]
        %v1670 = vld [vmem:[%s168 + $0x16a8] sm:$0xf]
        %v1671 = vld [vmem:[%s168 + $0x16ac] sm:$0xf]
        %v1672 = vld [vmem:[%s168 + $0x16b0] sm:$0xf]
        %v1673 = vld [vmem:[%s168 + $0x16b4] sm:$0xf]
        %v1674 = vld [vmem:[%s168 + $0x16b8] sm:$0xf]
        %v1675 = vld [vmem:[%s168 + $0x16bc] sm:$0xf]
        %v1676 = vld [vmem:[%s168 + $0x16c0] sm:$0xf]
        %v1677 = vld [vmem:[%s168 + $0x16c4] sm:$0xf]
        %v1678 = vld [vmem:[%s168 + $0x16c8] sm:$0xf]
        %v1679 = vld [vmem:[%s168 + $0x16cc] sm:$0xf]
        %v1680 = vld [vmem:[%s168 + $0x16d0] sm:$0xf]
        %v1681 = vld [vmem:[%s168 + $0x16d4] sm:$0xf]
        %v1682 = vld [vmem:[%s168 + $0x16d8] sm:$0xf]
        %v1683 = vld [vmem:[%s168 + $0x16dc] sm:$0xf]
        %v1684 = vld [vmem:[%s168 + $0x16e0] sm:$0xf]
        %v1685 = vld [vmem:[%s168 + $0x16e4] sm:$0xf]
        %v1686 = vld [vmem:[%s168 + $0x16e8] sm:$0xf]
        %v1687 = vld [vmem:[%s168 + $0x16ec] sm:$0xf]
        %v1688 = vld [vmem:[%s168 + $0x16f0] sm:$0xf]
        %v1689 = vld [vmem:[%s168 + $0x16f4] sm:$0xf]
        %v1690 = vld [vmem:[%s168 + $0x16f8] sm:$0xf]
        %v1691 = vld [vmem:[%s168 + $0x16fc] sm:$0xf]
        %v1692 = vld [vmem:[%s168 + $0x1700] sm:$0xf]
        %v1693 = vld [vmem:[%s168 + $0x1704] sm:$0xf]
        %v1694 = vld [vmem:[%s168 + $0x1708] sm:$0xf]
        %v1695 = vld [vmem:[%s168 + $0x170c] sm:$0xf]
        %v1696 = vld [vmem:[%s168 + $0x1710] sm:$0xf]
        %v1697 = vld [vmem:[%s168 + $0x1714] sm:$0xf]
        %v1698 = vld [vmem:[%s168 + $0x1718] sm:$0xf]
        %v1699 = vld [vmem:[%s168 + $0x171c] sm:$0xf]
        %v1700 = vld [vmem:[%s168 + $0x1720] sm:$0xf]
        %v1701 = vld [vmem:[%s168 + $0x1724] sm:$0xf]
        %v1702 = vld [vmem:[%s168 + $0x1728] sm:$0xf]
        %v1703 = vld [vmem:[%s168 + $0x172c] sm:$0xf]
        %v1704 = vld [vmem:[%s168 + $0x1730] sm:$0xf]
        %v1705 = vld [vmem:[%s168 + $0x1734] sm:$0xf]
        %v1706 = vld [vmem:[%s168 + $0x1738] sm:$0xf]
        %v1707 = vld [vmem:[%s168 + $0x173c] sm:$0xf]
        %v1708 = vld [vmem:[%s168 + $0x1740] sm:$0xf]
        %v1709 = vld [vmem:[%s168 + $0x1744] sm:$0xf]
        %v1710 = vld [vmem:[%s168 + $0x1748] sm:$0xf]
        %v1711 = vld [vmem:[%s168 + $0x174c] sm:$0xf]
        %v1712 = vld [vmem:[%s168 + $0x1750] sm:$0xf]
        %v1713 = vld [vmem:[%s168 + $0x1754] sm:$0xf]
        %v1714 = vld [vmem:[%s168 + $0x1758] sm:$0xf]
        %v1715 = vld [vmem:[%s168 + $0x175c] sm:$0xf]
        %v1716 = vld [vmem:[%s168 + $0x1760] sm:$0xf]
        %v1717 = vld [vmem:[%s168 + $0x1764] sm:$0xf]
        %v1718 = vld [vmem:[%s168 + $0x1768] sm:$0xf]
        %v1719 = vld [vmem:[%s168 + $0x176c] sm:$0xf]
        %v1720 = vld [vmem:[%s168 + $0x1770] sm:$0xf]
        %v1721 = vld [vmem:[%s168 + $0x1774] sm:$0xf]
        %v1722 = vld [vmem:[%s168 + $0x1778] sm:$0xf]
        %v1723 = vld [vmem:[%s168 + $0x177c] sm:$0xf]
        %v1724 = vld [vmem:[%s168 + $0x1780] sm:$0xf]
        %v1725 = vld [vmem:[%s168 + $0x1784] sm:$0xf]
        %v1726 = vld [vmem:[%s168 + $0x1788] sm:$0xf]
        %v1727 = vld [vmem:[%s168 + $0x178c] sm:$0xf]
        %v1728 = vld [vmem:[%s168 + $0x1790] sm:$0xf]
        %v1729 = vld [vmem:[%s168 + $0x1794] sm:$0xf]
        %v1730 = vld [vmem:[%s168 + $0x1798] sm:$0xf]
        %v1731 = vld [vmem:[%s168 + $0x179c] sm:$0xf]
        %v1732 = vld [vmem:[%s168 + $0x17a0] sm:$0xf]
        %v1733 = vld [vmem:[%s168 + $0x17a4] sm:$0xf]
        %v1734 = vld [vmem:[%s168 + $0x17a8] sm:$0xf]
        %v1735 = vld [vmem:[%s168 + $0x17ac] sm:$0xf]
        %v1736 = vld [vmem:[%s168 + $0x17b0] sm:$0xf]
        %v1737 = vld [vmem:[%s168 + $0x17b4] sm:$0xf]
        %v1738 = vld [vmem:[%s168 + $0x17b8] sm:$0xf]
        %v1739 = vld [vmem:[%s168 + $0x17bc] sm:$0xf]
        %v1740 = vld [vmem:[%s168 + $0x17c0] sm:$0xf]
        %v1741 = vld [vmem:[%s168 + $0x17c4] sm:$0xf]
        %v1742 = vld [vmem:[%s168 + $0x17c8] sm:$0xf]
        %v1743 = vld [vmem:[%s168 + $0x17cc] sm:$0xf]
        %v1744 = vld [vmem:[%s168 + $0x17d0] sm:$0xf]
        %v1745 = vld [vmem:[%s168 + $0x17d4] sm:$0xf]
        %v1746 = vld [vmem:[%s168 + $0x17d8] sm:$0xf]
        %v1747 = vld [vmem:[%s168 + $0x17dc] sm:$0xf]
        %v1748 = vld [vmem:[%s168 + $0x17e0] sm:$0xf]
        %v1749 = vld [vmem:[%s168 + $0x17e4] sm:$0xf]
        %v1750 = vld [vmem:[%s168 + $0x17e8] sm:$0xf]
        %v1751 = vld [vmem:[%s168 + $0x17ec] sm:$0xf]
        %v1752 = vld [vmem:[%s168 + $0x17f0] sm:$0xf]
        %v1753 = vld [vmem:[%s168 + $0x17f4] sm:$0xf]
        %v1754 = vld [vmem:[%s168 + $0x17f8] sm:$0xf]
        %v1755 = vld [vmem:[%s168 + $0x17fc] sm:$0xf]
        %v1756 = vld [vmem:[%s168 + $0x1800] sm:$0xf]
        %v1757 = vld [vmem:[%s168 + $0x1804] sm:$0xf]
        %v1758 = vld [vmem:[%s168 + $0x1808] sm:$0xf]
        %v1759 = vld [vmem:[%s168 + $0x180c] sm:$0xf]
        %v1760 = vld [vmem:[%s168 + $0x1810] sm:$0xf]
        %v1761 = vld [vmem:[%s168 + $0x1814] sm:$0xf]
        %v1762 = vld [vmem:[%s168 + $0x1818] sm:$0xf]
        %v1763 = vld [vmem:[%s168 + $0x181c] sm:$0xf]
        %v1764 = vld [vmem:[%s168 + $0x1820] sm:$0xf]
        %v1765 = vld [vmem:[%s168 + $0x1824] sm:$0xf]
        %v1766 = vld [vmem:[%s168 + $0x1828] sm:$0xf]
        %v1767 = vld [vmem:[%s168 + $0x182c] sm:$0xf]
        %v1768 = vld [vmem:[%s168 + $0x1830] sm:$0xf]
        %v1769 = vld [vmem:[%s168 + $0x1834] sm:$0xf]
        %v1770 = vld [vmem:[%s168 + $0x1838] sm:$0xf]
        %v1771 = vld [vmem:[%s168 + $0x183c] sm:$0xf]
        %v1772 = vld [vmem:[%s168 + $0x1840] sm:$0xf]
        %v1773 = vld [vmem:[%s168 + $0x1844] sm:$0xf]
        %v1774 = vld [vmem:[%s168 + $0x1848] sm:$0xf]
        %v1775 = vld [vmem:[%s168 + $0x184c] sm:$0xf]
        %v1776 = vld [vmem:[%s168 + $0x1850] sm:$0xf]
        %v1777 = vld [vmem:[%s168 + $0x1854] sm:$0xf]
        %v1778 = vld [vmem:[%s168 + $0x1858] sm:$0xf]
        %v1779 = vld [vmem:[%s168 + $0x185c] sm:$0xf]
        %v1780 = vld [vmem:[%s168 + $0x1860] sm:$0xf]
        %v1781 = vld [vmem:[%s168 + $0x1864] sm:$0xf]
        %v1782 = vld [vmem:[%s168 + $0x1868] sm:$0xf]
        %v1783 = vld [vmem:[%s168 + $0x186c] sm:$0xf]
        %v1784 = vld [vmem:[%s168 + $0x1870] sm:$0xf]
        %v1785 = vld [vmem:[%s168 + $0x1874] sm:$0xf]
        %v1786 = vld [vmem:[%s168 + $0x1878] sm:$0xf]
        %v1787 = vld [vmem:[%s168 + $0x187c] sm:$0xf]
        %v1788 = vld [vmem:[%s168 + $0x1880] sm:$0xf]
        %v1789 = vld [vmem:[%s168 + $0x1884] sm:$0xf]
        %v1790 = vld [vmem:[%s168 + $0x1888] sm:$0xf]
        %v1791 = vld [vmem:[%s168 + $0x188c] sm:$0xf]
        %v1792 = vld [vmem:[%s168 + $0x1890] sm:$0xf]
        %v1793 = vld [vmem:[%s168 + $0x1894] sm:$0xf]
        %v1794 = vld [vmem:[%s168 + $0x1898] sm:$0xf]
        %v1795 = vld [vmem:[%s168 + $0x189c] sm:$0xf]
        %v1796 = vld [vmem:[%s168 + $0x18a0] sm:$0xf]
        %v1797 = vld [vmem:[%s168 + $0x18a4] sm:$0xf]
        %v1798 = vld [vmem:[%s168 + $0x18a8] sm:$0xf]
        %v1799 = vld [vmem:[%s168 + $0x18ac] sm:$0xf]
        %v1800 = vld [vmem:[%s168 + $0x18b0] sm:$0xf]
        %v1801 = vld [vmem:[%s168 + $0x18b4] sm:$0xf]
        %v1802 = vld [vmem:[%s168 + $0x18b8] sm:$0xf]
        %v1803 = vld [vmem:[%s168 + $0x18bc] sm:$0xf]
        %v1804 = vld [vmem:[%s168 + $0x18c0] sm:$0xf]
        %v1805 = vld [vmem:[%s168 + $0x18c4] sm:$0xf]
        %v1806 = vld [vmem:[%s168 + $0x18c8] sm:$0xf]
        %v1807 = vld [vmem:[%s168 + $0x18cc] sm:$0xf]
        %v1808 = vld [vmem:[%s168 + $0x18d0] sm:$0xf]
        %v1809 = vld [vmem:[%s168 + $0x18d4] sm:$0xf]
        %v1810 = vld [vmem:[%s168 + $0x18d8] sm:$0xf]
        %v1811 = vld [vmem:[%s168 + $0x18dc] sm:$0xf]
        %v1812 = vld [vmem:[%s168 + $0x18e0] sm:$0xf]
        %v1813 = vld [vmem:[%s168 + $0x18e4] sm:$0xf]
        %v1814 = vld [vmem:[%s168 + $0x18e8] sm:$0xf]
        %v1815 = vld [vmem:[%s168 + $0x18ec] sm:$0xf]
        %v1816 = vld [vmem:[%s168 + $0x18f0] sm:$0xf]
        %v1817 = vld [vmem:[%s168 + $0x18f4] sm:$0xf]
        %v1818 = vld [vmem:[%s168 + $0x18f8] sm:$0xf]
        %v1819 = vld [vmem:[%s168 + $0x18fc] sm:$0xf]
        %v1820 = vld [vmem:[%s168 + $0x1900] sm:$0xf]
        %v1821 = vld [vmem:[%s168 + $0x1904] sm:$0xf]
        %v1822 = vld [vmem:[%s168 + $0x1908] sm:$0xf]
        %v1823 = vld [vmem:[%s168 + $0x190c] sm:$0xf]
        %v1824 = vld [vmem:[%s168 + $0x1910] sm:$0xf]
        %v1825 = vld [vmem:[%s168 + $0x1914] sm:$0xf]
        %v1826 = vld [vmem:[%s168 + $0x1918] sm:$0xf]
        %v1827 = vld [vmem:[%s168 + $0x191c] sm:$0xf]
        %v1828 = vld [vmem:[%s168 + $0x1920] sm:$0xf]
        %v1829 = vld [vmem:[%s168 + $0x1924] sm:$0xf]
        %v1830 = vld [vmem:[%s168 + $0x1928] sm:$0xf]
        %v1831 = vld [vmem:[%s168 + $0x192c] sm:$0xf]
        %v1832 = vld [vmem:[%s168 + $0x1930] sm:$0xf]
        %v1833 = vld [vmem:[%s168 + $0x1934] sm:$0xf]
        %v1834 = vld [vmem:[%s168 + $0x1938] sm:$0xf]
        %v1835 = vld [vmem:[%s168 + $0x193c] sm:$0xf]
        %v1836 = vld [vmem:[%s168 + $0x1940] sm:$0xf]
        %v1837 = vld [vmem:[%s168 + $0x1944] sm:$0xf]
        %v1838 = vld [vmem:[%s168 + $0x1948] sm:$0xf]
        %v1839 = vld [vmem:[%s168 + $0x194c] sm:$0xf]
        %v1840 = vld [vmem:[%s168 + $0x1950] sm:$0xf]
        %v1841 = vld [vmem:[%s168 + $0x1954] sm:$0xf]
        %v1842 = vld [vmem:[%s168 + $0x1958] sm:$0xf]
        %v1843 = vld [vmem:[%s168 + $0x195c] sm:$0xf]
        %v1844 = vld [vmem:[%s168 + $0x1960] sm:$0xf]
        %v1845 = vld [vmem:[%s168 + $0x1964] sm:$0xf]
        %v1846 = vld [vmem:[%s168 + $0x1968] sm:$0xf]
        %v1847 = vld [vmem:[%s168 + $0x196c] sm:$0xf]
        %v1848 = vld [vmem:[%s168 + $0x1970] sm:$0xf]
        %v1849 = vld [vmem:[%s168 + $0x1974] sm:$0xf]
        %v1850 = vld [vmem:[%s168 + $0x1978] sm:$0xf]
        %v1851 = vld [vmem:[%s168 + $0x197c] sm:$0xf]
        %v1852 = vld [vmem:[%s168 + $0x1980] sm:$0xf]
        %v1853 = vld [vmem:[%s168 + $0x1984] sm:$0xf]
        %v1854 = vld [vmem:[%s168 + $0x1988] sm:$0xf]
        %v1855 = vld [vmem:[%s168 + $0x198c] sm:$0xf]
        %v1856 = vld [vmem:[%s168 + $0x1990] sm:$0xf]
        %v1857 = vld [vmem:[%s168 + $0x1994] sm:$0xf]
        %v1858 = vld [vmem:[%s168 + $0x1998] sm:$0xf]
        %v1859 = vld [vmem:[%s168 + $0x199c] sm:$0xf]
        %v1860 = vld [vmem:[%s168 + $0x19a0] sm:$0xf]
        %v1861 = vld [vmem:[%s168 + $0x19a4] sm:$0xf]
        %v1862 = vld [vmem:[%s168 + $0x19a8] sm:$0xf]
        %v1863 = vld [vmem:[%s168 + $0x19ac] sm:$0xf]
        %v1864 = vld [vmem:[%s168 + $0x19b0] sm:$0xf]
        %v1865 = vld [vmem:[%s168 + $0x19b4] sm:$0xf]
        %v1866 = vld [vmem:[%s168 + $0x19b8] sm:$0xf]
        %v1867 = vld [vmem:[%s168 + $0x19bc] sm:$0xf]
        %v1868 = vld [vmem:[%s168 + $0x19c0] sm:$0xf]
        %v1869 = vld [vmem:[%s168 + $0x19c4] sm:$0xf]
        %v1870 = vld [vmem:[%s168 + $0x19c8] sm:$0xf]
        %v1871 = vld [vmem:[%s168 + $0x19cc] sm:$0xf]
        %v1872 = vld [vmem:[%s168 + $0x19d0] sm:$0xf]
        %v1873 = vld [vmem:[%s168 + $0x19d4] sm:$0xf]
        %v1874 = vld [vmem:[%s168 + $0x19d8] sm:$0xf]
        %v1875 = vld [vmem:[%s168 + $0x19dc] sm:$0xf]
        %v1876 = vld [vmem:[%s168 + $0x19e0] sm:$0xf]
        %v1877 = vld [vmem:[%s168 + $0x19e4] sm:$0xf]
        %v1878 = vld [vmem:[%s168 + $0x19e8] sm:$0xf]
        %v1879 = vld [vmem:[%s168 + $0x19ec] sm:$0xf]
        %v1880 = vld [vmem:[%s168 + $0x19f0] sm:$0xf]
        %v1881 = vld [vmem:[%s168 + $0x19f4] sm:$0xf]
        %v1882 = vld [vmem:[%s168 + $0x19f8] sm:$0xf]
        %v1883 = vld [vmem:[%s168 + $0x19fc] sm:$0xf]
        %v1884 = vld [vmem:[%s168 + $0x1a00] sm:$0xf]
        %v1885 = vld [vmem:[%s168 + $0x1a04] sm:$0xf]
        %v1886 = vld [vmem:[%s168 + $0x1a08] sm:$0xf]
        %v1887 = vld [vmem:[%s168 + $0x1a0c] sm:$0xf]
        %v1888 = vld [vmem:[%s168 + $0x1a10] sm:$0xf]
        %v1889 = vld [vmem:[%s168 + $0x1a14] sm:$0xf]
        %v1890 = vld [vmem:[%s168 + $0x1a18] sm:$0xf]
        %v1891 = vld [vmem:[%s168 + $0x1a1c] sm:$0xf]
        %v1892 = vld [vmem:[%s168 + $0x1a20] sm:$0xf]
        %v1893 = vld [vmem:[%s168 + $0x1a24] sm:$0xf]
        %v1894 = vld [vmem:[%s168 + $0x1a28] sm:$0xf]
        %v1895 = vld [vmem:[%s168 + $0x1a2c] sm:$0xf]
        %v1896 = vld [vmem:[%s168 + $0x1a30] sm:$0xf]
        %v1897 = vld [vmem:[%s168 + $0x1a34] sm:$0xf]
        %v1898 = vld [vmem:[%s168 + $0x1a38] sm:$0xf]
        %v1899 = vld [vmem:[%s168 + $0x1a3c] sm:$0xf]
        %v1900 = vld [vmem:[%s168 + $0x1a40] sm:$0xf]
        %v1901 = vld [vmem:[%s168 + $0x1a44] sm:$0xf]
        %v1902 = vld [vmem:[%s168 + $0x1a48] sm:$0xf]
        %v1903 = vld [vmem:[%s168 + $0x1a4c] sm:$0xf]
        %v1904 = vld [vmem:[%s168 + $0x1a50] sm:$0xf]
        %v1905 = vld [vmem:[%s168 + $0x1a54] sm:$0xf]
        %v1906 = vld [vmem:[%s168 + $0x1a58] sm:$0xf]
        %v1907 = vld [vmem:[%s168 + $0x1a5c] sm:$0xf]
        %v1908 = vld [vmem:[%s168 + $0x1a60] sm:$0xf]
        %v1909 = vld [vmem:[%s168 + $0x1a64] sm:$0xf]
        %v1910 = vld [vmem:[%s168 + $0x1a68] sm:$0xf]
        %v1911 = vld [vmem:[%s168 + $0x1a6c] sm:$0xf]
        %v1912 = vld [vmem:[%s168 + $0x1a70] sm:$0xf]
        %v1913 = vld [vmem:[%s168 + $0x1a74] sm:$0xf]
        %v1914 = vld [vmem:[%s168 + $0x1a78] sm:$0xf]
        %v1915 = vld [vmem:[%s168 + $0x1a7c] sm:$0xf]
        %v1916 = vld [vmem:[%s168 + $0x1a80] sm:$0xf]
        %v1917 = vld [vmem:[%s168 + $0x1a84] sm:$0xf]
        %v1918 = vld [vmem:[%s168 + $0x1a88] sm:$0xf]
        %v1919 = vld [vmem:[%s168 + $0x1a8c] sm:$0xf]
        %v1920 = vld [vmem:[%s168 + $0x1a90] sm:$0xf]
        %v1921 = vld [vmem:[%s168 + $0x1a94] sm:$0xf]
        %v1922 = vld [vmem:[%s168 + $0x1a98] sm:$0xf]
        %v1923 = vld [vmem:[%s168 + $0x1a9c] sm:$0xf]
        %v1924 = vld [vmem:[%s168 + $0x1aa0] sm:$0xf]
        %v1925 = vld [vmem:[%s168 + $0x1aa4] sm:$0xf]
        %v1926 = vld [vmem:[%s168 + $0x1aa8] sm:$0xf]
        %v1927 = vld [vmem:[%s168 + $0x1aac] sm:$0xf]
        %v1928 = vld [vmem:[%s168 + $0x1ab0] sm:$0xf]
        %v1929 = vld [vmem:[%s168 + $0x1ab4] sm:$0xf]
        %v1930 = vld [vmem:[%s168 + $0x1ab8] sm:$0xf]
        %v1931 = vld [vmem:[%s168 + $0x1abc] sm:$0xf]
        %v1932 = vld [vmem:[%s168 + $0x1ac0] sm:$0xf]
        %v1933 = vld [vmem:[%s168 + $0x1ac4] sm:$0xf]
        %v1934 = vld [vmem:[%s168 + $0x1ac8] sm:$0xf]
        %v1935 = vld [vmem:[%s168 + $0x1acc] sm:$0xf]
        %v1936 = vld [vmem:[%s168 + $0x1ad0] sm:$0xf]
        %v1937 = vld [vmem:[%s168 + $0x1ad4] sm:$0xf]
        %v1938 = vld [vmem:[%s168 + $0x1ad8] sm:$0xf]
        %v1939 = vld [vmem:[%s168 + $0x1adc] sm:$0xf]
        %v1940 = vld [vmem:[%s168 + $0x1ae0] sm:$0xf]
        %v1941 = vld [vmem:[%s168 + $0x1ae4] sm:$0xf]
        %v1942 = vld [vmem:[%s168 + $0x1ae8] sm:$0xf]
        %v1943 = vld [vmem:[%s168 + $0x1aec] sm:$0xf]
        %v1944 = vld [vmem:[%s168 + $0x1af0] sm:$0xf]
        %v1945 = vld [vmem:[%s168 + $0x1af4] sm:$0xf]
        %v1946 = vld [vmem:[%s168 + $0x1af8] sm:$0xf]
        %v1947 = vld [vmem:[%s168 + $0x1afc] sm:$0xf]
        %v1948 = vld [vmem:[%s168 + $0x1b00] sm:$0xf]
        %v1949 = vld [vmem:[%s168 + $0x1b04] sm:$0xf]
        %v1950 = vld [vmem:[%s168 + $0x1b08] sm:$0xf]
        %v1951 = vld [vmem:[%s168 + $0x1b0c] sm:$0xf]
        %v1952 = vld [vmem:[%s168 + $0x1b10] sm:$0xf]
        %v1953 = vld [vmem:[%s168 + $0x1b14] sm:$0xf]
        %v1954 = vld [vmem:[%s168 + $0x1b18] sm:$0xf]
        %v1955 = vld [vmem:[%s168 + $0x1b1c] sm:$0xf]
        %v1956 = vld [vmem:[%s168 + $0x1b20] sm:$0xf]
        %v1957 = vld [vmem:[%s168 + $0x1b24] sm:$0xf]
        %v1958 = vld [vmem:[%s168 + $0x1b28] sm:$0xf]
        %v1959 = vld [vmem:[%s168 + $0x1b2c] sm:$0xf]
        %v1960 = vld [vmem:[%s168 + $0x1b30] sm:$0xf]
        %v1961 = vld [vmem:[%s168 + $0x1b34] sm:$0xf]
        %v1962 = vld [vmem:[%s168 + $0x1b38] sm:$0xf]
        %v1963 = vld [vmem:[%s168 + $0x1b3c] sm:$0xf]
        %v1964 = vld [vmem:[%s168 + $0x1b40] sm:$0xf]
        %v1965 = vld [vmem:[%s168 + $0x1b44] sm:$0xf]
        %v1966 = vld [vmem:[%s168 + $0x1b48] sm:$0xf]
        %v1967 = vld [vmem:[%s168 + $0x1b4c] sm:$0xf]
        %v1968 = vld [vmem:[%s168 + $0x1b50] sm:$0xf]
        %v1969 = vld [vmem:[%s168 + $0x1b54] sm:$0xf]
        %v1970 = vld [vmem:[%s168 + $0x1b58] sm:$0xf]
        %v1971 = vld [vmem:[%s168 + $0x1b5c] sm:$0xf]
        %v1972 = vld [vmem:[%s168 + $0x1b60] sm:$0xf]
        %v1973 = vld [vmem:[%s168 + $0x1b64] sm:$0xf]
        %v1974 = vld [vmem:[%s168 + $0x1b68] sm:$0xf]
        %v1975 = vld [vmem:[%s168 + $0x1b6c] sm:$0xf]
        %v1976 = vld [vmem:[%s168 + $0x1b70] sm:$0xf]
        %v1977 = vld [vmem:[%s168 + $0x1b74] sm:$0xf]
        %v1978 = vld [vmem:[%s168 + $0x1b78] sm:$0xf]
        %v1979 = vld [vmem:[%s168 + $0x1b7c] sm:$0xf]
        %v1980 = vld [vmem:[%s168 + $0x1b80] sm:$0xf]
        %v1981 = vld [vmem:[%s168 + $0x1b84] sm:$0xf]
        %v1982 = vld [vmem:[%s168 + $0x1b88] sm:$0xf]
        %v1983 = vld [vmem:[%s168 + $0x1b8c] sm:$0xf]
        %v1984 = vld [vmem:[%s168 + $0x1b90] sm:$0xf]
        %v1985 = vld [vmem:[%s168 + $0x1b94] sm:$0xf]
        %v1986 = vld [vmem:[%s168 + $0x1b98] sm:$0xf]
        %v1987 = vld [vmem:[%s168 + $0x1b9c] sm:$0xf]
        %v1988 = vld [vmem:[%s168 + $0x1ba0] sm:$0xf]
        %v1989 = vld [vmem:[%s168 + $0x1ba4] sm:$0xf]
        %v1990 = vld [vmem:[%s168 + $0x1ba8] sm:$0xf]
        %v1991 = vld [vmem:[%s168 + $0x1bac] sm:$0xf]
        %v1992 = vld [vmem:[%s168 + $0x1bb0] sm:$0xf]
        %v1993 = vld [vmem:[%s168 + $0x1bb4] sm:$0xf]
        %v1994 = vld [vmem:[%s168 + $0x1bb8] sm:$0xf]
        %v1995 = vld [vmem:[%s168 + $0x1bbc] sm:$0xf]
        %v1996 = vld [vmem:[%s168 + $0x1bc0] sm:$0xf]
        %v1997 = vld [vmem:[%s168 + $0x1bc4] sm:$0xf]
        %v1998 = vld [vmem:[%s168 + $0x1bc8] sm:$0xf]
        %v1999 = vld [vmem:[%s168 + $0x1bcc] sm:$0xf]
        %v2000 = vld [vmem:[%s168 + $0x1bd0] sm:$0xf]
        %v2001 = vld [vmem:[%s168 + $0x1bd4] sm:$0xf]
        %v2002 = vld [vmem:[%s168 + $0x1bd8] sm:$0xf]
        %v2003 = vld [vmem:[%s168 + $0x1bdc] sm:$0xf]
        %v2004 = vld [vmem:[%s168 + $0x1be0] sm:$0xf]
        %v2005 = vld [vmem:[%s168 + $0x1be4] sm:$0xf]
        %v2006 = vld [vmem:[%s168 + $0x1be8] sm:$0xf]
        %v2007 = vld [vmem:[%s168 + $0x1bec] sm:$0xf]
        %v2008 = vld [vmem:[%s168 + $0x1bf0] sm:$0xf]
        %v2009 = vld [vmem:[%s168 + $0x1bf4] sm:$0xf]
        %v2010 = vld [vmem:[%s168 + $0x1bf8] sm:$0xf]
        %v2011 = vld [vmem:[%s168 + $0x1bfc] sm:$0xf]
        %v2012 = vld [vmem:[%s168 + $0x1c00] sm:$0xf]
        %v2013 = vld [vmem:[%s168 + $0x1c04] sm:$0xf]
        %v2014 = vld [vmem:[%s168 + $0x1c08] sm:$0xf]
        %v2015 = vld [vmem:[%s168 + $0x1c0c] sm:$0xf]
        %v2016 = vld [vmem:[%s168 + $0x1c10] sm:$0xf]
        %v2017 = vld [vmem:[%s168 + $0x1c14] sm:$0xf]
        %v2018 = vld [vmem:[%s168 + $0x1c18] sm:$0xf]
        %v2019 = vld [vmem:[%s168 + $0x1c1c] sm:$0xf]
        %v2020 = vld [vmem:[%s168 + $0x1c20] sm:$0xf]
        %v2021 = vld [vmem:[%s168 + $0x1c24] sm:$0xf]
        %v2022 = vld [vmem:[%s168 + $0x1c28] sm:$0xf]
        %v2023 = vld [vmem:[%s168 + $0x1c2c] sm:$0xf]
        %v2024 = vld [vmem:[%s168 + $0x1c30] sm:$0xf]
        %v2025 = vld [vmem:[%s168 + $0x1c34] sm:$0xf]
        %v2026 = vld [vmem:[%s168 + $0x1c38] sm:$0xf]
        %v2027 = vld [vmem:[%s168 + $0x1c3c] sm:$0xf]
        %v2028 = vld [vmem:[%s168 + $0x1c40] sm:$0xf]
        %v2029 = vld [vmem:[%s168 + $0x1c44] sm:$0xf]
        %v2030 = vld [vmem:[%s168 + $0x1c48] sm:$0xf]
        %v2031 = vld [vmem:[%s168 + $0x1c4c] sm:$0xf]
        %v2032 = vld [vmem:[%s168 + $0x1c50] sm:$0xf]
        %v2033 = vld [vmem:[%s168 + $0x1c54] sm:$0xf]
        %v2034 = vld [vmem:[%s168 + $0x1c58] sm:$0xf]
        %v2035 = vld [vmem:[%s168 + $0x1c5c] sm:$0xf]
        %v2036 = vld [vmem:[%s168 + $0x1c60] sm:$0xf]
        %v2037 = vld [vmem:[%s168 + $0x1c64] sm:$0xf]
        %v2038 = vld [vmem:[%s168 + $0x1c68] sm:$0xf]
        %v2039 = vld [vmem:[%s168 + $0x1c6c] sm:$0xf]
        %v2040 = vld [vmem:[%s168 + $0x1c70] sm:$0xf]
        %v2041 = vld [vmem:[%s168 + $0x1c74] sm:$0xf]
        %v2042 = vld [vmem:[%s168 + $0x1c78] sm:$0xf]
        %v2043 = vld [vmem:[%s168 + $0x1c7c] sm:$0xf]
        %v2044 = vld [vmem:[%s168 + $0x1c80] sm:$0xf]
        %v2045 = vld [vmem:[%s168 + $0x1c84] sm:$0xf]
        %v2046 = vld [vmem:[%s168 + $0x1c88] sm:$0xf]
        %v2047 = vld [vmem:[%s168 + $0x1c8c] sm:$0xf]
        %v2048 = vld [vmem:[%s168 + $0x1c90] sm:$0xf]
        %v2049 = vld [vmem:[%s168 + $0x1c94] sm:$0xf]
        %v2050 = vld [vmem:[%s168 + $0x1c98] sm:$0xf]
        %v2051 = vld [vmem:[%s168 + $0x1c9c] sm:$0xf]
        %v2052 = vld [vmem:[%s168 + $0x1ca0] sm:$0xf]
        %v2053 = vld [vmem:[%s168 + $0x1ca4] sm:$0xf]
        %v2054 = vld [vmem:[%s168 + $0x1ca8] sm:$0xf]
        %v2055 = vld [vmem:[%s168 + $0x1cac] sm:$0xf]
        %v2056 = vld [vmem:[%s168 + $0x1cb0] sm:$0xf]
        %v2057 = vld [vmem:[%s168 + $0x1cb4] sm:$0xf]
        %v2058 = vld [vmem:[%s168 + $0x1cb8] sm:$0xf]
        %v2059 = vld [vmem:[%s168 + $0x1cbc] sm:$0xf]
        %v2060 = vld [vmem:[%s168 + $0x1cc0] sm:$0xf]
        %v2061 = vld [vmem:[%s168 + $0x1cc4] sm:$0xf]
        %v2062 = vld [vmem:[%s168 + $0x1cc8] sm:$0xf]
        %v2063 = vld [vmem:[%s168 + $0x1ccc] sm:$0xf]
        %v2064 = vld [vmem:[%s168 + $0x1cd0] sm:$0xf]
        %v2065 = vld [vmem:[%s168 + $0x1cd4] sm:$0xf]
        %v2066 = vld [vmem:[%s168 + $0x1cd8] sm:$0xf]
        %v2067 = vld [vmem:[%s168 + $0x1cdc] sm:$0xf]
        %v2068 = vld [vmem:[%s168 + $0x1ce0] sm:$0xf]
        %v2069 = vld [vmem:[%s168 + $0x1ce4] sm:$0xf]
        %v2070 = vld [vmem:[%s168 + $0x1ce8] sm:$0xf]
        %v2071 = vld [vmem:[%s168 + $0x1cec] sm:$0xf]
        %v2072 = vld [vmem:[%s168 + $0x1cf0] sm:$0xf]
        %v2073 = vld [vmem:[%s168 + $0x1cf4] sm:$0xf]
        %v2074 = vld [vmem:[%s168 + $0x1cf8] sm:$0xf]
        %v2075 = vld [vmem:[%s168 + $0x1cfc] sm:$0xf]
        %v2076 = vld [vmem:[%s168 + $0x1d00] sm:$0xf]
        %v2077 = vld [vmem:[%s168 + $0x1d04] sm:$0xf]
        %v2078 = vld [vmem:[%s168 + $0x1d08] sm:$0xf]
        %v2079 = vld [vmem:[%s168 + $0x1d0c] sm:$0xf]
        %v2080 = vld [vmem:[%s168 + $0x1d10] sm:$0xf]
        %v2081 = vld [vmem:[%s168 + $0x1d14] sm:$0xf]
        %v2082 = vld [vmem:[%s168 + $0x1d18] sm:$0xf]
        %v2083 = vld [vmem:[%s168 + $0x1d1c] sm:$0xf]
        %v2084 = vld [vmem:[%s168 + $0x1d20] sm:$0xf]
        %v2085 = vld [vmem:[%s168 + $0x1d24] sm:$0xf]
        %v2086 = vld [vmem:[%s168 + $0x1d28] sm:$0xf]
        %v2087 = vld [vmem:[%s168 + $0x1d2c] sm:$0xf]
        %v2088 = vld [vmem:[%s168 + $0x1d30] sm:$0xf]
        %v2089 = vld [vmem:[%s168 + $0x1d34] sm:$0xf]
        %v2090 = vld [vmem:[%s168 + $0x1d38] sm:$0xf]
        %v2091 = vld [vmem:[%s168 + $0x1d3c] sm:$0xf]
        %v2092 = vld [vmem:[%s168 + $0x1d40] sm:$0xf]
        %v2093 = vld [vmem:[%s168 + $0x1d44] sm:$0xf]
        %v2094 = vld [vmem:[%s168 + $0x1d48] sm:$0xf]
        %v2095 = vld [vmem:[%s168 + $0x1d4c] sm:$0xf]
        %v2096 = vld [vmem:[%s168 + $0x1d50] sm:$0xf]
        %v2097 = vld [vmem:[%s168 + $0x1d54] sm:$0xf]
        %v2098 = vld [vmem:[%s168 + $0x1d58] sm:$0xf]
        %v2099 = vld [vmem:[%s168 + $0x1d5c] sm:$0xf]
        %v2100 = vld [vmem:[%s168 + $0x1d60] sm:$0xf]
        %v2101 = vld [vmem:[%s168 + $0x1d64] sm:$0xf]
        %v2102 = vld [vmem:[%s168 + $0x1d68] sm:$0xf]
        %v2103 = vld [vmem:[%s168 + $0x1d6c] sm:$0xf]
        %v2104 = vld [vmem:[%s168 + $0x1d70] sm:$0xf]
        %v2105 = vld [vmem:[%s168 + $0x1d74] sm:$0xf]
        %v2106 = vld [vmem:[%s168 + $0x1d78] sm:$0xf]
        %v2107 = vld [vmem:[%s168 + $0x1d7c] sm:$0xf]
        %v2108 = vld [vmem:[%s168 + $0x1d80] sm:$0xf]
        %v2109 = vld [vmem:[%s168 + $0x1d84] sm:$0xf]
        %v2110 = vld [vmem:[%s168 + $0x1d88] sm:$0xf]
        %v2111 = vld [vmem:[%s168 + $0x1d8c] sm:$0xf]
        %v2112 = vld [vmem:[%s168 + $0x1d90] sm:$0xf]
        %v2113 = vld [vmem:[%s168 + $0x1d94] sm:$0xf]
        %v2114 = vld [vmem:[%s168 + $0x1d98] sm:$0xf]
        %v2115 = vld [vmem:[%s168 + $0x1d9c] sm:$0xf]
        %v2116 = vld [vmem:[%s168 + $0x1da0] sm:$0xf]
        %v2117 = vld [vmem:[%s168 + $0x1da4] sm:$0xf]
        %v2118 = vld [vmem:[%s168 + $0x1da8] sm:$0xf]
        %v2119 = vld [vmem:[%s168 + $0x1dac] sm:$0xf]
        %v2120 = vld [vmem:[%s168 + $0x1db0] sm:$0xf]
        %v2121 = vld [vmem:[%s168 + $0x1db4] sm:$0xf]
        %v2122 = vld [vmem:[%s168 + $0x1db8] sm:$0xf]
        %v2123 = vld [vmem:[%s168 + $0x1dbc] sm:$0xf]
        %v2124 = vld [vmem:[%s168 + $0x1dc0] sm:$0xf]
        %v2125 = vld [vmem:[%s168 + $0x1dc4] sm:$0xf]
        %v2126 = vld [vmem:[%s168 + $0x1dc8] sm:$0xf]
        %v2127 = vld [vmem:[%s168 + $0x1dcc] sm:$0xf]
        %v2128 = vld [vmem:[%s168 + $0x1dd0] sm:$0xf]
        %v2129 = vld [vmem:[%s168 + $0x1dd4] sm:$0xf]
        %v2130 = vld [vmem:[%s168 + $0x1dd8] sm:$0xf]
        %v2131 = vld [vmem:[%s168 + $0x1ddc] sm:$0xf]
        %v2132 = vld [vmem:[%s168 + $0x1de0] sm:$0xf]
        %v2133 = vld [vmem:[%s168 + $0x1de4] sm:$0xf]
        %v2134 = vld [vmem:[%s168 + $0x1de8] sm:$0xf]
        %v2135 = vld [vmem:[%s168 + $0x1dec] sm:$0xf]
        %v2136 = vld [vmem:[%s168 + $0x1df0] sm:$0xf]
        %v2137 = vld [vmem:[%s168 + $0x1df4] sm:$0xf]
        %v2138 = vld [vmem:[%s168 + $0x1df8] sm:$0xf]
        %v2139 = vld [vmem:[%s168 + $0x1dfc] sm:$0xf]
        %v2140 = vld [vmem:[%s168 + $0x1e00] sm:$0xf]
        %v2141 = vld [vmem:[%s168 + $0x1e04] sm:$0xf]
        %v2142 = vld [vmem:[%s168 + $0x1e08] sm:$0xf]
        %v2143 = vld [vmem:[%s168 + $0x1e0c] sm:$0xf]
        %v2144 = vld [vmem:[%s168 + $0x1e10] sm:$0xf]
        %v2145 = vld [vmem:[%s168 + $0x1e14] sm:$0xf]
        %v2146 = vld [vmem:[%s168 + $0x1e18] sm:$0xf]
        %v2147 = vld [vmem:[%s168 + $0x1e1c] sm:$0xf]
        %v2148 = vld [vmem:[%s168 + $0x1e20] sm:$0xf]
        %v2149 = vld [vmem:[%s168 + $0x1e24] sm:$0xf]
        %v2150 = vld [vmem:[%s168 + $0x1e28] sm:$0xf]
        %v2151 = vld [vmem:[%s168 + $0x1e2c] sm:$0xf]
        %v2152 = vld [vmem:[%s168 + $0x1e30] sm:$0xf]
        %v2153 = vld [vmem:[%s168 + $0x1e34] sm:$0xf]
        %v2154 = vld [vmem:[%s168 + $0x1e38] sm:$0xf]
        %v2155 = vld [vmem:[%s168 + $0x1e3c] sm:$0xf]
        %v2156 = vld [vmem:[%s168 + $0x1e40] sm:$0xf]
        %v2157 = vld [vmem:[%s168 + $0x1e44] sm:$0xf]
        %v2158 = vld [vmem:[%s168 + $0x1e48] sm:$0xf]
        %v2159 = vld [vmem:[%s168 + $0x1e4c] sm:$0xf]
        %v2160 = vld [vmem:[%s168 + $0x1e50] sm:$0xf]
        %v2161 = vld [vmem:[%s168 + $0x1e54] sm:$0xf]
        %v2162 = vld [vmem:[%s168 + $0x1e58] sm:$0xf]
        %v2163 = vld [vmem:[%s168 + $0x1e5c] sm:$0xf]
        %v2164 = vld [vmem:[%s168 + $0x1e60] sm:$0xf]
        %v2165 = vld [vmem:[%s168 + $0x1e64] sm:$0xf]
        %v2166 = vld [vmem:[%s168 + $0x1e68] sm:$0xf]
        %v2167 = vld [vmem:[%s168 + $0x1e6c] sm:$0xf]
        %v2168 = vld [vmem:[%s168 + $0x1e70] sm:$0xf]
        %v2169 = vld [vmem:[%s168 + $0x1e74] sm:$0xf]
        %v2170 = vld [vmem:[%s168 + $0x1e78] sm:$0xf]
        %v2171 = vld [vmem:[%s168 + $0x1e7c] sm:$0xf]
        %v2172 = vld [vmem:[%s168 + $0x1e80] sm:$0xf]
        %v2173 = vld [vmem:[%s168 + $0x1e84] sm:$0xf]
        %v2174 = vld [vmem:[%s168 + $0x1e88] sm:$0xf]
        %v2175 = vld [vmem:[%s168 + $0x1e8c] sm:$0xf]
        %v2176 = vld [vmem:[%s168 + $0x1e90] sm:$0xf]
        %v2177 = vld [vmem:[%s168 + $0x1e94] sm:$0xf]
        %v2178 = vld [vmem:[%s168 + $0x1e98] sm:$0xf]
        %v2179 = vld [vmem:[%s168 + $0x1e9c] sm:$0xf]
        %v2180 = vld [vmem:[%s168 + $0x1ea0] sm:$0xf]
        %v2181 = vld [vmem:[%s168 + $0x1ea4] sm:$0xf]
        %v2182 = vld [vmem:[%s168 + $0x1ea8] sm:$0xf]
        %v2183 = vld [vmem:[%s168 + $0x1eac] sm:$0xf]
        %v2184 = vld [vmem:[%s168 + $0x1eb0] sm:$0xf]
        %v2185 = vld [vmem:[%s168 + $0x1eb4] sm:$0xf]
        %v2186 = vld [vmem:[%s168 + $0x1eb8] sm:$0xf]
        %v2187 = vld [vmem:[%s168 + $0x1ebc] sm:$0xf]
        %v2188 = vld [vmem:[%s168 + $0x1ec0] sm:$0xf]
        %v2189 = vld [vmem:[%s168 + $0x1ec4] sm:$0xf]
        %v2190 = vld [vmem:[%s168 + $0x1ec8] sm:$0xf]
        %v2191 = vld [vmem:[%s168 + $0x1ecc] sm:$0xf]
        %v2192 = vld [vmem:[%s168 + $0x1ed0] sm:$0xf]
        %v2193 = vld [vmem:[%s168 + $0x1ed4] sm:$0xf]
        %v2194 = vld [vmem:[%s168 + $0x1ed8] sm:$0xf]
        %v2195 = vld [vmem:[%s168 + $0x1edc] sm:$0xf]
        %v2196 = vld [vmem:[%s168 + $0x1ee0] sm:$0xf]
        %v2197 = vld [vmem:[%s168 + $0x1ee4] sm:$0xf]
        %v2198 = vld [vmem:[%s168 + $0x1ee8] sm:$0xf]
        %v2199 = vld [vmem:[%s168 + $0x1eec] sm:$0xf]
        %v2200 = vld [vmem:[%s168 + $0x1ef0] sm:$0xf]
        %v2201 = vld [vmem:[%s168 + $0x1ef4] sm:$0xf]
        %v2202 = vld [vmem:[%s168 + $0x1ef8] sm:$0xf]
        %v2203 = vld [vmem:[%s168 + $0x1efc] sm:$0xf]
        %v2204 = vld [vmem:[%s168 + $0x1f00] sm:$0xf]
        %v2205 = vld [vmem:[%s168 + $0x1f04] sm:$0xf]
        %v2206 = vld [vmem:[%s168 + $0x1f08] sm:$0xf]
        %v2207 = vld [vmem:[%s168 + $0x1f0c] sm:$0xf]
        %v2208 = vld [vmem:[%s168 + $0x1f10] sm:$0xf]
        %v2209 = vld [vmem:[%s168 + $0x1f14] sm:$0xf]
        %v2210 = vld [vmem:[%s168 + $0x1f18] sm:$0xf]
        %v2211 = vld [vmem:[%s168 + $0x1f1c] sm:$0xf]
        %v2212 = vld [vmem:[%s168 + $0x1f20] sm:$0xf]
        %v2213 = vld [vmem:[%s168 + $0x1f24] sm:$0xf]
        %v2214 = vld [vmem:[%s168 + $0x1f28] sm:$0xf]
        %v2215 = vld [vmem:[%s168 + $0x1f2c] sm:$0xf]
        %v2216 = vld [vmem:[%s168 + $0x1f30] sm:$0xf]
        %v2217 = vld [vmem:[%s168 + $0x1f34] sm:$0xf]
        %v2218 = vld [vmem:[%s168 + $0x1f38] sm:$0xf]
        %v2219 = vld [vmem:[%s168 + $0x1f3c] sm:$0xf]
        %v2220 = vld [vmem:[%s168 + $0x1f40] sm:$0xf]
        %v2221 = vld [vmem:[%s168 + $0x1f44] sm:$0xf]
        %v2222 = vld [vmem:[%s168 + $0x1f48] sm:$0xf]
        %v2223 = vld [vmem:[%s168 + $0x1f4c] sm:$0xf]
        %v2224 = vld [vmem:[%s168 + $0x1f50] sm:$0xf]
        %v2225 = vld [vmem:[%s168 + $0x1f54] sm:$0xf]
        %v2226 = vld [vmem:[%s168 + $0x1f58] sm:$0xf]
        %v2227 = vld [vmem:[%s168 + $0x1f5c] sm:$0xf]
        %v2228 = vld [vmem:[%s168 + $0x1f60] sm:$0xf]
        %v2229 = vld [vmem:[%s168 + $0x1f64] sm:$0xf]
        %v2230 = vld [vmem:[%s168 + $0x1f68] sm:$0xf]
        %v2231 = vld [vmem:[%s168 + $0x1f6c] sm:$0xf]
        %v2232 = vld [vmem:[%s168 + $0x1f70] sm:$0xf]
        %v2233 = vld [vmem:[%s168 + $0x1f74] sm:$0xf]
        %v2234 = vld [vmem:[%s168 + $0x1f78] sm:$0xf]
        %v2235 = vld [vmem:[%s168 + $0x1f7c] sm:$0xf]
        %v2236 = vld [vmem:[%s168 + $0x1f80] sm:$0xf]
        %v2237 = vld [vmem:[%s168 + $0x1f84] sm:$0xf]
        %v2238 = vld [vmem:[%s168 + $0x1f88] sm:$0xf]
        %v2239 = vld [vmem:[%s168 + $0x1f8c] sm:$0xf]
        %v2240 = vld [vmem:[%s168 + $0x1f90] sm:$0xf]
        %v2241 = vld [vmem:[%s168 + $0x1f94] sm:$0xf]
        %v2242 = vld [vmem:[%s168 + $0x1f98] sm:$0xf]
        %v2243 = vld [vmem:[%s168 + $0x1f9c] sm:$0xf]
        %v2244 = vld [vmem:[%s168 + $0x1fa0] sm:$0xf]
        %v2245 = vld [vmem:[%s168 + $0x1fa4] sm:$0xf]
        %v2246 = vld [vmem:[%s168 + $0x1fa8] sm:$0xf]
        %v2247 = vld [vmem:[%s168 + $0x1fac] sm:$0xf]
        %v2248 = vld [vmem:[%s168 + $0x1fb0] sm:$0xf]
        %v2249 = vld [vmem:[%s168 + $0x1fb4] sm:$0xf]
        %v2250 = vld [vmem:[%s168 + $0x1fb8] sm:$0xf]
        %v2251 = vld [vmem:[%s168 + $0x1fbc] sm:$0xf]
        %v2252 = vld [vmem:[%s168 + $0x1fc0] sm:$0xf]
        %v2253 = vld [vmem:[%s168 + $0x1fc4] sm:$0xf]
        %v2254 = vld [vmem:[%s168 + $0x1fc8] sm:$0xf]
        %v2255 = vld [vmem:[%s168 + $0x1fcc] sm:$0xf]
        %v2256 = vld [vmem:[%s168 + $0x1fd0] sm:$0xf]
        %v2257 = vld [vmem:[%s168 + $0x1fd4] sm:$0xf]
        %v2258 = vld [vmem:[%s168 + $0x1fd8] sm:$0xf]
        %v2259 = vld [vmem:[%s168 + $0x1fdc] sm:$0xf]
        %v2260 = vld [vmem:[%s168 + $0x1fe0] sm:$0xf]
        %v2261 = vld [vmem:[%s168 + $0x1fe4] sm:$0xf]
        %v2262 = vld [vmem:[%s168 + $0x1fe8] sm:$0xf]
        %v2263 = vld [vmem:[%s168 + $0x1fec] sm:$0xf]
        %v2264 = vld [vmem:[%s168 + $0x1ff0] sm:$0xf]
        %v2265 = vld [vmem:[%s168 + $0x1ff4] sm:$0xf]
        %v2266 = vld [vmem:[%s168 + $0x1ff8] sm:$0xf]
        %v2267 = vld [vmem:[%s168 + $0x1ffc] sm:$0xf]
        %v2268 = vld [vmem:[%s168 + $0x2000] sm:$0xf]
        %v2269 = vld [vmem:[%s168 + $0x2004] sm:$0xf]
        %v2270 = vld [vmem:[%s168 + $0x2008] sm:$0xf]
        %v2271 = vld [vmem:[%s168 + $0x200c] sm:$0xf]
        %v2272 = vld [vmem:[%s168 + $0x2010] sm:$0xf]
        %v2273 = vld [vmem:[%s168 + $0x2014] sm:$0xf]
        %v2274 = vld [vmem:[%s168 + $0x2018] sm:$0xf]
        %v2275 = vld [vmem:[%s168 + $0x201c] sm:$0xf]
        %v2276 = vld [vmem:[%s168 + $0x2020] sm:$0xf]
        %v2277 = vld [vmem:[%s168 + $0x2024] sm:$0xf]
        %v2278 = vld [vmem:[%s168 + $0x2028] sm:$0xf]
        %v2279 = vld [vmem:[%s168 + $0x202c] sm:$0xf]
        %v2280 = vld [vmem:[%s168 + $0x2030] sm:$0xf]
        %v2281 = vld [vmem:[%s168 + $0x2034] sm:$0xf]
        %v2282 = vld [vmem:[%s168 + $0x2038] sm:$0xf]
        %v2283 = vld [vmem:[%s168 + $0x203c] sm:$0xf]
        %v2284 = vld [vmem:[%s168 + $0x2040] sm:$0xf]
        %v2285 = vld [vmem:[%s168 + $0x2044] sm:$0xf]
        %v2286 = vld [vmem:[%s168 + $0x2048] sm:$0xf]
        %v2287 = vld [vmem:[%s168 + $0x204c] sm:$0xf]
        %v2288 = vld [vmem:[%s168 + $0x2050] sm:$0xf]
        %v2289 = vld [vmem:[%s168 + $0x2054] sm:$0xf]
        %v2290 = vld [vmem:[%s168 + $0x2058] sm:$0xf]
        %v2291 = vld [vmem:[%s168 + $0x205c] sm:$0xf]
        %v2292 = vld [vmem:[%s168 + $0x2060] sm:$0xf]
        %v2293 = vld [vmem:[%s168 + $0x2064] sm:$0xf]
        %v2294 = vld [vmem:[%s168 + $0x2068] sm:$0xf]
        %v2295 = vld [vmem:[%s168 + $0x206c] sm:$0xf]
        %v2296 = vld [vmem:[%s168 + $0x2070] sm:$0xf]
        %v2297 = vld [vmem:[%s168 + $0x2074] sm:$0xf]
        %v2298 = vld [vmem:[%s168 + $0x2078] sm:$0xf]
        %v2299 = vld [vmem:[%s168 + $0x207c] sm:$0xf]
        %v2300 = vld [vmem:[%s168 + $0x2080] sm:$0xf]
        %v2301 = vld [vmem:[%s168 + $0x2084] sm:$0xf]
        %v2302 = vld [vmem:[%s168 + $0x2088] sm:$0xf]
        %v2303 = vld [vmem:[%s168 + $0x208c] sm:$0xf]
        %v2304 = vld [vmem:[%s168 + $0x2090] sm:$0xf]
        %v2305 = vld [vmem:[%s168 + $0x2094] sm:$0xf]
        %v2306 = vld [vmem:[%s168 + $0x2098] sm:$0xf]
        %v2307 = vld [vmem:[%s168 + $0x209c] sm:$0xf]
        %v2308 = vld [vmem:[%s168 + $0x20a0] sm:$0xf]
        %v2309 = vld [vmem:[%s168 + $0x20a4] sm:$0xf]
        %v2310 = vld [vmem:[%s168 + $0x20a8] sm:$0xf]
        %v2311 = vld [vmem:[%s168 + $0x20ac] sm:$0xf]
        %v2312 = vld [vmem:[%s168 + $0x20b0] sm:$0xf]
        %v2313 = vld [vmem:[%s168 + $0x20b4] sm:$0xf]
        %v2314 = vld [vmem:[%s168 + $0x20b8] sm:$0xf]
        %v2315 = vld [vmem:[%s168 + $0x20bc] sm:$0xf]
        %v2316 = vld [vmem:[%s168 + $0x20c0] sm:$0xf]
        %v2317 = vld [vmem:[%s168 + $0x20c4] sm:$0xf]
        %v2318 = vld [vmem:[%s168 + $0x20c8] sm:$0xf]
        %v2319 = vld [vmem:[%s168 + $0x20cc] sm:$0xf]
        %v2320 = vld [vmem:[%s168 + $0x20d0] sm:$0xf]
        %v2321 = vld [vmem:[%s168 + $0x20d4] sm:$0xf]
        %v2322 = vld [vmem:[%s168 + $0x20d8] sm:$0xf]
        %v2323 = vld [vmem:[%s168 + $0x20dc] sm:$0xf]
        %v2324 = vld [vmem:[%s168 + $0x20e0] sm:$0xf]
        %v2325 = vld [vmem:[%s168 + $0x20e4] sm:$0xf]
        %v2326 = vld [vmem:[%s168 + $0x20e8] sm:$0xf]
        %v2327 = vld [vmem:[%s168 + $0x20ec] sm:$0xf]
        %v2328 = vld [vmem:[%s168 + $0x20f0] sm:$0xf]
        %v2329 = vld [vmem:[%s168 + $0x20f4] sm:$0xf]
        %v2330 = vld [vmem:[%s168 + $0x20f8] sm:$0xf]
        %v2331 = vld [vmem:[%s168 + $0x20fc] sm:$0xf]
        %v2349 = vcombine.high %v203, %v203
        %v2351 = vunpack.c.l.s4 1966171168
        %v2352 = vunpack.c.0.s8 %v2351
        %v2353 = vlaneseq
        %v2354 = vshrl.u32 %v2353, 7
        %v2355 = vsub.s32 %v2352, %v2354
        %v2356 = vrot.slane %v203, %v2355
        %v2358 = vunpack.c.l.s4 1966171168
        %v2359 = vunpack.c.0.s8 %v2358
        %v2360 = vlaneseq
        %v2361 = vshrl.u32 %v2360, 7
        %v2362 = vsub.s32 %v2359, %v2361
        %v2363 = vrot.slane %v2349, %v2362
        %v2364 = vcombine.high %v2356, %v2356
        %v2365 = vcombine.high %v2363, %v2363
        %v2367 = vunpack.c.l.s4 1966171168
        %v2368 = vunpack.c.0.s8 %v2367
        %v2369 = vlaneseq
        %v2370 = vshrl.u32 %v2369, 7
        %v2371 = vsub.s32 %v2368, %v2370
        %v2372 = vrot.slane %v2356, %v2371
        %v2374 = vunpack.c.l.s4 1966171168
        %v2375 = vunpack.c.0.s8 %v2374
        %v2376 = vlaneseq
        %v2377 = vshrl.u32 %v2376, 7
        %v2378 = vsub.s32 %v2375, %v2377
        %v2379 = vrot.slane %v2363, %v2378
        %v2381 = vunpack.c.l.s4 1966171168
        %v2382 = vunpack.c.0.s8 %v2381
        %v2383 = vlaneseq
        %v2384 = vshrl.u32 %v2383, 7
        %v2385 = vsub.s32 %v2382, %v2384
        %v2386 = vrot.slane %v2364, %v2385
        %v2388 = vunpack.c.l.s4 1966171168
        %v2389 = vunpack.c.0.s8 %v2388
        %v2390 = vlaneseq
        %v2391 = vshrl.u32 %v2390, 7
        %v2392 = vsub.s32 %v2389, %v2391
        %v2393 = vrot.slane %v2365, %v2392
        %v2394 = vcombine.high %v2372, %v2372
        %v2395 = vcombine.high %v2379, %v2379
        %v2396 = vcombine.high %v2386, %v2386
        %v2397 = vcombine.high %v2393, %v2393
        %v2398 = vcombine.high %v204, %v204
        %v2400 = vunpack.c.l.s4 1966171168
        %v2401 = vunpack.c.0.s8 %v2400
        %v2402 = vlaneseq
        %v2403 = vshrl.u32 %v2402, 7
        %v2404 = vsub.s32 %v2401, %v2403
        %v2405 = vrot.slane %v204, %v2404
        %v2407 = vunpack.c.l.s4 1966171168
        %v2408 = vunpack.c.0.s8 %v2407
        %v2409 = vlaneseq
        %v2410 = vshrl.u32 %v2409, 7
        %v2411 = vsub.s32 %v2408, %v2410
        %v2412 = vrot.slane %v2398, %v2411
        %v2413 = vcombine.high %v2405, %v2405
        %v2414 = vcombine.high %v2412, %v2412
        %v2416 = vunpack.c.l.s4 1966171168
        %v2417 = vunpack.c.0.s8 %v2416
        %v2418 = vlaneseq
        %v2419 = vshrl.u32 %v2418, 7
        %v2420 = vsub.s32 %v2417, %v2419
        %v2421 = vrot.slane %v2405, %v2420
        %v2423 = vunpack.c.l.s4 1966171168
        %v2424 = vunpack.c.0.s8 %v2423
        %v2425 = vlaneseq
        %v2426 = vshrl.u32 %v2425, 7
        %v2427 = vsub.s32 %v2424, %v2426
        %v2428 = vrot.slane %v2412, %v2427
        %v2430 = vunpack.c.l.s4 1966171168
        %v2431 = vunpack.c.0.s8 %v2430
        %v2432 = vlaneseq
        %v2433 = vshrl.u32 %v2432, 7
        %v2434 = vsub.s32 %v2431, %v2433
        %v2435 = vrot.slane %v2413, %v2434
        %v2437 = vunpack.c.l.s4 1966171168
        %v2438 = vunpack.c.0.s8 %v2437
        %v2439 = vlaneseq
        %v2440 = vshrl.u32 %v2439, 7
        %v2441 = vsub.s32 %v2438, %v2440
        %v2442 = vrot.slane %v2414, %v2441
        %v2443 = vcombine.high %v2421, %v2421
        %v2444 = vcombine.high %v2428, %v2428
        %v2445 = vcombine.high %v2435, %v2435
        %v2446 = vcombine.high %v2442, %v2442
        %v2447 = vcombine.high %v205, %v205
        %v2449 = vunpack.c.l.s4 1966171168
        %v2450 = vunpack.c.0.s8 %v2449
        %v2451 = vlaneseq
        %v2452 = vshrl.u32 %v2451, 7
        %v2453 = vsub.s32 %v2450, %v2452
        %v2454 = vrot.slane %v205, %v2453
        %v2456 = vunpack.c.l.s4 1966171168
        %v2457 = vunpack.c.0.s8 %v2456
        %v2458 = vlaneseq
        %v2459 = vshrl.u32 %v2458, 7
        %v2460 = vsub.s32 %v2457, %v2459
        %v2461 = vrot.slane %v2447, %v2460
        %v2462 = vcombine.high %v2454, %v2454
        %v2463 = vcombine.high %v2461, %v2461
        %v2465 = vunpack.c.l.s4 1966171168
        %v2466 = vunpack.c.0.s8 %v2465
        %v2467 = vlaneseq
        %v2468 = vshrl.u32 %v2467, 7
        %v2469 = vsub.s32 %v2466, %v2468
        %v2470 = vrot.slane %v2454, %v2469
        %v2472 = vunpack.c.l.s4 1966171168
        %v2473 = vunpack.c.0.s8 %v2472
        %v2474 = vlaneseq
        %v2475 = vshrl.u32 %v2474, 7
        %v2476 = vsub.s32 %v2473, %v2475
        %v2477 = vrot.slane %v2461, %v2476
        %v2479 = vunpack.c.l.s4 1966171168
        %v2480 = vunpack.c.0.s8 %v2479
        %v2481 = vlaneseq
        %v2482 = vshrl.u32 %v2481, 7
        %v2483 = vsub.s32 %v2480, %v2482
        %v2484 = vrot.slane %v2462, %v2483
        %v2486 = vunpack.c.l.s4 1966171168
        %v2487 = vunpack.c.0.s8 %v2486
        %v2488 = vlaneseq
        %v2489 = vshrl.u32 %v2488, 7
        %v2490 = vsub.s32 %v2487, %v2489
        %v2491 = vrot.slane %v2463, %v2490
        %v2492 = vcombine.high %v2470, %v2470
        %v2493 = vcombine.high %v2477, %v2477
        %v2494 = vcombine.high %v2484, %v2484
        %v2495 = vcombine.high %v2491, %v2491
        %v2496 = vcombine.high %v206, %v206
        %v2498 = vunpack.c.l.s4 1966171168
        %v2499 = vunpack.c.0.s8 %v2498
        %v2500 = vlaneseq
        %v2501 = vshrl.u32 %v2500, 7
        %v2502 = vsub.s32 %v2499, %v2501
        %v2503 = vrot.slane %v206, %v2502
        %v2505 = vunpack.c.l.s4 1966171168
        %v2506 = vunpack.c.0.s8 %v2505
        %v2507 = vlaneseq
        %v2508 = vshrl.u32 %v2507, 7
        %v2509 = vsub.s32 %v2506, %v2508
        %v2510 = vrot.slane %v2496, %v2509
        %v2511 = vcombine.high %v2503, %v2503
        %v2512 = vcombine.high %v2510, %v2510
        %v2514 = vunpack.c.l.s4 1966171168
        %v2515 = vunpack.c.0.s8 %v2514
        %v2516 = vlaneseq
        %v2517 = vshrl.u32 %v2516, 7
        %v2518 = vsub.s32 %v2515, %v2517
        %v2519 = vrot.slane %v2503, %v2518
        %v2521 = vunpack.c.l.s4 1966171168
        %v2522 = vunpack.c.0.s8 %v2521
        %v2523 = vlaneseq
        %v2524 = vshrl.u32 %v2523, 7
        %v2525 = vsub.s32 %v2522, %v2524
        %v2526 = vrot.slane %v2510, %v2525
        %v2528 = vunpack.c.l.s4 1966171168
        %v2529 = vunpack.c.0.s8 %v2528
        %v2530 = vlaneseq
        %v2531 = vshrl.u32 %v2530, 7
        %v2532 = vsub.s32 %v2529, %v2531
        %v2533 = vrot.slane %v2511, %v2532
        %v2535 = vunpack.c.l.s4 1966171168
        %v2536 = vunpack.c.0.s8 %v2535
        %v2537 = vlaneseq
        %v2538 = vshrl.u32 %v2537, 7
        %v2539 = vsub.s32 %v2536, %v2538
        %v2540 = vrot.slane %v2512, %v2539
        %v2541 = vcombine.high %v2519, %v2519
        %v2542 = vcombine.high %v2526, %v2526
        %v2543 = vcombine.high %v2533, %v2533
        %v2544 = vcombine.high %v2540, %v2540
        %v2545 = vcombine.high %v207, %v207
        %v2547 = vunpack.c.l.s4 1966171168
        %v2548 = vunpack.c.0.s8 %v2547
        %v2549 = vlaneseq
        %v2550 = vshrl.u32 %v2549, 7
        %v2551 = vsub.s32 %v2548, %v2550
        %v2552 = vrot.slane %v207, %v2551
        %v2554 = vunpack.c.l.s4 1966171168
        %v2555 = vunpack.c.0.s8 %v2554
        %v2556 = vlaneseq
        %v2557 = vshrl.u32 %v2556, 7
        %v2558 = vsub.s32 %v2555, %v2557
        %v2559 = vrot.slane %v2545, %v2558
        %v2560 = vcombine.high %v2552, %v2552
        %v2561 = vcombine.high %v2559, %v2559
        %v2563 = vunpack.c.l.s4 1966171168
        %v2564 = vunpack.c.0.s8 %v2563
        %v2565 = vlaneseq
        %v2566 = vshrl.u32 %v2565, 7
        %v2567 = vsub.s32 %v2564, %v2566
        %v2568 = vrot.slane %v2552, %v2567
        %v2570 = vunpack.c.l.s4 1966171168
        %v2571 = vunpack.c.0.s8 %v2570
        %v2572 = vlaneseq
        %v2573 = vshrl.u32 %v2572, 7
        %v2574 = vsub.s32 %v2571, %v2573
        %v2575 = vrot.slane %v2559, %v2574
        %v2577 = vunpack.c.l.s4 1966171168
        %v2578 = vunpack.c.0.s8 %v2577
        %v2579 = vlaneseq
        %v2580 = vshrl.u32 %v2579, 7
        %v2581 = vsub.s32 %v2578, %v2580
        %v2582 = vrot.slane %v2560, %v2581
        %v2584 = vunpack.c.l.s4 1966171168
        %v2585 = vunpack.c.0.s8 %v2584
        %v2586 = vlaneseq
        %v2587 = vshrl.u32 %v2586, 7
        %v2588 = vsub.s32 %v2585, %v2587
        %v2589 = vrot.slane %v2561, %v2588
        %v2590 = vcombine.high %v2568, %v2568
        %v2591 = vcombine.high %v2575, %v2575
        %v2592 = vcombine.high %v2582, %v2582
        %v2593 = vcombine.high %v2589, %v2589
        %v2594 = vcombine.high %v208, %v208
        %v2596 = vunpack.c.l.s4 1966171168
        %v2597 = vunpack.c.0.s8 %v2596
        %v2598 = vlaneseq
        %v2599 = vshrl.u32 %v2598, 7
        %v2600 = vsub.s32 %v2597, %v2599
        %v2601 = vrot.slane %v208, %v2600
        %v2603 = vunpack.c.l.s4 1966171168
        %v2604 = vunpack.c.0.s8 %v2603
        %v2605 = vlaneseq
        %v2606 = vshrl.u32 %v2605, 7
        %v2607 = vsub.s32 %v2604, %v2606
        %v2608 = vrot.slane %v2594, %v2607
        %v2609 = vcombine.high %v2601, %v2601
        %v2610 = vcombine.high %v2608, %v2608
        %v2612 = vunpack.c.l.s4 1966171168
        %v2613 = vunpack.c.0.s8 %v2612
        %v2614 = vlaneseq
        %v2615 = vshrl.u32 %v2614, 7
        %v2616 = vsub.s32 %v2613, %v2615
        %v2617 = vrot.slane %v2601, %v2616
        %v2619 = vunpack.c.l.s4 1966171168
        %v2620 = vunpack.c.0.s8 %v2619
        %v2621 = vlaneseq
        %v2622 = vshrl.u32 %v2621, 7
        %v2623 = vsub.s32 %v2620, %v2622
        %v2624 = vrot.slane %v2608, %v2623
        %v2626 = vunpack.c.l.s4 1966171168
        %v2627 = vunpack.c.0.s8 %v2626
        %v2628 = vlaneseq
        %v2629 = vshrl.u32 %v2628, 7
        %v2630 = vsub.s32 %v2627, %v2629
        %v2631 = vrot.slane %v2609, %v2630
        %v2633 = vunpack.c.l.s4 1966171168
        %v2634 = vunpack.c.0.s8 %v2633
        %v2635 = vlaneseq
        %v2636 = vshrl.u32 %v2635, 7
        %v2637 = vsub.s32 %v2634, %v2636
        %v2638 = vrot.slane %v2610, %v2637
        %v2639 = vcombine.high %v2617, %v2617
        %v2640 = vcombine.high %v2624, %v2624
        %v2641 = vcombine.high %v2631, %v2631
        %v2642 = vcombine.high %v2638, %v2638
        %v2643 = vcombine.high %v209, %v209
        %v2645 = vunpack.c.l.s4 1966171168
        %v2646 = vunpack.c.0.s8 %v2645
        %v2647 = vlaneseq
        %v2648 = vshrl.u32 %v2647, 7
        %v2649 = vsub.s32 %v2646, %v2648
        %v2650 = vrot.slane %v209, %v2649
        %v2652 = vunpack.c.l.s4 1966171168
        %v2653 = vunpack.c.0.s8 %v2652
        %v2654 = vlaneseq
        %v2655 = vshrl.u32 %v2654, 7
        %v2656 = vsub.s32 %v2653, %v2655
        %v2657 = vrot.slane %v2643, %v2656
        %v2658 = vcombine.high %v2650, %v2650
        %v2659 = vcombine.high %v2657, %v2657
        %v2661 = vunpack.c.l.s4 1966171168
        %v2662 = vunpack.c.0.s8 %v2661
        %v2663 = vlaneseq
        %v2664 = vshrl.u32 %v2663, 7
        %v2665 = vsub.s32 %v2662, %v2664
        %v2666 = vrot.slane %v2650, %v2665
        %v2668 = vunpack.c.l.s4 1966171168
        %v2669 = vunpack.c.0.s8 %v2668
        %v2670 = vlaneseq
        %v2671 = vshrl.u32 %v2670, 7
        %v2672 = vsub.s32 %v2669, %v2671
        %v2673 = vrot.slane %v2657, %v2672
        %v2675 = vunpack.c.l.s4 1966171168
        %v2676 = vunpack.c.0.s8 %v2675
        %v2677 = vlaneseq
        %v2678 = vshrl.u32 %v2677, 7
        %v2679 = vsub.s32 %v2676, %v2678
        %v2680 = vrot.slane %v2658, %v2679
        %v2682 = vunpack.c.l.s4 1966171168
        %v2683 = vunpack.c.0.s8 %v2682
        %v2684 = vlaneseq
        %v2685 = vshrl.u32 %v2684, 7
        %v2686 = vsub.s32 %v2683, %v2685
        %v2687 = vrot.slane %v2659, %v2686
        %v2688 = vcombine.high %v2666, %v2666
        %v2689 = vcombine.high %v2673, %v2673
        %v2690 = vcombine.high %v2680, %v2680
        %v2691 = vcombine.high %v2687, %v2687
        %v2692 = vcombine.high %v210, %v210
        %v2694 = vunpack.c.l.s4 1966171168
        %v2695 = vunpack.c.0.s8 %v2694
        %v2696 = vlaneseq
        %v2697 = vshrl.u32 %v2696, 7
        %v2698 = vsub.s32 %v2695, %v2697
        %v2699 = vrot.slane %v210, %v2698
        %v2701 = vunpack.c.l.s4 1966171168
        %v2702 = vunpack.c.0.s8 %v2701
        %v2703 = vlaneseq
        %v2704 = vshrl.u32 %v2703, 7
        %v2705 = vsub.s32 %v2702, %v2704
        %v2706 = vrot.slane %v2692, %v2705
        %v2707 = vcombine.high %v2699, %v2699
        %v2708 = vcombine.high %v2706, %v2706
        %v2710 = vunpack.c.l.s4 1966171168
        %v2711 = vunpack.c.0.s8 %v2710
        %v2712 = vlaneseq
        %v2713 = vshrl.u32 %v2712, 7
        %v2714 = vsub.s32 %v2711, %v2713
        %v2715 = vrot.slane %v2699, %v2714
        %v2717 = vunpack.c.l.s4 1966171168
        %v2718 = vunpack.c.0.s8 %v2717
        %v2719 = vlaneseq
        %v2720 = vshrl.u32 %v2719, 7
        %v2721 = vsub.s32 %v2718, %v2720
        %v2722 = vrot.slane %v2706, %v2721
        %v2724 = vunpack.c.l.s4 1966171168
        %v2725 = vunpack.c.0.s8 %v2724
        %v2726 = vlaneseq
        %v2727 = vshrl.u32 %v2726, 7
        %v2728 = vsub.s32 %v2725, %v2727
        %v2729 = vrot.slane %v2707, %v2728
        %v2731 = vunpack.c.l.s4 1966171168
        %v2732 = vunpack.c.0.s8 %v2731
        %v2733 = vlaneseq
        %v2734 = vshrl.u32 %v2733, 7
        %v2735 = vsub.s32 %v2732, %v2734
        %v2736 = vrot.slane %v2708, %v2735
        %v2737 = vcombine.high %v2715, %v2715
        %v2738 = vcombine.high %v2722, %v2722
        %v2739 = vcombine.high %v2729, %v2729
        %v2740 = vcombine.high %v2736, %v2736
        %v2741 = vcombine.high %v211, %v211
        %v2743 = vunpack.c.l.s4 1966171168
        %v2744 = vunpack.c.0.s8 %v2743
        %v2745 = vlaneseq
        %v2746 = vshrl.u32 %v2745, 7
        %v2747 = vsub.s32 %v2744, %v2746
        %v2748 = vrot.slane %v211, %v2747
        %v2750 = vunpack.c.l.s4 1966171168
        %v2751 = vunpack.c.0.s8 %v2750
        %v2752 = vlaneseq
        %v2753 = vshrl.u32 %v2752, 7
        %v2754 = vsub.s32 %v2751, %v2753
        %v2755 = vrot.slane %v2741, %v2754
        %v2756 = vcombine.high %v2748, %v2748
        %v2757 = vcombine.high %v2755, %v2755
        %v2759 = vunpack.c.l.s4 1966171168
        %v2760 = vunpack.c.0.s8 %v2759
        %v2761 = vlaneseq
        %v2762 = vshrl.u32 %v2761, 7
        %v2763 = vsub.s32 %v2760, %v2762
        %v2764 = vrot.slane %v2748, %v2763
        %v2766 = vunpack.c.l.s4 1966171168
        %v2767 = vunpack.c.0.s8 %v2766
        %v2768 = vlaneseq
        %v2769 = vshrl.u32 %v2768, 7
        %v2770 = vsub.s32 %v2767, %v2769
        %v2771 = vrot.slane %v2755, %v2770
        %v2773 = vunpack.c.l.s4 1966171168
        %v2774 = vunpack.c.0.s8 %v2773
        %v2775 = vlaneseq
        %v2776 = vshrl.u32 %v2775, 7
        %v2777 = vsub.s32 %v2774, %v2776
        %v2778 = vrot.slane %v2756, %v2777
        %v2780 = vunpack.c.l.s4 1966171168
        %v2781 = vunpack.c.0.s8 %v2780
        %v2782 = vlaneseq
        %v2783 = vshrl.u32 %v2782, 7
        %v2784 = vsub.s32 %v2781, %v2783
        %v2785 = vrot.slane %v2757, %v2784
        %v2786 = vcombine.high %v2764, %v2764
        %v2787 = vcombine.high %v2771, %v2771
        %v2788 = vcombine.high %v2778, %v2778
        %v2789 = vcombine.high %v2785, %v2785
        %v2790 = vcombine.high %v212, %v212
        %v2792 = vunpack.c.l.s4 1966171168
        %v2793 = vunpack.c.0.s8 %v2792
        %v2794 = vlaneseq
        %v2795 = vshrl.u32 %v2794, 7
        %v2796 = vsub.s32 %v2793, %v2795
        %v2797 = vrot.slane %v212, %v2796
        %v2799 = vunpack.c.l.s4 1966171168
        %v2800 = vunpack.c.0.s8 %v2799
        %v2801 = vlaneseq
        %v2802 = vshrl.u32 %v2801, 7
        %v2803 = vsub.s32 %v2800, %v2802
        %v2804 = vrot.slane %v2790, %v2803
        %v2805 = vcombine.high %v2797, %v2797
        %v2806 = vcombine.high %v2804, %v2804
        %v2808 = vunpack.c.l.s4 1966171168
        %v2809 = vunpack.c.0.s8 %v2808
        %v2810 = vlaneseq
        %v2811 = vshrl.u32 %v2810, 7
        %v2812 = vsub.s32 %v2809, %v2811
        %v2813 = vrot.slane %v2797, %v2812
        %v2815 = vunpack.c.l.s4 1966171168
        %v2816 = vunpack.c.0.s8 %v2815
        %v2817 = vlaneseq
        %v2818 = vshrl.u32 %v2817, 7
        %v2819 = vsub.s32 %v2816, %v2818
        %v2820 = vrot.slane %v2804, %v2819
        %v2822 = vunpack.c.l.s4 1966171168
        %v2823 = vunpack.c.0.s8 %v2822
        %v2824 = vlaneseq
        %v2825 = vshrl.u32 %v2824, 7
        %v2826 = vsub.s32 %v2823, %v2825
        %v2827 = vrot.slane %v2805, %v2826
        %v2829 = vunpack.c.l.s4 1966171168
        %v2830 = vunpack.c.0.s8 %v2829
        %v2831 = vlaneseq
        %v2832 = vshrl.u32 %v2831, 7
        %v2833 = vsub.s32 %v2830, %v2832
        %v2834 = vrot.slane %v2806, %v2833
        %v2835 = vcombine.high %v2813, %v2813
        %v2836 = vcombine.high %v2820, %v2820
        %v2837 = vcombine.high %v2827, %v2827
        %v2838 = vcombine.high %v2834, %v2834
        %v2839 = vcombine.high %v213, %v213
        %v2841 = vunpack.c.l.s4 1966171168
        %v2842 = vunpack.c.0.s8 %v2841
        %v2843 = vlaneseq
        %v2844 = vshrl.u32 %v2843, 7
        %v2845 = vsub.s32 %v2842, %v2844
        %v2846 = vrot.slane %v213, %v2845
        %v2848 = vunpack.c.l.s4 1966171168
        %v2849 = vunpack.c.0.s8 %v2848
        %v2850 = vlaneseq
        %v2851 = vshrl.u32 %v2850, 7
        %v2852 = vsub.s32 %v2849, %v2851
        %v2853 = vrot.slane %v2839, %v2852
        %v2854 = vcombine.high %v2846, %v2846
        %v2855 = vcombine.high %v2853, %v2853
        %v2857 = vunpack.c.l.s4 1966171168
        %v2858 = vunpack.c.0.s8 %v2857
        %v2859 = vlaneseq
        %v2860 = vshrl.u32 %v2859, 7
        %v2861 = vsub.s32 %v2858, %v2860
        %v2862 = vrot.slane %v2846, %v2861
        %v2864 = vunpack.c.l.s4 1966171168
        %v2865 = vunpack.c.0.s8 %v2864
        %v2866 = vlaneseq
        %v2867 = vshrl.u32 %v2866, 7
        %v2868 = vsub.s32 %v2865, %v2867
        %v2869 = vrot.slane %v2853, %v2868
        %v2871 = vunpack.c.l.s4 1966171168
        %v2872 = vunpack.c.0.s8 %v2871
        %v2873 = vlaneseq
        %v2874 = vshrl.u32 %v2873, 7
        %v2875 = vsub.s32 %v2872, %v2874
        %v2876 = vrot.slane %v2854, %v2875
        %v2878 = vunpack.c.l.s4 1966171168
        %v2879 = vunpack.c.0.s8 %v2878
        %v2880 = vlaneseq
        %v2881 = vshrl.u32 %v2880, 7
        %v2882 = vsub.s32 %v2879, %v2881
        %v2883 = vrot.slane %v2855, %v2882
        %v2884 = vcombine.high %v2862, %v2862
        %v2885 = vcombine.high %v2869, %v2869
        %v2886 = vcombine.high %v2876, %v2876
        %v2887 = vcombine.high %v2883, %v2883
        %v2888 = vcombine.high %v214, %v214
        %v2890 = vunpack.c.l.s4 1966171168
        %v2891 = vunpack.c.0.s8 %v2890
        %v2892 = vlaneseq
        %v2893 = vshrl.u32 %v2892, 7
        %v2894 = vsub.s32 %v2891, %v2893
        %v2895 = vrot.slane %v214, %v2894
        %v2897 = vunpack.c.l.s4 1966171168
        %v2898 = vunpack.c.0.s8 %v2897
        %v2899 = vlaneseq
        %v2900 = vshrl.u32 %v2899, 7
        %v2901 = vsub.s32 %v2898, %v2900
        %v2902 = vrot.slane %v2888, %v2901
        %v2903 = vcombine.high %v2895, %v2895
        %v2904 = vcombine.high %v2902, %v2902
        %v2906 = vunpack.c.l.s4 1966171168
        %v2907 = vunpack.c.0.s8 %v2906
        %v2908 = vlaneseq
        %v2909 = vshrl.u32 %v2908, 7
        %v2910 = vsub.s32 %v2907, %v2909
        %v2911 = vrot.slane %v2895, %v2910
        %v2913 = vunpack.c.l.s4 1966171168
        %v2914 = vunpack.c.0.s8 %v2913
        %v2915 = vlaneseq
        %v2916 = vshrl.u32 %v2915, 7
        %v2917 = vsub.s32 %v2914, %v2916
        %v2918 = vrot.slane %v2902, %v2917
        %v2920 = vunpack.c.l.s4 1966171168
        %v2921 = vunpack.c.0.s8 %v2920
        %v2922 = vlaneseq
        %v2923 = vshrl.u32 %v2922, 7
        %v2924 = vsub.s32 %v2921, %v2923
        %v2925 = vrot.slane %v2903, %v2924
        %v2927 = vunpack.c.l.s4 1966171168
        %v2928 = vunpack.c.0.s8 %v2927
        %v2929 = vlaneseq
        %v2930 = vshrl.u32 %v2929, 7
        %v2931 = vsub.s32 %v2928, %v2930
        %v2932 = vrot.slane %v2904, %v2931
        %v2933 = vcombine.high %v2911, %v2911
        %v2934 = vcombine.high %v2918, %v2918
        %v2935 = vcombine.high %v2925, %v2925
        %v2936 = vcombine.high %v2932, %v2932
        %v2937 = vcombine.high %v215, %v215
        %v2939 = vunpack.c.l.s4 1966171168
        %v2940 = vunpack.c.0.s8 %v2939
        %v2941 = vlaneseq
        %v2942 = vshrl.u32 %v2941, 7
        %v2943 = vsub.s32 %v2940, %v2942
        %v2944 = vrot.slane %v215, %v2943
        %v2946 = vunpack.c.l.s4 1966171168
        %v2947 = vunpack.c.0.s8 %v2946
        %v2948 = vlaneseq
        %v2949 = vshrl.u32 %v2948, 7
        %v2950 = vsub.s32 %v2947, %v2949
        %v2951 = vrot.slane %v2937, %v2950
        %v2952 = vcombine.high %v2944, %v2944
        %v2953 = vcombine.high %v2951, %v2951
        %v2955 = vunpack.c.l.s4 1966171168
        %v2956 = vunpack.c.0.s8 %v2955
        %v2957 = vlaneseq
        %v2958 = vshrl.u32 %v2957, 7
        %v2959 = vsub.s32 %v2956, %v2958
        %v2960 = vrot.slane %v2944, %v2959
        %v2962 = vunpack.c.l.s4 1966171168
        %v2963 = vunpack.c.0.s8 %v2962
        %v2964 = vlaneseq
        %v2965 = vshrl.u32 %v2964, 7
        %v2966 = vsub.s32 %v2963, %v2965
        %v2967 = vrot.slane %v2951, %v2966
        %v2969 = vunpack.c.l.s4 1966171168
        %v2970 = vunpack.c.0.s8 %v2969
        %v2971 = vlaneseq
        %v2972 = vshrl.u32 %v2971, 7
        %v2973 = vsub.s32 %v2970, %v2972
        %v2974 = vrot.slane %v2952, %v2973
        %v2976 = vunpack.c.l.s4 1966171168
        %v2977 = vunpack.c.0.s8 %v2976
        %v2978 = vlaneseq
        %v2979 = vshrl.u32 %v2978, 7
        %v2980 = vsub.s32 %v2977, %v2979
        %v2981 = vrot.slane %v2953, %v2980
        %v2982 = vcombine.high %v2960, %v2960
        %v2983 = vcombine.high %v2967, %v2967
        %v2984 = vcombine.high %v2974, %v2974
        %v2985 = vcombine.high %v2981, %v2981
        %v2986 = vcombine.high %v216, %v216
        %v2988 = vunpack.c.l.s4 1966171168
        %v2989 = vunpack.c.0.s8 %v2988
        %v2990 = vlaneseq
        %v2991 = vshrl.u32 %v2990, 7
        %v2992 = vsub.s32 %v2989, %v2991
        %v2993 = vrot.slane %v216, %v2992
        %v2995 = vunpack.c.l.s4 1966171168
        %v2996 = vunpack.c.0.s8 %v2995
        %v2997 = vlaneseq
        %v2998 = vshrl.u32 %v2997, 7
        %v2999 = vsub.s32 %v2996, %v2998
        %v3000 = vrot.slane %v2986, %v2999
        %v3001 = vcombine.high %v2993, %v2993
        %v3002 = vcombine.high %v3000, %v3000
        %v3004 = vunpack.c.l.s4 1966171168
        %v3005 = vunpack.c.0.s8 %v3004
        %v3006 = vlaneseq
        %v3007 = vshrl.u32 %v3006, 7
        %v3008 = vsub.s32 %v3005, %v3007
        %v3009 = vrot.slane %v2993, %v3008
        %v3011 = vunpack.c.l.s4 1966171168
        %v3012 = vunpack.c.0.s8 %v3011
        %v3013 = vlaneseq
        %v3014 = vshrl.u32 %v3013, 7
        %v3015 = vsub.s32 %v3012, %v3014
        %v3016 = vrot.slane %v3000, %v3015
        %v3018 = vunpack.c.l.s4 1966171168
        %v3019 = vunpack.c.0.s8 %v3018
        %v3020 = vlaneseq
        %v3021 = vshrl.u32 %v3020, 7
        %v3022 = vsub.s32 %v3019, %v3021
        %v3023 = vrot.slane %v3001, %v3022
        %v3025 = vunpack.c.l.s4 1966171168
        %v3026 = vunpack.c.0.s8 %v3025
        %v3027 = vlaneseq
        %v3028 = vshrl.u32 %v3027, 7
        %v3029 = vsub.s32 %v3026, %v3028
        %v3030 = vrot.slane %v3002, %v3029
        %v3031 = vcombine.high %v3009, %v3009
        %v3032 = vcombine.high %v3016, %v3016
        %v3033 = vcombine.high %v3023, %v3023
        %v3034 = vcombine.high %v3030, %v3030
        %v3035 = vcombine.high %v217, %v217
        %v3037 = vunpack.c.l.s4 1966171168
        %v3038 = vunpack.c.0.s8 %v3037
        %v3039 = vlaneseq
        %v3040 = vshrl.u32 %v3039, 7
        %v3041 = vsub.s32 %v3038, %v3040
        %v3042 = vrot.slane %v217, %v3041
        %v3044 = vunpack.c.l.s4 1966171168
        %v3045 = vunpack.c.0.s8 %v3044
        %v3046 = vlaneseq
        %v3047 = vshrl.u32 %v3046, 7
        %v3048 = vsub.s32 %v3045, %v3047
        %v3049 = vrot.slane %v3035, %v3048
        %v3050 = vcombine.high %v3042, %v3042
        %v3051 = vcombine.high %v3049, %v3049
        %v3053 = vunpack.c.l.s4 1966171168
        %v3054 = vunpack.c.0.s8 %v3053
        %v3055 = vlaneseq
        %v3056 = vshrl.u32 %v3055, 7
        %v3057 = vsub.s32 %v3054, %v3056
        %v3058 = vrot.slane %v3042, %v3057
        %v3060 = vunpack.c.l.s4 1966171168
        %v3061 = vunpack.c.0.s8 %v3060
        %v3062 = vlaneseq
        %v3063 = vshrl.u32 %v3062, 7
        %v3064 = vsub.s32 %v3061, %v3063
        %v3065 = vrot.slane %v3049, %v3064
        %v3067 = vunpack.c.l.s4 1966171168
        %v3068 = vunpack.c.0.s8 %v3067
        %v3069 = vlaneseq
        %v3070 = vshrl.u32 %v3069, 7
        %v3071 = vsub.s32 %v3068, %v3070
        %v3072 = vrot.slane %v3050, %v3071
        %v3074 = vunpack.c.l.s4 1966171168
        %v3075 = vunpack.c.0.s8 %v3074
        %v3076 = vlaneseq
        %v3077 = vshrl.u32 %v3076, 7
        %v3078 = vsub.s32 %v3075, %v3077
        %v3079 = vrot.slane %v3051, %v3078
        %v3080 = vcombine.high %v3058, %v3058
        %v3081 = vcombine.high %v3065, %v3065
        %v3082 = vcombine.high %v3072, %v3072
        %v3083 = vcombine.high %v3079, %v3079
        %v3084 = vcombine.high %v218, %v218
        %v3086 = vunpack.c.l.s4 1966171168
        %v3087 = vunpack.c.0.s8 %v3086
        %v3088 = vlaneseq
        %v3089 = vshrl.u32 %v3088, 7
        %v3090 = vsub.s32 %v3087, %v3089
        %v3091 = vrot.slane %v218, %v3090
        %v3093 = vunpack.c.l.s4 1966171168
        %v3094 = vunpack.c.0.s8 %v3093
        %v3095 = vlaneseq
        %v3096 = vshrl.u32 %v3095, 7
        %v3097 = vsub.s32 %v3094, %v3096
        %v3098 = vrot.slane %v3084, %v3097
        %v3099 = vcombine.high %v3091, %v3091
        %v3100 = vcombine.high %v3098, %v3098
        %v3102 = vunpack.c.l.s4 1966171168
        %v3103 = vunpack.c.0.s8 %v3102
        %v3104 = vlaneseq
        %v3105 = vshrl.u32 %v3104, 7
        %v3106 = vsub.s32 %v3103, %v3105
        %v3107 = vrot.slane %v3091, %v3106
        %v3109 = vunpack.c.l.s4 1966171168
        %v3110 = vunpack.c.0.s8 %v3109
        %v3111 = vlaneseq
        %v3112 = vshrl.u32 %v3111, 7
        %v3113 = vsub.s32 %v3110, %v3112
        %v3114 = vrot.slane %v3098, %v3113
        %v3116 = vunpack.c.l.s4 1966171168
        %v3117 = vunpack.c.0.s8 %v3116
        %v3118 = vlaneseq
        %v3119 = vshrl.u32 %v3118, 7
        %v3120 = vsub.s32 %v3117, %v3119
        %v3121 = vrot.slane %v3099, %v3120
        %v3123 = vunpack.c.l.s4 1966171168
        %v3124 = vunpack.c.0.s8 %v3123
        %v3125 = vlaneseq
        %v3126 = vshrl.u32 %v3125, 7
        %v3127 = vsub.s32 %v3124, %v3126
        %v3128 = vrot.slane %v3100, %v3127
        %v3129 = vcombine.high %v3107, %v3107
        %v3130 = vcombine.high %v3114, %v3114
        %v3131 = vcombine.high %v3121, %v3121
        %v3132 = vcombine.high %v3128, %v3128
        %v3134 = vunpack.c.l.s4 1966171168
        %v3135 = vunpack.c.0.s8 %v3134
        %v3136 = vlaneseq
        %v3137 = vshrl.u32 %v3136, 7
        %v3138 = vsub.s32 %v3135, %v3137
        %v3139 = vrot.slane %v219, %v3138
        %v3140 = vcombine.high %v3139, %v3139
        %v3142 = vunpack.c.l.s4 1966171168
        %v3143 = vunpack.c.0.s8 %v3142
        %v3144 = vlaneseq
        %v3145 = vshrl.u32 %v3144, 7
        %v3146 = vsub.s32 %v3143, %v3145
        %v3147 = vrot.slane %v3139, %v3146
        %v3149 = vunpack.c.l.s4 1966171168
        %v3150 = vunpack.c.0.s8 %v3149
        %v3151 = vlaneseq
        %v3152 = vshrl.u32 %v3151, 7
        %v3153 = vsub.s32 %v3150, %v3152
        %v3154 = vrot.slane %v3140, %v3153
        %v3155 = vcombine.high %v3147, %v3147
        %v3156 = vcombine.high %v3154, %v3154
        %v5401 = vunpack.c.l.b16 %v220
        %v5402 = vunpack.c.l.b16 %v221
        %v5403 = vunpack.c.l.b16 %v222
        %v5404 = vunpack.c.l.b16 %v223
        %v5405 = vunpack.c.l.b16 %v224
        %v5406 = vunpack.c.l.b16 %v225
        %v5407 = vunpack.c.l.b16 %v226
        %v5408 = vunpack.c.l.b16 %v227
        %v5409 = vunpack.c.l.b16 %v228
        %v5410 = vunpack.c.l.b16 %v229
        %v5411 = vunpack.c.l.b16 %v230
        %v5412 = vunpack.c.l.b16 %v231
        %v5413 = vunpack.c.l.b16 %v232
        %v5414 = vunpack.c.l.b16 %v233
        %v5415 = vunpack.c.l.b16 %v234
        %v5416 = vunpack.c.l.b16 %v235
        %v5417 = vunpack.c.l.b16 %v236
        %v5418 = vunpack.c.l.b16 %v237
        %v5419 = vunpack.c.l.b16 %v238
        %v5420 = vunpack.c.l.b16 %v239
        %v5421 = vunpack.c.l.b16 %v240
        %v5422 = vunpack.c.l.b16 %v241
        %v5423 = vunpack.c.l.b16 %v242
        %v5424 = vunpack.c.l.b16 %v243
        %v5425 = vunpack.c.l.b16 %v244
        %v5426 = vunpack.c.l.b16 %v245
        %v5427 = vunpack.c.l.b16 %v246
        %v5428 = vunpack.c.l.b16 %v247
        %v5429 = vunpack.c.l.b16 %v248
        %v5430 = vunpack.c.l.b16 %v249
        %v5431 = vunpack.c.l.b16 %v250
        %v5432 = vunpack.c.l.b16 %v251
        %v5433 = vunpack.c.l.b16 %v252
        %v5434 = vunpack.c.l.b16 %v253
        %v5435 = vunpack.c.l.b16 %v254
        %v5436 = vunpack.c.l.b16 %v255
        %v5437 = vunpack.c.l.b16 %v256
        %v5438 = vunpack.c.l.b16 %v257
        %v5439 = vunpack.c.l.b16 %v258
        %v5440 = vunpack.c.l.b16 %v259
        %v5441 = vunpack.c.l.b16 %v260
        %v5442 = vunpack.c.l.b16 %v261
        %v5443 = vunpack.c.l.b16 %v262
        %v5444 = vunpack.c.l.b16 %v263
        %v5445 = vunpack.c.l.b16 %v264
        %v5446 = vunpack.c.l.b16 %v265
        %v5447 = vunpack.c.l.b16 %v266
        %v5448 = vunpack.c.l.b16 %v267
        %v5449 = vunpack.c.l.b16 %v268
        %v5450 = vunpack.c.l.b16 %v269
        %v5451 = vunpack.c.l.b16 %v270
        %v5452 = vunpack.c.l.b16 %v271
        %v5453 = vunpack.c.l.b16 %v272
        %v5454 = vunpack.c.l.b16 %v273
        %v5455 = vunpack.c.l.b16 %v274
        %v5456 = vunpack.c.l.b16 %v275
        %v5457 = vunpack.c.l.b16 %v276
        %v5458 = vunpack.c.l.b16 %v277
        %v5459 = vunpack.c.l.b16 %v278
        %v5460 = vunpack.c.l.b16 %v279
        %v5461 = vunpack.c.l.b16 %v280
        %v5462 = vunpack.c.l.b16 %v281
        %v5463 = vunpack.c.l.b16 %v282
        %v5464 = vunpack.c.l.b16 %v283
        %v5465 = vunpack.c.l.b16 %v284
        %v5466 = vunpack.c.l.b16 %v285
        %v5467 = vunpack.c.l.b16 %v286
        %v5468 = vunpack.c.l.b16 %v287
        %v5469 = vunpack.c.l.b16 %v288
        %v5470 = vunpack.c.l.b16 %v289
        %v5471 = vunpack.c.l.b16 %v290
        %v5472 = vunpack.c.l.b16 %v291
        %v5473 = vunpack.c.l.b16 %v292
        %v5474 = vunpack.c.l.b16 %v293
        %v5475 = vunpack.c.l.b16 %v294
        %v5476 = vunpack.c.l.b16 %v295
        %v5477 = vunpack.c.l.b16 %v296
        %v5478 = vunpack.c.l.b16 %v297
        %v5479 = vunpack.c.l.b16 %v298
        %v5480 = vunpack.c.l.b16 %v299
        %v5481 = vunpack.c.l.b16 %v300
        %v5482 = vunpack.c.l.b16 %v301
        %v5483 = vunpack.c.l.b16 %v302
        %v5484 = vunpack.c.l.b16 %v303
        %v5485 = vunpack.c.l.b16 %v304
        %v5486 = vunpack.c.l.b16 %v305
        %v5487 = vunpack.c.l.b16 %v306
        %v5488 = vunpack.c.l.b16 %v307
        %v5489 = vunpack.c.l.b16 %v308
        %v5490 = vunpack.c.l.b16 %v309
        %v5491 = vunpack.c.l.b16 %v310
        %v5492 = vunpack.c.l.b16 %v311
        %v5493 = vunpack.c.l.b16 %v312
        %v5494 = vunpack.c.l.b16 %v313
        %v5495 = vunpack.c.l.b16 %v314
        %v5496 = vunpack.c.l.b16 %v315
        %v5497 = vunpack.c.l.b16 %v316
        %v5498 = vunpack.c.l.b16 %v317
        %v5499 = vunpack.c.l.b16 %v318
        %v5500 = vunpack.c.l.b16 %v319
        %v5501 = vunpack.c.l.b16 %v320
        %v5502 = vunpack.c.l.b16 %v321
        %v5503 = vunpack.c.l.b16 %v322
        %v5504 = vunpack.c.l.b16 %v323
        %v5505 = vunpack.c.l.b16 %v324
        %v5506 = vunpack.c.l.b16 %v325
        %v5507 = vunpack.c.l.b16 %v326
        %v5508 = vunpack.c.l.b16 %v327
        %v5509 = vunpack.c.l.b16 %v328
        %v5510 = vunpack.c.l.b16 %v329
        %v5511 = vunpack.c.l.b16 %v330
        %v5512 = vunpack.c.l.b16 %v331
        %v5513 = vunpack.c.l.b16 %v332
        %v5514 = vunpack.c.l.b16 %v333
        %v5515 = vunpack.c.l.b16 %v334
        %v5516 = vunpack.c.l.b16 %v335
        %v5517 = vunpack.c.l.b16 %v336
        %v5518 = vunpack.c.l.b16 %v337
        %v5519 = vunpack.c.l.b16 %v338
        %v5520 = vunpack.c.l.b16 %v339
        %v5521 = vunpack.c.l.b16 %v340
        %v5522 = vunpack.c.l.b16 %v341
        %v5523 = vunpack.c.l.b16 %v342
        %v5524 = vunpack.c.l.b16 %v343
        %v5525 = vunpack.c.l.b16 %v344
        %v5526 = vunpack.c.l.b16 %v345
        %v5527 = vunpack.c.l.b16 %v346
        %v5528 = vunpack.c.l.b16 %v347
        %v5529 = vunpack.c.l.b16 %v348
        %v5530 = vunpack.c.l.b16 %v349
        %v5531 = vunpack.c.l.b16 %v350
        %v5532 = vunpack.c.l.b16 %v351
        %v5533 = vunpack.c.l.b16 %v352
        %v5534 = vunpack.c.l.b16 %v353
        %v5535 = vunpack.c.l.b16 %v354
        %v5536 = vunpack.c.l.b16 %v355
        %v5537 = vunpack.c.l.b16 %v356
        %v5538 = vunpack.c.l.b16 %v357
        %v5539 = vunpack.c.l.b16 %v358
        %v5540 = vunpack.c.l.b16 %v359
        %v5541 = vunpack.c.l.b16 %v360
        %v5542 = vunpack.c.l.b16 %v361
        %v5543 = vunpack.c.l.b16 %v362
        %v5544 = vunpack.c.l.b16 %v363
        %v5545 = vunpack.c.l.b16 %v364
        %v5546 = vunpack.c.l.b16 %v365
        %v5547 = vunpack.c.l.b16 %v366
        %v5548 = vunpack.c.l.b16 %v367
        %v5549 = vunpack.c.l.b16 %v368
        %v5550 = vunpack.c.l.b16 %v369
        %v5551 = vunpack.c.l.b16 %v370
        %v5552 = vunpack.c.l.b16 %v371
        %v5553 = vunpack.c.l.b16 %v372
        %v5554 = vunpack.c.l.b16 %v373
        %v5555 = vunpack.c.l.b16 %v374
        %v5556 = vunpack.c.l.b16 %v375
        %v5557 = vunpack.c.l.b16 %v376
        %v5558 = vunpack.c.l.b16 %v377
        %v5559 = vunpack.c.l.b16 %v378
        %v5560 = vunpack.c.l.b16 %v379
        %v5561 = vunpack.c.l.b16 %v380
        %v5562 = vunpack.c.l.b16 %v381
        %v5563 = vunpack.c.l.b16 %v382
        %v5564 = vunpack.c.l.b16 %v383
        %v5565 = vunpack.c.l.b16 %v384
        %v5566 = vunpack.c.l.b16 %v385
        %v5567 = vunpack.c.l.b16 %v386
        %v5568 = vunpack.c.l.b16 %v387
        %v5569 = vunpack.c.l.b16 %v388
        %v5570 = vunpack.c.l.b16 %v389
        %v5571 = vunpack.c.l.b16 %v390
        %v5572 = vunpack.c.l.b16 %v391
        %v5573 = vunpack.c.l.b16 %v392
        %v5574 = vunpack.c.l.b16 %v393
        %v5575 = vunpack.c.l.b16 %v394
        %v5576 = vunpack.c.l.b16 %v395
        %v5577 = vunpack.c.l.b16 %v396
        %v5578 = vunpack.c.l.b16 %v397
        %v5579 = vunpack.c.l.b16 %v398
        %v5580 = vunpack.c.l.b16 %v399
        %v5581 = vunpack.c.l.b16 %v400
        %v5582 = vunpack.c.l.b16 %v401
        %v5583 = vunpack.c.l.b16 %v402
        %v5584 = vunpack.c.l.b16 %v403
        %v5585 = vunpack.c.l.b16 %v404
        %v5586 = vunpack.c.l.b16 %v405
        %v5587 = vunpack.c.l.b16 %v406
        %v5588 = vunpack.c.l.b16 %v407
        %v5589 = vunpack.c.l.b16 %v408
        %v5590 = vunpack.c.l.b16 %v409
        %v5591 = vunpack.c.l.b16 %v410
        %v5592 = vunpack.c.l.b16 %v411
        %v5593 = vunpack.c.l.b16 %v412
        %v5594 = vunpack.c.l.b16 %v413
        %v5595 = vunpack.c.l.b16 %v414
        %v5596 = vunpack.c.l.b16 %v415
        %v5597 = vunpack.c.l.b16 %v416
        %v5598 = vunpack.c.l.b16 %v417
        %v5599 = vunpack.c.l.b16 %v418
        %v5600 = vunpack.c.l.b16 %v419
        %v5601 = vunpack.c.l.b16 %v420
        %v5602 = vunpack.c.l.b16 %v421
        %v5603 = vunpack.c.l.b16 %v422
        %v5604 = vunpack.c.l.b16 %v423
        %v5605 = vunpack.c.l.b16 %v424
        %v5606 = vunpack.c.l.b16 %v425
        %v5607 = vunpack.c.l.b16 %v426
        %v5608 = vunpack.c.l.b16 %v427
        %v5609 = vunpack.c.l.b16 %v428
        %v5610 = vunpack.c.l.b16 %v429
        %v5611 = vunpack.c.l.b16 %v430
        %v5612 = vunpack.c.l.b16 %v431
        %v5613 = vunpack.c.l.b16 %v432
        %v5614 = vunpack.c.l.b16 %v433
        %v5615 = vunpack.c.l.b16 %v434
        %v5616 = vunpack.c.l.b16 %v435
        %v5617 = vunpack.c.l.b16 %v436
        %v5618 = vunpack.c.l.b16 %v437
        %v5619 = vunpack.c.l.b16 %v438
        %v5620 = vunpack.c.l.b16 %v439
        %v5621 = vunpack.c.l.b16 %v440
        %v5622 = vunpack.c.l.b16 %v441
        %v5623 = vunpack.c.l.b16 %v442
        %v5624 = vunpack.c.l.b16 %v443
        %v5625 = vunpack.c.l.b16 %v444
        %v5626 = vunpack.c.l.b16 %v445
        %v5627 = vunpack.c.l.b16 %v446
        %v5628 = vunpack.c.l.b16 %v447
        %v5629 = vunpack.c.l.b16 %v448
        %v5630 = vunpack.c.l.b16 %v449
        %v5631 = vunpack.c.l.b16 %v450
        %v5632 = vunpack.c.l.b16 %v451
        %v5633 = vunpack.c.l.b16 %v452
        %v5634 = vunpack.c.l.b16 %v453
        %v5635 = vunpack.c.l.b16 %v454
        %v5636 = vunpack.c.l.b16 %v455
        %v5637 = vunpack.c.l.b16 %v456
        %v5638 = vunpack.c.l.b16 %v457
        %v5639 = vunpack.c.l.b16 %v458
        %v5640 = vunpack.c.l.b16 %v459
        %v5641 = vunpack.c.l.b16 %v460
        %v5642 = vunpack.c.l.b16 %v461
        %v5643 = vunpack.c.l.b16 %v462
        %v5644 = vunpack.c.l.b16 %v463
        %v5645 = vunpack.c.l.b16 %v464
        %v5646 = vunpack.c.l.b16 %v465
        %v5647 = vunpack.c.l.b16 %v466
        %v5648 = vunpack.c.l.b16 %v467
        %v5649 = vunpack.c.l.b16 %v468
        %v5650 = vunpack.c.l.b16 %v469
        %v5651 = vunpack.c.l.b16 %v470
        %v5652 = vunpack.c.l.b16 %v471
        %v5653 = vunpack.c.l.b16 %v472
        %v5654 = vunpack.c.l.b16 %v473
        %v5655 = vunpack.c.l.b16 %v474
        %v5656 = vunpack.c.l.b16 %v475
        %v5657 = vunpack.c.l.b16 %v476
        %v5658 = vunpack.c.l.b16 %v477
        %v5659 = vunpack.c.l.b16 %v478
        %v5660 = vunpack.c.l.b16 %v479
        %v5661 = vunpack.c.l.b16 %v480
        %v5662 = vunpack.c.l.b16 %v481
        %v5663 = vunpack.c.l.b16 %v482
        %v5664 = vunpack.c.l.b16 %v483
        %v5665 = vunpack.c.l.b16 %v484
        %v5666 = vunpack.c.l.b16 %v485
        %v5667 = vunpack.c.l.b16 %v486
        %v5668 = vunpack.c.l.b16 %v487
        %v5669 = vunpack.c.l.b16 %v488
        %v5670 = vunpack.c.l.b16 %v489
        %v5671 = vunpack.c.l.b16 %v490
        %v5672 = vunpack.c.l.b16 %v491
        %v5673 = vunpack.c.l.b16 %v492
        %v5674 = vunpack.c.l.b16 %v493
        %v5675 = vunpack.c.l.b16 %v494
        %v5676 = vunpack.c.l.b16 %v495
        %v5677 = vunpack.c.l.b16 %v496
        %v5678 = vunpack.c.l.b16 %v497
        %v5679 = vunpack.c.l.b16 %v498
        %v5680 = vunpack.c.l.b16 %v499
        %v5681 = vunpack.c.l.b16 %v500
        %v5682 = vunpack.c.l.b16 %v501
        %v5683 = vunpack.c.l.b16 %v502
        %v5684 = vunpack.c.l.b16 %v503
        %v5685 = vunpack.c.l.b16 %v504
        %v5686 = vunpack.c.l.b16 %v505
        %v5687 = vunpack.c.l.b16 %v506
        %v5688 = vunpack.c.l.b16 %v507
        %v5689 = vunpack.c.l.b16 %v508
        %v5690 = vunpack.c.l.b16 %v509
        %v5691 = vunpack.c.l.b16 %v510
        %v5692 = vunpack.c.l.b16 %v511
        %v5693 = vunpack.c.l.b16 %v512
        %v5694 = vunpack.c.l.b16 %v513
        %v5695 = vunpack.c.l.b16 %v514
        %v5696 = vunpack.c.l.b16 %v515
        %v5697 = vunpack.c.l.b16 %v516
        %v5698 = vunpack.c.l.b16 %v517
        %v5699 = vunpack.c.l.b16 %v518
        %v5700 = vunpack.c.l.b16 %v519
        %v5701 = vunpack.c.l.b16 %v520
        %v5702 = vunpack.c.l.b16 %v521
        %v5703 = vunpack.c.l.b16 %v522
        %v5704 = vunpack.c.l.b16 %v523
        %v5705 = vunpack.c.l.b16 %v524
        %v5706 = vunpack.c.l.b16 %v525
        %v5707 = vunpack.c.l.b16 %v526
        %v5708 = vunpack.c.l.b16 %v527
        %v5709 = vunpack.c.l.b16 %v528
        %v5710 = vunpack.c.l.b16 %v529
        %v5711 = vunpack.c.l.b16 %v530
        %v5712 = vunpack.c.l.b16 %v531
        %v5713 = vunpack.c.l.b16 %v532
        %v5714 = vunpack.c.l.b16 %v533
        %v5715 = vunpack.c.l.b16 %v534
        %v5716 = vunpack.c.l.b16 %v535
        %v5717 = vunpack.c.l.b16 %v536
        %v5718 = vunpack.c.l.b16 %v537
        %v5719 = vunpack.c.l.b16 %v538
        %v5720 = vunpack.c.l.b16 %v539
        %v5721 = vunpack.c.l.b16 %v540
        %v5722 = vunpack.c.l.b16 %v541
        %v5723 = vunpack.c.l.b16 %v542
        %v5724 = vunpack.c.l.b16 %v543
        %v5725 = vunpack.c.l.b16 %v544
        %v5726 = vunpack.c.l.b16 %v545
        %v5727 = vunpack.c.l.b16 %v546
        %v5728 = vunpack.c.l.b16 %v547
        %v5729 = vunpack.c.l.b16 %v548
        %v5730 = vunpack.c.l.b16 %v549
        %v5731 = vunpack.c.l.b16 %v550
        %v5732 = vunpack.c.l.b16 %v551
        %v5733 = vunpack.c.l.b16 %v552
        %v5734 = vunpack.c.l.b16 %v553
        %v5735 = vunpack.c.l.b16 %v554
        %v5736 = vunpack.c.l.b16 %v555
        %v5737 = vunpack.c.l.b16 %v556
        %v5738 = vunpack.c.l.b16 %v557
        %v5739 = vunpack.c.l.b16 %v558
        %v5740 = vunpack.c.l.b16 %v559
        %v5741 = vunpack.c.l.b16 %v560
        %v5742 = vunpack.c.l.b16 %v561
        %v5743 = vunpack.c.l.b16 %v562
        %v5744 = vunpack.c.l.b16 %v563
        %v5745 = vunpack.c.l.b16 %v564
        %v5746 = vunpack.c.l.b16 %v565
        %v5747 = vunpack.c.l.b16 %v566
        %v5748 = vunpack.c.l.b16 %v567
        %v5749 = vunpack.c.l.b16 %v568
        %v5750 = vunpack.c.l.b16 %v569
        %v5751 = vunpack.c.l.b16 %v570
        %v5752 = vunpack.c.l.b16 %v571
        %v5753 = vunpack.c.l.b16 %v572
        %v5754 = vunpack.c.l.b16 %v573
        %v5755 = vunpack.c.l.b16 %v574
        %v5756 = vunpack.c.l.b16 %v575
        %v5757 = vunpack.c.l.b16 %v576
        %v5758 = vunpack.c.l.b16 %v577
        %v5759 = vunpack.c.l.b16 %v578
        %v5760 = vunpack.c.l.b16 %v579
        %v5761 = vunpack.c.l.b16 %v580
        %v5762 = vunpack.c.l.b16 %v581
        %v5763 = vunpack.c.l.b16 %v582
        %v5764 = vunpack.c.l.b16 %v583
        %v5765 = vunpack.c.l.b16 %v584
        %v5766 = vunpack.c.l.b16 %v585
        %v5767 = vunpack.c.l.b16 %v586
        %v5768 = vunpack.c.l.b16 %v587
        %v5769 = vunpack.c.l.b16 %v588
        %v5770 = vunpack.c.l.b16 %v589
        %v5771 = vunpack.c.l.b16 %v590
        %v5772 = vunpack.c.l.b16 %v591
        %v5773 = vunpack.c.l.b16 %v592
        %v5774 = vunpack.c.l.b16 %v593
        %v5775 = vunpack.c.l.b16 %v594
        %v5776 = vunpack.c.l.b16 %v595
        %v5777 = vunpack.c.l.b16 %v596
        %v5778 = vunpack.c.l.b16 %v597
        %v5779 = vunpack.c.l.b16 %v598
        %v5780 = vunpack.c.l.b16 %v599
        %v5781 = vunpack.c.l.b16 %v600
        %v5782 = vunpack.c.l.b16 %v601
        %v5783 = vunpack.c.l.b16 %v602
        %v5784 = vunpack.c.l.b16 %v603
        %v5785 = vunpack.c.l.b16 %v604
        %v5786 = vunpack.c.l.b16 %v605
        %v5787 = vunpack.c.l.b16 %v606
        %v5788 = vunpack.c.l.b16 %v607
        %v5789 = vunpack.c.l.b16 %v608
        %v5790 = vunpack.c.l.b16 %v609
        %v5791 = vunpack.c.l.b16 %v610
        %v5792 = vunpack.c.l.b16 %v611
        %v5793 = vunpack.c.l.b16 %v612
        %v5794 = vunpack.c.l.b16 %v613
        %v5795 = vunpack.c.l.b16 %v614
        %v5796 = vunpack.c.l.b16 %v615
        %v5797 = vunpack.c.l.b16 %v616
        %v5798 = vunpack.c.l.b16 %v617
        %v5799 = vunpack.c.l.b16 %v618
        %v5800 = vunpack.c.l.b16 %v619
        %v5801 = vunpack.c.l.b16 %v620
        %v5802 = vunpack.c.l.b16 %v621
        %v5803 = vunpack.c.l.b16 %v622
        %v5804 = vunpack.c.l.b16 %v623
        %v5805 = vunpack.c.l.b16 %v624
        %v5806 = vunpack.c.l.b16 %v625
        %v5807 = vunpack.c.l.b16 %v626
        %v5808 = vunpack.c.l.b16 %v627
        %v5809 = vunpack.c.l.b16 %v628
        %v5810 = vunpack.c.l.b16 %v629
        %v5811 = vunpack.c.l.b16 %v630
        %v5812 = vunpack.c.l.b16 %v631
        %v5813 = vunpack.c.l.b16 %v632
        %v5814 = vunpack.c.l.b16 %v633
        %v5815 = vunpack.c.l.b16 %v634
        %v5816 = vunpack.c.l.b16 %v635
        %v5817 = vunpack.c.l.b16 %v636
        %v5818 = vunpack.c.l.b16 %v637
        %v5819 = vunpack.c.l.b16 %v638
        %v5820 = vunpack.c.l.b16 %v639
        %v5821 = vunpack.c.l.b16 %v640
        %v5822 = vunpack.c.l.b16 %v641
        %v5823 = vunpack.c.l.b16 %v642
        %v5824 = vunpack.c.l.b16 %v643
        %v5825 = vunpack.c.l.b16 %v644
        %v5826 = vunpack.c.l.b16 %v645
        %v5827 = vunpack.c.l.b16 %v646
        %v5828 = vunpack.c.l.b16 %v647
        %v5829 = vunpack.c.l.b16 %v648
        %v5830 = vunpack.c.l.b16 %v649
        %v5831 = vunpack.c.l.b16 %v650
        %v5832 = vunpack.c.l.b16 %v651
        %v5833 = vunpack.c.l.b16 %v652
        %v5834 = vunpack.c.l.b16 %v653
        %v5835 = vunpack.c.l.b16 %v654
        %v5836 = vunpack.c.l.b16 %v655
        %v5837 = vunpack.c.l.b16 %v656
        %v5838 = vunpack.c.l.b16 %v657
        %v5839 = vunpack.c.l.b16 %v658
        %v5840 = vunpack.c.l.b16 %v659
        %v5841 = vunpack.c.l.b16 %v660
        %v5842 = vunpack.c.l.b16 %v661
        %v5843 = vunpack.c.l.b16 %v662
        %v5844 = vunpack.c.l.b16 %v663
        %v5845 = vunpack.c.l.b16 %v664
        %v5846 = vunpack.c.l.b16 %v665
        %v5847 = vunpack.c.l.b16 %v666
        %v5848 = vunpack.c.l.b16 %v667
        %v5849 = vunpack.c.l.b16 %v668
        %v5850 = vunpack.c.l.b16 %v669
        %v5851 = vunpack.c.l.b16 %v670
        %v5852 = vunpack.c.l.b16 %v671
        %v5853 = vunpack.c.l.b16 %v672
        %v5854 = vunpack.c.l.b16 %v673
        %v5855 = vunpack.c.l.b16 %v674
        %v5856 = vunpack.c.l.b16 %v675
        %v5857 = vunpack.c.l.b16 %v676
        %v5858 = vunpack.c.l.b16 %v677
        %v5859 = vunpack.c.l.b16 %v678
        %v5860 = vunpack.c.l.b16 %v679
        %v5861 = vunpack.c.l.b16 %v680
        %v5862 = vunpack.c.l.b16 %v681
        %v5863 = vunpack.c.l.b16 %v682
        %v5864 = vunpack.c.l.b16 %v683
        %v5865 = vunpack.c.l.b16 %v684
        %v5866 = vunpack.c.l.b16 %v685
        %v5867 = vunpack.c.l.b16 %v686
        %v5868 = vunpack.c.l.b16 %v687
        %v5869 = vunpack.c.l.b16 %v688
        %v5870 = vunpack.c.l.b16 %v689
        %v5871 = vunpack.c.l.b16 %v690
        %v5872 = vunpack.c.l.b16 %v691
        %v5873 = vunpack.c.l.b16 %v692
        %v5874 = vunpack.c.l.b16 %v693
        %v5875 = vunpack.c.l.b16 %v694
        %v5876 = vunpack.c.l.b16 %v695
        %v5877 = vunpack.c.l.b16 %v696
        %v5878 = vunpack.c.l.b16 %v697
        %v5879 = vunpack.c.l.b16 %v698
        %v5880 = vunpack.c.l.b16 %v699
        %v5881 = vunpack.c.l.b16 %v700
        %v5882 = vunpack.c.l.b16 %v701
        %v5883 = vunpack.c.l.b16 %v702
        %v5884 = vunpack.c.l.b16 %v703
        %v5885 = vunpack.c.l.b16 %v704
        %v5886 = vunpack.c.l.b16 %v705
        %v5887 = vunpack.c.l.b16 %v706
        %v5888 = vunpack.c.l.b16 %v707
        %v5889 = vunpack.c.l.b16 %v708
        %v5890 = vunpack.c.l.b16 %v709
        %v5891 = vunpack.c.l.b16 %v710
        %v5892 = vunpack.c.l.b16 %v711
        %v5893 = vunpack.c.l.b16 %v712
        %v5894 = vunpack.c.l.b16 %v713
        %v5895 = vunpack.c.l.b16 %v714
        %v5896 = vunpack.c.l.b16 %v715
        %v5897 = vunpack.c.l.b16 %v716
        %v5898 = vunpack.c.l.b16 %v717
        %v5899 = vunpack.c.l.b16 %v718
        %v5900 = vunpack.c.l.b16 %v719
        %v5901 = vunpack.c.l.b16 %v720
        %v5902 = vunpack.c.l.b16 %v721
        %v5903 = vunpack.c.l.b16 %v722
        %v5904 = vunpack.c.l.b16 %v723
        %v5905 = vunpack.c.l.b16 %v724
        %v5906 = vunpack.c.l.b16 %v725
        %v5907 = vunpack.c.l.b16 %v726
        %v5908 = vunpack.c.l.b16 %v727
        %v5909 = vunpack.c.l.b16 %v728
        %v5910 = vunpack.c.l.b16 %v729
        %v5911 = vunpack.c.l.b16 %v730
        %v5912 = vunpack.c.l.b16 %v731
        %v5913 = vunpack.c.l.b16 %v732
        %v5914 = vunpack.c.l.b16 %v733
        %v5915 = vunpack.c.l.b16 %v734
        %v5916 = vunpack.c.l.b16 %v735
        %v5917 = vunpack.c.l.b16 %v736
        %v5918 = vunpack.c.l.b16 %v737
        %v5919 = vunpack.c.l.b16 %v738
        %v5920 = vunpack.c.l.b16 %v739
        %v5921 = vunpack.c.l.b16 %v740
        %v5922 = vunpack.c.l.b16 %v741
        %v5923 = vunpack.c.l.b16 %v742
        %v5924 = vunpack.c.l.b16 %v743
        %v5925 = vunpack.c.l.b16 %v744
        %v5926 = vunpack.c.l.b16 %v745
        %v5927 = vunpack.c.l.b16 %v746
        %v5928 = vunpack.c.l.b16 %v747
        %v5929 = vunpack.c.l.b16 %v748
        %v5930 = vunpack.c.l.b16 %v749
        %v5931 = vunpack.c.l.b16 %v750
        %v5932 = vunpack.c.l.b16 %v751
        %v5933 = vunpack.c.l.b16 %v752
        %v5934 = vunpack.c.l.b16 %v753
        %v5935 = vunpack.c.l.b16 %v754
        %v5936 = vunpack.c.l.b16 %v755
        %v5937 = vunpack.c.l.b16 %v756
        %v5938 = vunpack.c.l.b16 %v757
        %v5939 = vunpack.c.l.b16 %v758
        %v5940 = vunpack.c.l.b16 %v759
        %v5941 = vunpack.c.l.b16 %v760
        %v5942 = vunpack.c.l.b16 %v761
        %v5943 = vunpack.c.l.b16 %v762
        %v5944 = vunpack.c.l.b16 %v763
        %v5945 = vunpack.c.l.b16 %v764
        %v5946 = vunpack.c.l.b16 %v765
        %v5947 = vunpack.c.l.b16 %v766
        %v5948 = vunpack.c.l.b16 %v767
        %v5949 = vunpack.c.l.b16 %v768
        %v5950 = vunpack.c.l.b16 %v769
        %v5951 = vunpack.c.l.b16 %v770
        %v5952 = vunpack.c.l.b16 %v771
        %v5953 = vunpack.c.l.b16 %v772
        %v5954 = vunpack.c.l.b16 %v773
        %v5955 = vunpack.c.l.b16 %v774
        %v5956 = vunpack.c.l.b16 %v775
        %v5957 = vunpack.c.l.b16 %v776
        %v5958 = vunpack.c.l.b16 %v777
        %v5959 = vunpack.c.l.b16 %v778
        %v5960 = vunpack.c.l.b16 %v779
        %v5961 = vunpack.c.l.b16 %v780
        %v5962 = vunpack.c.l.b16 %v781
        %v5963 = vunpack.c.l.b16 %v782
        %v5964 = vunpack.c.l.b16 %v783
        %v5965 = vunpack.c.l.b16 %v784
        %v5966 = vunpack.c.l.b16 %v785
        %v5967 = vunpack.c.l.b16 %v786
        %v5968 = vunpack.c.l.b16 %v787
        %v5969 = vunpack.c.l.b16 %v788
        %v5970 = vunpack.c.l.b16 %v789
        %v5971 = vunpack.c.l.b16 %v790
        %v5972 = vunpack.c.l.b16 %v791
        %v5973 = vunpack.c.l.b16 %v792
        %v5974 = vunpack.c.l.b16 %v793
        %v5975 = vunpack.c.l.b16 %v794
        %v5976 = vunpack.c.l.b16 %v795
        %v5977 = vunpack.c.l.b16 %v796
        %v5978 = vunpack.c.l.b16 %v797
        %v5979 = vunpack.c.l.b16 %v798
        %v5980 = vunpack.c.l.b16 %v799
        %v5981 = vunpack.c.l.b16 %v800
        %v5982 = vunpack.c.l.b16 %v801
        %v5983 = vunpack.c.l.b16 %v802
        %v5984 = vunpack.c.l.b16 %v803
        %v5985 = vunpack.c.l.b16 %v804
        %v5986 = vunpack.c.l.b16 %v805
        %v5987 = vunpack.c.l.b16 %v806
        %v5988 = vunpack.c.l.b16 %v807
        %v5989 = vunpack.c.l.b16 %v808
        %v5990 = vunpack.c.l.b16 %v809
        %v5991 = vunpack.c.l.b16 %v810
        %v5992 = vunpack.c.l.b16 %v811
        %v5993 = vunpack.c.l.b16 %v812
        %v5994 = vunpack.c.l.b16 %v813
        %v5995 = vunpack.c.l.b16 %v814
        %v5996 = vunpack.c.l.b16 %v815
        %v5997 = vunpack.c.l.b16 %v816
        %v5998 = vunpack.c.l.b16 %v817
        %v5999 = vunpack.c.l.b16 %v818
        %v6000 = vunpack.c.l.b16 %v819
        %v6001 = vunpack.c.l.b16 %v820
        %v6002 = vunpack.c.l.b16 %v821
        %v6003 = vunpack.c.l.b16 %v822
        %v6004 = vunpack.c.l.b16 %v823
        %v6005 = vunpack.c.l.b16 %v824
        %v6006 = vunpack.c.l.b16 %v825
        %v6007 = vunpack.c.l.b16 %v826
        %v6008 = vunpack.c.l.b16 %v827
        %v6009 = vunpack.c.l.b16 %v828
        %v6010 = vunpack.c.l.b16 %v829
        %v6011 = vunpack.c.l.b16 %v830
        %v6012 = vunpack.c.l.b16 %v831
        %v6013 = vunpack.c.l.b16 %v832
        %v6014 = vunpack.c.l.b16 %v833
        %v6015 = vunpack.c.l.b16 %v834
        %v6016 = vunpack.c.l.b16 %v835
        %v6017 = vunpack.c.l.b16 %v836
        %v6018 = vunpack.c.l.b16 %v837
        %v6019 = vunpack.c.l.b16 %v838
        %v6020 = vunpack.c.l.b16 %v839
        %v6021 = vunpack.c.l.b16 %v840
        %v6022 = vunpack.c.l.b16 %v841
        %v6023 = vunpack.c.l.b16 %v842
        %v6024 = vunpack.c.l.b16 %v843
        %v6025 = vunpack.c.l.b16 %v844
        %v6026 = vunpack.c.l.b16 %v845
        %v6027 = vunpack.c.l.b16 %v846
        %v6028 = vunpack.c.l.b16 %v847
        %v6029 = vunpack.c.l.b16 %v848
        %v6030 = vunpack.c.l.b16 %v849
        %v6031 = vunpack.c.l.b16 %v850
        %v6032 = vunpack.c.l.b16 %v851
        %v6033 = vunpack.c.l.b16 %v852
        %v6034 = vunpack.c.l.b16 %v853
        %v6035 = vunpack.c.l.b16 %v854
        %v6036 = vunpack.c.l.b16 %v855
        %v6037 = vunpack.c.l.b16 %v856
        %v6038 = vunpack.c.l.b16 %v857
        %v6039 = vunpack.c.l.b16 %v858
        %v6040 = vunpack.c.l.b16 %v859
        %v6041 = vunpack.c.l.b16 %v860
        %v6042 = vunpack.c.l.b16 %v861
        %v6043 = vunpack.c.l.b16 %v862
        %v6044 = vunpack.c.l.b16 %v863
        %v6045 = vunpack.c.l.b16 %v864
        %v6046 = vunpack.c.l.b16 %v865
        %v6047 = vunpack.c.l.b16 %v866
        %v6048 = vunpack.c.l.b16 %v867
        %v6049 = vunpack.c.l.b16 %v868
        %v6050 = vunpack.c.l.b16 %v869
        %v6051 = vunpack.c.l.b16 %v870
        %v6052 = vunpack.c.l.b16 %v871
        %v6053 = vunpack.c.l.b16 %v872
        %v6054 = vunpack.c.l.b16 %v873
        %v6055 = vunpack.c.l.b16 %v874
        %v6056 = vunpack.c.l.b16 %v875
        %v6057 = vunpack.c.l.b16 %v876
        %v6058 = vunpack.c.l.b16 %v877
        %v6059 = vunpack.c.l.b16 %v878
        %v6060 = vunpack.c.l.b16 %v879
        %v6061 = vunpack.c.l.b16 %v880
        %v6062 = vunpack.c.l.b16 %v881
        %v6063 = vunpack.c.l.b16 %v882
        %v6064 = vunpack.c.l.b16 %v883
        %v6065 = vunpack.c.l.b16 %v884
        %v6066 = vunpack.c.l.b16 %v885
        %v6067 = vunpack.c.l.b16 %v886
        %v6068 = vunpack.c.l.b16 %v887
        %v6069 = vunpack.c.l.b16 %v888
        %v6070 = vunpack.c.l.b16 %v889
        %v6071 = vunpack.c.l.b16 %v890
        %v6072 = vunpack.c.l.b16 %v891
        %v6073 = vunpack.c.l.b16 %v892
        %v6074 = vunpack.c.l.b16 %v893
        %v6075 = vunpack.c.l.b16 %v894
        %v6076 = vunpack.c.l.b16 %v895
        %v6077 = vunpack.c.l.b16 %v896
        %v6078 = vunpack.c.l.b16 %v897
        %v6079 = vunpack.c.l.b16 %v898
        %v6080 = vunpack.c.l.b16 %v899
        %v6081 = vunpack.c.l.b16 %v900
        %v6082 = vunpack.c.l.b16 %v901
        %v6083 = vunpack.c.l.b16 %v902
        %v6084 = vunpack.c.l.b16 %v903
        %v6085 = vunpack.c.l.b16 %v904
        %v6086 = vunpack.c.l.b16 %v905
        %v6087 = vunpack.c.l.b16 %v906
        %v6088 = vunpack.c.l.b16 %v907
        %v6089 = vunpack.c.l.b16 %v908
        %v6090 = vunpack.c.l.b16 %v909
        %v6091 = vunpack.c.l.b16 %v910
        %v6092 = vunpack.c.l.b16 %v911
        %v6093 = vunpack.c.l.b16 %v912
        %v6094 = vunpack.c.l.b16 %v913
        %v6095 = vunpack.c.l.b16 %v914
        %v6096 = vunpack.c.l.b16 %v915
        %v6097 = vunpack.c.l.b16 %v916
        %v6098 = vunpack.c.l.b16 %v917
        %v6099 = vunpack.c.l.b16 %v918
        %v6100 = vunpack.c.l.b16 %v919
        %v6101 = vunpack.c.l.b16 %v920
        %v6102 = vunpack.c.l.b16 %v921
        %v6103 = vunpack.c.l.b16 %v922
        %v6104 = vunpack.c.l.b16 %v923
        %v6105 = vunpack.c.l.b16 %v924
        %v6106 = vunpack.c.l.b16 %v925
        %v6107 = vunpack.c.l.b16 %v926
        %v6108 = vunpack.c.l.b16 %v927
        %v6109 = vunpack.c.l.b16 %v928
        %v6110 = vunpack.c.l.b16 %v929
        %v6111 = vunpack.c.l.b16 %v930
        %v6112 = vunpack.c.l.b16 %v931
        %v6113 = vunpack.c.l.b16 %v932
        %v6114 = vunpack.c.l.b16 %v933
        %v6115 = vunpack.c.l.b16 %v934
        %v6116 = vunpack.c.l.b16 %v935
        %v6117 = vunpack.c.l.b16 %v936
        %v6118 = vunpack.c.l.b16 %v937
        %v6119 = vunpack.c.l.b16 %v938
        %v6120 = vunpack.c.l.b16 %v939
        %v6121 = vunpack.c.l.b16 %v940
        %v6122 = vunpack.c.l.b16 %v941
        %v6123 = vunpack.c.l.b16 %v942
        %v6124 = vunpack.c.l.b16 %v943
        %v6125 = vunpack.c.l.b16 %v944
        %v6126 = vunpack.c.l.b16 %v945
        %v6127 = vunpack.c.l.b16 %v946
        %v6128 = vunpack.c.l.b16 %v947
        %v6129 = vunpack.c.l.b16 %v948
        %v6130 = vunpack.c.l.b16 %v949
        %v6131 = vunpack.c.l.b16 %v950
        %v6132 = vunpack.c.l.b16 %v951
        %v6133 = vunpack.c.l.b16 %v952
        %v6134 = vunpack.c.l.b16 %v953
        %v6135 = vunpack.c.l.b16 %v954
        %v6136 = vunpack.c.l.b16 %v955
        %v6137 = vunpack.c.l.b16 %v956
        %v6138 = vunpack.c.l.b16 %v957
        %v6139 = vunpack.c.l.b16 %v958
        %v6140 = vunpack.c.l.b16 %v959
        %v6141 = vunpack.c.l.b16 %v960
        %v6142 = vunpack.c.l.b16 %v961
        %v6143 = vunpack.c.l.b16 %v962
        %v6144 = vunpack.c.l.b16 %v963
        %v6145 = vunpack.c.l.b16 %v964
        %v6146 = vunpack.c.l.b16 %v965
        %v6147 = vunpack.c.l.b16 %v966
        %v6148 = vunpack.c.l.b16 %v967
        %v6149 = vunpack.c.l.b16 %v968
        %v6150 = vunpack.c.l.b16 %v969
        %v6151 = vunpack.c.l.b16 %v970
        %v6152 = vunpack.c.l.b16 %v971
        %v6153 = vunpack.c.l.b16 %v972
        %v6154 = vunpack.c.l.b16 %v973
        %v6155 = vunpack.c.l.b16 %v974
        %v6156 = vunpack.c.l.b16 %v975
        %v6157 = vunpack.c.l.b16 %v976
        %v6158 = vunpack.c.l.b16 %v977
        %v6159 = vunpack.c.l.b16 %v978
        %v6160 = vunpack.c.l.b16 %v979
        %v6161 = vunpack.c.l.b16 %v980
        %v6162 = vunpack.c.l.b16 %v981
        %v6163 = vunpack.c.l.b16 %v982
        %v6164 = vunpack.c.l.b16 %v983
        %v6165 = vunpack.c.l.b16 %v984
        %v6166 = vunpack.c.l.b16 %v985
        %v6167 = vunpack.c.l.b16 %v986
        %v6168 = vunpack.c.l.b16 %v987
        %v6169 = vunpack.c.l.b16 %v988
        %v6170 = vunpack.c.l.b16 %v989
        %v6171 = vunpack.c.l.b16 %v990
        %v6172 = vunpack.c.l.b16 %v991
        %v6173 = vunpack.c.l.b16 %v992
        %v6174 = vunpack.c.l.b16 %v993
        %v6175 = vunpack.c.l.b16 %v994
        %v6176 = vunpack.c.l.b16 %v995
        %v6177 = vunpack.c.l.b16 %v996
        %v6178 = vunpack.c.l.b16 %v997
        %v6179 = vunpack.c.l.b16 %v998
        %v6180 = vunpack.c.l.b16 %v999
        %v6181 = vunpack.c.l.b16 %v1000
        %v6182 = vunpack.c.l.b16 %v1001
        %v6183 = vunpack.c.l.b16 %v1002
        %v6184 = vunpack.c.l.b16 %v1003
        %v6185 = vunpack.c.l.b16 %v1004
        %v6186 = vunpack.c.l.b16 %v1005
        %v6187 = vunpack.c.l.b16 %v1006
        %v6188 = vunpack.c.l.b16 %v1007
        %v6189 = vunpack.c.l.b16 %v1008
        %v6190 = vunpack.c.l.b16 %v1009
        %v6191 = vunpack.c.l.b16 %v1010
        %v6192 = vunpack.c.l.b16 %v1011
        %v6193 = vunpack.c.l.b16 %v1012
        %v6194 = vunpack.c.l.b16 %v1013
        %v6195 = vunpack.c.l.b16 %v1014
        %v6196 = vunpack.c.l.b16 %v1015
        %v6197 = vunpack.c.l.b16 %v1016
        %v6198 = vunpack.c.l.b16 %v1017
        %v6199 = vunpack.c.l.b16 %v1018
        %v6200 = vunpack.c.l.b16 %v1019
        %v6201 = vunpack.c.l.b16 %v1020
        %v6202 = vunpack.c.l.b16 %v1021
        %v6203 = vunpack.c.l.b16 %v1022
        %v6204 = vunpack.c.l.b16 %v1023
        %v6205 = vunpack.c.l.b16 %v1024
        %v6206 = vunpack.c.l.b16 %v1025
        %v6207 = vunpack.c.l.b16 %v1026
        %v6208 = vunpack.c.l.b16 %v1027
        %v6209 = vunpack.c.l.b16 %v1028
        %v6210 = vunpack.c.l.b16 %v1029
        %v6211 = vunpack.c.l.b16 %v1030
        %v6212 = vunpack.c.l.b16 %v1031
        %v6213 = vunpack.c.l.b16 %v1032
        %v6214 = vunpack.c.l.b16 %v1033
        %v6215 = vunpack.c.l.b16 %v1034
        %v6216 = vunpack.c.l.b16 %v1035
        %v6217 = vunpack.c.l.b16 %v1036
        %v6218 = vunpack.c.l.b16 %v1037
        %v6219 = vunpack.c.l.b16 %v1038
        %v6220 = vunpack.c.l.b16 %v1039
        %v6221 = vunpack.c.l.b16 %v1040
        %v6222 = vunpack.c.l.b16 %v1041
        %v6223 = vunpack.c.l.b16 %v1042
        %v6224 = vunpack.c.l.b16 %v1043
        %v6225 = vunpack.c.l.b16 %v1044
        %v6226 = vunpack.c.l.b16 %v1045
        %v6227 = vunpack.c.l.b16 %v1046
        %v6228 = vunpack.c.l.b16 %v1047
        %v6229 = vunpack.c.l.b16 %v1048
        %v6230 = vunpack.c.l.b16 %v1049
        %v6231 = vunpack.c.l.b16 %v1050
        %v6232 = vunpack.c.l.b16 %v1051
        %v6233 = vunpack.c.l.b16 %v1052
        %v6234 = vunpack.c.l.b16 %v1053
        %v6235 = vunpack.c.l.b16 %v1054
        %v6236 = vunpack.c.l.b16 %v1055
        %v6237 = vunpack.c.l.b16 %v1056
        %v6238 = vunpack.c.l.b16 %v1057
        %v6239 = vunpack.c.l.b16 %v1058
        %v6240 = vunpack.c.l.b16 %v1059
        %v6241 = vunpack.c.l.b16 %v1060
        %v6242 = vunpack.c.l.b16 %v1061
        %v6243 = vunpack.c.l.b16 %v1062
        %v6244 = vunpack.c.l.b16 %v1063
        %v6245 = vunpack.c.l.b16 %v1064
        %v6246 = vunpack.c.l.b16 %v1065
        %v6247 = vunpack.c.l.b16 %v1066
        %v6248 = vunpack.c.l.b16 %v1067
        %v6249 = vunpack.c.l.b16 %v1068
        %v6250 = vunpack.c.l.b16 %v1069
        %v6251 = vunpack.c.l.b16 %v1070
        %v6252 = vunpack.c.l.b16 %v1071
        %v6253 = vunpack.c.l.b16 %v1072
        %v6254 = vunpack.c.l.b16 %v1073
        %v6255 = vunpack.c.l.b16 %v1074
        %v6256 = vunpack.c.l.b16 %v1075
        %v6257 = vunpack.c.l.b16 %v1076
        %v6258 = vunpack.c.l.b16 %v1077
        %v6259 = vunpack.c.l.b16 %v1078
        %v6260 = vunpack.c.l.b16 %v1079
        %v6261 = vunpack.c.l.b16 %v1080
        %v6262 = vunpack.c.l.b16 %v1081
        %v6263 = vunpack.c.l.b16 %v1082
        %v6264 = vunpack.c.l.b16 %v1083
        %v6265 = vunpack.c.l.b16 %v1084
        %v6266 = vunpack.c.l.b16 %v1085
        %v6267 = vunpack.c.l.b16 %v1086
        %v6268 = vunpack.c.l.b16 %v1087
        %v6269 = vunpack.c.l.b16 %v1088
        %v6270 = vunpack.c.l.b16 %v1089
        %v6271 = vunpack.c.l.b16 %v1090
        %v6272 = vunpack.c.l.b16 %v1091
        %v6273 = vunpack.c.l.b16 %v1092
        %v6274 = vunpack.c.l.b16 %v1093
        %v6275 = vunpack.c.l.b16 %v1094
        %v6276 = vunpack.c.l.b16 %v1095
        %v6277 = vunpack.c.l.b16 %v1096
        %v6278 = vunpack.c.l.b16 %v1097
        %v6279 = vunpack.c.l.b16 %v1098
        %v6280 = vunpack.c.l.b16 %v1099
        %v6281 = vunpack.c.l.b16 %v1100
        %v6282 = vunpack.c.l.b16 %v1101
        %v6283 = vunpack.c.l.b16 %v1102
        %v6284 = vunpack.c.l.b16 %v1103
        %v6285 = vunpack.c.l.b16 %v1104
        %v6286 = vunpack.c.l.b16 %v1105
        %v6287 = vunpack.c.l.b16 %v1106
        %v6288 = vunpack.c.l.b16 %v1107
        %v6289 = vunpack.c.l.b16 %v1108
        %v6290 = vunpack.c.l.b16 %v1109
        %v6291 = vunpack.c.l.b16 %v1110
        %v6292 = vunpack.c.l.b16 %v1111
        %v6293 = vunpack.c.l.b16 %v1112
        %v6294 = vunpack.c.l.b16 %v1113
        %v6295 = vunpack.c.l.b16 %v1114
        %v6296 = vunpack.c.l.b16 %v1115
        %v6297 = vunpack.c.l.b16 %v1116
        %v6298 = vunpack.c.l.b16 %v1117
        %v6299 = vunpack.c.l.b16 %v1118
        %v6300 = vunpack.c.l.b16 %v1119
        %v6301 = vunpack.c.l.b16 %v1120
        %v6302 = vunpack.c.l.b16 %v1121
        %v6303 = vunpack.c.l.b16 %v1122
        %v6304 = vunpack.c.l.b16 %v1123
        %v6305 = vunpack.c.l.b16 %v1124
        %v6306 = vunpack.c.l.b16 %v1125
        %v6307 = vunpack.c.l.b16 %v1126
        %v6308 = vunpack.c.l.b16 %v1127
        %v6309 = vunpack.c.l.b16 %v1128
        %v6310 = vunpack.c.l.b16 %v1129
        %v6311 = vunpack.c.l.b16 %v1130
        %v6312 = vunpack.c.l.b16 %v1131
        %v6313 = vunpack.c.l.b16 %v1132
        %v6314 = vunpack.c.l.b16 %v1133
        %v6315 = vunpack.c.l.b16 %v1134
        %v6316 = vunpack.c.l.b16 %v1135
        %v6317 = vunpack.c.l.b16 %v1136
        %v6318 = vunpack.c.l.b16 %v1137
        %v6319 = vunpack.c.l.b16 %v1138
        %v6320 = vunpack.c.l.b16 %v1139
        %v6321 = vunpack.c.l.b16 %v1140
        %v6322 = vunpack.c.l.b16 %v1141
        %v6323 = vunpack.c.l.b16 %v1142
        %v6324 = vunpack.c.l.b16 %v1143
        %v6325 = vunpack.c.l.b16 %v1144
        %v6326 = vunpack.c.l.b16 %v1145
        %v6327 = vunpack.c.l.b16 %v1146
        %v6328 = vunpack.c.l.b16 %v1147
        %v6329 = vunpack.c.l.b16 %v1148
        %v6330 = vunpack.c.l.b16 %v1149
        %v6331 = vunpack.c.l.b16 %v1150
        %v6332 = vunpack.c.l.b16 %v1151
        %v6333 = vunpack.c.l.b16 %v1152
        %v6334 = vunpack.c.l.b16 %v1153
        %v6335 = vunpack.c.l.b16 %v1154
        %v6336 = vunpack.c.l.b16 %v1155
        %v6337 = vunpack.c.l.b16 %v1156
        %v6338 = vunpack.c.l.b16 %v1157
        %v6339 = vunpack.c.l.b16 %v1158
        %v6340 = vunpack.c.l.b16 %v1159
        %v6341 = vunpack.c.l.b16 %v1160
        %v6342 = vunpack.c.l.b16 %v1161
        %v6343 = vunpack.c.l.b16 %v1162
        %v6344 = vunpack.c.l.b16 %v1163
        %v6345 = vunpack.c.l.b16 %v1164
        %v6346 = vunpack.c.l.b16 %v1165
        %v6347 = vunpack.c.l.b16 %v1166
        %v6348 = vunpack.c.l.b16 %v1167
        %v6349 = vunpack.c.l.b16 %v1168
        %v6350 = vunpack.c.l.b16 %v1169
        %v6351 = vunpack.c.l.b16 %v1170
        %v6352 = vunpack.c.l.b16 %v1171
        %v6353 = vunpack.c.l.b16 %v1172
        %v6354 = vunpack.c.l.b16 %v1173
        %v6355 = vunpack.c.l.b16 %v1174
        %v6356 = vunpack.c.l.b16 %v1175
        %v6357 = vunpack.c.l.b16 %v1176
        %v6358 = vunpack.c.l.b16 %v1177
        %v6359 = vunpack.c.l.b16 %v1178
        %v6360 = vunpack.c.l.b16 %v1179
        %v6361 = vunpack.c.l.b16 %v1180
        %v6362 = vunpack.c.l.b16 %v1181
        %v6363 = vunpack.c.l.b16 %v1182
        %v6364 = vunpack.c.l.b16 %v1183
        %v6365 = vunpack.c.l.b16 %v1184
        %v6366 = vunpack.c.l.b16 %v1185
        %v6367 = vunpack.c.l.b16 %v1186
        %v6368 = vunpack.c.l.b16 %v1187
        %v6369 = vunpack.c.l.b16 %v1188
        %v6370 = vunpack.c.l.b16 %v1189
        %v6371 = vunpack.c.l.b16 %v1190
        %v6372 = vunpack.c.l.b16 %v1191
        %v6373 = vunpack.c.l.b16 %v1192
        %v6374 = vunpack.c.l.b16 %v1193
        %v6375 = vunpack.c.l.b16 %v1194
        %v6376 = vunpack.c.l.b16 %v1195
        %v6377 = vunpack.c.l.b16 %v1196
        %v6378 = vunpack.c.l.b16 %v1197
        %v6379 = vunpack.c.l.b16 %v1198
        %v6380 = vunpack.c.l.b16 %v1199
        %v6381 = vunpack.c.l.b16 %v1200
        %v6382 = vunpack.c.l.b16 %v1201
        %v6383 = vunpack.c.l.b16 %v1202
        %v6384 = vunpack.c.l.b16 %v1203
        %v6385 = vunpack.c.l.b16 %v1204
        %v6386 = vunpack.c.l.b16 %v1205
        %v6387 = vunpack.c.l.b16 %v1206
        %v6388 = vunpack.c.l.b16 %v1207
        %v6389 = vunpack.c.l.b16 %v1208
        %v6390 = vunpack.c.l.b16 %v1209
        %v6391 = vunpack.c.l.b16 %v1210
        %v6392 = vunpack.c.l.b16 %v1211
        %v6393 = vunpack.c.l.b16 %v1212
        %v6394 = vunpack.c.l.b16 %v1213
        %v6395 = vunpack.c.l.b16 %v1214
        %v6396 = vunpack.c.l.b16 %v1215
        %v6397 = vunpack.c.l.b16 %v1216
        %v6398 = vunpack.c.l.b16 %v1217
        %v6399 = vunpack.c.l.b16 %v1218
        %v6400 = vunpack.c.l.b16 %v1219
        %v6401 = vunpack.c.l.b16 %v1220
        %v6402 = vunpack.c.l.b16 %v1221
        %v6403 = vunpack.c.l.b16 %v1222
        %v6404 = vunpack.c.l.b16 %v1223
        %v6405 = vunpack.c.l.b16 %v1224
        %v6406 = vunpack.c.l.b16 %v1225
        %v6407 = vunpack.c.l.b16 %v1226
        %v6408 = vunpack.c.l.b16 %v1227
        %v6409 = vunpack.c.l.b16 %v1228
        %v6410 = vunpack.c.l.b16 %v1229
        %v6411 = vunpack.c.l.b16 %v1230
        %v6412 = vunpack.c.l.b16 %v1231
        %v6413 = vunpack.c.l.b16 %v1232
        %v6414 = vunpack.c.l.b16 %v1233
        %v6415 = vunpack.c.l.b16 %v1234
        %v6416 = vunpack.c.l.b16 %v1235
        %v6417 = vunpack.c.l.b16 %v1236
        %v6418 = vunpack.c.l.b16 %v1237
        %v6419 = vunpack.c.l.b16 %v1238
        %v6420 = vunpack.c.l.b16 %v1239
        %v6421 = vunpack.c.l.b16 %v1240
        %v6422 = vunpack.c.l.b16 %v1241
        %v6423 = vunpack.c.l.b16 %v1242
        %v6424 = vunpack.c.l.b16 %v1243
        %v6425 = vunpack.c.l.b16 %v1244
        %v6426 = vunpack.c.l.b16 %v1245
        %v6427 = vunpack.c.l.b16 %v1246
        %v6428 = vunpack.c.l.b16 %v1247
        %v6429 = vunpack.c.l.b16 %v1248
        %v6430 = vunpack.c.l.b16 %v1249
        %v6431 = vunpack.c.l.b16 %v1250
        %v6432 = vunpack.c.l.b16 %v1251
        %v6433 = vunpack.c.l.b16 %v1252
        %v6434 = vunpack.c.l.b16 %v1253
        %v6435 = vunpack.c.l.b16 %v1254
        %v6436 = vunpack.c.l.b16 %v1255
        %v6437 = vunpack.c.l.b16 %v1256
        %v6438 = vunpack.c.l.b16 %v1257
        %v6439 = vunpack.c.l.b16 %v1258
        %v6440 = vunpack.c.l.b16 %v1259
        %v6441 = vunpack.c.l.b16 %v1260
        %v6442 = vunpack.c.l.b16 %v1261
        %v6443 = vunpack.c.l.b16 %v1262
        %v6444 = vunpack.c.l.b16 %v1263
        %v6445 = vunpack.c.l.b16 %v1264
        %v6446 = vunpack.c.l.b16 %v1265
        %v6447 = vunpack.c.l.b16 %v1266
        %v6448 = vunpack.c.l.b16 %v1267
        %v6449 = vunpack.c.l.b16 %v1268
        %v6450 = vunpack.c.l.b16 %v1269
        %v6451 = vunpack.c.l.b16 %v1270
        %v6452 = vunpack.c.l.b16 %v1271
        %v6453 = vunpack.c.l.b16 %v1272
        %v6454 = vunpack.c.l.b16 %v1273
        %v6455 = vunpack.c.l.b16 %v1274
        %v6456 = vunpack.c.l.b16 %v1275
        %v6457 = vunpack.c.l.b16 %v1276
        %v6458 = vunpack.c.l.b16 %v1277
        %v6459 = vunpack.c.l.b16 %v1278
        %v6460 = vunpack.c.l.b16 %v1279
        %v6461 = vunpack.c.l.b16 %v1280
        %v6462 = vunpack.c.l.b16 %v1281
        %v6463 = vunpack.c.l.b16 %v1282
        %v6464 = vunpack.c.l.b16 %v1283
        %v6465 = vunpack.c.l.b16 %v1284
        %v6466 = vunpack.c.l.b16 %v1285
        %v6467 = vunpack.c.l.b16 %v1286
        %v6468 = vunpack.c.l.b16 %v1287
        %v6469 = vunpack.c.l.b16 %v1288
        %v6470 = vunpack.c.l.b16 %v1289
        %v6471 = vunpack.c.l.b16 %v1290
        %v6472 = vunpack.c.l.b16 %v1291
        %v6473 = vunpack.c.l.b16 %v1292
        %v6474 = vunpack.c.l.b16 %v1293
        %v6475 = vunpack.c.l.b16 %v1294
        %v6476 = vunpack.c.l.b16 %v1295
        %v6477 = vunpack.c.l.b16 %v1296
        %v6478 = vunpack.c.l.b16 %v1297
        %v6479 = vunpack.c.l.b16 %v1298
        %v6480 = vunpack.c.l.b16 %v1299
        %v6481 = vunpack.c.l.b16 %v1300
        %v6482 = vunpack.c.l.b16 %v1301
        %v6483 = vunpack.c.l.b16 %v1302
        %v6484 = vunpack.c.l.b16 %v1303
        %v6485 = vunpack.c.l.b16 %v1304
        %v6486 = vunpack.c.l.b16 %v1305
        %v6487 = vunpack.c.l.b16 %v1306
        %v6488 = vunpack.c.l.b16 %v1307
        %v6489 = vunpack.c.l.b16 %v1308
        %v6490 = vunpack.c.l.b16 %v1309
        %v6491 = vunpack.c.l.b16 %v1310
        %v6492 = vunpack.c.l.b16 %v1311
        %v6493 = vunpack.c.l.b16 %v1312
        %v6494 = vunpack.c.l.b16 %v1313
        %v6495 = vunpack.c.l.b16 %v1314
        %v6496 = vunpack.c.l.b16 %v1315
        %v6497 = vunpack.c.l.b16 %v1316
        %v6498 = vunpack.c.l.b16 %v1317
        %v6499 = vunpack.c.l.b16 %v1318
        %v6500 = vunpack.c.l.b16 %v1319
        %v6501 = vunpack.c.l.b16 %v1320
        %v6502 = vunpack.c.l.b16 %v1321
        %v6503 = vunpack.c.l.b16 %v1322
        %v6504 = vunpack.c.l.b16 %v1323
        %v6505 = vunpack.c.l.b16 %v1324
        %v6506 = vunpack.c.l.b16 %v1325
        %v6507 = vunpack.c.l.b16 %v1326
        %v6508 = vunpack.c.l.b16 %v1327
        %v6509 = vunpack.c.l.b16 %v1328
        %v6510 = vunpack.c.l.b16 %v1329
        %v6511 = vunpack.c.l.b16 %v1330
        %v6512 = vunpack.c.l.b16 %v1331
        %v6513 = vunpack.c.l.b16 %v1332
        %v6514 = vunpack.c.l.b16 %v1333
        %v6515 = vunpack.c.l.b16 %v1334
        %v6516 = vunpack.c.l.b16 %v1335
        %v6517 = vunpack.c.l.b16 %v1336
        %v6518 = vunpack.c.l.b16 %v1337
        %v6519 = vunpack.c.l.b16 %v1338
        %v6520 = vunpack.c.l.b16 %v1339
        %v6521 = vunpack.c.l.b16 %v1340
        %v6522 = vunpack.c.l.b16 %v1341
        %v6523 = vunpack.c.l.b16 %v1342
        %v6524 = vunpack.c.l.b16 %v1343
        %v6525 = vunpack.c.l.b16 %v1344
        %v6526 = vunpack.c.l.b16 %v1345
        %v6527 = vunpack.c.l.b16 %v1346
        %v6528 = vunpack.c.l.b16 %v1347
        %v6529 = vunpack.c.l.b16 %v1348
        %v6530 = vunpack.c.l.b16 %v1349
        %v6531 = vunpack.c.l.b16 %v1350
        %v6532 = vunpack.c.l.b16 %v1351
        %v6533 = vunpack.c.l.b16 %v1352
        %v6534 = vunpack.c.l.b16 %v1353
        %v6535 = vunpack.c.l.b16 %v1354
        %v6536 = vunpack.c.l.b16 %v1355
        %v6537 = vunpack.c.l.b16 %v1356
        %v6538 = vunpack.c.l.b16 %v1357
        %v6539 = vunpack.c.l.b16 %v1358
        %v6540 = vunpack.c.l.b16 %v1359
        %v6541 = vunpack.c.l.b16 %v1360
        %v6542 = vunpack.c.l.b16 %v1361
        %v6543 = vunpack.c.l.b16 %v1362
        %v6544 = vunpack.c.l.b16 %v1363
        %v6545 = vunpack.c.l.b16 %v1364
        %v6546 = vunpack.c.l.b16 %v1365
        %v6547 = vunpack.c.l.b16 %v1366
        %v6548 = vunpack.c.l.b16 %v1367
        %v6549 = vunpack.c.l.b16 %v1368
        %v6550 = vunpack.c.l.b16 %v1369
        %v6551 = vunpack.c.l.b16 %v1370
        %v6552 = vunpack.c.l.b16 %v1371
        %v6553 = vunpack.c.l.b16 %v1372
        %v6554 = vunpack.c.l.b16 %v1373
        %v6555 = vunpack.c.l.b16 %v1374
        %v6556 = vunpack.c.l.b16 %v1375
        %v6557 = vunpack.c.l.b16 %v1376
        %v6558 = vunpack.c.l.b16 %v1377
        %v6559 = vunpack.c.l.b16 %v1378
        %v6560 = vunpack.c.l.b16 %v1379
        %v6561 = vunpack.c.l.b16 %v1380
        %v6562 = vunpack.c.l.b16 %v1381
        %v6563 = vunpack.c.l.b16 %v1382
        %v6564 = vunpack.c.l.b16 %v1383
        %v6565 = vunpack.c.l.b16 %v1384
        %v6566 = vunpack.c.l.b16 %v1385
        %v6567 = vunpack.c.l.b16 %v1386
        %v6568 = vunpack.c.l.b16 %v1387
        %v6569 = vunpack.c.l.b16 %v1388
        %v6570 = vunpack.c.l.b16 %v1389
        %v6571 = vunpack.c.l.b16 %v1390
        %v6572 = vunpack.c.l.b16 %v1391
        %v6573 = vunpack.c.l.b16 %v1392
        %v6574 = vunpack.c.l.b16 %v1393
        %v6575 = vunpack.c.l.b16 %v1394
        %v6576 = vunpack.c.l.b16 %v1395
        %v6577 = vunpack.c.l.b16 %v1396
        %v6578 = vunpack.c.l.b16 %v1397
        %v6579 = vunpack.c.l.b16 %v1398
        %v6580 = vunpack.c.l.b16 %v1399
        %v6581 = vunpack.c.l.b16 %v1400
        %v6582 = vunpack.c.l.b16 %v1401
        %v6583 = vunpack.c.l.b16 %v1402
        %v6584 = vunpack.c.l.b16 %v1403
        %v6585 = vunpack.c.l.b16 %v1404
        %v6586 = vunpack.c.l.b16 %v1405
        %v6587 = vunpack.c.l.b16 %v1406
        %v6588 = vunpack.c.l.b16 %v1407
        %v6589 = vunpack.c.l.b16 %v1408
        %v6590 = vunpack.c.l.b16 %v1409
        %v6591 = vunpack.c.l.b16 %v1410
        %v6592 = vunpack.c.l.b16 %v1411
        %v6593 = vunpack.c.l.b16 %v1412
        %v6594 = vunpack.c.l.b16 %v1413
        %v6595 = vunpack.c.l.b16 %v1414
        %v6596 = vunpack.c.l.b16 %v1415
        %v6597 = vunpack.c.l.b16 %v1416
        %v6598 = vunpack.c.l.b16 %v1417
        %v6599 = vunpack.c.l.b16 %v1418
        %v6600 = vunpack.c.l.b16 %v1419
        %v6601 = vunpack.c.l.b16 %v1420
        %v6602 = vunpack.c.l.b16 %v1421
        %v6603 = vunpack.c.l.b16 %v1422
        %v6604 = vunpack.c.l.b16 %v1423
        %v6605 = vunpack.c.l.b16 %v1424
        %v6606 = vunpack.c.l.b16 %v1425
        %v6607 = vunpack.c.l.b16 %v1426
        %v6608 = vunpack.c.l.b16 %v1427
        %v6609 = vunpack.c.l.b16 %v1428
        %v6610 = vunpack.c.l.b16 %v1429
        %v6611 = vunpack.c.l.b16 %v1430
        %v6612 = vunpack.c.l.b16 %v1431
        %v6613 = vunpack.c.l.b16 %v1432
        %v6614 = vunpack.c.l.b16 %v1433
        %v6615 = vunpack.c.l.b16 %v1434
        %v6616 = vunpack.c.l.b16 %v1435
        %v6617 = vunpack.c.l.b16 %v1436
        %v6618 = vunpack.c.l.b16 %v1437
        %v6619 = vunpack.c.l.b16 %v1438
        %v6620 = vunpack.c.l.b16 %v1439
        %v6621 = vunpack.c.l.b16 %v1440
        %v6622 = vunpack.c.l.b16 %v1441
        %v6623 = vunpack.c.l.b16 %v1442
        %v6624 = vunpack.c.l.b16 %v1443
        %v6625 = vunpack.c.l.b16 %v1444
        %v6626 = vunpack.c.l.b16 %v1445
        %v6627 = vunpack.c.l.b16 %v1446
        %v6628 = vunpack.c.l.b16 %v1447
        %v6629 = vunpack.c.l.b16 %v1448
        %v6630 = vunpack.c.l.b16 %v1449
        %v6631 = vunpack.c.l.b16 %v1450
        %v6632 = vunpack.c.l.b16 %v1451
        %v6633 = vunpack.c.l.b16 %v1452
        %v6634 = vunpack.c.l.b16 %v1453
        %v6635 = vunpack.c.l.b16 %v1454
        %v6636 = vunpack.c.l.b16 %v1455
        %v6637 = vunpack.c.l.b16 %v1456
        %v6638 = vunpack.c.l.b16 %v1457
        %v6639 = vunpack.c.l.b16 %v1458
        %v6640 = vunpack.c.l.b16 %v1459
        %v6641 = vunpack.c.l.b16 %v1460
        %v6642 = vunpack.c.l.b16 %v1461
        %v6643 = vunpack.c.l.b16 %v1462
        %v6644 = vunpack.c.l.b16 %v1463
        %v6645 = vunpack.c.l.b16 %v1464
        %v6646 = vunpack.c.l.b16 %v1465
        %v6647 = vunpack.c.l.b16 %v1466
        %v6648 = vunpack.c.l.b16 %v1467
        %v6649 = vunpack.c.l.b16 %v1468
        %v6650 = vunpack.c.l.b16 %v1469
        %v6651 = vunpack.c.l.b16 %v1470
        %v6652 = vunpack.c.l.b16 %v1471
        %v6653 = vunpack.c.l.b16 %v1472
        %v6654 = vunpack.c.l.b16 %v1473
        %v6655 = vunpack.c.l.b16 %v1474
        %v6656 = vunpack.c.l.b16 %v1475
        %v6657 = vunpack.c.l.b16 %v1476
        %v6658 = vunpack.c.l.b16 %v1477
        %v6659 = vunpack.c.l.b16 %v1478
        %v6660 = vunpack.c.l.b16 %v1479
        %v6661 = vunpack.c.l.b16 %v1480
        %v6662 = vunpack.c.l.b16 %v1481
        %v6663 = vunpack.c.l.b16 %v1482
        %v6664 = vunpack.c.l.b16 %v1483
        %v6665 = vunpack.c.l.b16 %v1484
        %v6666 = vunpack.c.l.b16 %v1485
        %v6667 = vunpack.c.l.b16 %v1486
        %v6668 = vunpack.c.l.b16 %v1487
        %v6669 = vunpack.c.l.b16 %v1488
        %v6670 = vunpack.c.l.b16 %v1489
        %v6671 = vunpack.c.l.b16 %v1490
        %v6672 = vunpack.c.l.b16 %v1491
        %v6673 = vunpack.c.l.b16 %v1492
        %v6674 = vunpack.c.l.b16 %v1493
        %v6675 = vunpack.c.l.b16 %v1494
        %v6676 = vunpack.c.l.b16 %v1495
        %v6677 = vunpack.c.l.b16 %v1496
        %v6678 = vunpack.c.l.b16 %v1497
        %v6679 = vunpack.c.l.b16 %v1498
        %v6680 = vunpack.c.l.b16 %v1499
        %v6681 = vunpack.c.l.b16 %v1500
        %v6682 = vunpack.c.l.b16 %v1501
        %v6683 = vunpack.c.l.b16 %v1502
        %v6684 = vunpack.c.l.b16 %v1503
        %v6685 = vunpack.c.l.b16 %v1504
        %v6686 = vunpack.c.l.b16 %v1505
        %v6687 = vunpack.c.l.b16 %v1506
        %v6688 = vunpack.c.l.b16 %v1507
        %v6689 = vunpack.c.l.b16 %v1508
        %v6690 = vunpack.c.l.b16 %v1509
        %v6691 = vunpack.c.l.b16 %v1510
        %v6692 = vunpack.c.l.b16 %v1511
        %v6693 = vunpack.c.l.b16 %v1512
        %v6694 = vunpack.c.l.b16 %v1513
        %v6695 = vunpack.c.l.b16 %v1514
        %v6696 = vunpack.c.l.b16 %v1515
        %v6697 = vunpack.c.l.b16 %v1516
        %v6698 = vunpack.c.l.b16 %v1517
        %v6699 = vunpack.c.l.b16 %v1518
        %v6700 = vunpack.c.l.b16 %v1519
        %v6701 = vunpack.c.l.b16 %v1520
        %v6702 = vunpack.c.l.b16 %v1521
        %v6703 = vunpack.c.l.b16 %v1522
        %v6704 = vunpack.c.l.b16 %v1523
        %v6705 = vunpack.c.l.b16 %v1524
        %v6706 = vunpack.c.l.b16 %v1525
        %v6707 = vunpack.c.l.b16 %v1526
        %v6708 = vunpack.c.l.b16 %v1527
        %v6709 = vunpack.c.l.b16 %v1528
        %v6710 = vunpack.c.l.b16 %v1529
        %v6711 = vunpack.c.l.b16 %v1530
        %v6712 = vunpack.c.l.b16 %v1531
        %v6713 = vunpack.c.l.b16 %v1532
        %v6714 = vunpack.c.l.b16 %v1533
        %v6715 = vunpack.c.l.b16 %v1534
        %v6716 = vunpack.c.l.b16 %v1535
        %v6717 = vunpack.c.l.b16 %v1536
        %v6718 = vunpack.c.l.b16 %v1537
        %v6719 = vunpack.c.l.b16 %v1538
        %v6720 = vunpack.c.l.b16 %v1539
        %v6721 = vunpack.c.l.b16 %v1540
        %v6722 = vunpack.c.l.b16 %v1541
        %v6723 = vunpack.c.l.b16 %v1542
        %v6724 = vunpack.c.l.b16 %v1543
        %v6725 = vunpack.c.l.b16 %v1544
        %v6726 = vunpack.c.l.b16 %v1545
        %v6727 = vunpack.c.l.b16 %v1546
        %v6728 = vunpack.c.l.b16 %v1547
        %v6729 = vunpack.c.l.b16 %v1548
        %v6730 = vunpack.c.l.b16 %v1549
        %v6731 = vunpack.c.l.b16 %v1550
        %v6732 = vunpack.c.l.b16 %v1551
        %v6733 = vunpack.c.l.b16 %v1552
        %v6734 = vunpack.c.l.b16 %v1553
        %v6735 = vunpack.c.l.b16 %v1554
        %v6736 = vunpack.c.l.b16 %v1555
        %v6737 = vunpack.c.l.b16 %v1556
        %v6738 = vunpack.c.l.b16 %v1557
        %v6739 = vunpack.c.l.b16 %v1558
        %v6740 = vunpack.c.l.b16 %v1559
        %v6741 = vunpack.c.l.b16 %v1560
        %v6742 = vunpack.c.l.b16 %v1561
        %v6743 = vunpack.c.l.b16 %v1562
        %v6744 = vunpack.c.l.b16 %v1563
        %v6745 = vunpack.c.l.b16 %v1564
        %v6746 = vunpack.c.l.b16 %v1565
        %v6747 = vunpack.c.l.b16 %v1566
        %v6748 = vunpack.c.l.b16 %v1567
        %v6749 = vunpack.c.l.b16 %v1568
        %v6750 = vunpack.c.l.b16 %v1569
        %v6751 = vunpack.c.l.b16 %v1570
        %v6752 = vunpack.c.l.b16 %v1571
        %v6753 = vunpack.c.l.b16 %v1572
        %v6754 = vunpack.c.l.b16 %v1573
        %v6755 = vunpack.c.l.b16 %v1574
        %v6756 = vunpack.c.l.b16 %v1575
        %v6757 = vunpack.c.l.b16 %v1576
        %v6758 = vunpack.c.l.b16 %v1577
        %v6759 = vunpack.c.l.b16 %v1578
        %v6760 = vunpack.c.l.b16 %v1579
        %v6761 = vunpack.c.l.b16 %v1580
        %v6762 = vunpack.c.l.b16 %v1581
        %v6763 = vunpack.c.l.b16 %v1582
        %v6764 = vunpack.c.l.b16 %v1583
        %v6765 = vunpack.c.l.b16 %v1584
        %v6766 = vunpack.c.l.b16 %v1585
        %v6767 = vunpack.c.l.b16 %v1586
        %v6768 = vunpack.c.l.b16 %v1587
        %v6769 = vunpack.c.l.b16 %v1588
        %v6770 = vunpack.c.l.b16 %v1589
        %v6771 = vunpack.c.l.b16 %v1590
        %v6772 = vunpack.c.l.b16 %v1591
        %v6773 = vunpack.c.l.b16 %v1592
        %v6774 = vunpack.c.l.b16 %v1593
        %v6775 = vunpack.c.l.b16 %v1594
        %v6776 = vunpack.c.l.b16 %v1595
        %v6777 = vunpack.c.l.b16 %v1596
        %v6778 = vunpack.c.l.b16 %v1597
        %v6779 = vunpack.c.l.b16 %v1598
        %v6780 = vunpack.c.l.b16 %v1599
        %v6781 = vunpack.c.l.b16 %v1600
        %v6782 = vunpack.c.l.b16 %v1601
        %v6783 = vunpack.c.l.b16 %v1602
        %v6784 = vunpack.c.l.b16 %v1603
        %v6785 = vunpack.c.l.b16 %v1604
        %v6786 = vunpack.c.l.b16 %v1605
        %v6787 = vunpack.c.l.b16 %v1606
        %v6788 = vunpack.c.l.b16 %v1607
        %v6789 = vunpack.c.l.b16 %v1608
        %v6790 = vunpack.c.l.b16 %v1609
        %v6791 = vunpack.c.l.b16 %v1610
        %v6792 = vunpack.c.l.b16 %v1611
        %v6793 = vunpack.c.l.b16 %v1612
        %v6794 = vunpack.c.l.b16 %v1613
        %v6795 = vunpack.c.l.b16 %v1614
        %v6796 = vunpack.c.l.b16 %v1615
        %v6797 = vunpack.c.l.b16 %v1616
        %v6798 = vunpack.c.l.b16 %v1617
        %v6799 = vunpack.c.l.b16 %v1618
        %v6800 = vunpack.c.l.b16 %v1619
        %v6801 = vunpack.c.l.b16 %v1620
        %v6802 = vunpack.c.l.b16 %v1621
        %v6803 = vunpack.c.l.b16 %v1622
        %v6804 = vunpack.c.l.b16 %v1623
        %v6805 = vunpack.c.l.b16 %v1624
        %v6806 = vunpack.c.l.b16 %v1625
        %v6807 = vunpack.c.l.b16 %v1626
        %v6808 = vunpack.c.l.b16 %v1627
        %v6809 = vunpack.c.l.b16 %v1628
        %v6810 = vunpack.c.l.b16 %v1629
        %v6811 = vunpack.c.l.b16 %v1630
        %v6812 = vunpack.c.l.b16 %v1631
        %v6813 = vunpack.c.l.b16 %v1632
        %v6814 = vunpack.c.l.b16 %v1633
        %v6815 = vunpack.c.l.b16 %v1634
        %v6816 = vunpack.c.l.b16 %v1635
        %v6817 = vunpack.c.l.b16 %v1636
        %v6818 = vunpack.c.l.b16 %v1637
        %v6819 = vunpack.c.l.b16 %v1638
        %v6820 = vunpack.c.l.b16 %v1639
        %v6821 = vunpack.c.l.b16 %v1640
        %v6822 = vunpack.c.l.b16 %v1641
        %v6823 = vunpack.c.l.b16 %v1642
        %v6824 = vunpack.c.l.b16 %v1643
        %v6825 = vunpack.c.l.b16 %v1644
        %v6826 = vunpack.c.l.b16 %v1645
        %v6827 = vunpack.c.l.b16 %v1646
        %v6828 = vunpack.c.l.b16 %v1647
        %v6829 = vunpack.c.l.b16 %v1648
        %v6830 = vunpack.c.l.b16 %v1649
        %v6831 = vunpack.c.l.b16 %v1650
        %v6832 = vunpack.c.l.b16 %v1651
        %v6833 = vunpack.c.l.b16 %v1652
        %v6834 = vunpack.c.l.b16 %v1653
        %v6835 = vunpack.c.l.b16 %v1654
        %v6836 = vunpack.c.l.b16 %v1655
        %v6837 = vunpack.c.l.b16 %v1656
        %v6838 = vunpack.c.l.b16 %v1657
        %v6839 = vunpack.c.l.b16 %v1658
        %v6840 = vunpack.c.l.b16 %v1659
        %v6841 = vunpack.c.l.b16 %v1660
        %v6842 = vunpack.c.l.b16 %v1661
        %v6843 = vunpack.c.l.b16 %v1662
        %v6844 = vunpack.c.l.b16 %v1663
        %v6845 = vunpack.c.l.b16 %v1664
        %v6846 = vunpack.c.l.b16 %v1665
        %v6847 = vunpack.c.l.b16 %v1666
        %v6848 = vunpack.c.l.b16 %v1667
        %v6849 = vunpack.c.l.b16 %v1668
        %v6850 = vunpack.c.l.b16 %v1669
        %v6851 = vunpack.c.l.b16 %v1670
        %v6852 = vunpack.c.l.b16 %v1671
        %v6853 = vunpack.c.l.b16 %v1672
        %v6854 = vunpack.c.l.b16 %v1673
        %v6855 = vunpack.c.l.b16 %v1674
        %v6856 = vunpack.c.l.b16 %v1675
        %v6857 = vunpack.c.l.b16 %v1676
        %v6858 = vunpack.c.l.b16 %v1677
        %v6859 = vunpack.c.l.b16 %v1678
        %v6860 = vunpack.c.l.b16 %v1679
        %v6861 = vunpack.c.l.b16 %v1680
        %v6862 = vunpack.c.l.b16 %v1681
        %v6863 = vunpack.c.l.b16 %v1682
        %v6864 = vunpack.c.l.b16 %v1683
        %v6865 = vunpack.c.l.b16 %v1684
        %v6866 = vunpack.c.l.b16 %v1685
        %v6867 = vunpack.c.l.b16 %v1686
        %v6868 = vunpack.c.l.b16 %v1687
        %v6869 = vunpack.c.l.b16 %v1688
        %v6870 = vunpack.c.l.b16 %v1689
        %v6871 = vunpack.c.l.b16 %v1690
        %v6872 = vunpack.c.l.b16 %v1691
        %v6873 = vunpack.c.l.b16 %v1692
        %v6874 = vunpack.c.l.b16 %v1693
        %v6875 = vunpack.c.l.b16 %v1694
        %v6876 = vunpack.c.l.b16 %v1695
        %v6877 = vunpack.c.l.b16 %v1696
        %v6878 = vunpack.c.l.b16 %v1697
        %v6879 = vunpack.c.l.b16 %v1698
        %v6880 = vunpack.c.l.b16 %v1699
        %v6881 = vunpack.c.l.b16 %v1700
        %v6882 = vunpack.c.l.b16 %v1701
        %v6883 = vunpack.c.l.b16 %v1702
        %v6884 = vunpack.c.l.b16 %v1703
        %v6885 = vunpack.c.l.b16 %v1704
        %v6886 = vunpack.c.l.b16 %v1705
        %v6887 = vunpack.c.l.b16 %v1706
        %v6888 = vunpack.c.l.b16 %v1707
        %v6889 = vunpack.c.l.b16 %v1708
        %v6890 = vunpack.c.l.b16 %v1709
        %v6891 = vunpack.c.l.b16 %v1710
        %v6892 = vunpack.c.l.b16 %v1711
        %v6893 = vunpack.c.l.b16 %v1712
        %v6894 = vunpack.c.l.b16 %v1713
        %v6895 = vunpack.c.l.b16 %v1714
        %v6896 = vunpack.c.l.b16 %v1715
        %v6897 = vunpack.c.l.b16 %v1716
        %v6898 = vunpack.c.l.b16 %v1717
        %v6899 = vunpack.c.l.b16 %v1718
        %v6900 = vunpack.c.l.b16 %v1719
        %v6901 = vunpack.c.l.b16 %v1720
        %v6902 = vunpack.c.l.b16 %v1721
        %v6903 = vunpack.c.l.b16 %v1722
        %v6904 = vunpack.c.l.b16 %v1723
        %v6905 = vunpack.c.l.b16 %v1724
        %v6906 = vunpack.c.l.b16 %v1725
        %v6907 = vunpack.c.l.b16 %v1726
        %v6908 = vunpack.c.l.b16 %v1727
        %v6909 = vunpack.c.l.b16 %v1728
        %v6910 = vunpack.c.l.b16 %v1729
        %v6911 = vunpack.c.l.b16 %v1730
        %v6912 = vunpack.c.l.b16 %v1731
        %v6913 = vunpack.c.l.b16 %v1732
        %v6914 = vunpack.c.l.b16 %v1733
        %v6915 = vunpack.c.l.b16 %v1734
        %v6916 = vunpack.c.l.b16 %v1735
        %v6917 = vunpack.c.l.b16 %v1736
        %v6918 = vunpack.c.l.b16 %v1737
        %v6919 = vunpack.c.l.b16 %v1738
        %v6920 = vunpack.c.l.b16 %v1739
        %v6921 = vunpack.c.l.b16 %v1740
        %v6922 = vunpack.c.l.b16 %v1741
        %v6923 = vunpack.c.l.b16 %v1742
        %v6924 = vunpack.c.l.b16 %v1743
        %v6925 = vunpack.c.l.b16 %v1744
        %v6926 = vunpack.c.l.b16 %v1745
        %v6927 = vunpack.c.l.b16 %v1746
        %v6928 = vunpack.c.l.b16 %v1747
        %v6929 = vunpack.c.l.b16 %v1748
        %v6930 = vunpack.c.l.b16 %v1749
        %v6931 = vunpack.c.l.b16 %v1750
        %v6932 = vunpack.c.l.b16 %v1751
        %v6933 = vunpack.c.l.b16 %v1752
        %v6934 = vunpack.c.l.b16 %v1753
        %v6935 = vunpack.c.l.b16 %v1754
        %v6936 = vunpack.c.l.b16 %v1755
        %v6937 = vunpack.c.l.b16 %v1756
        %v6938 = vunpack.c.l.b16 %v1757
        %v6939 = vunpack.c.l.b16 %v1758
        %v6940 = vunpack.c.l.b16 %v1759
        %v6941 = vunpack.c.l.b16 %v1760
        %v6942 = vunpack.c.l.b16 %v1761
        %v6943 = vunpack.c.l.b16 %v1762
        %v6944 = vunpack.c.l.b16 %v1763
        %v6945 = vunpack.c.l.b16 %v1764
        %v6946 = vunpack.c.l.b16 %v1765
        %v6947 = vunpack.c.l.b16 %v1766
        %v6948 = vunpack.c.l.b16 %v1767
        %v6949 = vunpack.c.l.b16 %v1768
        %v6950 = vunpack.c.l.b16 %v1769
        %v6951 = vunpack.c.l.b16 %v1770
        %v6952 = vunpack.c.l.b16 %v1771
        %v6953 = vunpack.c.l.b16 %v1772
        %v6954 = vunpack.c.l.b16 %v1773
        %v6955 = vunpack.c.l.b16 %v1774
        %v6956 = vunpack.c.l.b16 %v1775
        %v6957 = vunpack.c.l.b16 %v1776
        %v6958 = vunpack.c.l.b16 %v1777
        %v6959 = vunpack.c.l.b16 %v1778
        %v6960 = vunpack.c.l.b16 %v1779
        %v6961 = vunpack.c.l.b16 %v1780
        %v6962 = vunpack.c.l.b16 %v1781
        %v6963 = vunpack.c.l.b16 %v1782
        %v6964 = vunpack.c.l.b16 %v1783
        %v6965 = vunpack.c.l.b16 %v1784
        %v6966 = vunpack.c.l.b16 %v1785
        %v6967 = vunpack.c.l.b16 %v1786
        %v6968 = vunpack.c.l.b16 %v1787
        %v6969 = vunpack.c.l.b16 %v1788
        %v6970 = vunpack.c.l.b16 %v1789
        %v6971 = vunpack.c.l.b16 %v1790
        %v6972 = vunpack.c.l.b16 %v1791
        %v6973 = vunpack.c.l.b16 %v1792
        %v6974 = vunpack.c.l.b16 %v1793
        %v6975 = vunpack.c.l.b16 %v1794
        %v6976 = vunpack.c.l.b16 %v1795
        %v6977 = vunpack.c.l.b16 %v1796
        %v6978 = vunpack.c.l.b16 %v1797
        %v6979 = vunpack.c.l.b16 %v1798
        %v6980 = vunpack.c.l.b16 %v1799
        %v6981 = vunpack.c.l.b16 %v1800
        %v6982 = vunpack.c.l.b16 %v1801
        %v6983 = vunpack.c.l.b16 %v1802
        %v6984 = vunpack.c.l.b16 %v1803
        %v6985 = vunpack.c.l.b16 %v1804
        %v6986 = vunpack.c.l.b16 %v1805
        %v6987 = vunpack.c.l.b16 %v1806
        %v6988 = vunpack.c.l.b16 %v1807
        %v6989 = vunpack.c.l.b16 %v1808
        %v6990 = vunpack.c.l.b16 %v1809
        %v6991 = vunpack.c.l.b16 %v1810
        %v6992 = vunpack.c.l.b16 %v1811
        %v6993 = vunpack.c.l.b16 %v1812
        %v6994 = vunpack.c.l.b16 %v1813
        %v6995 = vunpack.c.l.b16 %v1814
        %v6996 = vunpack.c.l.b16 %v1815
        %v6997 = vunpack.c.l.b16 %v1816
        %v6998 = vunpack.c.l.b16 %v1817
        %v6999 = vunpack.c.l.b16 %v1818
        %v7000 = vunpack.c.l.b16 %v1819
        %v7001 = vunpack.c.l.b16 %v1820
        %v7002 = vunpack.c.l.b16 %v1821
        %v7003 = vunpack.c.l.b16 %v1822
        %v7004 = vunpack.c.l.b16 %v1823
        %v7005 = vunpack.c.l.b16 %v1824
        %v7006 = vunpack.c.l.b16 %v1825
        %v7007 = vunpack.c.l.b16 %v1826
        %v7008 = vunpack.c.l.b16 %v1827
        %v7009 = vunpack.c.l.b16 %v1828
        %v7010 = vunpack.c.l.b16 %v1829
        %v7011 = vunpack.c.l.b16 %v1830
        %v7012 = vunpack.c.l.b16 %v1831
        %v7013 = vunpack.c.l.b16 %v1832
        %v7014 = vunpack.c.l.b16 %v1833
        %v7015 = vunpack.c.l.b16 %v1834
        %v7016 = vunpack.c.l.b16 %v1835
        %v7017 = vunpack.c.l.b16 %v1836
        %v7018 = vunpack.c.l.b16 %v1837
        %v7019 = vunpack.c.l.b16 %v1838
        %v7020 = vunpack.c.l.b16 %v1839
        %v7021 = vunpack.c.l.b16 %v1840
        %v7022 = vunpack.c.l.b16 %v1841
        %v7023 = vunpack.c.l.b16 %v1842
        %v7024 = vunpack.c.l.b16 %v1843
        %v7025 = vunpack.c.l.b16 %v1844
        %v7026 = vunpack.c.l.b16 %v1845
        %v7027 = vunpack.c.l.b16 %v1846
        %v7028 = vunpack.c.l.b16 %v1847
        %v7029 = vunpack.c.l.b16 %v1848
        %v7030 = vunpack.c.l.b16 %v1849
        %v7031 = vunpack.c.l.b16 %v1850
        %v7032 = vunpack.c.l.b16 %v1851
        %v7033 = vunpack.c.l.b16 %v1852
        %v7034 = vunpack.c.l.b16 %v1853
        %v7035 = vunpack.c.l.b16 %v1854
        %v7036 = vunpack.c.l.b16 %v1855
        %v7037 = vunpack.c.l.b16 %v1856
        %v7038 = vunpack.c.l.b16 %v1857
        %v7039 = vunpack.c.l.b16 %v1858
        %v7040 = vunpack.c.l.b16 %v1859
        %v7041 = vunpack.c.l.b16 %v1860
        %v7042 = vunpack.c.l.b16 %v1861
        %v7043 = vunpack.c.l.b16 %v1862
        %v7044 = vunpack.c.l.b16 %v1863
        %v7045 = vunpack.c.l.b16 %v1864
        %v7046 = vunpack.c.l.b16 %v1865
        %v7047 = vunpack.c.l.b16 %v1866
        %v7048 = vunpack.c.l.b16 %v1867
        %v7049 = vunpack.c.l.b16 %v1868
        %v7050 = vunpack.c.l.b16 %v1869
        %v7051 = vunpack.c.l.b16 %v1870
        %v7052 = vunpack.c.l.b16 %v1871
        %v7053 = vunpack.c.l.b16 %v1872
        %v7054 = vunpack.c.l.b16 %v1873
        %v7055 = vunpack.c.l.b16 %v1874
        %v7056 = vunpack.c.l.b16 %v1875
        %v7057 = vunpack.c.l.b16 %v1876
        %v7058 = vunpack.c.l.b16 %v1877
        %v7059 = vunpack.c.l.b16 %v1878
        %v7060 = vunpack.c.l.b16 %v1879
        %v7061 = vunpack.c.l.b16 %v1880
        %v7062 = vunpack.c.l.b16 %v1881
        %v7063 = vunpack.c.l.b16 %v1882
        %v7064 = vunpack.c.l.b16 %v1883
        %v7065 = vunpack.c.l.b16 %v1884
        %v7066 = vunpack.c.l.b16 %v1885
        %v7067 = vunpack.c.l.b16 %v1886
        %v7068 = vunpack.c.l.b16 %v1887
        %v7069 = vunpack.c.l.b16 %v1888
        %v7070 = vunpack.c.l.b16 %v1889
        %v7071 = vunpack.c.l.b16 %v1890
        %v7072 = vunpack.c.l.b16 %v1891
        %v7073 = vunpack.c.l.b16 %v1892
        %v7074 = vunpack.c.l.b16 %v1893
        %v7075 = vunpack.c.l.b16 %v1894
        %v7076 = vunpack.c.l.b16 %v1895
        %v7077 = vunpack.c.l.b16 %v1896
        %v7078 = vunpack.c.l.b16 %v1897
        %v7079 = vunpack.c.l.b16 %v1898
        %v7080 = vunpack.c.l.b16 %v1899
        %v7081 = vunpack.c.l.b16 %v1900
        %v7082 = vunpack.c.l.b16 %v1901
        %v7083 = vunpack.c.l.b16 %v1902
        %v7084 = vunpack.c.l.b16 %v1903
        %v7085 = vunpack.c.l.b16 %v1904
        %v7086 = vunpack.c.l.b16 %v1905
        %v7087 = vunpack.c.l.b16 %v1906
        %v7088 = vunpack.c.l.b16 %v1907
        %v7089 = vunpack.c.l.b16 %v1908
        %v7090 = vunpack.c.l.b16 %v1909
        %v7091 = vunpack.c.l.b16 %v1910
        %v7092 = vunpack.c.l.b16 %v1911
        %v7093 = vunpack.c.l.b16 %v1912
        %v7094 = vunpack.c.l.b16 %v1913
        %v7095 = vunpack.c.l.b16 %v1914
        %v7096 = vunpack.c.l.b16 %v1915
        %v7097 = vunpack.c.l.b16 %v1916
        %v7098 = vunpack.c.l.b16 %v1917
        %v7099 = vunpack.c.l.b16 %v1918
        %v7100 = vunpack.c.l.b16 %v1919
        %v7101 = vunpack.c.l.b16 %v1920
        %v7102 = vunpack.c.l.b16 %v1921
        %v7103 = vunpack.c.l.b16 %v1922
        %v7104 = vunpack.c.l.b16 %v1923
        %v7105 = vunpack.c.l.b16 %v1924
        %v7106 = vunpack.c.l.b16 %v1925
        %v7107 = vunpack.c.l.b16 %v1926
        %v7108 = vunpack.c.l.b16 %v1927
        %v7109 = vunpack.c.l.b16 %v1928
        %v7110 = vunpack.c.l.b16 %v1929
        %v7111 = vunpack.c.l.b16 %v1930
        %v7112 = vunpack.c.l.b16 %v1931
        %v7113 = vunpack.c.l.b16 %v1932
        %v7114 = vunpack.c.l.b16 %v1933
        %v7115 = vunpack.c.l.b16 %v1934
        %v7116 = vunpack.c.l.b16 %v1935
        %v7117 = vunpack.c.l.b16 %v1936
        %v7118 = vunpack.c.l.b16 %v1937
        %v7119 = vunpack.c.l.b16 %v1938
        %v7120 = vunpack.c.l.b16 %v1939
        %v7121 = vunpack.c.l.b16 %v1940
        %v7122 = vunpack.c.l.b16 %v1941
        %v7123 = vunpack.c.l.b16 %v1942
        %v7124 = vunpack.c.l.b16 %v1943
        %v7125 = vunpack.c.l.b16 %v1944
        %v7126 = vunpack.c.l.b16 %v1945
        %v7127 = vunpack.c.l.b16 %v1946
        %v7128 = vunpack.c.l.b16 %v1947
        %v7129 = vunpack.c.l.b16 %v1948
        %v7130 = vunpack.c.l.b16 %v1949
        %v7131 = vunpack.c.l.b16 %v1950
        %v7132 = vunpack.c.l.b16 %v1951
        %v7133 = vunpack.c.l.b16 %v1952
        %v7134 = vunpack.c.l.b16 %v1953
        %v7135 = vunpack.c.l.b16 %v1954
        %v7136 = vunpack.c.l.b16 %v1955
        %v7137 = vunpack.c.l.b16 %v1956
        %v7138 = vunpack.c.l.b16 %v1957
        %v7139 = vunpack.c.l.b16 %v1958
        %v7140 = vunpack.c.l.b16 %v1959
        %v7141 = vunpack.c.l.b16 %v1960
        %v7142 = vunpack.c.l.b16 %v1961
        %v7143 = vunpack.c.l.b16 %v1962
        %v7144 = vunpack.c.l.b16 %v1963
        %v7145 = vunpack.c.l.b16 %v1964
        %v7146 = vunpack.c.l.b16 %v1965
        %v7147 = vunpack.c.l.b16 %v1966
        %v7148 = vunpack.c.l.b16 %v1967
        %v7149 = vunpack.c.l.b16 %v1968
        %v7150 = vunpack.c.l.b16 %v1969
        %v7151 = vunpack.c.l.b16 %v1970
        %v7152 = vunpack.c.l.b16 %v1971
        %v7153 = vunpack.c.l.b16 %v1972
        %v7154 = vunpack.c.l.b16 %v1973
        %v7155 = vunpack.c.l.b16 %v1974
        %v7156 = vunpack.c.l.b16 %v1975
        %v7157 = vunpack.c.l.b16 %v1976
        %v7158 = vunpack.c.l.b16 %v1977
        %v7159 = vunpack.c.l.b16 %v1978
        %v7160 = vunpack.c.l.b16 %v1979
        %v7161 = vunpack.c.l.b16 %v1980
        %v7162 = vunpack.c.l.b16 %v1981
        %v7163 = vunpack.c.l.b16 %v1982
        %v7164 = vunpack.c.l.b16 %v1983
        %v7165 = vunpack.c.l.b16 %v1984
        %v7166 = vunpack.c.l.b16 %v1985
        %v7167 = vunpack.c.l.b16 %v1986
        %v7168 = vunpack.c.l.b16 %v1987
        %v7169 = vunpack.c.l.b16 %v1988
        %v7170 = vunpack.c.l.b16 %v1989
        %v7171 = vunpack.c.l.b16 %v1990
        %v7172 = vunpack.c.l.b16 %v1991
        %v7173 = vunpack.c.l.b16 %v1992
        %v7174 = vunpack.c.l.b16 %v1993
        %v7175 = vunpack.c.l.b16 %v1994
        %v7176 = vunpack.c.l.b16 %v1995
        %v7177 = vunpack.c.l.b16 %v1996
        %v7178 = vunpack.c.l.b16 %v1997
        %v7179 = vunpack.c.l.b16 %v1998
        %v7180 = vunpack.c.l.b16 %v1999
        %v7181 = vunpack.c.l.b16 %v2000
        %v7182 = vunpack.c.l.b16 %v2001
        %v7183 = vunpack.c.l.b16 %v2002
        %v7184 = vunpack.c.l.b16 %v2003
        %v7185 = vunpack.c.l.b16 %v2004
        %v7186 = vunpack.c.l.b16 %v2005
        %v7187 = vunpack.c.l.b16 %v2006
        %v7188 = vunpack.c.l.b16 %v2007
        %v7189 = vunpack.c.l.b16 %v2008
        %v7190 = vunpack.c.l.b16 %v2009
        %v7191 = vunpack.c.l.b16 %v2010
        %v7192 = vunpack.c.l.b16 %v2011
        %v7193 = vunpack.c.l.b16 %v2012
        %v7194 = vunpack.c.l.b16 %v2013
        %v7195 = vunpack.c.l.b16 %v2014
        %v7196 = vunpack.c.l.b16 %v2015
        %v7197 = vunpack.c.l.b16 %v2016
        %v7198 = vunpack.c.l.b16 %v2017
        %v7199 = vunpack.c.l.b16 %v2018
        %v7200 = vunpack.c.l.b16 %v2019
        %v7201 = vunpack.c.l.b16 %v2020
        %v7202 = vunpack.c.l.b16 %v2021
        %v7203 = vunpack.c.l.b16 %v2022
        %v7204 = vunpack.c.l.b16 %v2023
        %v7205 = vunpack.c.l.b16 %v2024
        %v7206 = vunpack.c.l.b16 %v2025
        %v7207 = vunpack.c.l.b16 %v2026
        %v7208 = vunpack.c.l.b16 %v2027
        %v7209 = vunpack.c.l.b16 %v2028
        %v7210 = vunpack.c.l.b16 %v2029
        %v7211 = vunpack.c.l.b16 %v2030
        %v7212 = vunpack.c.l.b16 %v2031
        %v7213 = vunpack.c.l.b16 %v2032
        %v7214 = vunpack.c.l.b16 %v2033
        %v7215 = vunpack.c.l.b16 %v2034
        %v7216 = vunpack.c.l.b16 %v2035
        %v7217 = vunpack.c.l.b16 %v2036
        %v7218 = vunpack.c.l.b16 %v2037
        %v7219 = vunpack.c.l.b16 %v2038
        %v7220 = vunpack.c.l.b16 %v2039
        %v7221 = vunpack.c.l.b16 %v2040
        %v7222 = vunpack.c.l.b16 %v2041
        %v7223 = vunpack.c.l.b16 %v2042
        %v7224 = vunpack.c.l.b16 %v2043
        %v7225 = vunpack.c.l.b16 %v2044
        %v7226 = vunpack.c.l.b16 %v2045
        %v7227 = vunpack.c.l.b16 %v2046
        %v7228 = vunpack.c.l.b16 %v2047
        %v7229 = vunpack.c.l.b16 %v2048
        %v7230 = vunpack.c.l.b16 %v2049
        %v7231 = vunpack.c.l.b16 %v2050
        %v7232 = vunpack.c.l.b16 %v2051
        %v7233 = vunpack.c.l.b16 %v2052
        %v7234 = vunpack.c.l.b16 %v2053
        %v7235 = vunpack.c.l.b16 %v2054
        %v7236 = vunpack.c.l.b16 %v2055
        %v7237 = vunpack.c.l.b16 %v2056
        %v7238 = vunpack.c.l.b16 %v2057
        %v7239 = vunpack.c.l.b16 %v2058
        %v7240 = vunpack.c.l.b16 %v2059
        %v7241 = vunpack.c.l.b16 %v2060
        %v7242 = vunpack.c.l.b16 %v2061
        %v7243 = vunpack.c.l.b16 %v2062
        %v7244 = vunpack.c.l.b16 %v2063
        %v7245 = vunpack.c.l.b16 %v2064
        %v7246 = vunpack.c.l.b16 %v2065
        %v7247 = vunpack.c.l.b16 %v2066
        %v7248 = vunpack.c.l.b16 %v2067
        %v7249 = vunpack.c.l.b16 %v2068
        %v7250 = vunpack.c.l.b16 %v2069
        %v7251 = vunpack.c.l.b16 %v2070
        %v7252 = vunpack.c.l.b16 %v2071
        %v7253 = vunpack.c.l.b16 %v2072
        %v7254 = vunpack.c.l.b16 %v2073
        %v7255 = vunpack.c.l.b16 %v2074
        %v7256 = vunpack.c.l.b16 %v2075
        %v7257 = vunpack.c.l.b16 %v2076
        %v7258 = vunpack.c.l.b16 %v2077
        %v7259 = vunpack.c.l.b16 %v2078
        %v7260 = vunpack.c.l.b16 %v2079
        %v7261 = vunpack.c.l.b16 %v2080
        %v7262 = vunpack.c.l.b16 %v2081
        %v7263 = vunpack.c.l.b16 %v2082
        %v7264 = vunpack.c.l.b16 %v2083
        %v7265 = vunpack.c.l.b16 %v2084
        %v7266 = vunpack.c.l.b16 %v2085
        %v7267 = vunpack.c.l.b16 %v2086
        %v7268 = vunpack.c.l.b16 %v2087
        %v7269 = vunpack.c.l.b16 %v2088
        %v7270 = vunpack.c.l.b16 %v2089
        %v7271 = vunpack.c.l.b16 %v2090
        %v7272 = vunpack.c.l.b16 %v2091
        %v7273 = vunpack.c.l.b16 %v2092
        %v7274 = vunpack.c.l.b16 %v2093
        %v7275 = vunpack.c.l.b16 %v2094
        %v7276 = vunpack.c.l.b16 %v2095
        %v7277 = vunpack.c.l.b16 %v2096
        %v7278 = vunpack.c.l.b16 %v2097
        %v7279 = vunpack.c.l.b16 %v2098
        %v7280 = vunpack.c.l.b16 %v2099
        %v7281 = vunpack.c.l.b16 %v2100
        %v7282 = vunpack.c.l.b16 %v2101
        %v7283 = vunpack.c.l.b16 %v2102
        %v7284 = vunpack.c.l.b16 %v2103
        %v7285 = vunpack.c.l.b16 %v2104
        %v7286 = vunpack.c.l.b16 %v2105
        %v7287 = vunpack.c.l.b16 %v2106
        %v7288 = vunpack.c.l.b16 %v2107
        %v7289 = vunpack.c.l.b16 %v2108
        %v7290 = vunpack.c.l.b16 %v2109
        %v7291 = vunpack.c.l.b16 %v2110
        %v7292 = vunpack.c.l.b16 %v2111
        %v7293 = vunpack.c.l.b16 %v2112
        %v7294 = vunpack.c.l.b16 %v2113
        %v7295 = vunpack.c.l.b16 %v2114
        %v7296 = vunpack.c.l.b16 %v2115
        %v7297 = vunpack.c.l.b16 %v2116
        %v7298 = vunpack.c.l.b16 %v2117
        %v7299 = vunpack.c.l.b16 %v2118
        %v7300 = vunpack.c.l.b16 %v2119
        %v7301 = vunpack.c.l.b16 %v2120
        %v7302 = vunpack.c.l.b16 %v2121
        %v7303 = vunpack.c.l.b16 %v2122
        %v7304 = vunpack.c.l.b16 %v2123
        %v7305 = vunpack.c.l.b16 %v2124
        %v7306 = vunpack.c.l.b16 %v2125
        %v7307 = vunpack.c.l.b16 %v2126
        %v7308 = vunpack.c.l.b16 %v2127
        %v7309 = vunpack.c.l.b16 %v2128
        %v7310 = vunpack.c.l.b16 %v2129
        %v7311 = vunpack.c.l.b16 %v2130
        %v7312 = vunpack.c.l.b16 %v2131
        %v7313 = vunpack.c.l.b16 %v2132
        %v7314 = vunpack.c.l.b16 %v2133
        %v7315 = vunpack.c.l.b16 %v2134
        %v7316 = vunpack.c.l.b16 %v2135
        %v7317 = vunpack.c.l.b16 %v2136
        %v7318 = vunpack.c.l.b16 %v2137
        %v7319 = vunpack.c.l.b16 %v2138
        %v7320 = vunpack.c.l.b16 %v2139
        %v7321 = vunpack.c.l.b16 %v2140
        %v7322 = vunpack.c.l.b16 %v2141
        %v7323 = vunpack.c.l.b16 %v2142
        %v7324 = vunpack.c.l.b16 %v2143
        %v7325 = vunpack.c.l.b16 %v2144
        %v7326 = vunpack.c.l.b16 %v2145
        %v7327 = vunpack.c.l.b16 %v2146
        %v7328 = vunpack.c.l.b16 %v2147
        %v7329 = vunpack.c.l.b16 %v2148
        %v7330 = vunpack.c.l.b16 %v2149
        %v7331 = vunpack.c.l.b16 %v2150
        %v7332 = vunpack.c.l.b16 %v2151
        %v7333 = vunpack.c.l.b16 %v2152
        %v7334 = vunpack.c.l.b16 %v2153
        %v7335 = vunpack.c.l.b16 %v2154
        %v7336 = vunpack.c.l.b16 %v2155
        %v7337 = vunpack.c.l.b16 %v2156
        %v7338 = vunpack.c.l.b16 %v2157
        %v7339 = vunpack.c.l.b16 %v2158
        %v7340 = vunpack.c.l.b16 %v2159
        %v7341 = vunpack.c.l.b16 %v2160
        %v7342 = vunpack.c.l.b16 %v2161
        %v7343 = vunpack.c.l.b16 %v2162
        %v7344 = vunpack.c.l.b16 %v2163
        %v7345 = vunpack.c.l.b16 %v2164
        %v7346 = vunpack.c.l.b16 %v2165
        %v7347 = vunpack.c.l.b16 %v2166
        %v7348 = vunpack.c.l.b16 %v2167
        %v7349 = vunpack.c.l.b16 %v2168
        %v7350 = vunpack.c.l.b16 %v2169
        %v7351 = vunpack.c.l.b16 %v2170
        %v7352 = vunpack.c.l.b16 %v2171
        %v7353 = vunpack.c.l.b16 %v2172
        %v7354 = vunpack.c.l.b16 %v2173
        %v7355 = vunpack.c.l.b16 %v2174
        %v7356 = vunpack.c.l.b16 %v2175
        %v7357 = vunpack.c.l.b16 %v2176
        %v7358 = vunpack.c.l.b16 %v2177
        %v7359 = vunpack.c.l.b16 %v2178
        %v7360 = vunpack.c.l.b16 %v2179
        %v7361 = vunpack.c.l.b16 %v2180
        %v7362 = vunpack.c.l.b16 %v2181
        %v7363 = vunpack.c.l.b16 %v2182
        %v7364 = vunpack.c.l.b16 %v2183
        %v7365 = vunpack.c.l.b16 %v2184
        %v7366 = vunpack.c.l.b16 %v2185
        %v7367 = vunpack.c.l.b16 %v2186
        %v7368 = vunpack.c.l.b16 %v2187
        %v7369 = vunpack.c.l.b16 %v2188
        %v7370 = vunpack.c.l.b16 %v2189
        %v7371 = vunpack.c.l.b16 %v2190
        %v7372 = vunpack.c.l.b16 %v2191
        %v7373 = vunpack.c.l.b16 %v2192
        %v7374 = vunpack.c.l.b16 %v2193
        %v7375 = vunpack.c.l.b16 %v2194
        %v7376 = vunpack.c.l.b16 %v2195
        %v7377 = vunpack.c.l.b16 %v2196
        %v7378 = vunpack.c.l.b16 %v2197
        %v7379 = vunpack.c.l.b16 %v2198
        %v7380 = vunpack.c.l.b16 %v2199
        %v7381 = vunpack.c.l.b16 %v2200
        %v7382 = vunpack.c.l.b16 %v2201
        %v7383 = vunpack.c.l.b16 %v2202
        %v7384 = vunpack.c.l.b16 %v2203
        %v7385 = vunpack.c.l.b16 %v2204
        %v7386 = vunpack.c.l.b16 %v2205
        %v7387 = vunpack.c.l.b16 %v2206
        %v7388 = vunpack.c.l.b16 %v2207
        %v7389 = vunpack.c.l.b16 %v2208
        %v7390 = vunpack.c.l.b16 %v2209
        %v7391 = vunpack.c.l.b16 %v2210
        %v7392 = vunpack.c.l.b16 %v2211
        %v7393 = vunpack.c.l.b16 %v2212
        %v7394 = vunpack.c.l.b16 %v2213
        %v7395 = vunpack.c.l.b16 %v2214
        %v7396 = vunpack.c.l.b16 %v2215
        %v7397 = vunpack.c.l.b16 %v2216
        %v7398 = vunpack.c.l.b16 %v2217
        %v7399 = vunpack.c.l.b16 %v2218
        %v7400 = vunpack.c.l.b16 %v2219
        %v7401 = vunpack.c.l.b16 %v2220
        %v7402 = vunpack.c.l.b16 %v2221
        %v7403 = vunpack.c.l.b16 %v2222
        %v7404 = vunpack.c.l.b16 %v2223
        %v7405 = vunpack.c.l.b16 %v2224
        %v7406 = vunpack.c.l.b16 %v2225
        %v7407 = vunpack.c.l.b16 %v2226
        %v7408 = vunpack.c.l.b16 %v2227
        %v7409 = vunpack.c.l.b16 %v2228
        %v7410 = vunpack.c.l.b16 %v2229
        %v7411 = vunpack.c.l.b16 %v2230
        %v7412 = vunpack.c.l.b16 %v2231
        %v7413 = vunpack.c.l.b16 %v2232
        %v7414 = vunpack.c.l.b16 %v2233
        %v7415 = vunpack.c.l.b16 %v2234
        %v7416 = vunpack.c.l.b16 %v2235
        %v7417 = vunpack.c.l.b16 %v2236
        %v7418 = vunpack.c.l.b16 %v2237
        %v7419 = vunpack.c.l.b16 %v2238
        %v7420 = vunpack.c.l.b16 %v2239
        %v7421 = vunpack.c.l.b16 %v2240
        %v7422 = vunpack.c.l.b16 %v2241
        %v7423 = vunpack.c.l.b16 %v2242
        %v7424 = vunpack.c.l.b16 %v2243
        %v7425 = vunpack.c.l.b16 %v2244
        %v7426 = vunpack.c.l.b16 %v2245
        %v7427 = vunpack.c.l.b16 %v2246
        %v7428 = vunpack.c.l.b16 %v2247
        %v7429 = vunpack.c.l.b16 %v2248
        %v7430 = vunpack.c.l.b16 %v2249
        %v7431 = vunpack.c.l.b16 %v2250
        %v7432 = vunpack.c.l.b16 %v2251
        %v7433 = vunpack.c.l.b16 %v2252
        %v7434 = vunpack.c.l.b16 %v2253
        %v7435 = vunpack.c.l.b16 %v2254
        %v7436 = vunpack.c.l.b16 %v2255
        %v7437 = vunpack.c.l.b16 %v2256
        %v7438 = vunpack.c.l.b16 %v2257
        %v7439 = vunpack.c.l.b16 %v2258
        %v7440 = vunpack.c.l.b16 %v2259
        %v7441 = vunpack.c.l.b16 %v2260
        %v7442 = vunpack.c.l.b16 %v2261
        %v7443 = vunpack.c.l.b16 %v2262
        %v7444 = vunpack.c.l.b16 %v2263
        %v7445 = vunpack.c.l.b16 %v2264
        %v7446 = vunpack.c.l.b16 %v2265
        %v7447 = vunpack.c.l.b16 %v2266
        %v7448 = vunpack.c.l.b16 %v2267
        %v7449 = vunpack.c.l.b16 %v2268
        %v7450 = vunpack.c.l.b16 %v2269
        %v7451 = vunpack.c.l.b16 %v2270
        %v7452 = vunpack.c.l.b16 %v2271
        %v7453 = vunpack.c.l.b16 %v2272
        %v7454 = vunpack.c.l.b16 %v2273
        %v7455 = vunpack.c.l.b16 %v2274
        %v7456 = vunpack.c.l.b16 %v2275
        %v7457 = vunpack.c.l.b16 %v2276
        %v7458 = vunpack.c.l.b16 %v2277
        %v7459 = vunpack.c.l.b16 %v2278
        %v7460 = vunpack.c.l.b16 %v2279
        %v7461 = vunpack.c.l.b16 %v2280
        %v7462 = vunpack.c.l.b16 %v2281
        %v7463 = vunpack.c.l.b16 %v2282
        %v7464 = vunpack.c.l.b16 %v2283
        %v7465 = vunpack.c.l.b16 %v2284
        %v7466 = vunpack.c.l.b16 %v2285
        %v7467 = vunpack.c.l.b16 %v2286
        %v7468 = vunpack.c.l.b16 %v2287
        %v7469 = vunpack.c.l.b16 %v2288
        %v7470 = vunpack.c.l.b16 %v2289
        %v7471 = vunpack.c.l.b16 %v2290
        %v7472 = vunpack.c.l.b16 %v2291
        %v7473 = vunpack.c.l.b16 %v2292
        %v7474 = vunpack.c.l.b16 %v2293
        %v7475 = vunpack.c.l.b16 %v2294
        %v7476 = vunpack.c.l.b16 %v2295
        %v7477 = vunpack.c.l.b16 %v2296
        %v7478 = vunpack.c.l.b16 %v2297
        %v7479 = vunpack.c.l.b16 %v2298
        %v7480 = vunpack.c.l.b16 %v2299
        %v7481 = vunpack.c.l.b16 %v2300
        %v7482 = vunpack.c.l.b16 %v2301
        %v7483 = vunpack.c.l.b16 %v2302
        %v7484 = vunpack.c.l.b16 %v2303
        %v7485 = vunpack.c.l.b16 %v2304
        %v7486 = vunpack.c.l.b16 %v2305
        %v7487 = vunpack.c.l.b16 %v2306
        %v7488 = vunpack.c.l.b16 %v2307
        %v7489 = vunpack.c.l.b16 %v2308
        %v7490 = vunpack.c.l.b16 %v2309
        %v7491 = vunpack.c.l.b16 %v2310
        %v7492 = vunpack.c.l.b16 %v2311
        %v7493 = vunpack.c.l.b16 %v2312
        %v7494 = vunpack.c.l.b16 %v2313
        %v7495 = vunpack.c.l.b16 %v2314
        %v7496 = vunpack.c.l.b16 %v2315
        %v7497 = vunpack.c.l.b16 %v2316
        %v7498 = vunpack.c.l.b16 %v2317
        %v7499 = vunpack.c.l.b16 %v2318
        %v7500 = vunpack.c.l.b16 %v2319
        %v7501 = vunpack.c.l.b16 %v2320
        %v7502 = vunpack.c.l.b16 %v2321
        %v7503 = vunpack.c.l.b16 %v2322
        %v7504 = vunpack.c.l.b16 %v2323
        %v7505 = vunpack.c.l.b16 %v2324
        %v7506 = vunpack.c.l.b16 %v2325
        %v7507 = vunpack.c.l.b16 %v2326
        %v7508 = vunpack.c.l.b16 %v2327
        %v7509 = vunpack.c.l.b16 %v2328
        %v7510 = vunpack.c.l.b16 %v2329
        %v7511 = vunpack.c.l.b16 %v2330
        %v7512 = vunpack.c.l.b16 %v2331
        %v7513 = vpack.c.b16 %v5402, %v5401
        %v7514 = vpack.c.b16 %v5404, %v5403
        %v7515 = vpack.c.b16 %v5406, %v5405
        %v7516 = vpack.c.b16 %v5408, %v5407
        %v7517 = vpack.c.b16 %v5410, %v5409
        %v7518 = vpack.c.b16 %v5412, %v5411
        %v7519 = vpack.c.b16 %v5414, %v5413
        %v7520 = vpack.c.b16 %v5416, %v5415
        %v7521 = vpack.c.b16 %v5418, %v5417
        %v7522 = vpack.c.b16 %v5420, %v5419
        %v7523 = vpack.c.b16 %v5422, %v5421
        %v7524 = vpack.c.b16 %v5424, %v5423
        %v7525 = vpack.c.b16 %v5426, %v5425
        %v7526 = vpack.c.b16 %v5428, %v5427
        %v7527 = vpack.c.b16 %v5430, %v5429
        %v7528 = vpack.c.b16 %v5432, %v5431
        %v7529 = vpack.c.b16 %v5434, %v5433
        %v7530 = vpack.c.b16 %v5436, %v5435
        %v7531 = vpack.c.b16 %v5438, %v5437
        %v7532 = vpack.c.b16 %v5440, %v5439
        %v7533 = vpack.c.b16 %v5442, %v5441
        %v7534 = vpack.c.b16 %v5444, %v5443
        %v7535 = vpack.c.b16 %v5446, %v5445
        %v7536 = vpack.c.b16 %v5448, %v5447
        %v7537 = vpack.c.b16 %v5450, %v5449
        %v7538 = vpack.c.b16 %v5452, %v5451
        %v7539 = vpack.c.b16 %v5454, %v5453
        %v7540 = vpack.c.b16 %v5456, %v5455
        %v7541 = vpack.c.b16 %v5458, %v5457
        %v7542 = vpack.c.b16 %v5460, %v5459
        %v7543 = vpack.c.b16 %v5462, %v5461
        %v7544 = vpack.c.b16 %v5464, %v5463
        %v7545 = vpack.c.b16 %v5466, %v5465
        %v7546 = vpack.c.b16 %v5468, %v5467
        %v7547 = vpack.c.b16 %v5470, %v5469
        %v7548 = vpack.c.b16 %v5472, %v5471
        %v7549 = vpack.c.b16 %v5474, %v5473
        %v7550 = vpack.c.b16 %v5476, %v5475
        %v7551 = vpack.c.b16 %v5478, %v5477
        %v7552 = vpack.c.b16 %v5480, %v5479
        %v7553 = vpack.c.b16 %v5482, %v5481
        %v7554 = vpack.c.b16 %v5484, %v5483
        %v7555 = vpack.c.b16 %v5486, %v5485
        %v7556 = vpack.c.b16 %v5488, %v5487
        %v7557 = vpack.c.b16 %v5490, %v5489
        %v7558 = vpack.c.b16 %v5492, %v5491
        %v7559 = vpack.c.b16 %v5494, %v5493
        %v7560 = vpack.c.b16 %v5496, %v5495
        %v7561 = vpack.c.b16 %v5498, %v5497
        %v7562 = vpack.c.b16 %v5500, %v5499
        %v7563 = vpack.c.b16 %v5502, %v5501
        %v7564 = vpack.c.b16 %v5504, %v5503
        %v7565 = vpack.c.b16 %v5506, %v5505
        %v7566 = vpack.c.b16 %v5508, %v5507
        %v7567 = vpack.c.b16 %v5510, %v5509
        %v7568 = vpack.c.b16 %v5512, %v5511
        %v7569 = vpack.c.b16 %v5514, %v5513
        %v7570 = vpack.c.b16 %v5516, %v5515
        %v7571 = vpack.c.b16 %v5518, %v5517
        %v7572 = vpack.c.b16 %v5520, %v5519
        %v7573 = vpack.c.b16 %v5522, %v5521
        %v7574 = vpack.c.b16 %v5524, %v5523
        %v7575 = vpack.c.b16 %v5526, %v5525
        %v7576 = vpack.c.b16 %v5528, %v5527
        %v7577 = vpack.c.b16 %v5530, %v5529
        %v7578 = vpack.c.b16 %v5532, %v5531
        %v7579 = vpack.c.b16 %v5534, %v5533
        %v7580 = vpack.c.b16 %v5536, %v5535
        %v7581 = vpack.c.b16 %v5538, %v5537
        %v7582 = vpack.c.b16 %v5540, %v5539
        %v7583 = vpack.c.b16 %v5542, %v5541
        %v7584 = vpack.c.b16 %v5544, %v5543
        %v7585 = vpack.c.b16 %v5546, %v5545
        %v7586 = vpack.c.b16 %v5548, %v5547
        %v7587 = vpack.c.b16 %v5550, %v5549
        %v7588 = vpack.c.b16 %v5552, %v5551
        %v7589 = vpack.c.b16 %v5554, %v5553
        %v7590 = vpack.c.b16 %v5556, %v5555
        %v7591 = vpack.c.b16 %v5558, %v5557
        %v7592 = vpack.c.b16 %v5560, %v5559
        %v7593 = vpack.c.b16 %v5562, %v5561
        %v7594 = vpack.c.b16 %v5564, %v5563
        %v7595 = vpack.c.b16 %v5566, %v5565
        %v7596 = vpack.c.b16 %v5568, %v5567
        %v7597 = vpack.c.b16 %v5570, %v5569
        %v7598 = vpack.c.b16 %v5572, %v5571
        %v7599 = vpack.c.b16 %v5574, %v5573
        %v7600 = vpack.c.b16 %v5576, %v5575
        %v7601 = vpack.c.b16 %v5578, %v5577
        %v7602 = vpack.c.b16 %v5580, %v5579
        %v7603 = vpack.c.b16 %v5582, %v5581
        %v7604 = vpack.c.b16 %v5584, %v5583
        %v7605 = vpack.c.b16 %v5586, %v5585
        %v7606 = vpack.c.b16 %v5588, %v5587
        %v7607 = vpack.c.b16 %v5590, %v5589
        %v7608 = vpack.c.b16 %v5592, %v5591
        %v7609 = vpack.c.b16 %v5594, %v5593
        %v7610 = vpack.c.b16 %v5596, %v5595
        %v7611 = vpack.c.b16 %v5598, %v5597
        %v7612 = vpack.c.b16 %v5600, %v5599
        %v7613 = vpack.c.b16 %v5602, %v5601
        %v7614 = vpack.c.b16 %v5604, %v5603
        %v7615 = vpack.c.b16 %v5606, %v5605
        %v7616 = vpack.c.b16 %v5608, %v5607
        %v7617 = vpack.c.b16 %v5610, %v5609
        %v7618 = vpack.c.b16 %v5612, %v5611
        %v7619 = vpack.c.b16 %v5614, %v5613
        %v7620 = vpack.c.b16 %v5616, %v5615
        %v7621 = vpack.c.b16 %v5618, %v5617
        %v7622 = vpack.c.b16 %v5620, %v5619
        %v7623 = vpack.c.b16 %v5622, %v5621
        %v7624 = vpack.c.b16 %v5624, %v5623
        %v7625 = vpack.c.b16 %v5626, %v5625
        %v7626 = vpack.c.b16 %v5628, %v5627
        %v7627 = vpack.c.b16 %v5630, %v5629
        %v7628 = vpack.c.b16 %v5632, %v5631
        %v7629 = vpack.c.b16 %v5634, %v5633
        %v7630 = vpack.c.b16 %v5636, %v5635
        %v7631 = vpack.c.b16 %v5638, %v5637
        %v7632 = vpack.c.b16 %v5640, %v5639
        %v7633 = vpack.c.b16 %v5642, %v5641
        %v7634 = vpack.c.b16 %v5644, %v5643
        %v7635 = vpack.c.b16 %v5646, %v5645
        %v7636 = vpack.c.b16 %v5648, %v5647
        %v7637 = vpack.c.b16 %v5650, %v5649
        %v7638 = vpack.c.b16 %v5652, %v5651
        %v7639 = vpack.c.b16 %v5654, %v5653
        %v7640 = vpack.c.b16 %v5656, %v5655
        %v7641 = vpack.c.b16 %v5658, %v5657
        %v7642 = vpack.c.b16 %v5660, %v5659
        %v7643 = vpack.c.b16 %v5662, %v5661
        %v7644 = vpack.c.b16 %v5664, %v5663
        %v7645 = vpack.c.b16 %v5666, %v5665
        %v7646 = vpack.c.b16 %v5668, %v5667
        %v7647 = vpack.c.b16 %v5670, %v5669
        %v7648 = vpack.c.b16 %v5672, %v5671
        %v7649 = vpack.c.b16 %v5674, %v5673
        %v7650 = vpack.c.b16 %v5676, %v5675
        %v7651 = vpack.c.b16 %v5678, %v5677
        %v7652 = vpack.c.b16 %v5680, %v5679
        %v7653 = vpack.c.b16 %v5682, %v5681
        %v7654 = vpack.c.b16 %v5684, %v5683
        %v7655 = vpack.c.b16 %v5686, %v5685
        %v7656 = vpack.c.b16 %v5688, %v5687
        %v7657 = vpack.c.b16 %v5690, %v5689
        %v7658 = vpack.c.b16 %v5692, %v5691
        %v7659 = vpack.c.b16 %v5694, %v5693
        %v7660 = vpack.c.b16 %v5696, %v5695
        %v7661 = vpack.c.b16 %v5698, %v5697
        %v7662 = vpack.c.b16 %v5700, %v5699
        %v7663 = vpack.c.b16 %v5702, %v5701
        %v7664 = vpack.c.b16 %v5704, %v5703
        %v7665 = vpack.c.b16 %v5706, %v5705
        %v7666 = vpack.c.b16 %v5708, %v5707
        %v7667 = vpack.c.b16 %v5710, %v5709
        %v7668 = vpack.c.b16 %v5712, %v5711
        %v7669 = vpack.c.b16 %v5714, %v5713
        %v7670 = vpack.c.b16 %v5716, %v5715
        %v7671 = vpack.c.b16 %v5718, %v5717
        %v7672 = vpack.c.b16 %v5720, %v5719
        %v7673 = vpack.c.b16 %v5722, %v5721
        %v7674 = vpack.c.b16 %v5724, %v5723
        %v7675 = vpack.c.b16 %v5726, %v5725
        %v7676 = vpack.c.b16 %v5728, %v5727
        %v7677 = vpack.c.b16 %v5730, %v5729
        %v7678 = vpack.c.b16 %v5732, %v5731
        %v7679 = vpack.c.b16 %v5734, %v5733
        %v7680 = vpack.c.b16 %v5736, %v5735
        %v7681 = vpack.c.b16 %v5738, %v5737
        %v7682 = vpack.c.b16 %v5740, %v5739
        %v7683 = vpack.c.b16 %v5742, %v5741
        %v7684 = vpack.c.b16 %v5744, %v5743
        %v7685 = vpack.c.b16 %v5746, %v5745
        %v7686 = vpack.c.b16 %v5748, %v5747
        %v7687 = vpack.c.b16 %v5750, %v5749
        %v7688 = vpack.c.b16 %v5752, %v5751
        %v7689 = vpack.c.b16 %v5754, %v5753
        %v7690 = vpack.c.b16 %v5756, %v5755
        %v7691 = vpack.c.b16 %v5758, %v5757
        %v7692 = vpack.c.b16 %v5760, %v5759
        %v7693 = vpack.c.b16 %v5762, %v5761
        %v7694 = vpack.c.b16 %v5764, %v5763
        %v7695 = vpack.c.b16 %v5766, %v5765
        %v7696 = vpack.c.b16 %v5768, %v5767
        %v7697 = vpack.c.b16 %v5770, %v5769
        %v7698 = vpack.c.b16 %v5772, %v5771
        %v7699 = vpack.c.b16 %v5774, %v5773
        %v7700 = vpack.c.b16 %v5776, %v5775
        %v7701 = vpack.c.b16 %v5778, %v5777
        %v7702 = vpack.c.b16 %v5780, %v5779
        %v7703 = vpack.c.b16 %v5782, %v5781
        %v7704 = vpack.c.b16 %v5784, %v5783
        %v7705 = vpack.c.b16 %v5786, %v5785
        %v7706 = vpack.c.b16 %v5788, %v5787
        %v7707 = vpack.c.b16 %v5790, %v5789
        %v7708 = vpack.c.b16 %v5792, %v5791
        %v7709 = vpack.c.b16 %v5794, %v5793
        %v7710 = vpack.c.b16 %v5796, %v5795
        %v7711 = vpack.c.b16 %v5798, %v5797
        %v7712 = vpack.c.b16 %v5800, %v5799
        %v7713 = vpack.c.b16 %v5802, %v5801
        %v7714 = vpack.c.b16 %v5804, %v5803
        %v7715 = vpack.c.b16 %v5806, %v5805
        %v7716 = vpack.c.b16 %v5808, %v5807
        %v7717 = vpack.c.b16 %v5810, %v5809
        %v7718 = vpack.c.b16 %v5812, %v5811
        %v7719 = vpack.c.b16 %v5814, %v5813
        %v7720 = vpack.c.b16 %v5816, %v5815
        %v7721 = vpack.c.b16 %v5818, %v5817
        %v7722 = vpack.c.b16 %v5820, %v5819
        %v7723 = vpack.c.b16 %v5822, %v5821
        %v7724 = vpack.c.b16 %v5824, %v5823
        %v7725 = vpack.c.b16 %v5826, %v5825
        %v7726 = vpack.c.b16 %v5828, %v5827
        %v7727 = vpack.c.b16 %v5830, %v5829
        %v7728 = vpack.c.b16 %v5832, %v5831
        %v7729 = vpack.c.b16 %v5834, %v5833
        %v7730 = vpack.c.b16 %v5836, %v5835
        %v7731 = vpack.c.b16 %v5838, %v5837
        %v7732 = vpack.c.b16 %v5840, %v5839
        %v7733 = vpack.c.b16 %v5842, %v5841
        %v7734 = vpack.c.b16 %v5844, %v5843
        %v7735 = vpack.c.b16 %v5846, %v5845
        %v7736 = vpack.c.b16 %v5848, %v5847
        %v7737 = vpack.c.b16 %v5850, %v5849
        %v7738 = vpack.c.b16 %v5852, %v5851
        %v7739 = vpack.c.b16 %v5854, %v5853
        %v7740 = vpack.c.b16 %v5856, %v5855
        %v7741 = vpack.c.b16 %v5858, %v5857
        %v7742 = vpack.c.b16 %v5860, %v5859
        %v7743 = vpack.c.b16 %v5862, %v5861
        %v7744 = vpack.c.b16 %v5864, %v5863
        %v7745 = vpack.c.b16 %v5866, %v5865
        %v7746 = vpack.c.b16 %v5868, %v5867
        %v7747 = vpack.c.b16 %v5870, %v5869
        %v7748 = vpack.c.b16 %v5872, %v5871
        %v7749 = vpack.c.b16 %v5874, %v5873
        %v7750 = vpack.c.b16 %v5876, %v5875
        %v7751 = vpack.c.b16 %v5878, %v5877
        %v7752 = vpack.c.b16 %v5880, %v5879
        %v7753 = vpack.c.b16 %v5882, %v5881
        %v7754 = vpack.c.b16 %v5884, %v5883
        %v7755 = vpack.c.b16 %v5886, %v5885
        %v7756 = vpack.c.b16 %v5888, %v5887
        %v7757 = vpack.c.b16 %v5890, %v5889
        %v7758 = vpack.c.b16 %v5892, %v5891
        %v7759 = vpack.c.b16 %v5894, %v5893
        %v7760 = vpack.c.b16 %v5896, %v5895
        %v7761 = vpack.c.b16 %v5898, %v5897
        %v7762 = vpack.c.b16 %v5900, %v5899
        %v7763 = vpack.c.b16 %v5902, %v5901
        %v7764 = vpack.c.b16 %v5904, %v5903
        %v7765 = vpack.c.b16 %v5906, %v5905
        %v7766 = vpack.c.b16 %v5908, %v5907
        %v7767 = vpack.c.b16 %v5910, %v5909
        %v7768 = vpack.c.b16 %v5912, %v5911
        %v7769 = vpack.c.b16 %v5914, %v5913
        %v7770 = vpack.c.b16 %v5916, %v5915
        %v7771 = vpack.c.b16 %v5918, %v5917
        %v7772 = vpack.c.b16 %v5920, %v5919
        %v7773 = vpack.c.b16 %v5922, %v5921
        %v7774 = vpack.c.b16 %v5924, %v5923
        %v7775 = vpack.c.b16 %v5926, %v5925
        %v7776 = vpack.c.b16 %v5928, %v5927
        %v7777 = vpack.c.b16 %v5930, %v5929
        %v7778 = vpack.c.b16 %v5932, %v5931
        %v7779 = vpack.c.b16 %v5934, %v5933
        %v7780 = vpack.c.b16 %v5936, %v5935
        %v7781 = vpack.c.b16 %v5938, %v5937
        %v7782 = vpack.c.b16 %v5940, %v5939
        %v7783 = vpack.c.b16 %v5942, %v5941
        %v7784 = vpack.c.b16 %v5944, %v5943
        %v7785 = vpack.c.b16 %v5946, %v5945
        %v7786 = vpack.c.b16 %v5948, %v5947
        %v7787 = vpack.c.b16 %v5950, %v5949
        %v7788 = vpack.c.b16 %v5952, %v5951
        %v7789 = vpack.c.b16 %v5954, %v5953
        %v7790 = vpack.c.b16 %v5956, %v5955
        %v7791 = vpack.c.b16 %v5958, %v5957
        %v7792 = vpack.c.b16 %v5960, %v5959
        %v7793 = vpack.c.b16 %v5962, %v5961
        %v7794 = vpack.c.b16 %v5964, %v5963
        %v7795 = vpack.c.b16 %v5966, %v5965
        %v7796 = vpack.c.b16 %v5968, %v5967
        %v7797 = vpack.c.b16 %v5970, %v5969
        %v7798 = vpack.c.b16 %v5972, %v5971
        %v7799 = vpack.c.b16 %v5974, %v5973
        %v7800 = vpack.c.b16 %v5976, %v5975
        %v7801 = vpack.c.b16 %v5978, %v5977
        %v7802 = vpack.c.b16 %v5980, %v5979
        %v7803 = vpack.c.b16 %v5982, %v5981
        %v7804 = vpack.c.b16 %v5984, %v5983
        %v7805 = vpack.c.b16 %v5986, %v5985
        %v7806 = vpack.c.b16 %v5988, %v5987
        %v7807 = vpack.c.b16 %v5990, %v5989
        %v7808 = vpack.c.b16 %v5992, %v5991
        %v7809 = vpack.c.b16 %v5994, %v5993
        %v7810 = vpack.c.b16 %v5996, %v5995
        %v7811 = vpack.c.b16 %v5998, %v5997
        %v7812 = vpack.c.b16 %v6000, %v5999
        %v7813 = vpack.c.b16 %v6002, %v6001
        %v7814 = vpack.c.b16 %v6004, %v6003
        %v7815 = vpack.c.b16 %v6006, %v6005
        %v7816 = vpack.c.b16 %v6008, %v6007
        %v7817 = vpack.c.b16 %v6010, %v6009
        %v7818 = vpack.c.b16 %v6012, %v6011
        %v7819 = vpack.c.b16 %v6014, %v6013
        %v7820 = vpack.c.b16 %v6016, %v6015
        %v7821 = vpack.c.b16 %v6018, %v6017
        %v7822 = vpack.c.b16 %v6020, %v6019
        %v7823 = vpack.c.b16 %v6022, %v6021
        %v7824 = vpack.c.b16 %v6024, %v6023
        %v7825 = vpack.c.b16 %v6026, %v6025
        %v7826 = vpack.c.b16 %v6028, %v6027
        %v7827 = vpack.c.b16 %v6030, %v6029
        %v7828 = vpack.c.b16 %v6032, %v6031
        %v7829 = vpack.c.b16 %v6034, %v6033
        %v7830 = vpack.c.b16 %v6036, %v6035
        %v7831 = vpack.c.b16 %v6038, %v6037
        %v7832 = vpack.c.b16 %v6040, %v6039
        %v7833 = vpack.c.b16 %v6042, %v6041
        %v7834 = vpack.c.b16 %v6044, %v6043
        %v7835 = vpack.c.b16 %v6046, %v6045
        %v7836 = vpack.c.b16 %v6048, %v6047
        %v7837 = vpack.c.b16 %v6050, %v6049
        %v7838 = vpack.c.b16 %v6052, %v6051
        %v7839 = vpack.c.b16 %v6054, %v6053
        %v7840 = vpack.c.b16 %v6056, %v6055
        %v7841 = vpack.c.b16 %v6058, %v6057
        %v7842 = vpack.c.b16 %v6060, %v6059
        %v7843 = vpack.c.b16 %v6062, %v6061
        %v7844 = vpack.c.b16 %v6064, %v6063
        %v7845 = vpack.c.b16 %v6066, %v6065
        %v7846 = vpack.c.b16 %v6068, %v6067
        %v7847 = vpack.c.b16 %v6070, %v6069
        %v7848 = vpack.c.b16 %v6072, %v6071
        %v7849 = vpack.c.b16 %v6074, %v6073
        %v7850 = vpack.c.b16 %v6076, %v6075
        %v7851 = vpack.c.b16 %v6078, %v6077
        %v7852 = vpack.c.b16 %v6080, %v6079
        %v7853 = vpack.c.b16 %v6082, %v6081
        %v7854 = vpack.c.b16 %v6084, %v6083
        %v7855 = vpack.c.b16 %v6086, %v6085
        %v7856 = vpack.c.b16 %v6088, %v6087
        %v7857 = vpack.c.b16 %v6090, %v6089
        %v7858 = vpack.c.b16 %v6092, %v6091
        %v7859 = vpack.c.b16 %v6094, %v6093
        %v7860 = vpack.c.b16 %v6096, %v6095
        %v7861 = vpack.c.b16 %v6098, %v6097
        %v7862 = vpack.c.b16 %v6100, %v6099
        %v7863 = vpack.c.b16 %v6102, %v6101
        %v7864 = vpack.c.b16 %v6104, %v6103
        %v7865 = vpack.c.b16 %v6106, %v6105
        %v7866 = vpack.c.b16 %v6108, %v6107
        %v7867 = vpack.c.b16 %v6110, %v6109
        %v7868 = vpack.c.b16 %v6112, %v6111
        %v7869 = vpack.c.b16 %v6114, %v6113
        %v7870 = vpack.c.b16 %v6116, %v6115
        %v7871 = vpack.c.b16 %v6118, %v6117
        %v7872 = vpack.c.b16 %v6120, %v6119
        %v7873 = vpack.c.b16 %v6122, %v6121
        %v7874 = vpack.c.b16 %v6124, %v6123
        %v7875 = vpack.c.b16 %v6126, %v6125
        %v7876 = vpack.c.b16 %v6128, %v6127
        %v7877 = vpack.c.b16 %v6130, %v6129
        %v7878 = vpack.c.b16 %v6132, %v6131
        %v7879 = vpack.c.b16 %v6134, %v6133
        %v7880 = vpack.c.b16 %v6136, %v6135
        %v7881 = vpack.c.b16 %v6138, %v6137
        %v7882 = vpack.c.b16 %v6140, %v6139
        %v7883 = vpack.c.b16 %v6142, %v6141
        %v7884 = vpack.c.b16 %v6144, %v6143
        %v7885 = vpack.c.b16 %v6146, %v6145
        %v7886 = vpack.c.b16 %v6148, %v6147
        %v7887 = vpack.c.b16 %v6150, %v6149
        %v7888 = vpack.c.b16 %v6152, %v6151
        %v7889 = vpack.c.b16 %v6154, %v6153
        %v7890 = vpack.c.b16 %v6156, %v6155
        %v7891 = vpack.c.b16 %v6158, %v6157
        %v7892 = vpack.c.b16 %v6160, %v6159
        %v7893 = vpack.c.b16 %v6162, %v6161
        %v7894 = vpack.c.b16 %v6164, %v6163
        %v7895 = vpack.c.b16 %v6166, %v6165
        %v7896 = vpack.c.b16 %v6168, %v6167
        %v7897 = vpack.c.b16 %v6170, %v6169
        %v7898 = vpack.c.b16 %v6172, %v6171
        %v7899 = vpack.c.b16 %v6174, %v6173
        %v7900 = vpack.c.b16 %v6176, %v6175
        %v7901 = vpack.c.b16 %v6178, %v6177
        %v7902 = vpack.c.b16 %v6180, %v6179
        %v7903 = vpack.c.b16 %v6182, %v6181
        %v7904 = vpack.c.b16 %v6184, %v6183
        %v7905 = vpack.c.b16 %v6186, %v6185
        %v7906 = vpack.c.b16 %v6188, %v6187
        %v7907 = vpack.c.b16 %v6190, %v6189
        %v7908 = vpack.c.b16 %v6192, %v6191
        %v7909 = vpack.c.b16 %v6194, %v6193
        %v7910 = vpack.c.b16 %v6196, %v6195
        %v7911 = vpack.c.b16 %v6198, %v6197
        %v7912 = vpack.c.b16 %v6200, %v6199
        %v7913 = vpack.c.b16 %v6202, %v6201
        %v7914 = vpack.c.b16 %v6204, %v6203
        %v7915 = vpack.c.b16 %v6206, %v6205
        %v7916 = vpack.c.b16 %v6208, %v6207
        %v7917 = vpack.c.b16 %v6210, %v6209
        %v7918 = vpack.c.b16 %v6212, %v6211
        %v7919 = vpack.c.b16 %v6214, %v6213
        %v7920 = vpack.c.b16 %v6216, %v6215
        %v7921 = vpack.c.b16 %v6218, %v6217
        %v7922 = vpack.c.b16 %v6220, %v6219
        %v7923 = vpack.c.b16 %v6222, %v6221
        %v7924 = vpack.c.b16 %v6224, %v6223
        %v7925 = vpack.c.b16 %v6226, %v6225
        %v7926 = vpack.c.b16 %v6228, %v6227
        %v7927 = vpack.c.b16 %v6230, %v6229
        %v7928 = vpack.c.b16 %v6232, %v6231
        %v7929 = vpack.c.b16 %v6234, %v6233
        %v7930 = vpack.c.b16 %v6236, %v6235
        %v7931 = vpack.c.b16 %v6238, %v6237
        %v7932 = vpack.c.b16 %v6240, %v6239
        %v7933 = vpack.c.b16 %v6242, %v6241
        %v7934 = vpack.c.b16 %v6244, %v6243
        %v7935 = vpack.c.b16 %v6246, %v6245
        %v7936 = vpack.c.b16 %v6248, %v6247
        %v7937 = vpack.c.b16 %v6250, %v6249
        %v7938 = vpack.c.b16 %v6252, %v6251
        %v7939 = vpack.c.b16 %v6254, %v6253
        %v7940 = vpack.c.b16 %v6256, %v6255
        %v7941 = vpack.c.b16 %v6258, %v6257
        %v7942 = vpack.c.b16 %v6260, %v6259
        %v7943 = vpack.c.b16 %v6262, %v6261
        %v7944 = vpack.c.b16 %v6264, %v6263
        %v7945 = vpack.c.b16 %v6266, %v6265
        %v7946 = vpack.c.b16 %v6268, %v6267
        %v7947 = vpack.c.b16 %v6270, %v6269
        %v7948 = vpack.c.b16 %v6272, %v6271
        %v7949 = vpack.c.b16 %v6274, %v6273
        %v7950 = vpack.c.b16 %v6276, %v6275
        %v7951 = vpack.c.b16 %v6278, %v6277
        %v7952 = vpack.c.b16 %v6280, %v6279
        %v7953 = vpack.c.b16 %v6282, %v6281
        %v7954 = vpack.c.b16 %v6284, %v6283
        %v7955 = vpack.c.b16 %v6286, %v6285
        %v7956 = vpack.c.b16 %v6288, %v6287
        %v7957 = vpack.c.b16 %v6290, %v6289
        %v7958 = vpack.c.b16 %v6292, %v6291
        %v7959 = vpack.c.b16 %v6294, %v6293
        %v7960 = vpack.c.b16 %v6296, %v6295
        %v7961 = vpack.c.b16 %v6298, %v6297
        %v7962 = vpack.c.b16 %v6300, %v6299
        %v7963 = vpack.c.b16 %v6302, %v6301
        %v7964 = vpack.c.b16 %v6304, %v6303
        %v7965 = vpack.c.b16 %v6306, %v6305
        %v7966 = vpack.c.b16 %v6308, %v6307
        %v7967 = vpack.c.b16 %v6310, %v6309
        %v7968 = vpack.c.b16 %v6312, %v6311
        %v7969 = vpack.c.b16 %v6314, %v6313
        %v7970 = vpack.c.b16 %v6316, %v6315
        %v7971 = vpack.c.b16 %v6318, %v6317
        %v7972 = vpack.c.b16 %v6320, %v6319
        %v7973 = vpack.c.b16 %v6322, %v6321
        %v7974 = vpack.c.b16 %v6324, %v6323
        %v7975 = vpack.c.b16 %v6326, %v6325
        %v7976 = vpack.c.b16 %v6328, %v6327
        %v7977 = vpack.c.b16 %v6330, %v6329
        %v7978 = vpack.c.b16 %v6332, %v6331
        %v7979 = vpack.c.b16 %v6334, %v6333
        %v7980 = vpack.c.b16 %v6336, %v6335
        %v7981 = vpack.c.b16 %v6338, %v6337
        %v7982 = vpack.c.b16 %v6340, %v6339
        %v7983 = vpack.c.b16 %v6342, %v6341
        %v7984 = vpack.c.b16 %v6344, %v6343
        %v7985 = vpack.c.b16 %v6346, %v6345
        %v7986 = vpack.c.b16 %v6348, %v6347
        %v7987 = vpack.c.b16 %v6350, %v6349
        %v7988 = vpack.c.b16 %v6352, %v6351
        %v7989 = vpack.c.b16 %v6354, %v6353
        %v7990 = vpack.c.b16 %v6356, %v6355
        %v7991 = vpack.c.b16 %v6358, %v6357
        %v7992 = vpack.c.b16 %v6360, %v6359
        %v7993 = vpack.c.b16 %v6362, %v6361
        %v7994 = vpack.c.b16 %v6364, %v6363
        %v7995 = vpack.c.b16 %v6366, %v6365
        %v7996 = vpack.c.b16 %v6368, %v6367
        %v7997 = vpack.c.b16 %v6370, %v6369
        %v7998 = vpack.c.b16 %v6372, %v6371
        %v7999 = vpack.c.b16 %v6374, %v6373
        %v8000 = vpack.c.b16 %v6376, %v6375
        %v8001 = vpack.c.b16 %v6378, %v6377
        %v8002 = vpack.c.b16 %v6380, %v6379
        %v8003 = vpack.c.b16 %v6382, %v6381
        %v8004 = vpack.c.b16 %v6384, %v6383
        %v8005 = vpack.c.b16 %v6386, %v6385
        %v8006 = vpack.c.b16 %v6388, %v6387
        %v8007 = vpack.c.b16 %v6390, %v6389
        %v8008 = vpack.c.b16 %v6392, %v6391
        %v8009 = vpack.c.b16 %v6394, %v6393
        %v8010 = vpack.c.b16 %v6396, %v6395
        %v8011 = vpack.c.b16 %v6398, %v6397
        %v8012 = vpack.c.b16 %v6400, %v6399
        %v8013 = vpack.c.b16 %v6402, %v6401
        %v8014 = vpack.c.b16 %v6404, %v6403
        %v8015 = vpack.c.b16 %v6406, %v6405
        %v8016 = vpack.c.b16 %v6408, %v6407
        %v8017 = vpack.c.b16 %v6410, %v6409
        %v8018 = vpack.c.b16 %v6412, %v6411
        %v8019 = vpack.c.b16 %v6414, %v6413
        %v8020 = vpack.c.b16 %v6416, %v6415
        %v8021 = vpack.c.b16 %v6418, %v6417
        %v8022 = vpack.c.b16 %v6420, %v6419
        %v8023 = vpack.c.b16 %v6422, %v6421
        %v8024 = vpack.c.b16 %v6424, %v6423
        %v8025 = vpack.c.b16 %v6426, %v6425
        %v8026 = vpack.c.b16 %v6428, %v6427
        %v8027 = vpack.c.b16 %v6430, %v6429
        %v8028 = vpack.c.b16 %v6432, %v6431
        %v8029 = vpack.c.b16 %v6434, %v6433
        %v8030 = vpack.c.b16 %v6436, %v6435
        %v8031 = vpack.c.b16 %v6438, %v6437
        %v8032 = vpack.c.b16 %v6440, %v6439
        %v8033 = vpack.c.b16 %v6442, %v6441
        %v8034 = vpack.c.b16 %v6444, %v6443
        %v8035 = vpack.c.b16 %v6446, %v6445
        %v8036 = vpack.c.b16 %v6448, %v6447
        %v8037 = vpack.c.b16 %v6450, %v6449
        %v8038 = vpack.c.b16 %v6452, %v6451
        %v8039 = vpack.c.b16 %v6454, %v6453
        %v8040 = vpack.c.b16 %v6456, %v6455
        %v8041 = vpack.c.b16 %v6458, %v6457
        %v8042 = vpack.c.b16 %v6460, %v6459
        %v8043 = vpack.c.b16 %v6462, %v6461
        %v8044 = vpack.c.b16 %v6464, %v6463
        %v8045 = vpack.c.b16 %v6466, %v6465
        %v8046 = vpack.c.b16 %v6468, %v6467
        %v8047 = vpack.c.b16 %v6470, %v6469
        %v8048 = vpack.c.b16 %v6472, %v6471
        %v8049 = vpack.c.b16 %v6474, %v6473
        %v8050 = vpack.c.b16 %v6476, %v6475
        %v8051 = vpack.c.b16 %v6478, %v6477
        %v8052 = vpack.c.b16 %v6480, %v6479
        %v8053 = vpack.c.b16 %v6482, %v6481
        %v8054 = vpack.c.b16 %v6484, %v6483
        %v8055 = vpack.c.b16 %v6486, %v6485
        %v8056 = vpack.c.b16 %v6488, %v6487
        %v8057 = vpack.c.b16 %v6490, %v6489
        %v8058 = vpack.c.b16 %v6492, %v6491
        %v8059 = vpack.c.b16 %v6494, %v6493
        %v8060 = vpack.c.b16 %v6496, %v6495
        %v8061 = vpack.c.b16 %v6498, %v6497
        %v8062 = vpack.c.b16 %v6500, %v6499
        %v8063 = vpack.c.b16 %v6502, %v6501
        %v8064 = vpack.c.b16 %v6504, %v6503
        %v8065 = vpack.c.b16 %v6506, %v6505
        %v8066 = vpack.c.b16 %v6508, %v6507
        %v8067 = vpack.c.b16 %v6510, %v6509
        %v8068 = vpack.c.b16 %v6512, %v6511
        %v8069 = vpack.c.b16 %v6514, %v6513
        %v8070 = vpack.c.b16 %v6516, %v6515
        %v8071 = vpack.c.b16 %v6518, %v6517
        %v8072 = vpack.c.b16 %v6520, %v6519
        %v8073 = vpack.c.b16 %v6522, %v6521
        %v8074 = vpack.c.b16 %v6524, %v6523
        %v8075 = vpack.c.b16 %v6526, %v6525
        %v8076 = vpack.c.b16 %v6528, %v6527
        %v8077 = vpack.c.b16 %v6530, %v6529
        %v8078 = vpack.c.b16 %v6532, %v6531
        %v8079 = vpack.c.b16 %v6534, %v6533
        %v8080 = vpack.c.b16 %v6536, %v6535
        %v8081 = vpack.c.b16 %v6538, %v6537
        %v8082 = vpack.c.b16 %v6540, %v6539
        %v8083 = vpack.c.b16 %v6542, %v6541
        %v8084 = vpack.c.b16 %v6544, %v6543
        %v8085 = vpack.c.b16 %v6546, %v6545
        %v8086 = vpack.c.b16 %v6548, %v6547
        %v8087 = vpack.c.b16 %v6550, %v6549
        %v8088 = vpack.c.b16 %v6552, %v6551
        %v8089 = vpack.c.b16 %v6554, %v6553
        %v8090 = vpack.c.b16 %v6556, %v6555
        %v8091 = vpack.c.b16 %v6558, %v6557
        %v8092 = vpack.c.b16 %v6560, %v6559
        %v8093 = vpack.c.b16 %v6562, %v6561
        %v8094 = vpack.c.b16 %v6564, %v6563
        %v8095 = vpack.c.b16 %v6566, %v6565
        %v8096 = vpack.c.b16 %v6568, %v6567
        %v8097 = vpack.c.b16 %v6570, %v6569
        %v8098 = vpack.c.b16 %v6572, %v6571
        %v8099 = vpack.c.b16 %v6574, %v6573
        %v8100 = vpack.c.b16 %v6576, %v6575
        %v8101 = vpack.c.b16 %v6578, %v6577
        %v8102 = vpack.c.b16 %v6580, %v6579
        %v8103 = vpack.c.b16 %v6582, %v6581
        %v8104 = vpack.c.b16 %v6584, %v6583
        %v8105 = vpack.c.b16 %v6586, %v6585
        %v8106 = vpack.c.b16 %v6588, %v6587
        %v8107 = vpack.c.b16 %v6590, %v6589
        %v8108 = vpack.c.b16 %v6592, %v6591
        %v8109 = vpack.c.b16 %v6594, %v6593
        %v8110 = vpack.c.b16 %v6596, %v6595
        %v8111 = vpack.c.b16 %v6598, %v6597
        %v8112 = vpack.c.b16 %v6600, %v6599
        %v8113 = vpack.c.b16 %v6602, %v6601
        %v8114 = vpack.c.b16 %v6604, %v6603
        %v8115 = vpack.c.b16 %v6606, %v6605
        %v8116 = vpack.c.b16 %v6608, %v6607
        %v8117 = vpack.c.b16 %v6610, %v6609
        %v8118 = vpack.c.b16 %v6612, %v6611
        %v8119 = vpack.c.b16 %v6614, %v6613
        %v8120 = vpack.c.b16 %v6616, %v6615
        %v8121 = vpack.c.b16 %v6618, %v6617
        %v8122 = vpack.c.b16 %v6620, %v6619
        %v8123 = vpack.c.b16 %v6622, %v6621
        %v8124 = vpack.c.b16 %v6624, %v6623
        %v8125 = vpack.c.b16 %v6626, %v6625
        %v8126 = vpack.c.b16 %v6628, %v6627
        %v8127 = vpack.c.b16 %v6630, %v6629
        %v8128 = vpack.c.b16 %v6632, %v6631
        %v8129 = vpack.c.b16 %v6634, %v6633
        %v8130 = vpack.c.b16 %v6636, %v6635
        %v8131 = vpack.c.b16 %v6638, %v6637
        %v8132 = vpack.c.b16 %v6640, %v6639
        %v8133 = vpack.c.b16 %v6642, %v6641
        %v8134 = vpack.c.b16 %v6644, %v6643
        %v8135 = vpack.c.b16 %v6646, %v6645
        %v8136 = vpack.c.b16 %v6648, %v6647
        %v8137 = vpack.c.b16 %v6650, %v6649
        %v8138 = vpack.c.b16 %v6652, %v6651
        %v8139 = vpack.c.b16 %v6654, %v6653
        %v8140 = vpack.c.b16 %v6656, %v6655
        %v8141 = vpack.c.b16 %v6658, %v6657
        %v8142 = vpack.c.b16 %v6660, %v6659
        %v8143 = vpack.c.b16 %v6662, %v6661
        %v8144 = vpack.c.b16 %v6664, %v6663
        %v8145 = vpack.c.b16 %v6666, %v6665
        %v8146 = vpack.c.b16 %v6668, %v6667
        %v8147 = vpack.c.b16 %v6670, %v6669
        %v8148 = vpack.c.b16 %v6672, %v6671
        %v8149 = vpack.c.b16 %v6674, %v6673
        %v8150 = vpack.c.b16 %v6676, %v6675
        %v8151 = vpack.c.b16 %v6678, %v6677
        %v8152 = vpack.c.b16 %v6680, %v6679
        %v8153 = vpack.c.b16 %v6682, %v6681
        %v8154 = vpack.c.b16 %v6684, %v6683
        %v8155 = vpack.c.b16 %v6686, %v6685
        %v8156 = vpack.c.b16 %v6688, %v6687
        %v8157 = vpack.c.b16 %v6690, %v6689
        %v8158 = vpack.c.b16 %v6692, %v6691
        %v8159 = vpack.c.b16 %v6694, %v6693
        %v8160 = vpack.c.b16 %v6696, %v6695
        %v8161 = vpack.c.b16 %v6698, %v6697
        %v8162 = vpack.c.b16 %v6700, %v6699
        %v8163 = vpack.c.b16 %v6702, %v6701
        %v8164 = vpack.c.b16 %v6704, %v6703
        %v8165 = vpack.c.b16 %v6706, %v6705
        %v8166 = vpack.c.b16 %v6708, %v6707
        %v8167 = vpack.c.b16 %v6710, %v6709
        %v8168 = vpack.c.b16 %v6712, %v6711
        %v8169 = vpack.c.b16 %v6714, %v6713
        %v8170 = vpack.c.b16 %v6716, %v6715
        %v8171 = vpack.c.b16 %v6718, %v6717
        %v8172 = vpack.c.b16 %v6720, %v6719
        %v8173 = vpack.c.b16 %v6722, %v6721
        %v8174 = vpack.c.b16 %v6724, %v6723
        %v8175 = vpack.c.b16 %v6726, %v6725
        %v8176 = vpack.c.b16 %v6728, %v6727
        %v8177 = vpack.c.b16 %v6730, %v6729
        %v8178 = vpack.c.b16 %v6732, %v6731
        %v8179 = vpack.c.b16 %v6734, %v6733
        %v8180 = vpack.c.b16 %v6736, %v6735
        %v8181 = vpack.c.b16 %v6738, %v6737
        %v8182 = vpack.c.b16 %v6740, %v6739
        %v8183 = vpack.c.b16 %v6742, %v6741
        %v8184 = vpack.c.b16 %v6744, %v6743
        %v8185 = vpack.c.b16 %v6746, %v6745
        %v8186 = vpack.c.b16 %v6748, %v6747
        %v8187 = vpack.c.b16 %v6750, %v6749
        %v8188 = vpack.c.b16 %v6752, %v6751
        %v8189 = vpack.c.b16 %v6754, %v6753
        %v8190 = vpack.c.b16 %v6756, %v6755
        %v8191 = vpack.c.b16 %v6758, %v6757
        %v8192 = vpack.c.b16 %v6760, %v6759
        %v8193 = vpack.c.b16 %v6762, %v6761
        %v8194 = vpack.c.b16 %v6764, %v6763
        %v8195 = vpack.c.b16 %v6766, %v6765
        %v8196 = vpack.c.b16 %v6768, %v6767
        %v8197 = vpack.c.b16 %v6770, %v6769
        %v8198 = vpack.c.b16 %v6772, %v6771
        %v8199 = vpack.c.b16 %v6774, %v6773
        %v8200 = vpack.c.b16 %v6776, %v6775
        %v8201 = vpack.c.b16 %v6778, %v6777
        %v8202 = vpack.c.b16 %v6780, %v6779
        %v8203 = vpack.c.b16 %v6782, %v6781
        %v8204 = vpack.c.b16 %v6784, %v6783
        %v8205 = vpack.c.b16 %v6786, %v6785
        %v8206 = vpack.c.b16 %v6788, %v6787
        %v8207 = vpack.c.b16 %v6790, %v6789
        %v8208 = vpack.c.b16 %v6792, %v6791
        %v8209 = vpack.c.b16 %v6794, %v6793
        %v8210 = vpack.c.b16 %v6796, %v6795
        %v8211 = vpack.c.b16 %v6798, %v6797
        %v8212 = vpack.c.b16 %v6800, %v6799
        %v8213 = vpack.c.b16 %v6802, %v6801
        %v8214 = vpack.c.b16 %v6804, %v6803
        %v8215 = vpack.c.b16 %v6806, %v6805
        %v8216 = vpack.c.b16 %v6808, %v6807
        %v8217 = vpack.c.b16 %v6810, %v6809
        %v8218 = vpack.c.b16 %v6812, %v6811
        %v8219 = vpack.c.b16 %v6814, %v6813
        %v8220 = vpack.c.b16 %v6816, %v6815
        %v8221 = vpack.c.b16 %v6818, %v6817
        %v8222 = vpack.c.b16 %v6820, %v6819
        %v8223 = vpack.c.b16 %v6822, %v6821
        %v8224 = vpack.c.b16 %v6824, %v6823
        %v8225 = vpack.c.b16 %v6826, %v6825
        %v8226 = vpack.c.b16 %v6828, %v6827
        %v8227 = vpack.c.b16 %v6830, %v6829
        %v8228 = vpack.c.b16 %v6832, %v6831
        %v8229 = vpack.c.b16 %v6834, %v6833
        %v8230 = vpack.c.b16 %v6836, %v6835
        %v8231 = vpack.c.b16 %v6838, %v6837
        %v8232 = vpack.c.b16 %v6840, %v6839
        %v8233 = vpack.c.b16 %v6842, %v6841
        %v8234 = vpack.c.b16 %v6844, %v6843
        %v8235 = vpack.c.b16 %v6846, %v6845
        %v8236 = vpack.c.b16 %v6848, %v6847
        %v8237 = vpack.c.b16 %v6850, %v6849
        %v8238 = vpack.c.b16 %v6852, %v6851
        %v8239 = vpack.c.b16 %v6854, %v6853
        %v8240 = vpack.c.b16 %v6856, %v6855
        %v8241 = vpack.c.b16 %v6858, %v6857
        %v8242 = vpack.c.b16 %v6860, %v6859
        %v8243 = vpack.c.b16 %v6862, %v6861
        %v8244 = vpack.c.b16 %v6864, %v6863
        %v8245 = vpack.c.b16 %v6866, %v6865
        %v8246 = vpack.c.b16 %v6868, %v6867
        %v8247 = vpack.c.b16 %v6870, %v6869
        %v8248 = vpack.c.b16 %v6872, %v6871
        %v8249 = vpack.c.b16 %v6874, %v6873
        %v8250 = vpack.c.b16 %v6876, %v6875
        %v8251 = vpack.c.b16 %v6878, %v6877
        %v8252 = vpack.c.b16 %v6880, %v6879
        %v8253 = vpack.c.b16 %v6882, %v6881
        %v8254 = vpack.c.b16 %v6884, %v6883
        %v8255 = vpack.c.b16 %v6886, %v6885
        %v8256 = vpack.c.b16 %v6888, %v6887
        %v8257 = vpack.c.b16 %v6890, %v6889
        %v8258 = vpack.c.b16 %v6892, %v6891
        %v8259 = vpack.c.b16 %v6894, %v6893
        %v8260 = vpack.c.b16 %v6896, %v6895
        %v8261 = vpack.c.b16 %v6898, %v6897
        %v8262 = vpack.c.b16 %v6900, %v6899
        %v8263 = vpack.c.b16 %v6902, %v6901
        %v8264 = vpack.c.b16 %v6904, %v6903
        %v8265 = vpack.c.b16 %v6906, %v6905
        %v8266 = vpack.c.b16 %v6908, %v6907
        %v8267 = vpack.c.b16 %v6910, %v6909
        %v8268 = vpack.c.b16 %v6912, %v6911
        %v8269 = vpack.c.b16 %v6914, %v6913
        %v8270 = vpack.c.b16 %v6916, %v6915
        %v8271 = vpack.c.b16 %v6918, %v6917
        %v8272 = vpack.c.b16 %v6920, %v6919
        %v8273 = vpack.c.b16 %v6922, %v6921
        %v8274 = vpack.c.b16 %v6924, %v6923
        %v8275 = vpack.c.b16 %v6926, %v6925
        %v8276 = vpack.c.b16 %v6928, %v6927
        %v8277 = vpack.c.b16 %v6930, %v6929
        %v8278 = vpack.c.b16 %v6932, %v6931
        %v8279 = vpack.c.b16 %v6934, %v6933
        %v8280 = vpack.c.b16 %v6936, %v6935
        %v8281 = vpack.c.b16 %v6938, %v6937
        %v8282 = vpack.c.b16 %v6940, %v6939
        %v8283 = vpack.c.b16 %v6942, %v6941
        %v8284 = vpack.c.b16 %v6944, %v6943
        %v8285 = vpack.c.b16 %v6946, %v6945
        %v8286 = vpack.c.b16 %v6948, %v6947
        %v8287 = vpack.c.b16 %v6950, %v6949
        %v8288 = vpack.c.b16 %v6952, %v6951
        %v8289 = vpack.c.b16 %v6954, %v6953
        %v8290 = vpack.c.b16 %v6956, %v6955
        %v8291 = vpack.c.b16 %v6958, %v6957
        %v8292 = vpack.c.b16 %v6960, %v6959
        %v8293 = vpack.c.b16 %v6962, %v6961
        %v8294 = vpack.c.b16 %v6964, %v6963
        %v8295 = vpack.c.b16 %v6966, %v6965
        %v8296 = vpack.c.b16 %v6968, %v6967
        %v8297 = vpack.c.b16 %v6970, %v6969
        %v8298 = vpack.c.b16 %v6972, %v6971
        %v8299 = vpack.c.b16 %v6974, %v6973
        %v8300 = vpack.c.b16 %v6976, %v6975
        %v8301 = vpack.c.b16 %v6978, %v6977
        %v8302 = vpack.c.b16 %v6980, %v6979
        %v8303 = vpack.c.b16 %v6982, %v6981
        %v8304 = vpack.c.b16 %v6984, %v6983
        %v8305 = vpack.c.b16 %v6986, %v6985
        %v8306 = vpack.c.b16 %v6988, %v6987
        %v8307 = vpack.c.b16 %v6990, %v6989
        %v8308 = vpack.c.b16 %v6992, %v6991
        %v8309 = vpack.c.b16 %v6994, %v6993
        %v8310 = vpack.c.b16 %v6996, %v6995
        %v8311 = vpack.c.b16 %v6998, %v6997
        %v8312 = vpack.c.b16 %v7000, %v6999
        %v8313 = vpack.c.b16 %v7002, %v7001
        %v8314 = vpack.c.b16 %v7004, %v7003
        %v8315 = vpack.c.b16 %v7006, %v7005
        %v8316 = vpack.c.b16 %v7008, %v7007
        %v8317 = vpack.c.b16 %v7010, %v7009
        %v8318 = vpack.c.b16 %v7012, %v7011
        %v8319 = vpack.c.b16 %v7014, %v7013
        %v8320 = vpack.c.b16 %v7016, %v7015
        %v8321 = vpack.c.b16 %v7018, %v7017
        %v8322 = vpack.c.b16 %v7020, %v7019
        %v8323 = vpack.c.b16 %v7022, %v7021
        %v8324 = vpack.c.b16 %v7024, %v7023
        %v8325 = vpack.c.b16 %v7026, %v7025
        %v8326 = vpack.c.b16 %v7028, %v7027
        %v8327 = vpack.c.b16 %v7030, %v7029
        %v8328 = vpack.c.b16 %v7032, %v7031
        %v8329 = vpack.c.b16 %v7034, %v7033
        %v8330 = vpack.c.b16 %v7036, %v7035
        %v8331 = vpack.c.b16 %v7038, %v7037
        %v8332 = vpack.c.b16 %v7040, %v7039
        %v8333 = vpack.c.b16 %v7042, %v7041
        %v8334 = vpack.c.b16 %v7044, %v7043
        %v8335 = vpack.c.b16 %v7046, %v7045
        %v8336 = vpack.c.b16 %v7048, %v7047
        %v8337 = vpack.c.b16 %v7050, %v7049
        %v8338 = vpack.c.b16 %v7052, %v7051
        %v8339 = vpack.c.b16 %v7054, %v7053
        %v8340 = vpack.c.b16 %v7056, %v7055
        %v8341 = vpack.c.b16 %v7058, %v7057
        %v8342 = vpack.c.b16 %v7060, %v7059
        %v8343 = vpack.c.b16 %v7062, %v7061
        %v8344 = vpack.c.b16 %v7064, %v7063
        %v8345 = vpack.c.b16 %v7066, %v7065
        %v8346 = vpack.c.b16 %v7068, %v7067
        %v8347 = vpack.c.b16 %v7070, %v7069
        %v8348 = vpack.c.b16 %v7072, %v7071
        %v8349 = vpack.c.b16 %v7074, %v7073
        %v8350 = vpack.c.b16 %v7076, %v7075
        %v8351 = vpack.c.b16 %v7078, %v7077
        %v8352 = vpack.c.b16 %v7080, %v7079
        %v8353 = vpack.c.b16 %v7082, %v7081
        %v8354 = vpack.c.b16 %v7084, %v7083
        %v8355 = vpack.c.b16 %v7086, %v7085
        %v8356 = vpack.c.b16 %v7088, %v7087
        %v8357 = vpack.c.b16 %v7090, %v7089
        %v8358 = vpack.c.b16 %v7092, %v7091
        %v8359 = vpack.c.b16 %v7094, %v7093
        %v8360 = vpack.c.b16 %v7096, %v7095
        %v8361 = vpack.c.b16 %v7098, %v7097
        %v8362 = vpack.c.b16 %v7100, %v7099
        %v8363 = vpack.c.b16 %v7102, %v7101
        %v8364 = vpack.c.b16 %v7104, %v7103
        %v8365 = vpack.c.b16 %v7106, %v7105
        %v8366 = vpack.c.b16 %v7108, %v7107
        %v8367 = vpack.c.b16 %v7110, %v7109
        %v8368 = vpack.c.b16 %v7112, %v7111
        %v8369 = vpack.c.b16 %v7114, %v7113
        %v8370 = vpack.c.b16 %v7116, %v7115
        %v8371 = vpack.c.b16 %v7118, %v7117
        %v8372 = vpack.c.b16 %v7120, %v7119
        %v8373 = vpack.c.b16 %v7122, %v7121
        %v8374 = vpack.c.b16 %v7124, %v7123
        %v8375 = vpack.c.b16 %v7126, %v7125
        %v8376 = vpack.c.b16 %v7128, %v7127
        %v8377 = vpack.c.b16 %v7130, %v7129
        %v8378 = vpack.c.b16 %v7132, %v7131
        %v8379 = vpack.c.b16 %v7134, %v7133
        %v8380 = vpack.c.b16 %v7136, %v7135
        %v8381 = vpack.c.b16 %v7138, %v7137
        %v8382 = vpack.c.b16 %v7140, %v7139
        %v8383 = vpack.c.b16 %v7142, %v7141
        %v8384 = vpack.c.b16 %v7144, %v7143
        %v8385 = vpack.c.b16 %v7146, %v7145
        %v8386 = vpack.c.b16 %v7148, %v7147
        %v8387 = vpack.c.b16 %v7150, %v7149
        %v8388 = vpack.c.b16 %v7152, %v7151
        %v8389 = vpack.c.b16 %v7154, %v7153
        %v8390 = vpack.c.b16 %v7156, %v7155
        %v8391 = vpack.c.b16 %v7158, %v7157
        %v8392 = vpack.c.b16 %v7160, %v7159
        %v8393 = vpack.c.b16 %v7162, %v7161
        %v8394 = vpack.c.b16 %v7164, %v7163
        %v8395 = vpack.c.b16 %v7166, %v7165
        %v8396 = vpack.c.b16 %v7168, %v7167
        %v8397 = vpack.c.b16 %v7170, %v7169
        %v8398 = vpack.c.b16 %v7172, %v7171
        %v8399 = vpack.c.b16 %v7174, %v7173
        %v8400 = vpack.c.b16 %v7176, %v7175
        %v8401 = vpack.c.b16 %v7178, %v7177
        %v8402 = vpack.c.b16 %v7180, %v7179
        %v8403 = vpack.c.b16 %v7182, %v7181
        %v8404 = vpack.c.b16 %v7184, %v7183
        %v8405 = vpack.c.b16 %v7186, %v7185
        %v8406 = vpack.c.b16 %v7188, %v7187
        %v8407 = vpack.c.b16 %v7190, %v7189
        %v8408 = vpack.c.b16 %v7192, %v7191
        %v8409 = vpack.c.b16 %v7194, %v7193
        %v8410 = vpack.c.b16 %v7196, %v7195
        %v8411 = vpack.c.b16 %v7198, %v7197
        %v8412 = vpack.c.b16 %v7200, %v7199
        %v8413 = vpack.c.b16 %v7202, %v7201
        %v8414 = vpack.c.b16 %v7204, %v7203
        %v8415 = vpack.c.b16 %v7206, %v7205
        %v8416 = vpack.c.b16 %v7208, %v7207
        %v8417 = vpack.c.b16 %v7210, %v7209
        %v8418 = vpack.c.b16 %v7212, %v7211
        %v8419 = vpack.c.b16 %v7214, %v7213
        %v8420 = vpack.c.b16 %v7216, %v7215
        %v8421 = vpack.c.b16 %v7218, %v7217
        %v8422 = vpack.c.b16 %v7220, %v7219
        %v8423 = vpack.c.b16 %v7222, %v7221
        %v8424 = vpack.c.b16 %v7224, %v7223
        %v8425 = vpack.c.b16 %v7226, %v7225
        %v8426 = vpack.c.b16 %v7228, %v7227
        %v8427 = vpack.c.b16 %v7230, %v7229
        %v8428 = vpack.c.b16 %v7232, %v7231
        %v8429 = vpack.c.b16 %v7234, %v7233
        %v8430 = vpack.c.b16 %v7236, %v7235
        %v8431 = vpack.c.b16 %v7238, %v7237
        %v8432 = vpack.c.b16 %v7240, %v7239
        %v8433 = vpack.c.b16 %v7242, %v7241
        %v8434 = vpack.c.b16 %v7244, %v7243
        %v8435 = vpack.c.b16 %v7246, %v7245
        %v8436 = vpack.c.b16 %v7248, %v7247
        %v8437 = vpack.c.b16 %v7250, %v7249
        %v8438 = vpack.c.b16 %v7252, %v7251
        %v8439 = vpack.c.b16 %v7254, %v7253
        %v8440 = vpack.c.b16 %v7256, %v7255
        %v8441 = vpack.c.b16 %v7258, %v7257
        %v8442 = vpack.c.b16 %v7260, %v7259
        %v8443 = vpack.c.b16 %v7262, %v7261
        %v8444 = vpack.c.b16 %v7264, %v7263
        %v8445 = vpack.c.b16 %v7266, %v7265
        %v8446 = vpack.c.b16 %v7268, %v7267
        %v8447 = vpack.c.b16 %v7270, %v7269
        %v8448 = vpack.c.b16 %v7272, %v7271
        %v8449 = vpack.c.b16 %v7274, %v7273
        %v8450 = vpack.c.b16 %v7276, %v7275
        %v8451 = vpack.c.b16 %v7278, %v7277
        %v8452 = vpack.c.b16 %v7280, %v7279
        %v8453 = vpack.c.b16 %v7282, %v7281
        %v8454 = vpack.c.b16 %v7284, %v7283
        %v8455 = vpack.c.b16 %v7286, %v7285
        %v8456 = vpack.c.b16 %v7288, %v7287
        %v8457 = vpack.c.b16 %v7290, %v7289
        %v8458 = vpack.c.b16 %v7292, %v7291
        %v8459 = vpack.c.b16 %v7294, %v7293
        %v8460 = vpack.c.b16 %v7296, %v7295
        %v8461 = vpack.c.b16 %v7298, %v7297
        %v8462 = vpack.c.b16 %v7300, %v7299
        %v8463 = vpack.c.b16 %v7302, %v7301
        %v8464 = vpack.c.b16 %v7304, %v7303
        %v8465 = vpack.c.b16 %v7306, %v7305
        %v8466 = vpack.c.b16 %v7308, %v7307
        %v8467 = vpack.c.b16 %v7310, %v7309
        %v8468 = vpack.c.b16 %v7312, %v7311
        %v8469 = vpack.c.b16 %v7314, %v7313
        %v8470 = vpack.c.b16 %v7316, %v7315
        %v8471 = vpack.c.b16 %v7318, %v7317
        %v8472 = vpack.c.b16 %v7320, %v7319
        %v8473 = vpack.c.b16 %v7322, %v7321
        %v8474 = vpack.c.b16 %v7324, %v7323
        %v8475 = vpack.c.b16 %v7326, %v7325
        %v8476 = vpack.c.b16 %v7328, %v7327
        %v8477 = vpack.c.b16 %v7330, %v7329
        %v8478 = vpack.c.b16 %v7332, %v7331
        %v8479 = vpack.c.b16 %v7334, %v7333
        %v8480 = vpack.c.b16 %v7336, %v7335
        %v8481 = vpack.c.b16 %v7338, %v7337
        %v8482 = vpack.c.b16 %v7340, %v7339
        %v8483 = vpack.c.b16 %v7342, %v7341
        %v8484 = vpack.c.b16 %v7344, %v7343
        %v8485 = vpack.c.b16 %v7346, %v7345
        %v8486 = vpack.c.b16 %v7348, %v7347
        %v8487 = vpack.c.b16 %v7350, %v7349
        %v8488 = vpack.c.b16 %v7352, %v7351
        %v8489 = vpack.c.b16 %v7354, %v7353
        %v8490 = vpack.c.b16 %v7356, %v7355
        %v8491 = vpack.c.b16 %v7358, %v7357
        %v8492 = vpack.c.b16 %v7360, %v7359
        %v8493 = vpack.c.b16 %v7362, %v7361
        %v8494 = vpack.c.b16 %v7364, %v7363
        %v8495 = vpack.c.b16 %v7366, %v7365
        %v8496 = vpack.c.b16 %v7368, %v7367
        %v8497 = vpack.c.b16 %v7370, %v7369
        %v8498 = vpack.c.b16 %v7372, %v7371
        %v8499 = vpack.c.b16 %v7374, %v7373
        %v8500 = vpack.c.b16 %v7376, %v7375
        %v8501 = vpack.c.b16 %v7378, %v7377
        %v8502 = vpack.c.b16 %v7380, %v7379
        %v8503 = vpack.c.b16 %v7382, %v7381
        %v8504 = vpack.c.b16 %v7384, %v7383
        %v8505 = vpack.c.b16 %v7386, %v7385
        %v8506 = vpack.c.b16 %v7388, %v7387
        %v8507 = vpack.c.b16 %v7390, %v7389
        %v8508 = vpack.c.b16 %v7392, %v7391
        %v8509 = vpack.c.b16 %v7394, %v7393
        %v8510 = vpack.c.b16 %v7396, %v7395
        %v8511 = vpack.c.b16 %v7398, %v7397
        %v8512 = vpack.c.b16 %v7400, %v7399
        %v8513 = vpack.c.b16 %v7402, %v7401
        %v8514 = vpack.c.b16 %v7404, %v7403
        %v8515 = vpack.c.b16 %v7406, %v7405
        %v8516 = vpack.c.b16 %v7408, %v7407
        %v8517 = vpack.c.b16 %v7410, %v7409
        %v8518 = vpack.c.b16 %v7412, %v7411
        %v8519 = vpack.c.b16 %v7414, %v7413
        %v8520 = vpack.c.b16 %v7416, %v7415
        %v8521 = vpack.c.b16 %v7418, %v7417
        %v8522 = vpack.c.b16 %v7420, %v7419
        %v8523 = vpack.c.b16 %v7422, %v7421
        %v8524 = vpack.c.b16 %v7424, %v7423
        %v8525 = vpack.c.b16 %v7426, %v7425
        %v8526 = vpack.c.b16 %v7428, %v7427
        %v8527 = vpack.c.b16 %v7430, %v7429
        %v8528 = vpack.c.b16 %v7432, %v7431
        %v8529 = vpack.c.b16 %v7434, %v7433
        %v8530 = vpack.c.b16 %v7436, %v7435
        %v8531 = vpack.c.b16 %v7438, %v7437
        %v8532 = vpack.c.b16 %v7440, %v7439
        %v8533 = vpack.c.b16 %v7442, %v7441
        %v8534 = vpack.c.b16 %v7444, %v7443
        %v8535 = vpack.c.b16 %v7446, %v7445
        %v8536 = vpack.c.b16 %v7448, %v7447
        %v8537 = vpack.c.b16 %v7450, %v7449
        %v8538 = vpack.c.b16 %v7452, %v7451
        %v8539 = vpack.c.b16 %v7454, %v7453
        %v8540 = vpack.c.b16 %v7456, %v7455
        %v8541 = vpack.c.b16 %v7458, %v7457
        %v8542 = vpack.c.b16 %v7460, %v7459
        %v8543 = vpack.c.b16 %v7462, %v7461
        %v8544 = vpack.c.b16 %v7464, %v7463
        %v8545 = vpack.c.b16 %v7466, %v7465
        %v8546 = vpack.c.b16 %v7468, %v7467
        %v8547 = vpack.c.b16 %v7470, %v7469
        %v8548 = vpack.c.b16 %v7472, %v7471
        %v8549 = vpack.c.b16 %v7474, %v7473
        %v8550 = vpack.c.b16 %v7476, %v7475
        %v8551 = vpack.c.b16 %v7478, %v7477
        %v8552 = vpack.c.b16 %v7480, %v7479
        %v8553 = vpack.c.b16 %v7482, %v7481
        %v8554 = vpack.c.b16 %v7484, %v7483
        %v8555 = vpack.c.b16 %v7486, %v7485
        %v8556 = vpack.c.b16 %v7488, %v7487
        %v8557 = vpack.c.b16 %v7490, %v7489
        %v8558 = vpack.c.b16 %v7492, %v7491
        %v8559 = vpack.c.b16 %v7494, %v7493
        %v8560 = vpack.c.b16 %v7496, %v7495
        %v8561 = vpack.c.b16 %v7498, %v7497
        %v8562 = vpack.c.b16 %v7500, %v7499
        %v8563 = vpack.c.b16 %v7502, %v7501
        %v8564 = vpack.c.b16 %v7504, %v7503
        %v8565 = vpack.c.b16 %v7506, %v7505
        %v8566 = vpack.c.b16 %v7508, %v7507
        %v8567 = vpack.c.b16 %v7510, %v7509
        %v8568 = vpack.c.b16 %v7512, %v7511
        %9625 = vmatprep.subr.bf16.mxu0 0
        %9626 = vmatpush1.bf16.msra.mxu0 %v7520
        %9627 = vmatprep.subr.bf16.mxu0 0
        %9628 = vmatpush1.bf16.msra.mxu0 %v7519
        %9629 = vmatprep.subr.bf16.mxu0 0
        %9630 = vmatpush1.bf16.msra.mxu0 %v7518
        %9631 = vmatprep.subr.bf16.mxu0 0
        %9632 = vmatpush1.bf16.msra.mxu0 %v7517
        %9633 = vmatprep.subr.bf16.mxu0 0
        %9634 = vmatpush1.bf16.msra.mxu0 %v7516
        %9635 = vmatprep.subr.bf16.mxu0 0
        %9636 = vmatpush1.bf16.msra.mxu0 %v7515
        %9637 = vmatprep.subr.bf16.mxu0 0
        %9638 = vmatpush1.bf16.msra.mxu0 %v7514
        %9639 = vmatprep.subr.bf16.mxu0 0
        %9640 = vmatpush1.bf16.msra.mxu0 %v7513
        %9641 = vmatprep.subr.bf16.mxu0 0
        %9642 = vmatpush2.bf16.msra.mxu0 %v7528
        %9643 = vmatprep.subr.bf16.mxu0 0
        %9644 = vmatpush2.bf16.msra.mxu0 %v7527
        %9645 = vmatprep.subr.bf16.mxu0 0
        %9646 = vmatpush2.bf16.msra.mxu0 %v7526
        %9647 = vmatprep.subr.bf16.mxu0 0
        %9648 = vmatpush2.bf16.msra.mxu0 %v7525
        %9649 = vmatprep.subr.bf16.mxu0 0
        %9650 = vmatpush2.bf16.msra.mxu0 %v7524
        %9651 = vmatprep.subr.bf16.mxu0 0
        %9652 = vmatpush2.bf16.msra.mxu0 %v7523
        %9653 = vmatprep.subr.bf16.mxu0 0
        %9654 = vmatpush2.bf16.msra.mxu0 %v7522
        %9655 = vmatprep.subr.bf16.mxu0 0
        %9656 = vmatpush2.bf16.msra.mxu0 %v7521
        %9657 = vmatprep.mubr.bf16.mxu0 %v2386
        %9658 = vmatmul.mubr.bf16.gmra.mxu0 %v2372
        %v9659 = vpop.f32.mrf.mxu0
        %v9660 = vadd.f32 0.0, %v9659
        %v9661 = vpop.f32.mrf.mxu0
        %v9662 = vpop.f32.mrf.mxu0
        %v9663 = vpop.f32.mrf.mxu0
        %9664 = vdwg.mxu0
        %9665 = vmatprep.subr.bf16.mxu0 0
        %9666 = vmatpush1.bf16.msra.mxu0 %v7536
        %9667 = vmatprep.subr.bf16.mxu0 0
        %9668 = vmatpush1.bf16.msra.mxu0 %v7535
        %9669 = vmatprep.subr.bf16.mxu0 0
        %9670 = vmatpush1.bf16.msra.mxu0 %v7534
        %9671 = vmatprep.subr.bf16.mxu0 0
        %9672 = vmatpush1.bf16.msra.mxu0 %v7533
        %9673 = vmatprep.subr.bf16.mxu0 0
        %9674 = vmatpush1.bf16.msra.mxu0 %v7532
        %9675 = vmatprep.subr.bf16.mxu0 0
        %9676 = vmatpush1.bf16.msra.mxu0 %v7531
        %9677 = vmatprep.subr.bf16.mxu0 0
        %9678 = vmatpush1.bf16.msra.mxu0 %v7530
        %9679 = vmatprep.subr.bf16.mxu0 0
        %9680 = vmatpush1.bf16.msra.mxu0 %v7529
        %9681 = vmatprep.subr.bf16.mxu0 0
        %9682 = vmatpush2.bf16.msra.mxu0 %v7544
        %9683 = vmatprep.subr.bf16.mxu0 0
        %9684 = vmatpush2.bf16.msra.mxu0 %v7543
        %9685 = vmatprep.subr.bf16.mxu0 0
        %9686 = vmatpush2.bf16.msra.mxu0 %v7542
        %9687 = vmatprep.subr.bf16.mxu0 0
        %9688 = vmatpush2.bf16.msra.mxu0 %v7541
        %9689 = vmatprep.subr.bf16.mxu0 0
        %9690 = vmatpush2.bf16.msra.mxu0 %v7540
        %9691 = vmatprep.subr.bf16.mxu0 0
        %9692 = vmatpush2.bf16.msra.mxu0 %v7539
        %9693 = vmatprep.subr.bf16.mxu0 0
        %9694 = vmatpush2.bf16.msra.mxu0 %v7538
        %9695 = vmatprep.subr.bf16.mxu0 0
        %9696 = vmatpush2.bf16.msra.mxu0 %v7537
        %9697 = vmatprep.mubr.bf16.mxu0 %v2396
        %9698 = vmatmul.mubr.bf16.gmra.mxu0 %v2394
        %v9699 = vpop.f32.mrf.mxu0
        %v9700 = vadd.f32 %v9660, %v9699
        %v9701 = vpop.f32.mrf.mxu0
        %v9702 = vpop.f32.mrf.mxu0
        %v9703 = vpop.f32.mrf.mxu0
        %9704 = vdwg.mxu0
        %9705 = vmatprep.subr.bf16.mxu0 0
        %9706 = vmatpush1.bf16.msra.mxu0 %v7552
        %9707 = vmatprep.subr.bf16.mxu0 0
        %9708 = vmatpush1.bf16.msra.mxu0 %v7551
        %9709 = vmatprep.subr.bf16.mxu0 0
        %9710 = vmatpush1.bf16.msra.mxu0 %v7550
        %9711 = vmatprep.subr.bf16.mxu0 0
        %9712 = vmatpush1.bf16.msra.mxu0 %v7549
        %9713 = vmatprep.subr.bf16.mxu0 0
        %9714 = vmatpush1.bf16.msra.mxu0 %v7548
        %9715 = vmatprep.subr.bf16.mxu0 0
        %9716 = vmatpush1.bf16.msra.mxu0 %v7547
        %9717 = vmatprep.subr.bf16.mxu0 0
        %9718 = vmatpush1.bf16.msra.mxu0 %v7546
        %9719 = vmatprep.subr.bf16.mxu0 0
        %9720 = vmatpush1.bf16.msra.mxu0 %v7545
        %9721 = vmatprep.subr.bf16.mxu0 0
        %9722 = vmatpush2.bf16.msra.mxu0 %v7560
        %9723 = vmatprep.subr.bf16.mxu0 0
        %9724 = vmatpush2.bf16.msra.mxu0 %v7559
        %9725 = vmatprep.subr.bf16.mxu0 0
        %9726 = vmatpush2.bf16.msra.mxu0 %v7558
        %9727 = vmatprep.subr.bf16.mxu0 0
        %9728 = vmatpush2.bf16.msra.mxu0 %v7557
        %9729 = vmatprep.subr.bf16.mxu0 0
        %9730 = vmatpush2.bf16.msra.mxu0 %v7556
        %9731 = vmatprep.subr.bf16.mxu0 0
        %9732 = vmatpush2.bf16.msra.mxu0 %v7555
        %9733 = vmatprep.subr.bf16.mxu0 0
        %9734 = vmatpush2.bf16.msra.mxu0 %v7554
        %9735 = vmatprep.subr.bf16.mxu0 0
        %9736 = vmatpush2.bf16.msra.mxu0 %v7553
        %9737 = vmatprep.mubr.bf16.mxu0 %v2393
        %9738 = vmatmul.mubr.bf16.gmra.mxu0 %v2379
        %v9739 = vpop.f32.mrf.mxu0
        %v9740 = vadd.f32 %v9700, %v9739
        %v9741 = vpop.f32.mrf.mxu0
        %v9742 = vpop.f32.mrf.mxu0
        %v9743 = vpop.f32.mrf.mxu0
        %9744 = vdwg.mxu0
        %9745 = vmatprep.subr.bf16.mxu0 0
        %9746 = vmatpush1.bf16.msra.mxu0 %v7568
        %9747 = vmatprep.subr.bf16.mxu0 0
        %9748 = vmatpush1.bf16.msra.mxu0 %v7567
        %9749 = vmatprep.subr.bf16.mxu0 0
        %9750 = vmatpush1.bf16.msra.mxu0 %v7566
        %9751 = vmatprep.subr.bf16.mxu0 0
        %9752 = vmatpush1.bf16.msra.mxu0 %v7565
        %9753 = vmatprep.subr.bf16.mxu0 0
        %9754 = vmatpush1.bf16.msra.mxu0 %v7564
        %9755 = vmatprep.subr.bf16.mxu0 0
        %9756 = vmatpush1.bf16.msra.mxu0 %v7563
        %9757 = vmatprep.subr.bf16.mxu0 0
        %9758 = vmatpush1.bf16.msra.mxu0 %v7562
        %9759 = vmatprep.subr.bf16.mxu0 0
        %9760 = vmatpush1.bf16.msra.mxu0 %v7561
        %9761 = vmatprep.subr.bf16.mxu0 0
        %9762 = vmatpush2.bf16.msra.mxu0 %v7576
        %9763 = vmatprep.subr.bf16.mxu0 0
        %9764 = vmatpush2.bf16.msra.mxu0 %v7575
        %9765 = vmatprep.subr.bf16.mxu0 0
        %9766 = vmatpush2.bf16.msra.mxu0 %v7574
        %9767 = vmatprep.subr.bf16.mxu0 0
        %9768 = vmatpush2.bf16.msra.mxu0 %v7573
        %9769 = vmatprep.subr.bf16.mxu0 0
        %9770 = vmatpush2.bf16.msra.mxu0 %v7572
        %9771 = vmatprep.subr.bf16.mxu0 0
        %9772 = vmatpush2.bf16.msra.mxu0 %v7571
        %9773 = vmatprep.subr.bf16.mxu0 0
        %9774 = vmatpush2.bf16.msra.mxu0 %v7570
        %9775 = vmatprep.subr.bf16.mxu0 0
        %9776 = vmatpush2.bf16.msra.mxu0 %v7569
        %9777 = vmatprep.mubr.bf16.mxu0 %v2397
        %9778 = vmatmul.mubr.bf16.gmra.mxu0 %v2395
        %v9779 = vpop.f32.mrf.mxu0
        %v9780 = vadd.f32 %v9740, %v9779
        %v9781 = vpop.f32.mrf.mxu0
        %v9782 = vpop.f32.mrf.mxu0
        %v9783 = vpop.f32.mrf.mxu0
        %9784 = vdwg.mxu0
        %9785 = vmatprep.subr.bf16.mxu0 0
        %9786 = vmatpush1.bf16.msra.mxu0 %v7584
        %9787 = vmatprep.subr.bf16.mxu0 0
        %9788 = vmatpush1.bf16.msra.mxu0 %v7583
        %9789 = vmatprep.subr.bf16.mxu0 0
        %9790 = vmatpush1.bf16.msra.mxu0 %v7582
        %9791 = vmatprep.subr.bf16.mxu0 0
        %9792 = vmatpush1.bf16.msra.mxu0 %v7581
        %9793 = vmatprep.subr.bf16.mxu0 0
        %9794 = vmatpush1.bf16.msra.mxu0 %v7580
        %9795 = vmatprep.subr.bf16.mxu0 0
        %9796 = vmatpush1.bf16.msra.mxu0 %v7579
        %9797 = vmatprep.subr.bf16.mxu0 0
        %9798 = vmatpush1.bf16.msra.mxu0 %v7578
        %9799 = vmatprep.subr.bf16.mxu0 0
        %9800 = vmatpush1.bf16.msra.mxu0 %v7577
        %9801 = vmatprep.subr.bf16.mxu0 0
        %9802 = vmatpush2.bf16.msra.mxu0 %v7592
        %9803 = vmatprep.subr.bf16.mxu0 0
        %9804 = vmatpush2.bf16.msra.mxu0 %v7591
        %9805 = vmatprep.subr.bf16.mxu0 0
        %9806 = vmatpush2.bf16.msra.mxu0 %v7590
        %9807 = vmatprep.subr.bf16.mxu0 0
        %9808 = vmatpush2.bf16.msra.mxu0 %v7589
        %9809 = vmatprep.subr.bf16.mxu0 0
        %9810 = vmatpush2.bf16.msra.mxu0 %v7588
        %9811 = vmatprep.subr.bf16.mxu0 0
        %9812 = vmatpush2.bf16.msra.mxu0 %v7587
        %9813 = vmatprep.subr.bf16.mxu0 0
        %9814 = vmatpush2.bf16.msra.mxu0 %v7586
        %9815 = vmatprep.subr.bf16.mxu0 0
        %9816 = vmatpush2.bf16.msra.mxu0 %v7585
        %9817 = vmatprep.mubr.bf16.mxu0 %v2435
        %9818 = vmatmul.mubr.bf16.gmra.mxu0 %v2421
        %v9819 = vpop.f32.mrf.mxu0
        %v9820 = vadd.f32 %v9780, %v9819
        %v9821 = vpop.f32.mrf.mxu0
        %v9822 = vpop.f32.mrf.mxu0
        %v9823 = vpop.f32.mrf.mxu0
        %9824 = vdwg.mxu0
        %9825 = vmatprep.subr.bf16.mxu0 0
        %9826 = vmatpush1.bf16.msra.mxu0 %v7600
        %9827 = vmatprep.subr.bf16.mxu0 0
        %9828 = vmatpush1.bf16.msra.mxu0 %v7599
        %9829 = vmatprep.subr.bf16.mxu0 0
        %9830 = vmatpush1.bf16.msra.mxu0 %v7598
        %9831 = vmatprep.subr.bf16.mxu0 0
        %9832 = vmatpush1.bf16.msra.mxu0 %v7597
        %9833 = vmatprep.subr.bf16.mxu0 0
        %9834 = vmatpush1.bf16.msra.mxu0 %v7596
        %9835 = vmatprep.subr.bf16.mxu0 0
        %9836 = vmatpush1.bf16.msra.mxu0 %v7595
        %9837 = vmatprep.subr.bf16.mxu0 0
        %9838 = vmatpush1.bf16.msra.mxu0 %v7594
        %9839 = vmatprep.subr.bf16.mxu0 0
        %9840 = vmatpush1.bf16.msra.mxu0 %v7593
        %9841 = vmatprep.subr.bf16.mxu0 0
        %9842 = vmatpush2.bf16.msra.mxu0 %v7608
        %9843 = vmatprep.subr.bf16.mxu0 0
        %9844 = vmatpush2.bf16.msra.mxu0 %v7607
        %9845 = vmatprep.subr.bf16.mxu0 0
        %9846 = vmatpush2.bf16.msra.mxu0 %v7606
        %9847 = vmatprep.subr.bf16.mxu0 0
        %9848 = vmatpush2.bf16.msra.mxu0 %v7605
        %9849 = vmatprep.subr.bf16.mxu0 0
        %9850 = vmatpush2.bf16.msra.mxu0 %v7604
        %9851 = vmatprep.subr.bf16.mxu0 0
        %9852 = vmatpush2.bf16.msra.mxu0 %v7603
        %9853 = vmatprep.subr.bf16.mxu0 0
        %9854 = vmatpush2.bf16.msra.mxu0 %v7602
        %9855 = vmatprep.subr.bf16.mxu0 0
        %9856 = vmatpush2.bf16.msra.mxu0 %v7601
        %9857 = vmatprep.mubr.bf16.mxu0 %v2445
        %9858 = vmatmul.mubr.bf16.gmra.mxu0 %v2443
        %v9859 = vpop.f32.mrf.mxu0
        %v9860 = vadd.f32 %v9820, %v9859
        %v9861 = vpop.f32.mrf.mxu0
        %v9862 = vpop.f32.mrf.mxu0
        %v9863 = vpop.f32.mrf.mxu0
        %9864 = vdwg.mxu0
        %9865 = vmatprep.subr.bf16.mxu0 0
        %9866 = vmatpush1.bf16.msra.mxu0 %v7616
        %9867 = vmatprep.subr.bf16.mxu0 0
        %9868 = vmatpush1.bf16.msra.mxu0 %v7615
        %9869 = vmatprep.subr.bf16.mxu0 0
        %9870 = vmatpush1.bf16.msra.mxu0 %v7614
        %9871 = vmatprep.subr.bf16.mxu0 0
        %9872 = vmatpush1.bf16.msra.mxu0 %v7613
        %9873 = vmatprep.subr.bf16.mxu0 0
        %9874 = vmatpush1.bf16.msra.mxu0 %v7612
        %9875 = vmatprep.subr.bf16.mxu0 0
        %9876 = vmatpush1.bf16.msra.mxu0 %v7611
        %9877 = vmatprep.subr.bf16.mxu0 0
        %9878 = vmatpush1.bf16.msra.mxu0 %v7610
        %9879 = vmatprep.subr.bf16.mxu0 0
        %9880 = vmatpush1.bf16.msra.mxu0 %v7609
        %9881 = vmatprep.subr.bf16.mxu0 0
        %9882 = vmatpush2.bf16.msra.mxu0 %v7624
        %9883 = vmatprep.subr.bf16.mxu0 0
        %9884 = vmatpush2.bf16.msra.mxu0 %v7623
        %9885 = vmatprep.subr.bf16.mxu0 0
        %9886 = vmatpush2.bf16.msra.mxu0 %v7622
        %9887 = vmatprep.subr.bf16.mxu0 0
        %9888 = vmatpush2.bf16.msra.mxu0 %v7621
        %9889 = vmatprep.subr.bf16.mxu0 0
        %9890 = vmatpush2.bf16.msra.mxu0 %v7620
        %9891 = vmatprep.subr.bf16.mxu0 0
        %9892 = vmatpush2.bf16.msra.mxu0 %v7619
        %9893 = vmatprep.subr.bf16.mxu0 0
        %9894 = vmatpush2.bf16.msra.mxu0 %v7618
        %9895 = vmatprep.subr.bf16.mxu0 0
        %9896 = vmatpush2.bf16.msra.mxu0 %v7617
        %9897 = vmatprep.mubr.bf16.mxu0 %v2442
        %9898 = vmatmul.mubr.bf16.gmra.mxu0 %v2428
        %v9899 = vpop.f32.mrf.mxu0
        %v9900 = vadd.f32 %v9860, %v9899
        %v9901 = vpop.f32.mrf.mxu0
        %v9902 = vpop.f32.mrf.mxu0
        %v9903 = vpop.f32.mrf.mxu0
        %9904 = vdwg.mxu0
        %9905 = vmatprep.subr.bf16.mxu0 0
        %9906 = vmatpush1.bf16.msra.mxu0 %v7632
        %9907 = vmatprep.subr.bf16.mxu0 0
        %9908 = vmatpush1.bf16.msra.mxu0 %v7631
        %9909 = vmatprep.subr.bf16.mxu0 0
        %9910 = vmatpush1.bf16.msra.mxu0 %v7630
        %9911 = vmatprep.subr.bf16.mxu0 0
        %9912 = vmatpush1.bf16.msra.mxu0 %v7629
        %9913 = vmatprep.subr.bf16.mxu0 0
        %9914 = vmatpush1.bf16.msra.mxu0 %v7628
        %9915 = vmatprep.subr.bf16.mxu0 0
        %9916 = vmatpush1.bf16.msra.mxu0 %v7627
        %9917 = vmatprep.subr.bf16.mxu0 0
        %9918 = vmatpush1.bf16.msra.mxu0 %v7626
        %9919 = vmatprep.subr.bf16.mxu0 0
        %9920 = vmatpush1.bf16.msra.mxu0 %v7625
        %9921 = vmatprep.subr.bf16.mxu0 0
        %9922 = vmatpush2.bf16.msra.mxu0 %v7640
        %9923 = vmatprep.subr.bf16.mxu0 0
        %9924 = vmatpush2.bf16.msra.mxu0 %v7639
        %9925 = vmatprep.subr.bf16.mxu0 0
        %9926 = vmatpush2.bf16.msra.mxu0 %v7638
        %9927 = vmatprep.subr.bf16.mxu0 0
        %9928 = vmatpush2.bf16.msra.mxu0 %v7637
        %9929 = vmatprep.subr.bf16.mxu0 0
        %9930 = vmatpush2.bf16.msra.mxu0 %v7636
        %9931 = vmatprep.subr.bf16.mxu0 0
        %9932 = vmatpush2.bf16.msra.mxu0 %v7635
        %9933 = vmatprep.subr.bf16.mxu0 0
        %9934 = vmatpush2.bf16.msra.mxu0 %v7634
        %9935 = vmatprep.subr.bf16.mxu0 0
        %9936 = vmatpush2.bf16.msra.mxu0 %v7633
        %9937 = vmatprep.mubr.bf16.mxu0 %v2446
        %9938 = vmatmul.mubr.bf16.gmra.mxu0 %v2444
        %v9939 = vpop.f32.mrf.mxu0
        %v9940 = vadd.f32 %v9900, %v9939
        %v9941 = vpop.f32.mrf.mxu0
        %v9942 = vpop.f32.mrf.mxu0
        %v9943 = vpop.f32.mrf.mxu0
        %9944 = vdwg.mxu0
        %9945 = vmatprep.subr.bf16.mxu0 0
        %9946 = vmatpush1.bf16.msra.mxu0 %v7648
        %9947 = vmatprep.subr.bf16.mxu0 0
        %9948 = vmatpush1.bf16.msra.mxu0 %v7647
        %9949 = vmatprep.subr.bf16.mxu0 0
        %9950 = vmatpush1.bf16.msra.mxu0 %v7646
        %9951 = vmatprep.subr.bf16.mxu0 0
        %9952 = vmatpush1.bf16.msra.mxu0 %v7645
        %9953 = vmatprep.subr.bf16.mxu0 0
        %9954 = vmatpush1.bf16.msra.mxu0 %v7644
        %9955 = vmatprep.subr.bf16.mxu0 0
        %9956 = vmatpush1.bf16.msra.mxu0 %v7643
        %9957 = vmatprep.subr.bf16.mxu0 0
        %9958 = vmatpush1.bf16.msra.mxu0 %v7642
        %9959 = vmatprep.subr.bf16.mxu0 0
        %9960 = vmatpush1.bf16.msra.mxu0 %v7641
        %9961 = vmatprep.subr.bf16.mxu0 0
        %9962 = vmatpush2.bf16.msra.mxu0 %v7656
        %9963 = vmatprep.subr.bf16.mxu0 0
        %9964 = vmatpush2.bf16.msra.mxu0 %v7655
        %9965 = vmatprep.subr.bf16.mxu0 0
        %9966 = vmatpush2.bf16.msra.mxu0 %v7654
        %9967 = vmatprep.subr.bf16.mxu0 0
        %9968 = vmatpush2.bf16.msra.mxu0 %v7653
        %9969 = vmatprep.subr.bf16.mxu0 0
        %9970 = vmatpush2.bf16.msra.mxu0 %v7652
        %9971 = vmatprep.subr.bf16.mxu0 0
        %9972 = vmatpush2.bf16.msra.mxu0 %v7651
        %9973 = vmatprep.subr.bf16.mxu0 0
        %9974 = vmatpush2.bf16.msra.mxu0 %v7650
        %9975 = vmatprep.subr.bf16.mxu0 0
        %9976 = vmatpush2.bf16.msra.mxu0 %v7649
        %9977 = vmatprep.mubr.bf16.mxu0 %v2484
        %9978 = vmatmul.mubr.bf16.gmra.mxu0 %v2470
        %v9979 = vpop.f32.mrf.mxu0
        %v9980 = vadd.f32 %v9940, %v9979
        %v9981 = vpop.f32.mrf.mxu0
        %v9982 = vpop.f32.mrf.mxu0
        %v9983 = vpop.f32.mrf.mxu0
        %9984 = vdwg.mxu0
        %9985 = vmatprep.subr.bf16.mxu0 0
        %9986 = vmatpush1.bf16.msra.mxu0 %v7664
        %9987 = vmatprep.subr.bf16.mxu0 0
        %9988 = vmatpush1.bf16.msra.mxu0 %v7663
        %9989 = vmatprep.subr.bf16.mxu0 0
        %9990 = vmatpush1.bf16.msra.mxu0 %v7662
        %9991 = vmatprep.subr.bf16.mxu0 0
        %9992 = vmatpush1.bf16.msra.mxu0 %v7661
        %9993 = vmatprep.subr.bf16.mxu0 0
        %9994 = vmatpush1.bf16.msra.mxu0 %v7660
        %9995 = vmatprep.subr.bf16.mxu0 0
        %9996 = vmatpush1.bf16.msra.mxu0 %v7659
        %9997 = vmatprep.subr.bf16.mxu0 0
        %9998 = vmatpush1.bf16.msra.mxu0 %v7658
        %9999 = vmatprep.subr.bf16.mxu0 0
        %10000 = vmatpush1.bf16.msra.mxu0 %v7657
        %10001 = vmatprep.subr.bf16.mxu0 0
        %10002 = vmatpush2.bf16.msra.mxu0 %v7672
        %10003 = vmatprep.subr.bf16.mxu0 0
        %10004 = vmatpush2.bf16.msra.mxu0 %v7671
        %10005 = vmatprep.subr.bf16.mxu0 0
        %10006 = vmatpush2.bf16.msra.mxu0 %v7670
        %10007 = vmatprep.subr.bf16.mxu0 0
        %10008 = vmatpush2.bf16.msra.mxu0 %v7669
        %10009 = vmatprep.subr.bf16.mxu0 0
        %10010 = vmatpush2.bf16.msra.mxu0 %v7668
        %10011 = vmatprep.subr.bf16.mxu0 0
        %10012 = vmatpush2.bf16.msra.mxu0 %v7667
        %10013 = vmatprep.subr.bf16.mxu0 0
        %10014 = vmatpush2.bf16.msra.mxu0 %v7666
        %10015 = vmatprep.subr.bf16.mxu0 0
        %10016 = vmatpush2.bf16.msra.mxu0 %v7665
        %10017 = vmatprep.mubr.bf16.mxu0 %v2494
        %10018 = vmatmul.mubr.bf16.gmra.mxu0 %v2492
        %v10019 = vpop.f32.mrf.mxu0
        %v10020 = vadd.f32 %v9980, %v10019
        %v10021 = vpop.f32.mrf.mxu0
        %v10022 = vpop.f32.mrf.mxu0
        %v10023 = vpop.f32.mrf.mxu0
        %10024 = vdwg.mxu0
        %10025 = vmatprep.subr.bf16.mxu0 0
        %10026 = vmatpush1.bf16.msra.mxu0 %v7680
        %10027 = vmatprep.subr.bf16.mxu0 0
        %10028 = vmatpush1.bf16.msra.mxu0 %v7679
        %10029 = vmatprep.subr.bf16.mxu0 0
        %10030 = vmatpush1.bf16.msra.mxu0 %v7678
        %10031 = vmatprep.subr.bf16.mxu0 0
        %10032 = vmatpush1.bf16.msra.mxu0 %v7677
        %10033 = vmatprep.subr.bf16.mxu0 0
        %10034 = vmatpush1.bf16.msra.mxu0 %v7676
        %10035 = vmatprep.subr.bf16.mxu0 0
        %10036 = vmatpush1.bf16.msra.mxu0 %v7675
        %10037 = vmatprep.subr.bf16.mxu0 0
        %10038 = vmatpush1.bf16.msra.mxu0 %v7674
        %10039 = vmatprep.subr.bf16.mxu0 0
        %10040 = vmatpush1.bf16.msra.mxu0 %v7673
        %10041 = vmatprep.subr.bf16.mxu0 0
        %10042 = vmatpush2.bf16.msra.mxu0 %v7688
        %10043 = vmatprep.subr.bf16.mxu0 0
        %10044 = vmatpush2.bf16.msra.mxu0 %v7687
        %10045 = vmatprep.subr.bf16.mxu0 0
        %10046 = vmatpush2.bf16.msra.mxu0 %v7686
        %10047 = vmatprep.subr.bf16.mxu0 0
        %10048 = vmatpush2.bf16.msra.mxu0 %v7685
        %10049 = vmatprep.subr.bf16.mxu0 0
        %10050 = vmatpush2.bf16.msra.mxu0 %v7684
        %10051 = vmatprep.subr.bf16.mxu0 0
        %10052 = vmatpush2.bf16.msra.mxu0 %v7683
        %10053 = vmatprep.subr.bf16.mxu0 0
        %10054 = vmatpush2.bf16.msra.mxu0 %v7682
        %10055 = vmatprep.subr.bf16.mxu0 0
        %10056 = vmatpush2.bf16.msra.mxu0 %v7681
        %10057 = vmatprep.mubr.bf16.mxu0 %v2491
        %10058 = vmatmul.mubr.bf16.gmra.mxu0 %v2477
        %v10059 = vpop.f32.mrf.mxu0
        %v10060 = vadd.f32 %v10020, %v10059
        %v10061 = vpop.f32.mrf.mxu0
        %v10062 = vpop.f32.mrf.mxu0
        %v10063 = vpop.f32.mrf.mxu0
        %10064 = vdwg.mxu0
        %10065 = vmatprep.subr.bf16.mxu0 0
        %10066 = vmatpush1.bf16.msra.mxu0 %v7696
        %10067 = vmatprep.subr.bf16.mxu0 0
        %10068 = vmatpush1.bf16.msra.mxu0 %v7695
        %10069 = vmatprep.subr.bf16.mxu0 0
        %10070 = vmatpush1.bf16.msra.mxu0 %v7694
        %10071 = vmatprep.subr.bf16.mxu0 0
        %10072 = vmatpush1.bf16.msra.mxu0 %v7693
        %10073 = vmatprep.subr.bf16.mxu0 0
        %10074 = vmatpush1.bf16.msra.mxu0 %v7692
        %10075 = vmatprep.subr.bf16.mxu0 0
        %10076 = vmatpush1.bf16.msra.mxu0 %v7691
        %10077 = vmatprep.subr.bf16.mxu0 0
        %10078 = vmatpush1.bf16.msra.mxu0 %v7690
        %10079 = vmatprep.subr.bf16.mxu0 0
        %10080 = vmatpush1.bf16.msra.mxu0 %v7689
        %10081 = vmatprep.subr.bf16.mxu0 0
        %10082 = vmatpush2.bf16.msra.mxu0 %v7704
        %10083 = vmatprep.subr.bf16.mxu0 0
        %10084 = vmatpush2.bf16.msra.mxu0 %v7703
        %10085 = vmatprep.subr.bf16.mxu0 0
        %10086 = vmatpush2.bf16.msra.mxu0 %v7702
        %10087 = vmatprep.subr.bf16.mxu0 0
        %10088 = vmatpush2.bf16.msra.mxu0 %v7701
        %10089 = vmatprep.subr.bf16.mxu0 0
        %10090 = vmatpush2.bf16.msra.mxu0 %v7700
        %10091 = vmatprep.subr.bf16.mxu0 0
        %10092 = vmatpush2.bf16.msra.mxu0 %v7699
        %10093 = vmatprep.subr.bf16.mxu0 0
        %10094 = vmatpush2.bf16.msra.mxu0 %v7698
        %10095 = vmatprep.subr.bf16.mxu0 0
        %10096 = vmatpush2.bf16.msra.mxu0 %v7697
        %10097 = vmatprep.mubr.bf16.mxu0 %v2495
        %10098 = vmatmul.mubr.bf16.gmra.mxu0 %v2493
        %v10099 = vpop.f32.mrf.mxu0
        %v10100 = vadd.f32 %v10060, %v10099
        %v10101 = vpop.f32.mrf.mxu0
        %v10102 = vpop.f32.mrf.mxu0
        %v10103 = vpop.f32.mrf.mxu0
        %10104 = vdwg.mxu0
        %10105 = vmatprep.subr.bf16.mxu0 0
        %10106 = vmatpush1.bf16.msra.mxu0 %v7712
        %10107 = vmatprep.subr.bf16.mxu0 0
        %10108 = vmatpush1.bf16.msra.mxu0 %v7711
        %10109 = vmatprep.subr.bf16.mxu0 0
        %10110 = vmatpush1.bf16.msra.mxu0 %v7710
        %10111 = vmatprep.subr.bf16.mxu0 0
        %10112 = vmatpush1.bf16.msra.mxu0 %v7709
        %10113 = vmatprep.subr.bf16.mxu0 0
        %10114 = vmatpush1.bf16.msra.mxu0 %v7708
        %10115 = vmatprep.subr.bf16.mxu0 0
        %10116 = vmatpush1.bf16.msra.mxu0 %v7707
        %10117 = vmatprep.subr.bf16.mxu0 0
        %10118 = vmatpush1.bf16.msra.mxu0 %v7706
        %10119 = vmatprep.subr.bf16.mxu0 0
        %10120 = vmatpush1.bf16.msra.mxu0 %v7705
        %10121 = vmatprep.subr.bf16.mxu0 0
        %10122 = vmatpush2.bf16.msra.mxu0 %v7720
        %10123 = vmatprep.subr.bf16.mxu0 0
        %10124 = vmatpush2.bf16.msra.mxu0 %v7719
        %10125 = vmatprep.subr.bf16.mxu0 0
        %10126 = vmatpush2.bf16.msra.mxu0 %v7718
        %10127 = vmatprep.subr.bf16.mxu0 0
        %10128 = vmatpush2.bf16.msra.mxu0 %v7717
        %10129 = vmatprep.subr.bf16.mxu0 0
        %10130 = vmatpush2.bf16.msra.mxu0 %v7716
        %10131 = vmatprep.subr.bf16.mxu0 0
        %10132 = vmatpush2.bf16.msra.mxu0 %v7715
        %10133 = vmatprep.subr.bf16.mxu0 0
        %10134 = vmatpush2.bf16.msra.mxu0 %v7714
        %10135 = vmatprep.subr.bf16.mxu0 0
        %10136 = vmatpush2.bf16.msra.mxu0 %v7713
        %10137 = vmatprep.mubr.bf16.mxu0 %v2533
        %10138 = vmatmul.mubr.bf16.gmra.mxu0 %v2519
        %v10139 = vpop.f32.mrf.mxu0
        %v10140 = vadd.f32 %v10100, %v10139
        %v10141 = vpop.f32.mrf.mxu0
        %v10142 = vpop.f32.mrf.mxu0
        %v10143 = vpop.f32.mrf.mxu0
        %10144 = vdwg.mxu0
        %10145 = vmatprep.subr.bf16.mxu0 0
        %10146 = vmatpush1.bf16.msra.mxu0 %v7728
        %10147 = vmatprep.subr.bf16.mxu0 0
        %10148 = vmatpush1.bf16.msra.mxu0 %v7727
        %10149 = vmatprep.subr.bf16.mxu0 0
        %10150 = vmatpush1.bf16.msra.mxu0 %v7726
        %10151 = vmatprep.subr.bf16.mxu0 0
        %10152 = vmatpush1.bf16.msra.mxu0 %v7725
        %10153 = vmatprep.subr.bf16.mxu0 0
        %10154 = vmatpush1.bf16.msra.mxu0 %v7724
        %10155 = vmatprep.subr.bf16.mxu0 0
        %10156 = vmatpush1.bf16.msra.mxu0 %v7723
        %10157 = vmatprep.subr.bf16.mxu0 0
        %10158 = vmatpush1.bf16.msra.mxu0 %v7722
        %10159 = vmatprep.subr.bf16.mxu0 0
        %10160 = vmatpush1.bf16.msra.mxu0 %v7721
        %10161 = vmatprep.subr.bf16.mxu0 0
        %10162 = vmatpush2.bf16.msra.mxu0 %v7736
        %10163 = vmatprep.subr.bf16.mxu0 0
        %10164 = vmatpush2.bf16.msra.mxu0 %v7735
        %10165 = vmatprep.subr.bf16.mxu0 0
        %10166 = vmatpush2.bf16.msra.mxu0 %v7734
        %10167 = vmatprep.subr.bf16.mxu0 0
        %10168 = vmatpush2.bf16.msra.mxu0 %v7733
        %10169 = vmatprep.subr.bf16.mxu0 0
        %10170 = vmatpush2.bf16.msra.mxu0 %v7732
        %10171 = vmatprep.subr.bf16.mxu0 0
        %10172 = vmatpush2.bf16.msra.mxu0 %v7731
        %10173 = vmatprep.subr.bf16.mxu0 0
        %10174 = vmatpush2.bf16.msra.mxu0 %v7730
        %10175 = vmatprep.subr.bf16.mxu0 0
        %10176 = vmatpush2.bf16.msra.mxu0 %v7729
        %10177 = vmatprep.mubr.bf16.mxu0 %v2543
        %10178 = vmatmul.mubr.bf16.gmra.mxu0 %v2541
        %v10179 = vpop.f32.mrf.mxu0
        %v10180 = vadd.f32 %v10140, %v10179
        %v10181 = vpop.f32.mrf.mxu0
        %v10182 = vpop.f32.mrf.mxu0
        %v10183 = vpop.f32.mrf.mxu0
        %10184 = vdwg.mxu0
        %10185 = vmatprep.subr.bf16.mxu0 0
        %10186 = vmatpush1.bf16.msra.mxu0 %v7744
        %10187 = vmatprep.subr.bf16.mxu0 0
        %10188 = vmatpush1.bf16.msra.mxu0 %v7743
        %10189 = vmatprep.subr.bf16.mxu0 0
        %10190 = vmatpush1.bf16.msra.mxu0 %v7742
        %10191 = vmatprep.subr.bf16.mxu0 0
        %10192 = vmatpush1.bf16.msra.mxu0 %v7741
        %10193 = vmatprep.subr.bf16.mxu0 0
        %10194 = vmatpush1.bf16.msra.mxu0 %v7740
        %10195 = vmatprep.subr.bf16.mxu0 0
        %10196 = vmatpush1.bf16.msra.mxu0 %v7739
        %10197 = vmatprep.subr.bf16.mxu0 0
        %10198 = vmatpush1.bf16.msra.mxu0 %v7738
        %10199 = vmatprep.subr.bf16.mxu0 0
        %10200 = vmatpush1.bf16.msra.mxu0 %v7737
        %10201 = vmatprep.subr.bf16.mxu0 0
        %10202 = vmatpush2.bf16.msra.mxu0 %v7752
        %10203 = vmatprep.subr.bf16.mxu0 0
        %10204 = vmatpush2.bf16.msra.mxu0 %v7751
        %10205 = vmatprep.subr.bf16.mxu0 0
        %10206 = vmatpush2.bf16.msra.mxu0 %v7750
        %10207 = vmatprep.subr.bf16.mxu0 0
        %10208 = vmatpush2.bf16.msra.mxu0 %v7749
        %10209 = vmatprep.subr.bf16.mxu0 0
        %10210 = vmatpush2.bf16.msra.mxu0 %v7748
        %10211 = vmatprep.subr.bf16.mxu0 0
        %10212 = vmatpush2.bf16.msra.mxu0 %v7747
        %10213 = vmatprep.subr.bf16.mxu0 0
        %10214 = vmatpush2.bf16.msra.mxu0 %v7746
        %10215 = vmatprep.subr.bf16.mxu0 0
        %10216 = vmatpush2.bf16.msra.mxu0 %v7745
        %10217 = vmatprep.mubr.bf16.mxu0 %v2540
        %10218 = vmatmul.mubr.bf16.gmra.mxu0 %v2526
        %v10219 = vpop.f32.mrf.mxu0
        %v10220 = vadd.f32 %v10180, %v10219
        %v10221 = vpop.f32.mrf.mxu0
        %v10222 = vpop.f32.mrf.mxu0
        %v10223 = vpop.f32.mrf.mxu0
        %10224 = vdwg.mxu0
        %10225 = vmatprep.subr.bf16.mxu0 0
        %10226 = vmatpush1.bf16.msra.mxu0 %v7760
        %10227 = vmatprep.subr.bf16.mxu0 0
        %10228 = vmatpush1.bf16.msra.mxu0 %v7759
        %10229 = vmatprep.subr.bf16.mxu0 0
        %10230 = vmatpush1.bf16.msra.mxu0 %v7758
        %10231 = vmatprep.subr.bf16.mxu0 0
        %10232 = vmatpush1.bf16.msra.mxu0 %v7757
        %10233 = vmatprep.subr.bf16.mxu0 0
        %10234 = vmatpush1.bf16.msra.mxu0 %v7756
        %10235 = vmatprep.subr.bf16.mxu0 0
        %10236 = vmatpush1.bf16.msra.mxu0 %v7755
        %10237 = vmatprep.subr.bf16.mxu0 0
        %10238 = vmatpush1.bf16.msra.mxu0 %v7754
        %10239 = vmatprep.subr.bf16.mxu0 0
        %10240 = vmatpush1.bf16.msra.mxu0 %v7753
        %10241 = vmatprep.subr.bf16.mxu0 0
        %10242 = vmatpush2.bf16.msra.mxu0 %v7768
        %10243 = vmatprep.subr.bf16.mxu0 0
        %10244 = vmatpush2.bf16.msra.mxu0 %v7767
        %10245 = vmatprep.subr.bf16.mxu0 0
        %10246 = vmatpush2.bf16.msra.mxu0 %v7766
        %10247 = vmatprep.subr.bf16.mxu0 0
        %10248 = vmatpush2.bf16.msra.mxu0 %v7765
        %10249 = vmatprep.subr.bf16.mxu0 0
        %10250 = vmatpush2.bf16.msra.mxu0 %v7764
        %10251 = vmatprep.subr.bf16.mxu0 0
        %10252 = vmatpush2.bf16.msra.mxu0 %v7763
        %10253 = vmatprep.subr.bf16.mxu0 0
        %10254 = vmatpush2.bf16.msra.mxu0 %v7762
        %10255 = vmatprep.subr.bf16.mxu0 0
        %10256 = vmatpush2.bf16.msra.mxu0 %v7761
        %10257 = vmatprep.mubr.bf16.mxu0 %v2544
        %10258 = vmatmul.mubr.bf16.gmra.mxu0 %v2542
        %v10259 = vpop.f32.mrf.mxu0
        %v10260 = vadd.f32 %v10220, %v10259
        %v10261 = vpop.f32.mrf.mxu0
        %v10262 = vpop.f32.mrf.mxu0
        %v10263 = vpop.f32.mrf.mxu0
        %10264 = vdwg.mxu0
        %10265 = vmatprep.subr.bf16.mxu0 0
        %10266 = vmatpush1.bf16.msra.mxu0 %v7776
        %10267 = vmatprep.subr.bf16.mxu0 0
        %10268 = vmatpush1.bf16.msra.mxu0 %v7775
        %10269 = vmatprep.subr.bf16.mxu0 0
        %10270 = vmatpush1.bf16.msra.mxu0 %v7774
        %10271 = vmatprep.subr.bf16.mxu0 0
        %10272 = vmatpush1.bf16.msra.mxu0 %v7773
        %10273 = vmatprep.subr.bf16.mxu0 0
        %10274 = vmatpush1.bf16.msra.mxu0 %v7772
        %10275 = vmatprep.subr.bf16.mxu0 0
        %10276 = vmatpush1.bf16.msra.mxu0 %v7771
        %10277 = vmatprep.subr.bf16.mxu0 0
        %10278 = vmatpush1.bf16.msra.mxu0 %v7770
        %10279 = vmatprep.subr.bf16.mxu0 0
        %10280 = vmatpush1.bf16.msra.mxu0 %v7769
        %10281 = vmatprep.subr.bf16.mxu0 0
        %10282 = vmatpush2.bf16.msra.mxu0 %v7784
        %10283 = vmatprep.subr.bf16.mxu0 0
        %10284 = vmatpush2.bf16.msra.mxu0 %v7783
        %10285 = vmatprep.subr.bf16.mxu0 0
        %10286 = vmatpush2.bf16.msra.mxu0 %v7782
        %10287 = vmatprep.subr.bf16.mxu0 0
        %10288 = vmatpush2.bf16.msra.mxu0 %v7781
        %10289 = vmatprep.subr.bf16.mxu0 0
        %10290 = vmatpush2.bf16.msra.mxu0 %v7780
        %10291 = vmatprep.subr.bf16.mxu0 0
        %10292 = vmatpush2.bf16.msra.mxu0 %v7779
        %10293 = vmatprep.subr.bf16.mxu0 0
        %10294 = vmatpush2.bf16.msra.mxu0 %v7778
        %10295 = vmatprep.subr.bf16.mxu0 0
        %10296 = vmatpush2.bf16.msra.mxu0 %v7777
        %10297 = vmatprep.mubr.bf16.mxu0 %v2582
        %10298 = vmatmul.mubr.bf16.gmra.mxu0 %v2568
        %v10299 = vpop.f32.mrf.mxu0
        %v10300 = vadd.f32 %v10260, %v10299
        %v10301 = vpop.f32.mrf.mxu0
        %v10302 = vpop.f32.mrf.mxu0
        %v10303 = vpop.f32.mrf.mxu0
        %10304 = vdwg.mxu0
        %10305 = vmatprep.subr.bf16.mxu0 0
        %10306 = vmatpush1.bf16.msra.mxu0 %v7792
        %10307 = vmatprep.subr.bf16.mxu0 0
        %10308 = vmatpush1.bf16.msra.mxu0 %v7791
        %10309 = vmatprep.subr.bf16.mxu0 0
        %10310 = vmatpush1.bf16.msra.mxu0 %v7790
        %10311 = vmatprep.subr.bf16.mxu0 0
        %10312 = vmatpush1.bf16.msra.mxu0 %v7789
        %10313 = vmatprep.subr.bf16.mxu0 0
        %10314 = vmatpush1.bf16.msra.mxu0 %v7788
        %10315 = vmatprep.subr.bf16.mxu0 0
        %10316 = vmatpush1.bf16.msra.mxu0 %v7787
        %10317 = vmatprep.subr.bf16.mxu0 0
        %10318 = vmatpush1.bf16.msra.mxu0 %v7786
        %10319 = vmatprep.subr.bf16.mxu0 0
        %10320 = vmatpush1.bf16.msra.mxu0 %v7785
        %10321 = vmatprep.subr.bf16.mxu0 0
        %10322 = vmatpush2.bf16.msra.mxu0 %v7800
        %10323 = vmatprep.subr.bf16.mxu0 0
        %10324 = vmatpush2.bf16.msra.mxu0 %v7799
        %10325 = vmatprep.subr.bf16.mxu0 0
        %10326 = vmatpush2.bf16.msra.mxu0 %v7798
        %10327 = vmatprep.subr.bf16.mxu0 0
        %10328 = vmatpush2.bf16.msra.mxu0 %v7797
        %10329 = vmatprep.subr.bf16.mxu0 0
        %10330 = vmatpush2.bf16.msra.mxu0 %v7796
        %10331 = vmatprep.subr.bf16.mxu0 0
        %10332 = vmatpush2.bf16.msra.mxu0 %v7795
        %10333 = vmatprep.subr.bf16.mxu0 0
        %10334 = vmatpush2.bf16.msra.mxu0 %v7794
        %10335 = vmatprep.subr.bf16.mxu0 0
        %10336 = vmatpush2.bf16.msra.mxu0 %v7793
        %10337 = vmatprep.mubr.bf16.mxu0 %v2592
        %10338 = vmatmul.mubr.bf16.gmra.mxu0 %v2590
        %v10339 = vpop.f32.mrf.mxu0
        %v10340 = vadd.f32 %v10300, %v10339
        %v10341 = vpop.f32.mrf.mxu0
        %v10342 = vpop.f32.mrf.mxu0
        %v10343 = vpop.f32.mrf.mxu0
        %10344 = vdwg.mxu0
        %10345 = vmatprep.subr.bf16.mxu0 0
        %10346 = vmatpush1.bf16.msra.mxu0 %v7808
        %10347 = vmatprep.subr.bf16.mxu0 0
        %10348 = vmatpush1.bf16.msra.mxu0 %v7807
        %10349 = vmatprep.subr.bf16.mxu0 0
        %10350 = vmatpush1.bf16.msra.mxu0 %v7806
        %10351 = vmatprep.subr.bf16.mxu0 0
        %10352 = vmatpush1.bf16.msra.mxu0 %v7805
        %10353 = vmatprep.subr.bf16.mxu0 0
        %10354 = vmatpush1.bf16.msra.mxu0 %v7804
        %10355 = vmatprep.subr.bf16.mxu0 0
        %10356 = vmatpush1.bf16.msra.mxu0 %v7803
        %10357 = vmatprep.subr.bf16.mxu0 0
        %10358 = vmatpush1.bf16.msra.mxu0 %v7802
        %10359 = vmatprep.subr.bf16.mxu0 0
        %10360 = vmatpush1.bf16.msra.mxu0 %v7801
        %10361 = vmatprep.subr.bf16.mxu0 0
        %10362 = vmatpush2.bf16.msra.mxu0 %v7816
        %10363 = vmatprep.subr.bf16.mxu0 0
        %10364 = vmatpush2.bf16.msra.mxu0 %v7815
        %10365 = vmatprep.subr.bf16.mxu0 0
        %10366 = vmatpush2.bf16.msra.mxu0 %v7814
        %10367 = vmatprep.subr.bf16.mxu0 0
        %10368 = vmatpush2.bf16.msra.mxu0 %v7813
        %10369 = vmatprep.subr.bf16.mxu0 0
        %10370 = vmatpush2.bf16.msra.mxu0 %v7812
        %10371 = vmatprep.subr.bf16.mxu0 0
        %10372 = vmatpush2.bf16.msra.mxu0 %v7811
        %10373 = vmatprep.subr.bf16.mxu0 0
        %10374 = vmatpush2.bf16.msra.mxu0 %v7810
        %10375 = vmatprep.subr.bf16.mxu0 0
        %10376 = vmatpush2.bf16.msra.mxu0 %v7809
        %10377 = vmatprep.mubr.bf16.mxu0 %v2589
        %10378 = vmatmul.mubr.bf16.gmra.mxu0 %v2575
        %v10379 = vpop.f32.mrf.mxu0
        %v10380 = vadd.f32 %v10340, %v10379
        %v10381 = vpop.f32.mrf.mxu0
        %v10382 = vpop.f32.mrf.mxu0
        %v10383 = vpop.f32.mrf.mxu0
        %10384 = vdwg.mxu0
        %10385 = vmatprep.subr.bf16.mxu0 0
        %10386 = vmatpush1.bf16.msra.mxu0 %v7824
        %10387 = vmatprep.subr.bf16.mxu0 0
        %10388 = vmatpush1.bf16.msra.mxu0 %v7823
        %10389 = vmatprep.subr.bf16.mxu0 0
        %10390 = vmatpush1.bf16.msra.mxu0 %v7822
        %10391 = vmatprep.subr.bf16.mxu0 0
        %10392 = vmatpush1.bf16.msra.mxu0 %v7821
        %10393 = vmatprep.subr.bf16.mxu0 0
        %10394 = vmatpush1.bf16.msra.mxu0 %v7820
        %10395 = vmatprep.subr.bf16.mxu0 0
        %10396 = vmatpush1.bf16.msra.mxu0 %v7819
        %10397 = vmatprep.subr.bf16.mxu0 0
        %10398 = vmatpush1.bf16.msra.mxu0 %v7818
        %10399 = vmatprep.subr.bf16.mxu0 0
        %10400 = vmatpush1.bf16.msra.mxu0 %v7817
        %10401 = vmatprep.subr.bf16.mxu0 0
        %10402 = vmatpush2.bf16.msra.mxu0 %v7832
        %10403 = vmatprep.subr.bf16.mxu0 0
        %10404 = vmatpush2.bf16.msra.mxu0 %v7831
        %10405 = vmatprep.subr.bf16.mxu0 0
        %10406 = vmatpush2.bf16.msra.mxu0 %v7830
        %10407 = vmatprep.subr.bf16.mxu0 0
        %10408 = vmatpush2.bf16.msra.mxu0 %v7829
        %10409 = vmatprep.subr.bf16.mxu0 0
        %10410 = vmatpush2.bf16.msra.mxu0 %v7828
        %10411 = vmatprep.subr.bf16.mxu0 0
        %10412 = vmatpush2.bf16.msra.mxu0 %v7827
        %10413 = vmatprep.subr.bf16.mxu0 0
        %10414 = vmatpush2.bf16.msra.mxu0 %v7826
        %10415 = vmatprep.subr.bf16.mxu0 0
        %10416 = vmatpush2.bf16.msra.mxu0 %v7825
        %10417 = vmatprep.mubr.bf16.mxu0 %v2593
        %10418 = vmatmul.mubr.bf16.gmra.mxu0 %v2591
        %v10419 = vpop.f32.mrf.mxu0
        %v10420 = vadd.f32 %v10380, %v10419
        %v10421 = vpop.f32.mrf.mxu0
        %v10422 = vpop.f32.mrf.mxu0
        %v10423 = vpop.f32.mrf.mxu0
        %10424 = vdwg.mxu0
        %10425 = vmatprep.subr.bf16.mxu0 0
        %10426 = vmatpush1.bf16.msra.mxu0 %v7840
        %10427 = vmatprep.subr.bf16.mxu0 0
        %10428 = vmatpush1.bf16.msra.mxu0 %v7839
        %10429 = vmatprep.subr.bf16.mxu0 0
        %10430 = vmatpush1.bf16.msra.mxu0 %v7838
        %10431 = vmatprep.subr.bf16.mxu0 0
        %10432 = vmatpush1.bf16.msra.mxu0 %v7837
        %10433 = vmatprep.subr.bf16.mxu0 0
        %10434 = vmatpush1.bf16.msra.mxu0 %v7836
        %10435 = vmatprep.subr.bf16.mxu0 0
        %10436 = vmatpush1.bf16.msra.mxu0 %v7835
        %10437 = vmatprep.subr.bf16.mxu0 0
        %10438 = vmatpush1.bf16.msra.mxu0 %v7834
        %10439 = vmatprep.subr.bf16.mxu0 0
        %10440 = vmatpush1.bf16.msra.mxu0 %v7833
        %10441 = vmatprep.subr.bf16.mxu0 0
        %10442 = vmatpush2.bf16.msra.mxu0 %v7848
        %10443 = vmatprep.subr.bf16.mxu0 0
        %10444 = vmatpush2.bf16.msra.mxu0 %v7847
        %10445 = vmatprep.subr.bf16.mxu0 0
        %10446 = vmatpush2.bf16.msra.mxu0 %v7846
        %10447 = vmatprep.subr.bf16.mxu0 0
        %10448 = vmatpush2.bf16.msra.mxu0 %v7845
        %10449 = vmatprep.subr.bf16.mxu0 0
        %10450 = vmatpush2.bf16.msra.mxu0 %v7844
        %10451 = vmatprep.subr.bf16.mxu0 0
        %10452 = vmatpush2.bf16.msra.mxu0 %v7843
        %10453 = vmatprep.subr.bf16.mxu0 0
        %10454 = vmatpush2.bf16.msra.mxu0 %v7842
        %10455 = vmatprep.subr.bf16.mxu0 0
        %10456 = vmatpush2.bf16.msra.mxu0 %v7841
        %10457 = vmatprep.mubr.bf16.mxu0 %v2631
        %10458 = vmatmul.mubr.bf16.gmra.mxu0 %v2617
        %v10459 = vpop.f32.mrf.mxu0
        %v10460 = vadd.f32 %v10420, %v10459
        %v10461 = vpop.f32.mrf.mxu0
        %v10462 = vpop.f32.mrf.mxu0
        %v10463 = vpop.f32.mrf.mxu0
        %10464 = vdwg.mxu0
        %10465 = vmatprep.subr.bf16.mxu0 0
        %10466 = vmatpush1.bf16.msra.mxu0 %v7856
        %10467 = vmatprep.subr.bf16.mxu0 0
        %10468 = vmatpush1.bf16.msra.mxu0 %v7855
        %10469 = vmatprep.subr.bf16.mxu0 0
        %10470 = vmatpush1.bf16.msra.mxu0 %v7854
        %10471 = vmatprep.subr.bf16.mxu0 0
        %10472 = vmatpush1.bf16.msra.mxu0 %v7853
        %10473 = vmatprep.subr.bf16.mxu0 0
        %10474 = vmatpush1.bf16.msra.mxu0 %v7852
        %10475 = vmatprep.subr.bf16.mxu0 0
        %10476 = vmatpush1.bf16.msra.mxu0 %v7851
        %10477 = vmatprep.subr.bf16.mxu0 0
        %10478 = vmatpush1.bf16.msra.mxu0 %v7850
        %10479 = vmatprep.subr.bf16.mxu0 0
        %10480 = vmatpush1.bf16.msra.mxu0 %v7849
        %10481 = vmatprep.subr.bf16.mxu0 0
        %10482 = vmatpush2.bf16.msra.mxu0 %v7864
        %10483 = vmatprep.subr.bf16.mxu0 0
        %10484 = vmatpush2.bf16.msra.mxu0 %v7863
        %10485 = vmatprep.subr.bf16.mxu0 0
        %10486 = vmatpush2.bf16.msra.mxu0 %v7862
        %10487 = vmatprep.subr.bf16.mxu0 0
        %10488 = vmatpush2.bf16.msra.mxu0 %v7861
        %10489 = vmatprep.subr.bf16.mxu0 0
        %10490 = vmatpush2.bf16.msra.mxu0 %v7860
        %10491 = vmatprep.subr.bf16.mxu0 0
        %10492 = vmatpush2.bf16.msra.mxu0 %v7859
        %10493 = vmatprep.subr.bf16.mxu0 0
        %10494 = vmatpush2.bf16.msra.mxu0 %v7858
        %10495 = vmatprep.subr.bf16.mxu0 0
        %10496 = vmatpush2.bf16.msra.mxu0 %v7857
        %10497 = vmatprep.mubr.bf16.mxu0 %v2641
        %10498 = vmatmul.mubr.bf16.gmra.mxu0 %v2639
        %v10499 = vpop.f32.mrf.mxu0
        %v10500 = vadd.f32 %v10460, %v10499
        %v10501 = vpop.f32.mrf.mxu0
        %v10502 = vpop.f32.mrf.mxu0
        %v10503 = vpop.f32.mrf.mxu0
        %10504 = vdwg.mxu0
        %10505 = vmatprep.subr.bf16.mxu0 0
        %10506 = vmatpush1.bf16.msra.mxu0 %v7872
        %10507 = vmatprep.subr.bf16.mxu0 0
        %10508 = vmatpush1.bf16.msra.mxu0 %v7871
        %10509 = vmatprep.subr.bf16.mxu0 0
        %10510 = vmatpush1.bf16.msra.mxu0 %v7870
        %10511 = vmatprep.subr.bf16.mxu0 0
        %10512 = vmatpush1.bf16.msra.mxu0 %v7869
        %10513 = vmatprep.subr.bf16.mxu0 0
        %10514 = vmatpush1.bf16.msra.mxu0 %v7868
        %10515 = vmatprep.subr.bf16.mxu0 0
        %10516 = vmatpush1.bf16.msra.mxu0 %v7867
        %10517 = vmatprep.subr.bf16.mxu0 0
        %10518 = vmatpush1.bf16.msra.mxu0 %v7866
        %10519 = vmatprep.subr.bf16.mxu0 0
        %10520 = vmatpush1.bf16.msra.mxu0 %v7865
        %10521 = vmatprep.subr.bf16.mxu0 0
        %10522 = vmatpush2.bf16.msra.mxu0 %v7880
        %10523 = vmatprep.subr.bf16.mxu0 0
        %10524 = vmatpush2.bf16.msra.mxu0 %v7879
        %10525 = vmatprep.subr.bf16.mxu0 0
        %10526 = vmatpush2.bf16.msra.mxu0 %v7878
        %10527 = vmatprep.subr.bf16.mxu0 0
        %10528 = vmatpush2.bf16.msra.mxu0 %v7877
        %10529 = vmatprep.subr.bf16.mxu0 0
        %10530 = vmatpush2.bf16.msra.mxu0 %v7876
        %10531 = vmatprep.subr.bf16.mxu0 0
        %10532 = vmatpush2.bf16.msra.mxu0 %v7875
        %10533 = vmatprep.subr.bf16.mxu0 0
        %10534 = vmatpush2.bf16.msra.mxu0 %v7874
        %10535 = vmatprep.subr.bf16.mxu0 0
        %10536 = vmatpush2.bf16.msra.mxu0 %v7873
        %10537 = vmatprep.mubr.bf16.mxu0 %v2638
        %10538 = vmatmul.mubr.bf16.gmra.mxu0 %v2624
        %v10539 = vpop.f32.mrf.mxu0
        %v10540 = vadd.f32 %v10500, %v10539
        %v10541 = vpop.f32.mrf.mxu0
        %v10542 = vpop.f32.mrf.mxu0
        %v10543 = vpop.f32.mrf.mxu0
        %10544 = vdwg.mxu0
        %10545 = vmatprep.subr.bf16.mxu0 0
        %10546 = vmatpush1.bf16.msra.mxu0 %v7888
        %10547 = vmatprep.subr.bf16.mxu0 0
        %10548 = vmatpush1.bf16.msra.mxu0 %v7887
        %10549 = vmatprep.subr.bf16.mxu0 0
        %10550 = vmatpush1.bf16.msra.mxu0 %v7886
        %10551 = vmatprep.subr.bf16.mxu0 0
        %10552 = vmatpush1.bf16.msra.mxu0 %v7885
        %10553 = vmatprep.subr.bf16.mxu0 0
        %10554 = vmatpush1.bf16.msra.mxu0 %v7884
        %10555 = vmatprep.subr.bf16.mxu0 0
        %10556 = vmatpush1.bf16.msra.mxu0 %v7883
        %10557 = vmatprep.subr.bf16.mxu0 0
        %10558 = vmatpush1.bf16.msra.mxu0 %v7882
        %10559 = vmatprep.subr.bf16.mxu0 0
        %10560 = vmatpush1.bf16.msra.mxu0 %v7881
        %10561 = vmatprep.subr.bf16.mxu0 0
        %10562 = vmatpush2.bf16.msra.mxu0 %v7896
        %10563 = vmatprep.subr.bf16.mxu0 0
        %10564 = vmatpush2.bf16.msra.mxu0 %v7895
        %10565 = vmatprep.subr.bf16.mxu0 0
        %10566 = vmatpush2.bf16.msra.mxu0 %v7894
        %10567 = vmatprep.subr.bf16.mxu0 0
        %10568 = vmatpush2.bf16.msra.mxu0 %v7893
        %10569 = vmatprep.subr.bf16.mxu0 0
        %10570 = vmatpush2.bf16.msra.mxu0 %v7892
        %10571 = vmatprep.subr.bf16.mxu0 0
        %10572 = vmatpush2.bf16.msra.mxu0 %v7891
        %10573 = vmatprep.subr.bf16.mxu0 0
        %10574 = vmatpush2.bf16.msra.mxu0 %v7890
        %10575 = vmatprep.subr.bf16.mxu0 0
        %10576 = vmatpush2.bf16.msra.mxu0 %v7889
        %10577 = vmatprep.mubr.bf16.mxu0 %v2642
        %10578 = vmatmul.mubr.bf16.gmra.mxu0 %v2640
        %v10579 = vpop.f32.mrf.mxu0
        %v10580 = vadd.f32 %v10540, %v10579
        %v10581 = vpop.f32.mrf.mxu0
        %v10582 = vpop.f32.mrf.mxu0
        %v10583 = vpop.f32.mrf.mxu0
        %10584 = vdwg.mxu0
        %10585 = vmatprep.subr.bf16.mxu0 0
        %10586 = vmatpush1.bf16.msra.mxu0 %v7904
        %10587 = vmatprep.subr.bf16.mxu0 0
        %10588 = vmatpush1.bf16.msra.mxu0 %v7903
        %10589 = vmatprep.subr.bf16.mxu0 0
        %10590 = vmatpush1.bf16.msra.mxu0 %v7902
        %10591 = vmatprep.subr.bf16.mxu0 0
        %10592 = vmatpush1.bf16.msra.mxu0 %v7901
        %10593 = vmatprep.subr.bf16.mxu0 0
        %10594 = vmatpush1.bf16.msra.mxu0 %v7900
        %10595 = vmatprep.subr.bf16.mxu0 0
        %10596 = vmatpush1.bf16.msra.mxu0 %v7899
        %10597 = vmatprep.subr.bf16.mxu0 0
        %10598 = vmatpush1.bf16.msra.mxu0 %v7898
        %10599 = vmatprep.subr.bf16.mxu0 0
        %10600 = vmatpush1.bf16.msra.mxu0 %v7897
        %10601 = vmatprep.subr.bf16.mxu0 0
        %10602 = vmatpush2.bf16.msra.mxu0 %v7912
        %10603 = vmatprep.subr.bf16.mxu0 0
        %10604 = vmatpush2.bf16.msra.mxu0 %v7911
        %10605 = vmatprep.subr.bf16.mxu0 0
        %10606 = vmatpush2.bf16.msra.mxu0 %v7910
        %10607 = vmatprep.subr.bf16.mxu0 0
        %10608 = vmatpush2.bf16.msra.mxu0 %v7909
        %10609 = vmatprep.subr.bf16.mxu0 0
        %10610 = vmatpush2.bf16.msra.mxu0 %v7908
        %10611 = vmatprep.subr.bf16.mxu0 0
        %10612 = vmatpush2.bf16.msra.mxu0 %v7907
        %10613 = vmatprep.subr.bf16.mxu0 0
        %10614 = vmatpush2.bf16.msra.mxu0 %v7906
        %10615 = vmatprep.subr.bf16.mxu0 0
        %10616 = vmatpush2.bf16.msra.mxu0 %v7905
        %10617 = vmatprep.mubr.bf16.mxu0 %v2680
        %10618 = vmatmul.mubr.bf16.gmra.mxu0 %v2666
        %v10619 = vpop.f32.mrf.mxu0
        %v10620 = vadd.f32 %v10580, %v10619
        %v10621 = vpop.f32.mrf.mxu0
        %v10622 = vpop.f32.mrf.mxu0
        %v10623 = vpop.f32.mrf.mxu0
        %10624 = vdwg.mxu0
        %10625 = vmatprep.subr.bf16.mxu0 0
        %10626 = vmatpush1.bf16.msra.mxu0 %v7920
        %10627 = vmatprep.subr.bf16.mxu0 0
        %10628 = vmatpush1.bf16.msra.mxu0 %v7919
        %10629 = vmatprep.subr.bf16.mxu0 0
        %10630 = vmatpush1.bf16.msra.mxu0 %v7918
        %10631 = vmatprep.subr.bf16.mxu0 0
        %10632 = vmatpush1.bf16.msra.mxu0 %v7917
        %10633 = vmatprep.subr.bf16.mxu0 0
        %10634 = vmatpush1.bf16.msra.mxu0 %v7916
        %10635 = vmatprep.subr.bf16.mxu0 0
        %10636 = vmatpush1.bf16.msra.mxu0 %v7915
        %10637 = vmatprep.subr.bf16.mxu0 0
        %10638 = vmatpush1.bf16.msra.mxu0 %v7914
        %10639 = vmatprep.subr.bf16.mxu0 0
        %10640 = vmatpush1.bf16.msra.mxu0 %v7913
        %10641 = vmatprep.subr.bf16.mxu0 0
        %10642 = vmatpush2.bf16.msra.mxu0 %v7928
        %10643 = vmatprep.subr.bf16.mxu0 0
        %10644 = vmatpush2.bf16.msra.mxu0 %v7927
        %10645 = vmatprep.subr.bf16.mxu0 0
        %10646 = vmatpush2.bf16.msra.mxu0 %v7926
        %10647 = vmatprep.subr.bf16.mxu0 0
        %10648 = vmatpush2.bf16.msra.mxu0 %v7925
        %10649 = vmatprep.subr.bf16.mxu0 0
        %10650 = vmatpush2.bf16.msra.mxu0 %v7924
        %10651 = vmatprep.subr.bf16.mxu0 0
        %10652 = vmatpush2.bf16.msra.mxu0 %v7923
        %10653 = vmatprep.subr.bf16.mxu0 0
        %10654 = vmatpush2.bf16.msra.mxu0 %v7922
        %10655 = vmatprep.subr.bf16.mxu0 0
        %10656 = vmatpush2.bf16.msra.mxu0 %v7921
        %10657 = vmatprep.mubr.bf16.mxu0 %v2690
        %10658 = vmatmul.mubr.bf16.gmra.mxu0 %v2688
        %v10659 = vpop.f32.mrf.mxu0
        %v10660 = vadd.f32 %v10620, %v10659
        %v10661 = vpop.f32.mrf.mxu0
        %v10662 = vpop.f32.mrf.mxu0
        %v10663 = vpop.f32.mrf.mxu0
        %10664 = vdwg.mxu0
        %10665 = vmatprep.subr.bf16.mxu0 0
        %10666 = vmatpush1.bf16.msra.mxu0 %v7936
        %10667 = vmatprep.subr.bf16.mxu0 0
        %10668 = vmatpush1.bf16.msra.mxu0 %v7935
        %10669 = vmatprep.subr.bf16.mxu0 0
        %10670 = vmatpush1.bf16.msra.mxu0 %v7934
        %10671 = vmatprep.subr.bf16.mxu0 0
        %10672 = vmatpush1.bf16.msra.mxu0 %v7933
        %10673 = vmatprep.subr.bf16.mxu0 0
        %10674 = vmatpush1.bf16.msra.mxu0 %v7932
        %10675 = vmatprep.subr.bf16.mxu0 0
        %10676 = vmatpush1.bf16.msra.mxu0 %v7931
        %10677 = vmatprep.subr.bf16.mxu0 0
        %10678 = vmatpush1.bf16.msra.mxu0 %v7930
        %10679 = vmatprep.subr.bf16.mxu0 0
        %10680 = vmatpush1.bf16.msra.mxu0 %v7929
        %10681 = vmatprep.subr.bf16.mxu0 0
        %10682 = vmatpush2.bf16.msra.mxu0 %v7944
        %10683 = vmatprep.subr.bf16.mxu0 0
        %10684 = vmatpush2.bf16.msra.mxu0 %v7943
        %10685 = vmatprep.subr.bf16.mxu0 0
        %10686 = vmatpush2.bf16.msra.mxu0 %v7942
        %10687 = vmatprep.subr.bf16.mxu0 0
        %10688 = vmatpush2.bf16.msra.mxu0 %v7941
        %10689 = vmatprep.subr.bf16.mxu0 0
        %10690 = vmatpush2.bf16.msra.mxu0 %v7940
        %10691 = vmatprep.subr.bf16.mxu0 0
        %10692 = vmatpush2.bf16.msra.mxu0 %v7939
        %10693 = vmatprep.subr.bf16.mxu0 0
        %10694 = vmatpush2.bf16.msra.mxu0 %v7938
        %10695 = vmatprep.subr.bf16.mxu0 0
        %10696 = vmatpush2.bf16.msra.mxu0 %v7937
        %10697 = vmatprep.mubr.bf16.mxu0 %v2687
        %10698 = vmatmul.mubr.bf16.gmra.mxu0 %v2673
        %v10699 = vpop.f32.mrf.mxu0
        %v10700 = vadd.f32 %v10660, %v10699
        %v10701 = vpop.f32.mrf.mxu0
        %v10702 = vpop.f32.mrf.mxu0
        %v10703 = vpop.f32.mrf.mxu0
        %10704 = vdwg.mxu0
        %10705 = vmatprep.subr.bf16.mxu0 0
        %10706 = vmatpush1.bf16.msra.mxu0 %v7952
        %10707 = vmatprep.subr.bf16.mxu0 0
        %10708 = vmatpush1.bf16.msra.mxu0 %v7951
        %10709 = vmatprep.subr.bf16.mxu0 0
        %10710 = vmatpush1.bf16.msra.mxu0 %v7950
        %10711 = vmatprep.subr.bf16.mxu0 0
        %10712 = vmatpush1.bf16.msra.mxu0 %v7949
        %10713 = vmatprep.subr.bf16.mxu0 0
        %10714 = vmatpush1.bf16.msra.mxu0 %v7948
        %10715 = vmatprep.subr.bf16.mxu0 0
        %10716 = vmatpush1.bf16.msra.mxu0 %v7947
        %10717 = vmatprep.subr.bf16.mxu0 0
        %10718 = vmatpush1.bf16.msra.mxu0 %v7946
        %10719 = vmatprep.subr.bf16.mxu0 0
        %10720 = vmatpush1.bf16.msra.mxu0 %v7945
        %10721 = vmatprep.subr.bf16.mxu0 0
        %10722 = vmatpush2.bf16.msra.mxu0 %v7960
        %10723 = vmatprep.subr.bf16.mxu0 0
        %10724 = vmatpush2.bf16.msra.mxu0 %v7959
        %10725 = vmatprep.subr.bf16.mxu0 0
        %10726 = vmatpush2.bf16.msra.mxu0 %v7958
        %10727 = vmatprep.subr.bf16.mxu0 0
        %10728 = vmatpush2.bf16.msra.mxu0 %v7957
        %10729 = vmatprep.subr.bf16.mxu0 0
        %10730 = vmatpush2.bf16.msra.mxu0 %v7956
        %10731 = vmatprep.subr.bf16.mxu0 0
        %10732 = vmatpush2.bf16.msra.mxu0 %v7955
        %10733 = vmatprep.subr.bf16.mxu0 0
        %10734 = vmatpush2.bf16.msra.mxu0 %v7954
        %10735 = vmatprep.subr.bf16.mxu0 0
        %10736 = vmatpush2.bf16.msra.mxu0 %v7953
        %10737 = vmatprep.mubr.bf16.mxu0 %v2691
        %10738 = vmatmul.mubr.bf16.gmra.mxu0 %v2689
        %v10739 = vpop.f32.mrf.mxu0
        %v10740 = vadd.f32 %v10700, %v10739
        %v10741 = vpop.f32.mrf.mxu0
        %v10742 = vpop.f32.mrf.mxu0
        %v10743 = vpop.f32.mrf.mxu0
        %10744 = vdwg.mxu0
        %10745 = vmatprep.subr.bf16.mxu0 0
        %10746 = vmatpush1.bf16.msra.mxu0 %v7968
        %10747 = vmatprep.subr.bf16.mxu0 0
        %10748 = vmatpush1.bf16.msra.mxu0 %v7967
        %10749 = vmatprep.subr.bf16.mxu0 0
        %10750 = vmatpush1.bf16.msra.mxu0 %v7966
        %10751 = vmatprep.subr.bf16.mxu0 0
        %10752 = vmatpush1.bf16.msra.mxu0 %v7965
        %10753 = vmatprep.subr.bf16.mxu0 0
        %10754 = vmatpush1.bf16.msra.mxu0 %v7964
        %10755 = vmatprep.subr.bf16.mxu0 0
        %10756 = vmatpush1.bf16.msra.mxu0 %v7963
        %10757 = vmatprep.subr.bf16.mxu0 0
        %10758 = vmatpush1.bf16.msra.mxu0 %v7962
        %10759 = vmatprep.subr.bf16.mxu0 0
        %10760 = vmatpush1.bf16.msra.mxu0 %v7961
        %10761 = vmatprep.subr.bf16.mxu0 0
        %10762 = vmatpush2.bf16.msra.mxu0 %v7976
        %10763 = vmatprep.subr.bf16.mxu0 0
        %10764 = vmatpush2.bf16.msra.mxu0 %v7975
        %10765 = vmatprep.subr.bf16.mxu0 0
        %10766 = vmatpush2.bf16.msra.mxu0 %v7974
        %10767 = vmatprep.subr.bf16.mxu0 0
        %10768 = vmatpush2.bf16.msra.mxu0 %v7973
        %10769 = vmatprep.subr.bf16.mxu0 0
        %10770 = vmatpush2.bf16.msra.mxu0 %v7972
        %10771 = vmatprep.subr.bf16.mxu0 0
        %10772 = vmatpush2.bf16.msra.mxu0 %v7971
        %10773 = vmatprep.subr.bf16.mxu0 0
        %10774 = vmatpush2.bf16.msra.mxu0 %v7970
        %10775 = vmatprep.subr.bf16.mxu0 0
        %10776 = vmatpush2.bf16.msra.mxu0 %v7969
        %10777 = vmatprep.mubr.bf16.mxu0 %v2729
        %10778 = vmatmul.mubr.bf16.gmra.mxu0 %v2715
        %v10779 = vpop.f32.mrf.mxu0
        %v10780 = vadd.f32 %v10740, %v10779
        %v10781 = vpop.f32.mrf.mxu0
        %v10782 = vpop.f32.mrf.mxu0
        %v10783 = vpop.f32.mrf.mxu0
        %10784 = vdwg.mxu0
        %10785 = vmatprep.subr.bf16.mxu0 0
        %10786 = vmatpush1.bf16.msra.mxu0 %v7984
        %10787 = vmatprep.subr.bf16.mxu0 0
        %10788 = vmatpush1.bf16.msra.mxu0 %v7983
        %10789 = vmatprep.subr.bf16.mxu0 0
        %10790 = vmatpush1.bf16.msra.mxu0 %v7982
        %10791 = vmatprep.subr.bf16.mxu0 0
        %10792 = vmatpush1.bf16.msra.mxu0 %v7981
        %10793 = vmatprep.subr.bf16.mxu0 0
        %10794 = vmatpush1.bf16.msra.mxu0 %v7980
        %10795 = vmatprep.subr.bf16.mxu0 0
        %10796 = vmatpush1.bf16.msra.mxu0 %v7979
        %10797 = vmatprep.subr.bf16.mxu0 0
        %10798 = vmatpush1.bf16.msra.mxu0 %v7978
        %10799 = vmatprep.subr.bf16.mxu0 0
        %10800 = vmatpush1.bf16.msra.mxu0 %v7977
        %10801 = vmatprep.subr.bf16.mxu0 0
        %10802 = vmatpush2.bf16.msra.mxu0 %v7992
        %10803 = vmatprep.subr.bf16.mxu0 0
        %10804 = vmatpush2.bf16.msra.mxu0 %v7991
        %10805 = vmatprep.subr.bf16.mxu0 0
        %10806 = vmatpush2.bf16.msra.mxu0 %v7990
        %10807 = vmatprep.subr.bf16.mxu0 0
        %10808 = vmatpush2.bf16.msra.mxu0 %v7989
        %10809 = vmatprep.subr.bf16.mxu0 0
        %10810 = vmatpush2.bf16.msra.mxu0 %v7988
        %10811 = vmatprep.subr.bf16.mxu0 0
        %10812 = vmatpush2.bf16.msra.mxu0 %v7987
        %10813 = vmatprep.subr.bf16.mxu0 0
        %10814 = vmatpush2.bf16.msra.mxu0 %v7986
        %10815 = vmatprep.subr.bf16.mxu0 0
        %10816 = vmatpush2.bf16.msra.mxu0 %v7985
        %10817 = vmatprep.mubr.bf16.mxu0 %v2739
        %10818 = vmatmul.mubr.bf16.gmra.mxu0 %v2737
        %v10819 = vpop.f32.mrf.mxu0
        %v10820 = vadd.f32 %v10780, %v10819
        %v10821 = vpop.f32.mrf.mxu0
        %v10822 = vpop.f32.mrf.mxu0
        %v10823 = vpop.f32.mrf.mxu0
        %10824 = vdwg.mxu0
        %10825 = vmatprep.subr.bf16.mxu0 0
        %10826 = vmatpush1.bf16.msra.mxu0 %v8000
        %10827 = vmatprep.subr.bf16.mxu0 0
        %10828 = vmatpush1.bf16.msra.mxu0 %v7999
        %10829 = vmatprep.subr.bf16.mxu0 0
        %10830 = vmatpush1.bf16.msra.mxu0 %v7998
        %10831 = vmatprep.subr.bf16.mxu0 0
        %10832 = vmatpush1.bf16.msra.mxu0 %v7997
        %10833 = vmatprep.subr.bf16.mxu0 0
        %10834 = vmatpush1.bf16.msra.mxu0 %v7996
        %10835 = vmatprep.subr.bf16.mxu0 0
        %10836 = vmatpush1.bf16.msra.mxu0 %v7995
        %10837 = vmatprep.subr.bf16.mxu0 0
        %10838 = vmatpush1.bf16.msra.mxu0 %v7994
        %10839 = vmatprep.subr.bf16.mxu0 0
        %10840 = vmatpush1.bf16.msra.mxu0 %v7993
        %10841 = vmatprep.subr.bf16.mxu0 0
        %10842 = vmatpush2.bf16.msra.mxu0 %v8008
        %10843 = vmatprep.subr.bf16.mxu0 0
        %10844 = vmatpush2.bf16.msra.mxu0 %v8007
        %10845 = vmatprep.subr.bf16.mxu0 0
        %10846 = vmatpush2.bf16.msra.mxu0 %v8006
        %10847 = vmatprep.subr.bf16.mxu0 0
        %10848 = vmatpush2.bf16.msra.mxu0 %v8005
        %10849 = vmatprep.subr.bf16.mxu0 0
        %10850 = vmatpush2.bf16.msra.mxu0 %v8004
        %10851 = vmatprep.subr.bf16.mxu0 0
        %10852 = vmatpush2.bf16.msra.mxu0 %v8003
        %10853 = vmatprep.subr.bf16.mxu0 0
        %10854 = vmatpush2.bf16.msra.mxu0 %v8002
        %10855 = vmatprep.subr.bf16.mxu0 0
        %10856 = vmatpush2.bf16.msra.mxu0 %v8001
        %10857 = vmatprep.mubr.bf16.mxu0 %v2736
        %10858 = vmatmul.mubr.bf16.gmra.mxu0 %v2722
        %v10859 = vpop.f32.mrf.mxu0
        %v10860 = vadd.f32 %v10820, %v10859
        %v10861 = vpop.f32.mrf.mxu0
        %v10862 = vpop.f32.mrf.mxu0
        %v10863 = vpop.f32.mrf.mxu0
        %10864 = vdwg.mxu0
        %10865 = vmatprep.subr.bf16.mxu0 0
        %10866 = vmatpush1.bf16.msra.mxu0 %v8016
        %10867 = vmatprep.subr.bf16.mxu0 0
        %10868 = vmatpush1.bf16.msra.mxu0 %v8015
        %10869 = vmatprep.subr.bf16.mxu0 0
        %10870 = vmatpush1.bf16.msra.mxu0 %v8014
        %10871 = vmatprep.subr.bf16.mxu0 0
        %10872 = vmatpush1.bf16.msra.mxu0 %v8013
        %10873 = vmatprep.subr.bf16.mxu0 0
        %10874 = vmatpush1.bf16.msra.mxu0 %v8012
        %10875 = vmatprep.subr.bf16.mxu0 0
        %10876 = vmatpush1.bf16.msra.mxu0 %v8011
        %10877 = vmatprep.subr.bf16.mxu0 0
        %10878 = vmatpush1.bf16.msra.mxu0 %v8010
        %10879 = vmatprep.subr.bf16.mxu0 0
        %10880 = vmatpush1.bf16.msra.mxu0 %v8009
        %10881 = vmatprep.subr.bf16.mxu0 0
        %10882 = vmatpush2.bf16.msra.mxu0 %v8024
        %10883 = vmatprep.subr.bf16.mxu0 0
        %10884 = vmatpush2.bf16.msra.mxu0 %v8023
        %10885 = vmatprep.subr.bf16.mxu0 0
        %10886 = vmatpush2.bf16.msra.mxu0 %v8022
        %10887 = vmatprep.subr.bf16.mxu0 0
        %10888 = vmatpush2.bf16.msra.mxu0 %v8021
        %10889 = vmatprep.subr.bf16.mxu0 0
        %10890 = vmatpush2.bf16.msra.mxu0 %v8020
        %10891 = vmatprep.subr.bf16.mxu0 0
        %10892 = vmatpush2.bf16.msra.mxu0 %v8019
        %10893 = vmatprep.subr.bf16.mxu0 0
        %10894 = vmatpush2.bf16.msra.mxu0 %v8018
        %10895 = vmatprep.subr.bf16.mxu0 0
        %10896 = vmatpush2.bf16.msra.mxu0 %v8017
        %10897 = vmatprep.mubr.bf16.mxu0 %v2740
        %10898 = vmatmul.mubr.bf16.gmra.mxu0 %v2738
        %v10899 = vpop.f32.mrf.mxu0
        %v10900 = vadd.f32 %v10860, %v10899
        %v10901 = vpop.f32.mrf.mxu0
        %v10902 = vpop.f32.mrf.mxu0
        %v10903 = vpop.f32.mrf.mxu0
        %10904 = vdwg.mxu0
        %10905 = vmatprep.subr.bf16.mxu0 0
        %10906 = vmatpush1.bf16.msra.mxu0 %v8032
        %10907 = vmatprep.subr.bf16.mxu0 0
        %10908 = vmatpush1.bf16.msra.mxu0 %v8031
        %10909 = vmatprep.subr.bf16.mxu0 0
        %10910 = vmatpush1.bf16.msra.mxu0 %v8030
        %10911 = vmatprep.subr.bf16.mxu0 0
        %10912 = vmatpush1.bf16.msra.mxu0 %v8029
        %10913 = vmatprep.subr.bf16.mxu0 0
        %10914 = vmatpush1.bf16.msra.mxu0 %v8028
        %10915 = vmatprep.subr.bf16.mxu0 0
        %10916 = vmatpush1.bf16.msra.mxu0 %v8027
        %10917 = vmatprep.subr.bf16.mxu0 0
        %10918 = vmatpush1.bf16.msra.mxu0 %v8026
        %10919 = vmatprep.subr.bf16.mxu0 0
        %10920 = vmatpush1.bf16.msra.mxu0 %v8025
        %10921 = vmatprep.subr.bf16.mxu0 0
        %10922 = vmatpush2.bf16.msra.mxu0 %v8040
        %10923 = vmatprep.subr.bf16.mxu0 0
        %10924 = vmatpush2.bf16.msra.mxu0 %v8039
        %10925 = vmatprep.subr.bf16.mxu0 0
        %10926 = vmatpush2.bf16.msra.mxu0 %v8038
        %10927 = vmatprep.subr.bf16.mxu0 0
        %10928 = vmatpush2.bf16.msra.mxu0 %v8037
        %10929 = vmatprep.subr.bf16.mxu0 0
        %10930 = vmatpush2.bf16.msra.mxu0 %v8036
        %10931 = vmatprep.subr.bf16.mxu0 0
        %10932 = vmatpush2.bf16.msra.mxu0 %v8035
        %10933 = vmatprep.subr.bf16.mxu0 0
        %10934 = vmatpush2.bf16.msra.mxu0 %v8034
        %10935 = vmatprep.subr.bf16.mxu0 0
        %10936 = vmatpush2.bf16.msra.mxu0 %v8033
        %10937 = vmatprep.mubr.bf16.mxu0 %v2778
        %10938 = vmatmul.mubr.bf16.gmra.mxu0 %v2764
        %v10939 = vpop.f32.mrf.mxu0
        %v10940 = vadd.f32 %v10900, %v10939
        %v10941 = vpop.f32.mrf.mxu0
        %v10942 = vpop.f32.mrf.mxu0
        %v10943 = vpop.f32.mrf.mxu0
        %10944 = vdwg.mxu0
        %10945 = vmatprep.subr.bf16.mxu0 0
        %10946 = vmatpush1.bf16.msra.mxu0 %v8048
        %10947 = vmatprep.subr.bf16.mxu0 0
        %10948 = vmatpush1.bf16.msra.mxu0 %v8047
        %10949 = vmatprep.subr.bf16.mxu0 0
        %10950 = vmatpush1.bf16.msra.mxu0 %v8046
        %10951 = vmatprep.subr.bf16.mxu0 0
        %10952 = vmatpush1.bf16.msra.mxu0 %v8045
        %10953 = vmatprep.subr.bf16.mxu0 0
        %10954 = vmatpush1.bf16.msra.mxu0 %v8044
        %10955 = vmatprep.subr.bf16.mxu0 0
        %10956 = vmatpush1.bf16.msra.mxu0 %v8043
        %10957 = vmatprep.subr.bf16.mxu0 0
        %10958 = vmatpush1.bf16.msra.mxu0 %v8042
        %10959 = vmatprep.subr.bf16.mxu0 0
        %10960 = vmatpush1.bf16.msra.mxu0 %v8041
        %10961 = vmatprep.subr.bf16.mxu0 0
        %10962 = vmatpush2.bf16.msra.mxu0 %v8056
        %10963 = vmatprep.subr.bf16.mxu0 0
        %10964 = vmatpush2.bf16.msra.mxu0 %v8055
        %10965 = vmatprep.subr.bf16.mxu0 0
        %10966 = vmatpush2.bf16.msra.mxu0 %v8054
        %10967 = vmatprep.subr.bf16.mxu0 0
        %10968 = vmatpush2.bf16.msra.mxu0 %v8053
        %10969 = vmatprep.subr.bf16.mxu0 0
        %10970 = vmatpush2.bf16.msra.mxu0 %v8052
        %10971 = vmatprep.subr.bf16.mxu0 0
        %10972 = vmatpush2.bf16.msra.mxu0 %v8051
        %10973 = vmatprep.subr.bf16.mxu0 0
        %10974 = vmatpush2.bf16.msra.mxu0 %v8050
        %10975 = vmatprep.subr.bf16.mxu0 0
        %10976 = vmatpush2.bf16.msra.mxu0 %v8049
        %10977 = vmatprep.mubr.bf16.mxu0 %v2788
        %10978 = vmatmul.mubr.bf16.gmra.mxu0 %v2786
        %v10979 = vpop.f32.mrf.mxu0
        %v10980 = vadd.f32 %v10940, %v10979
        %v10981 = vpop.f32.mrf.mxu0
        %v10982 = vpop.f32.mrf.mxu0
        %v10983 = vpop.f32.mrf.mxu0
        %10984 = vdwg.mxu0
        %10985 = vmatprep.subr.bf16.mxu0 0
        %10986 = vmatpush1.bf16.msra.mxu0 %v8064
        %10987 = vmatprep.subr.bf16.mxu0 0
        %10988 = vmatpush1.bf16.msra.mxu0 %v8063
        %10989 = vmatprep.subr.bf16.mxu0 0
        %10990 = vmatpush1.bf16.msra.mxu0 %v8062
        %10991 = vmatprep.subr.bf16.mxu0 0
        %10992 = vmatpush1.bf16.msra.mxu0 %v8061
        %10993 = vmatprep.subr.bf16.mxu0 0
        %10994 = vmatpush1.bf16.msra.mxu0 %v8060
        %10995 = vmatprep.subr.bf16.mxu0 0
        %10996 = vmatpush1.bf16.msra.mxu0 %v8059
        %10997 = vmatprep.subr.bf16.mxu0 0
        %10998 = vmatpush1.bf16.msra.mxu0 %v8058
        %10999 = vmatprep.subr.bf16.mxu0 0
        %11000 = vmatpush1.bf16.msra.mxu0 %v8057
        %11001 = vmatprep.subr.bf16.mxu0 0
        %11002 = vmatpush2.bf16.msra.mxu0 %v8072
        %11003 = vmatprep.subr.bf16.mxu0 0
        %11004 = vmatpush2.bf16.msra.mxu0 %v8071
        %11005 = vmatprep.subr.bf16.mxu0 0
        %11006 = vmatpush2.bf16.msra.mxu0 %v8070
        %11007 = vmatprep.subr.bf16.mxu0 0
        %11008 = vmatpush2.bf16.msra.mxu0 %v8069
        %11009 = vmatprep.subr.bf16.mxu0 0
        %11010 = vmatpush2.bf16.msra.mxu0 %v8068
        %11011 = vmatprep.subr.bf16.mxu0 0
        %11012 = vmatpush2.bf16.msra.mxu0 %v8067
        %11013 = vmatprep.subr.bf16.mxu0 0
        %11014 = vmatpush2.bf16.msra.mxu0 %v8066
        %11015 = vmatprep.subr.bf16.mxu0 0
        %11016 = vmatpush2.bf16.msra.mxu0 %v8065
        %11017 = vmatprep.mubr.bf16.mxu0 %v2785
        %11018 = vmatmul.mubr.bf16.gmra.mxu0 %v2771
        %v11019 = vpop.f32.mrf.mxu0
        %v11020 = vadd.f32 %v10980, %v11019
        %v11021 = vpop.f32.mrf.mxu0
        %v11022 = vpop.f32.mrf.mxu0
        %v11023 = vpop.f32.mrf.mxu0
        %11024 = vdwg.mxu0
        %11025 = vmatprep.subr.bf16.mxu0 0
        %11026 = vmatpush1.bf16.msra.mxu0 %v8080
        %11027 = vmatprep.subr.bf16.mxu0 0
        %11028 = vmatpush1.bf16.msra.mxu0 %v8079
        %11029 = vmatprep.subr.bf16.mxu0 0
        %11030 = vmatpush1.bf16.msra.mxu0 %v8078
        %11031 = vmatprep.subr.bf16.mxu0 0
        %11032 = vmatpush1.bf16.msra.mxu0 %v8077
        %11033 = vmatprep.subr.bf16.mxu0 0
        %11034 = vmatpush1.bf16.msra.mxu0 %v8076
        %11035 = vmatprep.subr.bf16.mxu0 0
        %11036 = vmatpush1.bf16.msra.mxu0 %v8075
        %11037 = vmatprep.subr.bf16.mxu0 0
        %11038 = vmatpush1.bf16.msra.mxu0 %v8074
        %11039 = vmatprep.subr.bf16.mxu0 0
        %11040 = vmatpush1.bf16.msra.mxu0 %v8073
        %11041 = vmatprep.subr.bf16.mxu0 0
        %11042 = vmatpush2.bf16.msra.mxu0 %v8088
        %11043 = vmatprep.subr.bf16.mxu0 0
        %11044 = vmatpush2.bf16.msra.mxu0 %v8087
        %11045 = vmatprep.subr.bf16.mxu0 0
        %11046 = vmatpush2.bf16.msra.mxu0 %v8086
        %11047 = vmatprep.subr.bf16.mxu0 0
        %11048 = vmatpush2.bf16.msra.mxu0 %v8085
        %11049 = vmatprep.subr.bf16.mxu0 0
        %11050 = vmatpush2.bf16.msra.mxu0 %v8084
        %11051 = vmatprep.subr.bf16.mxu0 0
        %11052 = vmatpush2.bf16.msra.mxu0 %v8083
        %11053 = vmatprep.subr.bf16.mxu0 0
        %11054 = vmatpush2.bf16.msra.mxu0 %v8082
        %11055 = vmatprep.subr.bf16.mxu0 0
        %11056 = vmatpush2.bf16.msra.mxu0 %v8081
        %11057 = vmatprep.mubr.bf16.mxu0 %v2789
        %11058 = vmatmul.mubr.bf16.gmra.mxu0 %v2787
        %v11059 = vpop.f32.mrf.mxu0
        %v11060 = vadd.f32 %v11020, %v11059
        %v11061 = vpop.f32.mrf.mxu0
        %v11062 = vpop.f32.mrf.mxu0
        %v11063 = vpop.f32.mrf.mxu0
        %11064 = vdwg.mxu0
        %11065 = vmatprep.subr.bf16.mxu0 0
        %11066 = vmatpush1.bf16.msra.mxu0 %v8096
        %11067 = vmatprep.subr.bf16.mxu0 0
        %11068 = vmatpush1.bf16.msra.mxu0 %v8095
        %11069 = vmatprep.subr.bf16.mxu0 0
        %11070 = vmatpush1.bf16.msra.mxu0 %v8094
        %11071 = vmatprep.subr.bf16.mxu0 0
        %11072 = vmatpush1.bf16.msra.mxu0 %v8093
        %11073 = vmatprep.subr.bf16.mxu0 0
        %11074 = vmatpush1.bf16.msra.mxu0 %v8092
        %11075 = vmatprep.subr.bf16.mxu0 0
        %11076 = vmatpush1.bf16.msra.mxu0 %v8091
        %11077 = vmatprep.subr.bf16.mxu0 0
        %11078 = vmatpush1.bf16.msra.mxu0 %v8090
        %11079 = vmatprep.subr.bf16.mxu0 0
        %11080 = vmatpush1.bf16.msra.mxu0 %v8089
        %11081 = vmatprep.subr.bf16.mxu0 0
        %11082 = vmatpush2.bf16.msra.mxu0 %v8104
        %11083 = vmatprep.subr.bf16.mxu0 0
        %11084 = vmatpush2.bf16.msra.mxu0 %v8103
        %11085 = vmatprep.subr.bf16.mxu0 0
        %11086 = vmatpush2.bf16.msra.mxu0 %v8102
        %11087 = vmatprep.subr.bf16.mxu0 0
        %11088 = vmatpush2.bf16.msra.mxu0 %v8101
        %11089 = vmatprep.subr.bf16.mxu0 0
        %11090 = vmatpush2.bf16.msra.mxu0 %v8100
        %11091 = vmatprep.subr.bf16.mxu0 0
        %11092 = vmatpush2.bf16.msra.mxu0 %v8099
        %11093 = vmatprep.subr.bf16.mxu0 0
        %11094 = vmatpush2.bf16.msra.mxu0 %v8098
        %11095 = vmatprep.subr.bf16.mxu0 0
        %11096 = vmatpush2.bf16.msra.mxu0 %v8097
        %11097 = vmatprep.mubr.bf16.mxu0 %v2827
        %11098 = vmatmul.mubr.bf16.gmra.mxu0 %v2813
        %v11099 = vpop.f32.mrf.mxu0
        %v11100 = vadd.f32 %v11060, %v11099
        %v11101 = vpop.f32.mrf.mxu0
        %v11102 = vpop.f32.mrf.mxu0
        %v11103 = vpop.f32.mrf.mxu0
        %11104 = vdwg.mxu0
        %11105 = vmatprep.subr.bf16.mxu0 0
        %11106 = vmatpush1.bf16.msra.mxu0 %v8112
        %11107 = vmatprep.subr.bf16.mxu0 0
        %11108 = vmatpush1.bf16.msra.mxu0 %v8111
        %11109 = vmatprep.subr.bf16.mxu0 0
        %11110 = vmatpush1.bf16.msra.mxu0 %v8110
        %11111 = vmatprep.subr.bf16.mxu0 0
        %11112 = vmatpush1.bf16.msra.mxu0 %v8109
        %11113 = vmatprep.subr.bf16.mxu0 0
        %11114 = vmatpush1.bf16.msra.mxu0 %v8108
        %11115 = vmatprep.subr.bf16.mxu0 0
        %11116 = vmatpush1.bf16.msra.mxu0 %v8107
        %11117 = vmatprep.subr.bf16.mxu0 0
        %11118 = vmatpush1.bf16.msra.mxu0 %v8106
        %11119 = vmatprep.subr.bf16.mxu0 0
        %11120 = vmatpush1.bf16.msra.mxu0 %v8105
        %11121 = vmatprep.subr.bf16.mxu0 0
        %11122 = vmatpush2.bf16.msra.mxu0 %v8120
        %11123 = vmatprep.subr.bf16.mxu0 0
        %11124 = vmatpush2.bf16.msra.mxu0 %v8119
        %11125 = vmatprep.subr.bf16.mxu0 0
        %11126 = vmatpush2.bf16.msra.mxu0 %v8118
        %11127 = vmatprep.subr.bf16.mxu0 0
        %11128 = vmatpush2.bf16.msra.mxu0 %v8117
        %11129 = vmatprep.subr.bf16.mxu0 0
        %11130 = vmatpush2.bf16.msra.mxu0 %v8116
        %11131 = vmatprep.subr.bf16.mxu0 0
        %11132 = vmatpush2.bf16.msra.mxu0 %v8115
        %11133 = vmatprep.subr.bf16.mxu0 0
        %11134 = vmatpush2.bf16.msra.mxu0 %v8114
        %11135 = vmatprep.subr.bf16.mxu0 0
        %11136 = vmatpush2.bf16.msra.mxu0 %v8113
        %11137 = vmatprep.mubr.bf16.mxu0 %v2837
        %11138 = vmatmul.mubr.bf16.gmra.mxu0 %v2835
        %v11139 = vpop.f32.mrf.mxu0
        %v11140 = vadd.f32 %v11100, %v11139
        %v11141 = vpop.f32.mrf.mxu0
        %v11142 = vpop.f32.mrf.mxu0
        %v11143 = vpop.f32.mrf.mxu0
        %11144 = vdwg.mxu0
        %11145 = vmatprep.subr.bf16.mxu0 0
        %11146 = vmatpush1.bf16.msra.mxu0 %v8128
        %11147 = vmatprep.subr.bf16.mxu0 0
        %11148 = vmatpush1.bf16.msra.mxu0 %v8127
        %11149 = vmatprep.subr.bf16.mxu0 0
        %11150 = vmatpush1.bf16.msra.mxu0 %v8126
        %11151 = vmatprep.subr.bf16.mxu0 0
        %11152 = vmatpush1.bf16.msra.mxu0 %v8125
        %11153 = vmatprep.subr.bf16.mxu0 0
        %11154 = vmatpush1.bf16.msra.mxu0 %v8124
        %11155 = vmatprep.subr.bf16.mxu0 0
        %11156 = vmatpush1.bf16.msra.mxu0 %v8123
        %11157 = vmatprep.subr.bf16.mxu0 0
        %11158 = vmatpush1.bf16.msra.mxu0 %v8122
        %11159 = vmatprep.subr.bf16.mxu0 0
        %11160 = vmatpush1.bf16.msra.mxu0 %v8121
        %11161 = vmatprep.subr.bf16.mxu0 0
        %11162 = vmatpush2.bf16.msra.mxu0 %v8136
        %11163 = vmatprep.subr.bf16.mxu0 0
        %11164 = vmatpush2.bf16.msra.mxu0 %v8135
        %11165 = vmatprep.subr.bf16.mxu0 0
        %11166 = vmatpush2.bf16.msra.mxu0 %v8134
        %11167 = vmatprep.subr.bf16.mxu0 0
        %11168 = vmatpush2.bf16.msra.mxu0 %v8133
        %11169 = vmatprep.subr.bf16.mxu0 0
        %11170 = vmatpush2.bf16.msra.mxu0 %v8132
        %11171 = vmatprep.subr.bf16.mxu0 0
        %11172 = vmatpush2.bf16.msra.mxu0 %v8131
        %11173 = vmatprep.subr.bf16.mxu0 0
        %11174 = vmatpush2.bf16.msra.mxu0 %v8130
        %11175 = vmatprep.subr.bf16.mxu0 0
        %11176 = vmatpush2.bf16.msra.mxu0 %v8129
        %11177 = vmatprep.mubr.bf16.mxu0 %v2834
        %11178 = vmatmul.mubr.bf16.gmra.mxu0 %v2820
        %v11179 = vpop.f32.mrf.mxu0
        %v11180 = vadd.f32 %v11140, %v11179
        %v11181 = vpop.f32.mrf.mxu0
        %v11182 = vpop.f32.mrf.mxu0
        %v11183 = vpop.f32.mrf.mxu0
        %11184 = vdwg.mxu0
        %11185 = vmatprep.subr.bf16.mxu0 0
        %11186 = vmatpush1.bf16.msra.mxu0 %v8144
        %11187 = vmatprep.subr.bf16.mxu0 0
        %11188 = vmatpush1.bf16.msra.mxu0 %v8143
        %11189 = vmatprep.subr.bf16.mxu0 0
        %11190 = vmatpush1.bf16.msra.mxu0 %v8142
        %11191 = vmatprep.subr.bf16.mxu0 0
        %11192 = vmatpush1.bf16.msra.mxu0 %v8141
        %11193 = vmatprep.subr.bf16.mxu0 0
        %11194 = vmatpush1.bf16.msra.mxu0 %v8140
        %11195 = vmatprep.subr.bf16.mxu0 0
        %11196 = vmatpush1.bf16.msra.mxu0 %v8139
        %11197 = vmatprep.subr.bf16.mxu0 0
        %11198 = vmatpush1.bf16.msra.mxu0 %v8138
        %11199 = vmatprep.subr.bf16.mxu0 0
        %11200 = vmatpush1.bf16.msra.mxu0 %v8137
        %11201 = vmatprep.subr.bf16.mxu0 0
        %11202 = vmatpush2.bf16.msra.mxu0 %v8152
        %11203 = vmatprep.subr.bf16.mxu0 0
        %11204 = vmatpush2.bf16.msra.mxu0 %v8151
        %11205 = vmatprep.subr.bf16.mxu0 0
        %11206 = vmatpush2.bf16.msra.mxu0 %v8150
        %11207 = vmatprep.subr.bf16.mxu0 0
        %11208 = vmatpush2.bf16.msra.mxu0 %v8149
        %11209 = vmatprep.subr.bf16.mxu0 0
        %11210 = vmatpush2.bf16.msra.mxu0 %v8148
        %11211 = vmatprep.subr.bf16.mxu0 0
        %11212 = vmatpush2.bf16.msra.mxu0 %v8147
        %11213 = vmatprep.subr.bf16.mxu0 0
        %11214 = vmatpush2.bf16.msra.mxu0 %v8146
        %11215 = vmatprep.subr.bf16.mxu0 0
        %11216 = vmatpush2.bf16.msra.mxu0 %v8145
        %11217 = vmatprep.mubr.bf16.mxu0 %v2838
        %11218 = vmatmul.mubr.bf16.gmra.mxu0 %v2836
        %v11219 = vpop.f32.mrf.mxu0
        %v11220 = vadd.f32 %v11180, %v11219
        %v11221 = vpop.f32.mrf.mxu0
        %v11222 = vpop.f32.mrf.mxu0
        %v11223 = vpop.f32.mrf.mxu0
        %11224 = vdwg.mxu0
        %11225 = vmatprep.subr.bf16.mxu0 0
        %11226 = vmatpush1.bf16.msra.mxu0 %v8160
        %11227 = vmatprep.subr.bf16.mxu0 0
        %11228 = vmatpush1.bf16.msra.mxu0 %v8159
        %11229 = vmatprep.subr.bf16.mxu0 0
        %11230 = vmatpush1.bf16.msra.mxu0 %v8158
        %11231 = vmatprep.subr.bf16.mxu0 0
        %11232 = vmatpush1.bf16.msra.mxu0 %v8157
        %11233 = vmatprep.subr.bf16.mxu0 0
        %11234 = vmatpush1.bf16.msra.mxu0 %v8156
        %11235 = vmatprep.subr.bf16.mxu0 0
        %11236 = vmatpush1.bf16.msra.mxu0 %v8155
        %11237 = vmatprep.subr.bf16.mxu0 0
        %11238 = vmatpush1.bf16.msra.mxu0 %v8154
        %11239 = vmatprep.subr.bf16.mxu0 0
        %11240 = vmatpush1.bf16.msra.mxu0 %v8153
        %11241 = vmatprep.subr.bf16.mxu0 0
        %11242 = vmatpush2.bf16.msra.mxu0 %v8168
        %11243 = vmatprep.subr.bf16.mxu0 0
        %11244 = vmatpush2.bf16.msra.mxu0 %v8167
        %11245 = vmatprep.subr.bf16.mxu0 0
        %11246 = vmatpush2.bf16.msra.mxu0 %v8166
        %11247 = vmatprep.subr.bf16.mxu0 0
        %11248 = vmatpush2.bf16.msra.mxu0 %v8165
        %11249 = vmatprep.subr.bf16.mxu0 0
        %11250 = vmatpush2.bf16.msra.mxu0 %v8164
        %11251 = vmatprep.subr.bf16.mxu0 0
        %11252 = vmatpush2.bf16.msra.mxu0 %v8163
        %11253 = vmatprep.subr.bf16.mxu0 0
        %11254 = vmatpush2.bf16.msra.mxu0 %v8162
        %11255 = vmatprep.subr.bf16.mxu0 0
        %11256 = vmatpush2.bf16.msra.mxu0 %v8161
        %11257 = vmatprep.mubr.bf16.mxu0 %v2876
        %11258 = vmatmul.mubr.bf16.gmra.mxu0 %v2862
        %v11259 = vpop.f32.mrf.mxu0
        %v11260 = vadd.f32 %v11220, %v11259
        %v11261 = vpop.f32.mrf.mxu0
        %v11262 = vpop.f32.mrf.mxu0
        %v11263 = vpop.f32.mrf.mxu0
        %11264 = vdwg.mxu0
        %11265 = vmatprep.subr.bf16.mxu0 0
        %11266 = vmatpush1.bf16.msra.mxu0 %v8176
        %11267 = vmatprep.subr.bf16.mxu0 0
        %11268 = vmatpush1.bf16.msra.mxu0 %v8175
        %11269 = vmatprep.subr.bf16.mxu0 0
        %11270 = vmatpush1.bf16.msra.mxu0 %v8174
        %11271 = vmatprep.subr.bf16.mxu0 0
        %11272 = vmatpush1.bf16.msra.mxu0 %v8173
        %11273 = vmatprep.subr.bf16.mxu0 0
        %11274 = vmatpush1.bf16.msra.mxu0 %v8172
        %11275 = vmatprep.subr.bf16.mxu0 0
        %11276 = vmatpush1.bf16.msra.mxu0 %v8171
        %11277 = vmatprep.subr.bf16.mxu0 0
        %11278 = vmatpush1.bf16.msra.mxu0 %v8170
        %11279 = vmatprep.subr.bf16.mxu0 0
        %11280 = vmatpush1.bf16.msra.mxu0 %v8169
        %11281 = vmatprep.subr.bf16.mxu0 0
        %11282 = vmatpush2.bf16.msra.mxu0 %v8184
        %11283 = vmatprep.subr.bf16.mxu0 0
        %11284 = vmatpush2.bf16.msra.mxu0 %v8183
        %11285 = vmatprep.subr.bf16.mxu0 0
        %11286 = vmatpush2.bf16.msra.mxu0 %v8182
        %11287 = vmatprep.subr.bf16.mxu0 0
        %11288 = vmatpush2.bf16.msra.mxu0 %v8181
        %11289 = vmatprep.subr.bf16.mxu0 0
        %11290 = vmatpush2.bf16.msra.mxu0 %v8180
        %11291 = vmatprep.subr.bf16.mxu0 0
        %11292 = vmatpush2.bf16.msra.mxu0 %v8179
        %11293 = vmatprep.subr.bf16.mxu0 0
        %11294 = vmatpush2.bf16.msra.mxu0 %v8178
        %11295 = vmatprep.subr.bf16.mxu0 0
        %11296 = vmatpush2.bf16.msra.mxu0 %v8177
        %11297 = vmatprep.mubr.bf16.mxu0 %v2886
        %11298 = vmatmul.mubr.bf16.gmra.mxu0 %v2884
        %v11299 = vpop.f32.mrf.mxu0
        %v11300 = vadd.f32 %v11260, %v11299
        %v11301 = vpop.f32.mrf.mxu0
        %v11302 = vpop.f32.mrf.mxu0
        %v11303 = vpop.f32.mrf.mxu0
        %11304 = vdwg.mxu0
        %11305 = vmatprep.subr.bf16.mxu0 0
        %11306 = vmatpush1.bf16.msra.mxu0 %v8192
        %11307 = vmatprep.subr.bf16.mxu0 0
        %11308 = vmatpush1.bf16.msra.mxu0 %v8191
        %11309 = vmatprep.subr.bf16.mxu0 0
        %11310 = vmatpush1.bf16.msra.mxu0 %v8190
        %11311 = vmatprep.subr.bf16.mxu0 0
        %11312 = vmatpush1.bf16.msra.mxu0 %v8189
        %11313 = vmatprep.subr.bf16.mxu0 0
        %11314 = vmatpush1.bf16.msra.mxu0 %v8188
        %11315 = vmatprep.subr.bf16.mxu0 0
        %11316 = vmatpush1.bf16.msra.mxu0 %v8187
        %11317 = vmatprep.subr.bf16.mxu0 0
        %11318 = vmatpush1.bf16.msra.mxu0 %v8186
        %11319 = vmatprep.subr.bf16.mxu0 0
        %11320 = vmatpush1.bf16.msra.mxu0 %v8185
        %11321 = vmatprep.subr.bf16.mxu0 0
        %11322 = vmatpush2.bf16.msra.mxu0 %v8200
        %11323 = vmatprep.subr.bf16.mxu0 0
        %11324 = vmatpush2.bf16.msra.mxu0 %v8199
        %11325 = vmatprep.subr.bf16.mxu0 0
        %11326 = vmatpush2.bf16.msra.mxu0 %v8198
        %11327 = vmatprep.subr.bf16.mxu0 0
        %11328 = vmatpush2.bf16.msra.mxu0 %v8197
        %11329 = vmatprep.subr.bf16.mxu0 0
        %11330 = vmatpush2.bf16.msra.mxu0 %v8196
        %11331 = vmatprep.subr.bf16.mxu0 0
        %11332 = vmatpush2.bf16.msra.mxu0 %v8195
        %11333 = vmatprep.subr.bf16.mxu0 0
        %11334 = vmatpush2.bf16.msra.mxu0 %v8194
        %11335 = vmatprep.subr.bf16.mxu0 0
        %11336 = vmatpush2.bf16.msra.mxu0 %v8193
        %11337 = vmatprep.mubr.bf16.mxu0 %v2883
        %11338 = vmatmul.mubr.bf16.gmra.mxu0 %v2869
        %v11339 = vpop.f32.mrf.mxu0
        %v11340 = vadd.f32 %v11300, %v11339
        %v11341 = vpop.f32.mrf.mxu0
        %v11342 = vpop.f32.mrf.mxu0
        %v11343 = vpop.f32.mrf.mxu0
        %11344 = vdwg.mxu0
        %11345 = vmatprep.subr.bf16.mxu0 0
        %11346 = vmatpush1.bf16.msra.mxu0 %v8208
        %11347 = vmatprep.subr.bf16.mxu0 0
        %11348 = vmatpush1.bf16.msra.mxu0 %v8207
        %11349 = vmatprep.subr.bf16.mxu0 0
        %11350 = vmatpush1.bf16.msra.mxu0 %v8206
        %11351 = vmatprep.subr.bf16.mxu0 0
        %11352 = vmatpush1.bf16.msra.mxu0 %v8205
        %11353 = vmatprep.subr.bf16.mxu0 0
        %11354 = vmatpush1.bf16.msra.mxu0 %v8204
        %11355 = vmatprep.subr.bf16.mxu0 0
        %11356 = vmatpush1.bf16.msra.mxu0 %v8203
        %11357 = vmatprep.subr.bf16.mxu0 0
        %11358 = vmatpush1.bf16.msra.mxu0 %v8202
        %11359 = vmatprep.subr.bf16.mxu0 0
        %11360 = vmatpush1.bf16.msra.mxu0 %v8201
        %11361 = vmatprep.subr.bf16.mxu0 0
        %11362 = vmatpush2.bf16.msra.mxu0 %v8216
        %11363 = vmatprep.subr.bf16.mxu0 0
        %11364 = vmatpush2.bf16.msra.mxu0 %v8215
        %11365 = vmatprep.subr.bf16.mxu0 0
        %11366 = vmatpush2.bf16.msra.mxu0 %v8214
        %11367 = vmatprep.subr.bf16.mxu0 0
        %11368 = vmatpush2.bf16.msra.mxu0 %v8213
        %11369 = vmatprep.subr.bf16.mxu0 0
        %11370 = vmatpush2.bf16.msra.mxu0 %v8212
        %11371 = vmatprep.subr.bf16.mxu0 0
        %11372 = vmatpush2.bf16.msra.mxu0 %v8211
        %11373 = vmatprep.subr.bf16.mxu0 0
        %11374 = vmatpush2.bf16.msra.mxu0 %v8210
        %11375 = vmatprep.subr.bf16.mxu0 0
        %11376 = vmatpush2.bf16.msra.mxu0 %v8209
        %11377 = vmatprep.mubr.bf16.mxu0 %v2887
        %11378 = vmatmul.mubr.bf16.gmra.mxu0 %v2885
        %v11379 = vpop.f32.mrf.mxu0
        %v11380 = vadd.f32 %v11340, %v11379
        %v11381 = vpop.f32.mrf.mxu0
        %v11382 = vpop.f32.mrf.mxu0
        %v11383 = vpop.f32.mrf.mxu0
        %11384 = vdwg.mxu0
        %11385 = vmatprep.subr.bf16.mxu0 0
        %11386 = vmatpush1.bf16.msra.mxu0 %v8224
        %11387 = vmatprep.subr.bf16.mxu0 0
        %11388 = vmatpush1.bf16.msra.mxu0 %v8223
        %11389 = vmatprep.subr.bf16.mxu0 0
        %11390 = vmatpush1.bf16.msra.mxu0 %v8222
        %11391 = vmatprep.subr.bf16.mxu0 0
        %11392 = vmatpush1.bf16.msra.mxu0 %v8221
        %11393 = vmatprep.subr.bf16.mxu0 0
        %11394 = vmatpush1.bf16.msra.mxu0 %v8220
        %11395 = vmatprep.subr.bf16.mxu0 0
        %11396 = vmatpush1.bf16.msra.mxu0 %v8219
        %11397 = vmatprep.subr.bf16.mxu0 0
        %11398 = vmatpush1.bf16.msra.mxu0 %v8218
        %11399 = vmatprep.subr.bf16.mxu0 0
        %11400 = vmatpush1.bf16.msra.mxu0 %v8217
        %11401 = vmatprep.subr.bf16.mxu0 0
        %11402 = vmatpush2.bf16.msra.mxu0 %v8232
        %11403 = vmatprep.subr.bf16.mxu0 0
        %11404 = vmatpush2.bf16.msra.mxu0 %v8231
        %11405 = vmatprep.subr.bf16.mxu0 0
        %11406 = vmatpush2.bf16.msra.mxu0 %v8230
        %11407 = vmatprep.subr.bf16.mxu0 0
        %11408 = vmatpush2.bf16.msra.mxu0 %v8229
        %11409 = vmatprep.subr.bf16.mxu0 0
        %11410 = vmatpush2.bf16.msra.mxu0 %v8228
        %11411 = vmatprep.subr.bf16.mxu0 0
        %11412 = vmatpush2.bf16.msra.mxu0 %v8227
        %11413 = vmatprep.subr.bf16.mxu0 0
        %11414 = vmatpush2.bf16.msra.mxu0 %v8226
        %11415 = vmatprep.subr.bf16.mxu0 0
        %11416 = vmatpush2.bf16.msra.mxu0 %v8225
        %11417 = vmatprep.mubr.bf16.mxu0 %v2925
        %11418 = vmatmul.mubr.bf16.gmra.mxu0 %v2911
        %v11419 = vpop.f32.mrf.mxu0
        %v11420 = vadd.f32 %v11380, %v11419
        %v11421 = vpop.f32.mrf.mxu0
        %v11422 = vpop.f32.mrf.mxu0
        %v11423 = vpop.f32.mrf.mxu0
        %11424 = vdwg.mxu0
        %11425 = vmatprep.subr.bf16.mxu0 0
        %11426 = vmatpush1.bf16.msra.mxu0 %v8240
        %11427 = vmatprep.subr.bf16.mxu0 0
        %11428 = vmatpush1.bf16.msra.mxu0 %v8239
        %11429 = vmatprep.subr.bf16.mxu0 0
        %11430 = vmatpush1.bf16.msra.mxu0 %v8238
        %11431 = vmatprep.subr.bf16.mxu0 0
        %11432 = vmatpush1.bf16.msra.mxu0 %v8237
        %11433 = vmatprep.subr.bf16.mxu0 0
        %11434 = vmatpush1.bf16.msra.mxu0 %v8236
        %11435 = vmatprep.subr.bf16.mxu0 0
        %11436 = vmatpush1.bf16.msra.mxu0 %v8235
        %11437 = vmatprep.subr.bf16.mxu0 0
        %11438 = vmatpush1.bf16.msra.mxu0 %v8234
        %11439 = vmatprep.subr.bf16.mxu0 0
        %11440 = vmatpush1.bf16.msra.mxu0 %v8233
        %11441 = vmatprep.subr.bf16.mxu0 0
        %11442 = vmatpush2.bf16.msra.mxu0 %v8248
        %11443 = vmatprep.subr.bf16.mxu0 0
        %11444 = vmatpush2.bf16.msra.mxu0 %v8247
        %11445 = vmatprep.subr.bf16.mxu0 0
        %11446 = vmatpush2.bf16.msra.mxu0 %v8246
        %11447 = vmatprep.subr.bf16.mxu0 0
        %11448 = vmatpush2.bf16.msra.mxu0 %v8245
        %11449 = vmatprep.subr.bf16.mxu0 0
        %11450 = vmatpush2.bf16.msra.mxu0 %v8244
        %11451 = vmatprep.subr.bf16.mxu0 0
        %11452 = vmatpush2.bf16.msra.mxu0 %v8243
        %11453 = vmatprep.subr.bf16.mxu0 0
        %11454 = vmatpush2.bf16.msra.mxu0 %v8242
        %11455 = vmatprep.subr.bf16.mxu0 0
        %11456 = vmatpush2.bf16.msra.mxu0 %v8241
        %11457 = vmatprep.mubr.bf16.mxu0 %v2935
        %11458 = vmatmul.mubr.bf16.gmra.mxu0 %v2933
        %v11459 = vpop.f32.mrf.mxu0
        %v11460 = vadd.f32 %v11420, %v11459
        %v11461 = vpop.f32.mrf.mxu0
        %v11462 = vpop.f32.mrf.mxu0
        %v11463 = vpop.f32.mrf.mxu0
        %11464 = vdwg.mxu0
        %11465 = vmatprep.subr.bf16.mxu0 0
        %11466 = vmatpush1.bf16.msra.mxu0 %v8256
        %11467 = vmatprep.subr.bf16.mxu0 0
        %11468 = vmatpush1.bf16.msra.mxu0 %v8255
        %11469 = vmatprep.subr.bf16.mxu0 0
        %11470 = vmatpush1.bf16.msra.mxu0 %v8254
        %11471 = vmatprep.subr.bf16.mxu0 0
        %11472 = vmatpush1.bf16.msra.mxu0 %v8253
        %11473 = vmatprep.subr.bf16.mxu0 0
        %11474 = vmatpush1.bf16.msra.mxu0 %v8252
        %11475 = vmatprep.subr.bf16.mxu0 0
        %11476 = vmatpush1.bf16.msra.mxu0 %v8251
        %11477 = vmatprep.subr.bf16.mxu0 0
        %11478 = vmatpush1.bf16.msra.mxu0 %v8250
        %11479 = vmatprep.subr.bf16.mxu0 0
        %11480 = vmatpush1.bf16.msra.mxu0 %v8249
        %11481 = vmatprep.subr.bf16.mxu0 0
        %11482 = vmatpush2.bf16.msra.mxu0 %v8264
        %11483 = vmatprep.subr.bf16.mxu0 0
        %11484 = vmatpush2.bf16.msra.mxu0 %v8263
        %11485 = vmatprep.subr.bf16.mxu0 0
        %11486 = vmatpush2.bf16.msra.mxu0 %v8262
        %11487 = vmatprep.subr.bf16.mxu0 0
        %11488 = vmatpush2.bf16.msra.mxu0 %v8261
        %11489 = vmatprep.subr.bf16.mxu0 0
        %11490 = vmatpush2.bf16.msra.mxu0 %v8260
        %11491 = vmatprep.subr.bf16.mxu0 0
        %11492 = vmatpush2.bf16.msra.mxu0 %v8259
        %11493 = vmatprep.subr.bf16.mxu0 0
        %11494 = vmatpush2.bf16.msra.mxu0 %v8258
        %11495 = vmatprep.subr.bf16.mxu0 0
        %11496 = vmatpush2.bf16.msra.mxu0 %v8257
        %11497 = vmatprep.mubr.bf16.mxu0 %v2932
        %11498 = vmatmul.mubr.bf16.gmra.mxu0 %v2918
        %v11499 = vpop.f32.mrf.mxu0
        %v11500 = vadd.f32 %v11460, %v11499
        %v11501 = vpop.f32.mrf.mxu0
        %v11502 = vpop.f32.mrf.mxu0
        %v11503 = vpop.f32.mrf.mxu0
        %11504 = vdwg.mxu0
        %11505 = vmatprep.subr.bf16.mxu0 0
        %11506 = vmatpush1.bf16.msra.mxu0 %v8272
        %11507 = vmatprep.subr.bf16.mxu0 0
        %11508 = vmatpush1.bf16.msra.mxu0 %v8271
        %11509 = vmatprep.subr.bf16.mxu0 0
        %11510 = vmatpush1.bf16.msra.mxu0 %v8270
        %11511 = vmatprep.subr.bf16.mxu0 0
        %11512 = vmatpush1.bf16.msra.mxu0 %v8269
        %11513 = vmatprep.subr.bf16.mxu0 0
        %11514 = vmatpush1.bf16.msra.mxu0 %v8268
        %11515 = vmatprep.subr.bf16.mxu0 0
        %11516 = vmatpush1.bf16.msra.mxu0 %v8267
        %11517 = vmatprep.subr.bf16.mxu0 0
        %11518 = vmatpush1.bf16.msra.mxu0 %v8266
        %11519 = vmatprep.subr.bf16.mxu0 0
        %11520 = vmatpush1.bf16.msra.mxu0 %v8265
        %11521 = vmatprep.subr.bf16.mxu0 0
        %11522 = vmatpush2.bf16.msra.mxu0 %v8280
        %11523 = vmatprep.subr.bf16.mxu0 0
        %11524 = vmatpush2.bf16.msra.mxu0 %v8279
        %11525 = vmatprep.subr.bf16.mxu0 0
        %11526 = vmatpush2.bf16.msra.mxu0 %v8278
        %11527 = vmatprep.subr.bf16.mxu0 0
        %11528 = vmatpush2.bf16.msra.mxu0 %v8277
        %11529 = vmatprep.subr.bf16.mxu0 0
        %11530 = vmatpush2.bf16.msra.mxu0 %v8276
        %11531 = vmatprep.subr.bf16.mxu0 0
        %11532 = vmatpush2.bf16.msra.mxu0 %v8275
        %11533 = vmatprep.subr.bf16.mxu0 0
        %11534 = vmatpush2.bf16.msra.mxu0 %v8274
        %11535 = vmatprep.subr.bf16.mxu0 0
        %11536 = vmatpush2.bf16.msra.mxu0 %v8273
        %11537 = vmatprep.mubr.bf16.mxu0 %v2936
        %11538 = vmatmul.mubr.bf16.gmra.mxu0 %v2934
        %v11539 = vpop.f32.mrf.mxu0
        %v11540 = vadd.f32 %v11500, %v11539
        %v11541 = vpop.f32.mrf.mxu0
        %v11542 = vpop.f32.mrf.mxu0
        %v11543 = vpop.f32.mrf.mxu0
        %11544 = vdwg.mxu0
        %11545 = vmatprep.subr.bf16.mxu0 0
        %11546 = vmatpush1.bf16.msra.mxu0 %v8288
        %11547 = vmatprep.subr.bf16.mxu0 0
        %11548 = vmatpush1.bf16.msra.mxu0 %v8287
        %11549 = vmatprep.subr.bf16.mxu0 0
        %11550 = vmatpush1.bf16.msra.mxu0 %v8286
        %11551 = vmatprep.subr.bf16.mxu0 0
        %11552 = vmatpush1.bf16.msra.mxu0 %v8285
        %11553 = vmatprep.subr.bf16.mxu0 0
        %11554 = vmatpush1.bf16.msra.mxu0 %v8284
        %11555 = vmatprep.subr.bf16.mxu0 0
        %11556 = vmatpush1.bf16.msra.mxu0 %v8283
        %11557 = vmatprep.subr.bf16.mxu0 0
        %11558 = vmatpush1.bf16.msra.mxu0 %v8282
        %11559 = vmatprep.subr.bf16.mxu0 0
        %11560 = vmatpush1.bf16.msra.mxu0 %v8281
        %11561 = vmatprep.subr.bf16.mxu0 0
        %11562 = vmatpush2.bf16.msra.mxu0 %v8296
        %11563 = vmatprep.subr.bf16.mxu0 0
        %11564 = vmatpush2.bf16.msra.mxu0 %v8295
        %11565 = vmatprep.subr.bf16.mxu0 0
        %11566 = vmatpush2.bf16.msra.mxu0 %v8294
        %11567 = vmatprep.subr.bf16.mxu0 0
        %11568 = vmatpush2.bf16.msra.mxu0 %v8293
        %11569 = vmatprep.subr.bf16.mxu0 0
        %11570 = vmatpush2.bf16.msra.mxu0 %v8292
        %11571 = vmatprep.subr.bf16.mxu0 0
        %11572 = vmatpush2.bf16.msra.mxu0 %v8291
        %11573 = vmatprep.subr.bf16.mxu0 0
        %11574 = vmatpush2.bf16.msra.mxu0 %v8290
        %11575 = vmatprep.subr.bf16.mxu0 0
        %11576 = vmatpush2.bf16.msra.mxu0 %v8289
        %11577 = vmatprep.mubr.bf16.mxu0 %v2974
        %11578 = vmatmul.mubr.bf16.gmra.mxu0 %v2960
        %v11579 = vpop.f32.mrf.mxu0
        %v11580 = vadd.f32 %v11540, %v11579
        %v11581 = vpop.f32.mrf.mxu0
        %v11582 = vpop.f32.mrf.mxu0
        %v11583 = vpop.f32.mrf.mxu0
        %11584 = vdwg.mxu0
        %11585 = vmatprep.subr.bf16.mxu0 0
        %11586 = vmatpush1.bf16.msra.mxu0 %v8304
        %11587 = vmatprep.subr.bf16.mxu0 0
        %11588 = vmatpush1.bf16.msra.mxu0 %v8303
        %11589 = vmatprep.subr.bf16.mxu0 0
        %11590 = vmatpush1.bf16.msra.mxu0 %v8302
        %11591 = vmatprep.subr.bf16.mxu0 0
        %11592 = vmatpush1.bf16.msra.mxu0 %v8301
        %11593 = vmatprep.subr.bf16.mxu0 0
        %11594 = vmatpush1.bf16.msra.mxu0 %v8300
        %11595 = vmatprep.subr.bf16.mxu0 0
        %11596 = vmatpush1.bf16.msra.mxu0 %v8299
        %11597 = vmatprep.subr.bf16.mxu0 0
        %11598 = vmatpush1.bf16.msra.mxu0 %v8298
        %11599 = vmatprep.subr.bf16.mxu0 0
        %11600 = vmatpush1.bf16.msra.mxu0 %v8297
        %11601 = vmatprep.subr.bf16.mxu0 0
        %11602 = vmatpush2.bf16.msra.mxu0 %v8312
        %11603 = vmatprep.subr.bf16.mxu0 0
        %11604 = vmatpush2.bf16.msra.mxu0 %v8311
        %11605 = vmatprep.subr.bf16.mxu0 0
        %11606 = vmatpush2.bf16.msra.mxu0 %v8310
        %11607 = vmatprep.subr.bf16.mxu0 0
        %11608 = vmatpush2.bf16.msra.mxu0 %v8309
        %11609 = vmatprep.subr.bf16.mxu0 0
        %11610 = vmatpush2.bf16.msra.mxu0 %v8308
        %11611 = vmatprep.subr.bf16.mxu0 0
        %11612 = vmatpush2.bf16.msra.mxu0 %v8307
        %11613 = vmatprep.subr.bf16.mxu0 0
        %11614 = vmatpush2.bf16.msra.mxu0 %v8306
        %11615 = vmatprep.subr.bf16.mxu0 0
        %11616 = vmatpush2.bf16.msra.mxu0 %v8305
        %11617 = vmatprep.mubr.bf16.mxu0 %v2984
        %11618 = vmatmul.mubr.bf16.gmra.mxu0 %v2982
        %v11619 = vpop.f32.mrf.mxu0
        %v11620 = vadd.f32 %v11580, %v11619
        %v11621 = vpop.f32.mrf.mxu0
        %v11622 = vpop.f32.mrf.mxu0
        %v11623 = vpop.f32.mrf.mxu0
        %11624 = vdwg.mxu0
        %11625 = vmatprep.subr.bf16.mxu0 0
        %11626 = vmatpush1.bf16.msra.mxu0 %v8320
        %11627 = vmatprep.subr.bf16.mxu0 0
        %11628 = vmatpush1.bf16.msra.mxu0 %v8319
        %11629 = vmatprep.subr.bf16.mxu0 0
        %11630 = vmatpush1.bf16.msra.mxu0 %v8318
        %11631 = vmatprep.subr.bf16.mxu0 0
        %11632 = vmatpush1.bf16.msra.mxu0 %v8317
        %11633 = vmatprep.subr.bf16.mxu0 0
        %11634 = vmatpush1.bf16.msra.mxu0 %v8316
        %11635 = vmatprep.subr.bf16.mxu0 0
        %11636 = vmatpush1.bf16.msra.mxu0 %v8315
        %11637 = vmatprep.subr.bf16.mxu0 0
        %11638 = vmatpush1.bf16.msra.mxu0 %v8314
        %11639 = vmatprep.subr.bf16.mxu0 0
        %11640 = vmatpush1.bf16.msra.mxu0 %v8313
        %11641 = vmatprep.subr.bf16.mxu0 0
        %11642 = vmatpush2.bf16.msra.mxu0 %v8328
        %11643 = vmatprep.subr.bf16.mxu0 0
        %11644 = vmatpush2.bf16.msra.mxu0 %v8327
        %11645 = vmatprep.subr.bf16.mxu0 0
        %11646 = vmatpush2.bf16.msra.mxu0 %v8326
        %11647 = vmatprep.subr.bf16.mxu0 0
        %11648 = vmatpush2.bf16.msra.mxu0 %v8325
        %11649 = vmatprep.subr.bf16.mxu0 0
        %11650 = vmatpush2.bf16.msra.mxu0 %v8324
        %11651 = vmatprep.subr.bf16.mxu0 0
        %11652 = vmatpush2.bf16.msra.mxu0 %v8323
        %11653 = vmatprep.subr.bf16.mxu0 0
        %11654 = vmatpush2.bf16.msra.mxu0 %v8322
        %11655 = vmatprep.subr.bf16.mxu0 0
        %11656 = vmatpush2.bf16.msra.mxu0 %v8321
        %11657 = vmatprep.mubr.bf16.mxu0 %v2981
        %11658 = vmatmul.mubr.bf16.gmra.mxu0 %v2967
        %v11659 = vpop.f32.mrf.mxu0
        %v11660 = vadd.f32 %v11620, %v11659
        %v11661 = vpop.f32.mrf.mxu0
        %v11662 = vpop.f32.mrf.mxu0
        %v11663 = vpop.f32.mrf.mxu0
        %11664 = vdwg.mxu0
        %11665 = vmatprep.subr.bf16.mxu0 0
        %11666 = vmatpush1.bf16.msra.mxu0 %v8336
        %11667 = vmatprep.subr.bf16.mxu0 0
        %11668 = vmatpush1.bf16.msra.mxu0 %v8335
        %11669 = vmatprep.subr.bf16.mxu0 0
        %11670 = vmatpush1.bf16.msra.mxu0 %v8334
        %11671 = vmatprep.subr.bf16.mxu0 0
        %11672 = vmatpush1.bf16.msra.mxu0 %v8333
        %11673 = vmatprep.subr.bf16.mxu0 0
        %11674 = vmatpush1.bf16.msra.mxu0 %v8332
        %11675 = vmatprep.subr.bf16.mxu0 0
        %11676 = vmatpush1.bf16.msra.mxu0 %v8331
        %11677 = vmatprep.subr.bf16.mxu0 0
        %11678 = vmatpush1.bf16.msra.mxu0 %v8330
        %11679 = vmatprep.subr.bf16.mxu0 0
        %11680 = vmatpush1.bf16.msra.mxu0 %v8329
        %11681 = vmatprep.subr.bf16.mxu0 0
        %11682 = vmatpush2.bf16.msra.mxu0 %v8344
        %11683 = vmatprep.subr.bf16.mxu0 0
        %11684 = vmatpush2.bf16.msra.mxu0 %v8343
        %11685 = vmatprep.subr.bf16.mxu0 0
        %11686 = vmatpush2.bf16.msra.mxu0 %v8342
        %11687 = vmatprep.subr.bf16.mxu0 0
        %11688 = vmatpush2.bf16.msra.mxu0 %v8341
        %11689 = vmatprep.subr.bf16.mxu0 0
        %11690 = vmatpush2.bf16.msra.mxu0 %v8340
        %11691 = vmatprep.subr.bf16.mxu0 0
        %11692 = vmatpush2.bf16.msra.mxu0 %v8339
        %11693 = vmatprep.subr.bf16.mxu0 0
        %11694 = vmatpush2.bf16.msra.mxu0 %v8338
        %11695 = vmatprep.subr.bf16.mxu0 0
        %11696 = vmatpush2.bf16.msra.mxu0 %v8337
        %11697 = vmatprep.mubr.bf16.mxu0 %v2985
        %11698 = vmatmul.mubr.bf16.gmra.mxu0 %v2983
        %v11699 = vpop.f32.mrf.mxu0
        %v11700 = vadd.f32 %v11660, %v11699
        %v11701 = vpop.f32.mrf.mxu0
        %v11702 = vpop.f32.mrf.mxu0
        %v11703 = vpop.f32.mrf.mxu0
        %11704 = vdwg.mxu0
        %11705 = vmatprep.subr.bf16.mxu0 0
        %11706 = vmatpush1.bf16.msra.mxu0 %v8352
        %11707 = vmatprep.subr.bf16.mxu0 0
        %11708 = vmatpush1.bf16.msra.mxu0 %v8351
        %11709 = vmatprep.subr.bf16.mxu0 0
        %11710 = vmatpush1.bf16.msra.mxu0 %v8350
        %11711 = vmatprep.subr.bf16.mxu0 0
        %11712 = vmatpush1.bf16.msra.mxu0 %v8349
        %11713 = vmatprep.subr.bf16.mxu0 0
        %11714 = vmatpush1.bf16.msra.mxu0 %v8348
        %11715 = vmatprep.subr.bf16.mxu0 0
        %11716 = vmatpush1.bf16.msra.mxu0 %v8347
        %11717 = vmatprep.subr.bf16.mxu0 0
        %11718 = vmatpush1.bf16.msra.mxu0 %v8346
        %11719 = vmatprep.subr.bf16.mxu0 0
        %11720 = vmatpush1.bf16.msra.mxu0 %v8345
        %11721 = vmatprep.subr.bf16.mxu0 0
        %11722 = vmatpush2.bf16.msra.mxu0 %v8360
        %11723 = vmatprep.subr.bf16.mxu0 0
        %11724 = vmatpush2.bf16.msra.mxu0 %v8359
        %11725 = vmatprep.subr.bf16.mxu0 0
        %11726 = vmatpush2.bf16.msra.mxu0 %v8358
        %11727 = vmatprep.subr.bf16.mxu0 0
        %11728 = vmatpush2.bf16.msra.mxu0 %v8357
        %11729 = vmatprep.subr.bf16.mxu0 0
        %11730 = vmatpush2.bf16.msra.mxu0 %v8356
        %11731 = vmatprep.subr.bf16.mxu0 0
        %11732 = vmatpush2.bf16.msra.mxu0 %v8355
        %11733 = vmatprep.subr.bf16.mxu0 0
        %11734 = vmatpush2.bf16.msra.mxu0 %v8354
        %11735 = vmatprep.subr.bf16.mxu0 0
        %11736 = vmatpush2.bf16.msra.mxu0 %v8353
        %11737 = vmatprep.mubr.bf16.mxu0 %v3023
        %11738 = vmatmul.mubr.bf16.gmra.mxu0 %v3009
        %v11739 = vpop.f32.mrf.mxu0
        %v11740 = vadd.f32 %v11700, %v11739
        %v11741 = vpop.f32.mrf.mxu0
        %v11742 = vpop.f32.mrf.mxu0
        %v11743 = vpop.f32.mrf.mxu0
        %11744 = vdwg.mxu0
        %11745 = vmatprep.subr.bf16.mxu0 0
        %11746 = vmatpush1.bf16.msra.mxu0 %v8368
        %11747 = vmatprep.subr.bf16.mxu0 0
        %11748 = vmatpush1.bf16.msra.mxu0 %v8367
        %11749 = vmatprep.subr.bf16.mxu0 0
        %11750 = vmatpush1.bf16.msra.mxu0 %v8366
        %11751 = vmatprep.subr.bf16.mxu0 0
        %11752 = vmatpush1.bf16.msra.mxu0 %v8365
        %11753 = vmatprep.subr.bf16.mxu0 0
        %11754 = vmatpush1.bf16.msra.mxu0 %v8364
        %11755 = vmatprep.subr.bf16.mxu0 0
        %11756 = vmatpush1.bf16.msra.mxu0 %v8363
        %11757 = vmatprep.subr.bf16.mxu0 0
        %11758 = vmatpush1.bf16.msra.mxu0 %v8362
        %11759 = vmatprep.subr.bf16.mxu0 0
        %11760 = vmatpush1.bf16.msra.mxu0 %v8361
        %11761 = vmatprep.subr.bf16.mxu0 0
        %11762 = vmatpush2.bf16.msra.mxu0 %v8376
        %11763 = vmatprep.subr.bf16.mxu0 0
        %11764 = vmatpush2.bf16.msra.mxu0 %v8375
        %11765 = vmatprep.subr.bf16.mxu0 0
        %11766 = vmatpush2.bf16.msra.mxu0 %v8374
        %11767 = vmatprep.subr.bf16.mxu0 0
        %11768 = vmatpush2.bf16.msra.mxu0 %v8373
        %11769 = vmatprep.subr.bf16.mxu0 0
        %11770 = vmatpush2.bf16.msra.mxu0 %v8372
        %11771 = vmatprep.subr.bf16.mxu0 0
        %11772 = vmatpush2.bf16.msra.mxu0 %v8371
        %11773 = vmatprep.subr.bf16.mxu0 0
        %11774 = vmatpush2.bf16.msra.mxu0 %v8370
        %11775 = vmatprep.subr.bf16.mxu0 0
        %11776 = vmatpush2.bf16.msra.mxu0 %v8369
        %11777 = vmatprep.mubr.bf16.mxu0 %v3033
        %11778 = vmatmul.mubr.bf16.gmra.mxu0 %v3031
        %v11779 = vpop.f32.mrf.mxu0
        %v11780 = vadd.f32 %v11740, %v11779
        %v11781 = vpop.f32.mrf.mxu0
        %v11782 = vpop.f32.mrf.mxu0
        %v11783 = vpop.f32.mrf.mxu0
        %11784 = vdwg.mxu0
        %11785 = vmatprep.subr.bf16.mxu0 0
        %11786 = vmatpush1.bf16.msra.mxu0 %v8384
        %11787 = vmatprep.subr.bf16.mxu0 0
        %11788 = vmatpush1.bf16.msra.mxu0 %v8383
        %11789 = vmatprep.subr.bf16.mxu0 0
        %11790 = vmatpush1.bf16.msra.mxu0 %v8382
        %11791 = vmatprep.subr.bf16.mxu0 0
        %11792 = vmatpush1.bf16.msra.mxu0 %v8381
        %11793 = vmatprep.subr.bf16.mxu0 0
        %11794 = vmatpush1.bf16.msra.mxu0 %v8380
        %11795 = vmatprep.subr.bf16.mxu0 0
        %11796 = vmatpush1.bf16.msra.mxu0 %v8379
        %11797 = vmatprep.subr.bf16.mxu0 0
        %11798 = vmatpush1.bf16.msra.mxu0 %v8378
        %11799 = vmatprep.subr.bf16.mxu0 0
        %11800 = vmatpush1.bf16.msra.mxu0 %v8377
        %11801 = vmatprep.subr.bf16.mxu0 0
        %11802 = vmatpush2.bf16.msra.mxu0 %v8392
        %11803 = vmatprep.subr.bf16.mxu0 0
        %11804 = vmatpush2.bf16.msra.mxu0 %v8391
        %11805 = vmatprep.subr.bf16.mxu0 0
        %11806 = vmatpush2.bf16.msra.mxu0 %v8390
        %11807 = vmatprep.subr.bf16.mxu0 0
        %11808 = vmatpush2.bf16.msra.mxu0 %v8389
        %11809 = vmatprep.subr.bf16.mxu0 0
        %11810 = vmatpush2.bf16.msra.mxu0 %v8388
        %11811 = vmatprep.subr.bf16.mxu0 0
        %11812 = vmatpush2.bf16.msra.mxu0 %v8387
        %11813 = vmatprep.subr.bf16.mxu0 0
        %11814 = vmatpush2.bf16.msra.mxu0 %v8386
        %11815 = vmatprep.subr.bf16.mxu0 0
        %11816 = vmatpush2.bf16.msra.mxu0 %v8385
        %11817 = vmatprep.mubr.bf16.mxu0 %v3030
        %11818 = vmatmul.mubr.bf16.gmra.mxu0 %v3016
        %v11819 = vpop.f32.mrf.mxu0
        %v11820 = vadd.f32 %v11780, %v11819
        %v11821 = vpop.f32.mrf.mxu0
        %v11822 = vpop.f32.mrf.mxu0
        %v11823 = vpop.f32.mrf.mxu0
        %11824 = vdwg.mxu0
        %11825 = vmatprep.subr.bf16.mxu0 0
        %11826 = vmatpush1.bf16.msra.mxu0 %v8400
        %11827 = vmatprep.subr.bf16.mxu0 0
        %11828 = vmatpush1.bf16.msra.mxu0 %v8399
        %11829 = vmatprep.subr.bf16.mxu0 0
        %11830 = vmatpush1.bf16.msra.mxu0 %v8398
        %11831 = vmatprep.subr.bf16.mxu0 0
        %11832 = vmatpush1.bf16.msra.mxu0 %v8397
        %11833 = vmatprep.subr.bf16.mxu0 0
        %11834 = vmatpush1.bf16.msra.mxu0 %v8396
        %11835 = vmatprep.subr.bf16.mxu0 0
        %11836 = vmatpush1.bf16.msra.mxu0 %v8395
        %11837 = vmatprep.subr.bf16.mxu0 0
        %11838 = vmatpush1.bf16.msra.mxu0 %v8394
        %11839 = vmatprep.subr.bf16.mxu0 0
        %11840 = vmatpush1.bf16.msra.mxu0 %v8393
        %11841 = vmatprep.subr.bf16.mxu0 0
        %11842 = vmatpush2.bf16.msra.mxu0 %v8408
        %11843 = vmatprep.subr.bf16.mxu0 0
        %11844 = vmatpush2.bf16.msra.mxu0 %v8407
        %11845 = vmatprep.subr.bf16.mxu0 0
        %11846 = vmatpush2.bf16.msra.mxu0 %v8406
        %11847 = vmatprep.subr.bf16.mxu0 0
        %11848 = vmatpush2.bf16.msra.mxu0 %v8405
        %11849 = vmatprep.subr.bf16.mxu0 0
        %11850 = vmatpush2.bf16.msra.mxu0 %v8404
        %11851 = vmatprep.subr.bf16.mxu0 0
        %11852 = vmatpush2.bf16.msra.mxu0 %v8403
        %11853 = vmatprep.subr.bf16.mxu0 0
        %11854 = vmatpush2.bf16.msra.mxu0 %v8402
        %11855 = vmatprep.subr.bf16.mxu0 0
        %11856 = vmatpush2.bf16.msra.mxu0 %v8401
        %11857 = vmatprep.mubr.bf16.mxu0 %v3034
        %11858 = vmatmul.mubr.bf16.gmra.mxu0 %v3032
        %v11859 = vpop.f32.mrf.mxu0
        %v11860 = vadd.f32 %v11820, %v11859
        %v11861 = vpop.f32.mrf.mxu0
        %v11862 = vpop.f32.mrf.mxu0
        %v11863 = vpop.f32.mrf.mxu0
        %11864 = vdwg.mxu0
        %11865 = vmatprep.subr.bf16.mxu0 0
        %11866 = vmatpush1.bf16.msra.mxu0 %v8416
        %11867 = vmatprep.subr.bf16.mxu0 0
        %11868 = vmatpush1.bf16.msra.mxu0 %v8415
        %11869 = vmatprep.subr.bf16.mxu0 0
        %11870 = vmatpush1.bf16.msra.mxu0 %v8414
        %11871 = vmatprep.subr.bf16.mxu0 0
        %11872 = vmatpush1.bf16.msra.mxu0 %v8413
        %11873 = vmatprep.subr.bf16.mxu0 0
        %11874 = vmatpush1.bf16.msra.mxu0 %v8412
        %11875 = vmatprep.subr.bf16.mxu0 0
        %11876 = vmatpush1.bf16.msra.mxu0 %v8411
        %11877 = vmatprep.subr.bf16.mxu0 0
        %11878 = vmatpush1.bf16.msra.mxu0 %v8410
        %11879 = vmatprep.subr.bf16.mxu0 0
        %11880 = vmatpush1.bf16.msra.mxu0 %v8409
        %11881 = vmatprep.subr.bf16.mxu0 0
        %11882 = vmatpush2.bf16.msra.mxu0 %v8424
        %11883 = vmatprep.subr.bf16.mxu0 0
        %11884 = vmatpush2.bf16.msra.mxu0 %v8423
        %11885 = vmatprep.subr.bf16.mxu0 0
        %11886 = vmatpush2.bf16.msra.mxu0 %v8422
        %11887 = vmatprep.subr.bf16.mxu0 0
        %11888 = vmatpush2.bf16.msra.mxu0 %v8421
        %11889 = vmatprep.subr.bf16.mxu0 0
        %11890 = vmatpush2.bf16.msra.mxu0 %v8420
        %11891 = vmatprep.subr.bf16.mxu0 0
        %11892 = vmatpush2.bf16.msra.mxu0 %v8419
        %11893 = vmatprep.subr.bf16.mxu0 0
        %11894 = vmatpush2.bf16.msra.mxu0 %v8418
        %11895 = vmatprep.subr.bf16.mxu0 0
        %11896 = vmatpush2.bf16.msra.mxu0 %v8417
        %11897 = vmatprep.mubr.bf16.mxu0 %v3072
        %11898 = vmatmul.mubr.bf16.gmra.mxu0 %v3058
        %v11899 = vpop.f32.mrf.mxu0
        %v11900 = vadd.f32 %v11860, %v11899
        %v11901 = vpop.f32.mrf.mxu0
        %v11902 = vpop.f32.mrf.mxu0
        %v11903 = vpop.f32.mrf.mxu0
        %11904 = vdwg.mxu0
        %11905 = vmatprep.subr.bf16.mxu0 0
        %11906 = vmatpush1.bf16.msra.mxu0 %v8432
        %11907 = vmatprep.subr.bf16.mxu0 0
        %11908 = vmatpush1.bf16.msra.mxu0 %v8431
        %11909 = vmatprep.subr.bf16.mxu0 0
        %11910 = vmatpush1.bf16.msra.mxu0 %v8430
        %11911 = vmatprep.subr.bf16.mxu0 0
        %11912 = vmatpush1.bf16.msra.mxu0 %v8429
        %11913 = vmatprep.subr.bf16.mxu0 0
        %11914 = vmatpush1.bf16.msra.mxu0 %v8428
        %11915 = vmatprep.subr.bf16.mxu0 0
        %11916 = vmatpush1.bf16.msra.mxu0 %v8427
        %11917 = vmatprep.subr.bf16.mxu0 0
        %11918 = vmatpush1.bf16.msra.mxu0 %v8426
        %11919 = vmatprep.subr.bf16.mxu0 0
        %11920 = vmatpush1.bf16.msra.mxu0 %v8425
        %11921 = vmatprep.subr.bf16.mxu0 0
        %11922 = vmatpush2.bf16.msra.mxu0 %v8440
        %11923 = vmatprep.subr.bf16.mxu0 0
        %11924 = vmatpush2.bf16.msra.mxu0 %v8439
        %11925 = vmatprep.subr.bf16.mxu0 0
        %11926 = vmatpush2.bf16.msra.mxu0 %v8438
        %11927 = vmatprep.subr.bf16.mxu0 0
        %11928 = vmatpush2.bf16.msra.mxu0 %v8437
        %11929 = vmatprep.subr.bf16.mxu0 0
        %11930 = vmatpush2.bf16.msra.mxu0 %v8436
        %11931 = vmatprep.subr.bf16.mxu0 0
        %11932 = vmatpush2.bf16.msra.mxu0 %v8435
        %11933 = vmatprep.subr.bf16.mxu0 0
        %11934 = vmatpush2.bf16.msra.mxu0 %v8434
        %11935 = vmatprep.subr.bf16.mxu0 0
        %11936 = vmatpush2.bf16.msra.mxu0 %v8433
        %11937 = vmatprep.mubr.bf16.mxu0 %v3082
        %11938 = vmatmul.mubr.bf16.gmra.mxu0 %v3080
        %v11939 = vpop.f32.mrf.mxu0
        %v11940 = vadd.f32 %v11900, %v11939
        %v11941 = vpop.f32.mrf.mxu0
        %v11942 = vpop.f32.mrf.mxu0
        %v11943 = vpop.f32.mrf.mxu0
        %11944 = vdwg.mxu0
        %11945 = vmatprep.subr.bf16.mxu0 0
        %11946 = vmatpush1.bf16.msra.mxu0 %v8448
        %11947 = vmatprep.subr.bf16.mxu0 0
        %11948 = vmatpush1.bf16.msra.mxu0 %v8447
        %11949 = vmatprep.subr.bf16.mxu0 0
        %11950 = vmatpush1.bf16.msra.mxu0 %v8446
        %11951 = vmatprep.subr.bf16.mxu0 0
        %11952 = vmatpush1.bf16.msra.mxu0 %v8445
        %11953 = vmatprep.subr.bf16.mxu0 0
        %11954 = vmatpush1.bf16.msra.mxu0 %v8444
        %11955 = vmatprep.subr.bf16.mxu0 0
        %11956 = vmatpush1.bf16.msra.mxu0 %v8443
        %11957 = vmatprep.subr.bf16.mxu0 0
        %11958 = vmatpush1.bf16.msra.mxu0 %v8442
        %11959 = vmatprep.subr.bf16.mxu0 0
        %11960 = vmatpush1.bf16.msra.mxu0 %v8441
        %11961 = vmatprep.subr.bf16.mxu0 0
        %11962 = vmatpush2.bf16.msra.mxu0 %v8456
        %11963 = vmatprep.subr.bf16.mxu0 0
        %11964 = vmatpush2.bf16.msra.mxu0 %v8455
        %11965 = vmatprep.subr.bf16.mxu0 0
        %11966 = vmatpush2.bf16.msra.mxu0 %v8454
        %11967 = vmatprep.subr.bf16.mxu0 0
        %11968 = vmatpush2.bf16.msra.mxu0 %v8453
        %11969 = vmatprep.subr.bf16.mxu0 0
        %11970 = vmatpush2.bf16.msra.mxu0 %v8452
        %11971 = vmatprep.subr.bf16.mxu0 0
        %11972 = vmatpush2.bf16.msra.mxu0 %v8451
        %11973 = vmatprep.subr.bf16.mxu0 0
        %11974 = vmatpush2.bf16.msra.mxu0 %v8450
        %11975 = vmatprep.subr.bf16.mxu0 0
        %11976 = vmatpush2.bf16.msra.mxu0 %v8449
        %11977 = vmatprep.mubr.bf16.mxu0 %v3079
        %11978 = vmatmul.mubr.bf16.gmra.mxu0 %v3065
        %v11979 = vpop.f32.mrf.mxu0
        %v11980 = vadd.f32 %v11940, %v11979
        %v11981 = vpop.f32.mrf.mxu0
        %v11982 = vpop.f32.mrf.mxu0
        %v11983 = vpop.f32.mrf.mxu0
        %11984 = vdwg.mxu0
        %11985 = vmatprep.subr.bf16.mxu0 0
        %11986 = vmatpush1.bf16.msra.mxu0 %v8464
        %11987 = vmatprep.subr.bf16.mxu0 0
        %11988 = vmatpush1.bf16.msra.mxu0 %v8463
        %11989 = vmatprep.subr.bf16.mxu0 0
        %11990 = vmatpush1.bf16.msra.mxu0 %v8462
        %11991 = vmatprep.subr.bf16.mxu0 0
        %11992 = vmatpush1.bf16.msra.mxu0 %v8461
        %11993 = vmatprep.subr.bf16.mxu0 0
        %11994 = vmatpush1.bf16.msra.mxu0 %v8460
        %11995 = vmatprep.subr.bf16.mxu0 0
        %11996 = vmatpush1.bf16.msra.mxu0 %v8459
        %11997 = vmatprep.subr.bf16.mxu0 0
        %11998 = vmatpush1.bf16.msra.mxu0 %v8458
        %11999 = vmatprep.subr.bf16.mxu0 0
        %12000 = vmatpush1.bf16.msra.mxu0 %v8457
        %12001 = vmatprep.subr.bf16.mxu0 0
        %12002 = vmatpush2.bf16.msra.mxu0 %v8472
        %12003 = vmatprep.subr.bf16.mxu0 0
        %12004 = vmatpush2.bf16.msra.mxu0 %v8471
        %12005 = vmatprep.subr.bf16.mxu0 0
        %12006 = vmatpush2.bf16.msra.mxu0 %v8470
        %12007 = vmatprep.subr.bf16.mxu0 0
        %12008 = vmatpush2.bf16.msra.mxu0 %v8469
        %12009 = vmatprep.subr.bf16.mxu0 0
        %12010 = vmatpush2.bf16.msra.mxu0 %v8468
        %12011 = vmatprep.subr.bf16.mxu0 0
        %12012 = vmatpush2.bf16.msra.mxu0 %v8467
        %12013 = vmatprep.subr.bf16.mxu0 0
        %12014 = vmatpush2.bf16.msra.mxu0 %v8466
        %12015 = vmatprep.subr.bf16.mxu0 0
        %12016 = vmatpush2.bf16.msra.mxu0 %v8465
        %12017 = vmatprep.mubr.bf16.mxu0 %v3083
        %12018 = vmatmul.mubr.bf16.gmra.mxu0 %v3081
        %v12019 = vpop.f32.mrf.mxu0
        %v12020 = vadd.f32 %v11980, %v12019
        %v12021 = vpop.f32.mrf.mxu0
        %v12022 = vpop.f32.mrf.mxu0
        %v12023 = vpop.f32.mrf.mxu0
        %12024 = vdwg.mxu0
        %12025 = vmatprep.subr.bf16.mxu0 0
        %12026 = vmatpush1.bf16.msra.mxu0 %v8480
        %12027 = vmatprep.subr.bf16.mxu0 0
        %12028 = vmatpush1.bf16.msra.mxu0 %v8479
        %12029 = vmatprep.subr.bf16.mxu0 0
        %12030 = vmatpush1.bf16.msra.mxu0 %v8478
        %12031 = vmatprep.subr.bf16.mxu0 0
        %12032 = vmatpush1.bf16.msra.mxu0 %v8477
        %12033 = vmatprep.subr.bf16.mxu0 0
        %12034 = vmatpush1.bf16.msra.mxu0 %v8476
        %12035 = vmatprep.subr.bf16.mxu0 0
        %12036 = vmatpush1.bf16.msra.mxu0 %v8475
        %12037 = vmatprep.subr.bf16.mxu0 0
        %12038 = vmatpush1.bf16.msra.mxu0 %v8474
        %12039 = vmatprep.subr.bf16.mxu0 0
        %12040 = vmatpush1.bf16.msra.mxu0 %v8473
        %12041 = vmatprep.subr.bf16.mxu0 0
        %12042 = vmatpush2.bf16.msra.mxu0 %v8488
        %12043 = vmatprep.subr.bf16.mxu0 0
        %12044 = vmatpush2.bf16.msra.mxu0 %v8487
        %12045 = vmatprep.subr.bf16.mxu0 0
        %12046 = vmatpush2.bf16.msra.mxu0 %v8486
        %12047 = vmatprep.subr.bf16.mxu0 0
        %12048 = vmatpush2.bf16.msra.mxu0 %v8485
        %12049 = vmatprep.subr.bf16.mxu0 0
        %12050 = vmatpush2.bf16.msra.mxu0 %v8484
        %12051 = vmatprep.subr.bf16.mxu0 0
        %12052 = vmatpush2.bf16.msra.mxu0 %v8483
        %12053 = vmatprep.subr.bf16.mxu0 0
        %12054 = vmatpush2.bf16.msra.mxu0 %v8482
        %12055 = vmatprep.subr.bf16.mxu0 0
        %12056 = vmatpush2.bf16.msra.mxu0 %v8481
        %12057 = vmatprep.mubr.bf16.mxu0 %v3121
        %12058 = vmatmul.mubr.bf16.gmra.mxu0 %v3107
        %v12059 = vpop.f32.mrf.mxu0
        %v12060 = vadd.f32 %v12020, %v12059
        %v12061 = vpop.f32.mrf.mxu0
        %v12062 = vpop.f32.mrf.mxu0
        %v12063 = vpop.f32.mrf.mxu0
        %12064 = vdwg.mxu0
        %12065 = vmatprep.subr.bf16.mxu0 0
        %12066 = vmatpush1.bf16.msra.mxu0 %v8496
        %12067 = vmatprep.subr.bf16.mxu0 0
        %12068 = vmatpush1.bf16.msra.mxu0 %v8495
        %12069 = vmatprep.subr.bf16.mxu0 0
        %12070 = vmatpush1.bf16.msra.mxu0 %v8494
        %12071 = vmatprep.subr.bf16.mxu0 0
        %12072 = vmatpush1.bf16.msra.mxu0 %v8493
        %12073 = vmatprep.subr.bf16.mxu0 0
        %12074 = vmatpush1.bf16.msra.mxu0 %v8492
        %12075 = vmatprep.subr.bf16.mxu0 0
        %12076 = vmatpush1.bf16.msra.mxu0 %v8491
        %12077 = vmatprep.subr.bf16.mxu0 0
        %12078 = vmatpush1.bf16.msra.mxu0 %v8490
        %12079 = vmatprep.subr.bf16.mxu0 0
        %12080 = vmatpush1.bf16.msra.mxu0 %v8489
        %12081 = vmatprep.subr.bf16.mxu0 0
        %12082 = vmatpush2.bf16.msra.mxu0 %v8504
        %12083 = vmatprep.subr.bf16.mxu0 0
        %12084 = vmatpush2.bf16.msra.mxu0 %v8503
        %12085 = vmatprep.subr.bf16.mxu0 0
        %12086 = vmatpush2.bf16.msra.mxu0 %v8502
        %12087 = vmatprep.subr.bf16.mxu0 0
        %12088 = vmatpush2.bf16.msra.mxu0 %v8501
        %12089 = vmatprep.subr.bf16.mxu0 0
        %12090 = vmatpush2.bf16.msra.mxu0 %v8500
        %12091 = vmatprep.subr.bf16.mxu0 0
        %12092 = vmatpush2.bf16.msra.mxu0 %v8499
        %12093 = vmatprep.subr.bf16.mxu0 0
        %12094 = vmatpush2.bf16.msra.mxu0 %v8498
        %12095 = vmatprep.subr.bf16.mxu0 0
        %12096 = vmatpush2.bf16.msra.mxu0 %v8497
        %12097 = vmatprep.mubr.bf16.mxu0 %v3131
        %12098 = vmatmul.mubr.bf16.gmra.mxu0 %v3129
        %v12099 = vpop.f32.mrf.mxu0
        %v12100 = vadd.f32 %v12060, %v12099
        %v12101 = vpop.f32.mrf.mxu0
        %v12102 = vpop.f32.mrf.mxu0
        %v12103 = vpop.f32.mrf.mxu0
        %12104 = vdwg.mxu0
        %12105 = vmatprep.subr.bf16.mxu0 0
        %12106 = vmatpush1.bf16.msra.mxu0 %v8512
        %12107 = vmatprep.subr.bf16.mxu0 0
        %12108 = vmatpush1.bf16.msra.mxu0 %v8511
        %12109 = vmatprep.subr.bf16.mxu0 0
        %12110 = vmatpush1.bf16.msra.mxu0 %v8510
        %12111 = vmatprep.subr.bf16.mxu0 0
        %12112 = vmatpush1.bf16.msra.mxu0 %v8509
        %12113 = vmatprep.subr.bf16.mxu0 0
        %12114 = vmatpush1.bf16.msra.mxu0 %v8508
        %12115 = vmatprep.subr.bf16.mxu0 0
        %12116 = vmatpush1.bf16.msra.mxu0 %v8507
        %12117 = vmatprep.subr.bf16.mxu0 0
        %12118 = vmatpush1.bf16.msra.mxu0 %v8506
        %12119 = vmatprep.subr.bf16.mxu0 0
        %12120 = vmatpush1.bf16.msra.mxu0 %v8505
        %12121 = vmatprep.subr.bf16.mxu0 0
        %12122 = vmatpush2.bf16.msra.mxu0 %v8520
        %12123 = vmatprep.subr.bf16.mxu0 0
        %12124 = vmatpush2.bf16.msra.mxu0 %v8519
        %12125 = vmatprep.subr.bf16.mxu0 0
        %12126 = vmatpush2.bf16.msra.mxu0 %v8518
        %12127 = vmatprep.subr.bf16.mxu0 0
        %12128 = vmatpush2.bf16.msra.mxu0 %v8517
        %12129 = vmatprep.subr.bf16.mxu0 0
        %12130 = vmatpush2.bf16.msra.mxu0 %v8516
        %12131 = vmatprep.subr.bf16.mxu0 0
        %12132 = vmatpush2.bf16.msra.mxu0 %v8515
        %12133 = vmatprep.subr.bf16.mxu0 0
        %12134 = vmatpush2.bf16.msra.mxu0 %v8514
        %12135 = vmatprep.subr.bf16.mxu0 0
        %12136 = vmatpush2.bf16.msra.mxu0 %v8513
        %12137 = vmatprep.mubr.bf16.mxu0 %v3128
        %12138 = vmatmul.mubr.bf16.gmra.mxu0 %v3114
        %v12139 = vpop.f32.mrf.mxu0
        %v12140 = vadd.f32 %v12100, %v12139
        %v12141 = vpop.f32.mrf.mxu0
        %v12142 = vpop.f32.mrf.mxu0
        %v12143 = vpop.f32.mrf.mxu0
        %12144 = vdwg.mxu0
        %12145 = vmatprep.subr.bf16.mxu0 0
        %12146 = vmatpush1.bf16.msra.mxu0 %v8528
        %12147 = vmatprep.subr.bf16.mxu0 0
        %12148 = vmatpush1.bf16.msra.mxu0 %v8527
        %12149 = vmatprep.subr.bf16.mxu0 0
        %12150 = vmatpush1.bf16.msra.mxu0 %v8526
        %12151 = vmatprep.subr.bf16.mxu0 0
        %12152 = vmatpush1.bf16.msra.mxu0 %v8525
        %12153 = vmatprep.subr.bf16.mxu0 0
        %12154 = vmatpush1.bf16.msra.mxu0 %v8524
        %12155 = vmatprep.subr.bf16.mxu0 0
        %12156 = vmatpush1.bf16.msra.mxu0 %v8523
        %12157 = vmatprep.subr.bf16.mxu0 0
        %12158 = vmatpush1.bf16.msra.mxu0 %v8522
        %12159 = vmatprep.subr.bf16.mxu0 0
        %12160 = vmatpush1.bf16.msra.mxu0 %v8521
        %12161 = vmatprep.subr.bf16.mxu0 0
        %12162 = vmatpush2.bf16.msra.mxu0 %v8536
        %12163 = vmatprep.subr.bf16.mxu0 0
        %12164 = vmatpush2.bf16.msra.mxu0 %v8535
        %12165 = vmatprep.subr.bf16.mxu0 0
        %12166 = vmatpush2.bf16.msra.mxu0 %v8534
        %12167 = vmatprep.subr.bf16.mxu0 0
        %12168 = vmatpush2.bf16.msra.mxu0 %v8533
        %12169 = vmatprep.subr.bf16.mxu0 0
        %12170 = vmatpush2.bf16.msra.mxu0 %v8532
        %12171 = vmatprep.subr.bf16.mxu0 0
        %12172 = vmatpush2.bf16.msra.mxu0 %v8531
        %12173 = vmatprep.subr.bf16.mxu0 0
        %12174 = vmatpush2.bf16.msra.mxu0 %v8530
        %12175 = vmatprep.subr.bf16.mxu0 0
        %12176 = vmatpush2.bf16.msra.mxu0 %v8529
        %12177 = vmatprep.mubr.bf16.mxu0 %v3132
        %12178 = vmatmul.mubr.bf16.gmra.mxu0 %v3130
        %v12179 = vpop.f32.mrf.mxu0
        %v12180 = vadd.f32 %v12140, %v12179
        %v12181 = vpop.f32.mrf.mxu0
        %v12182 = vpop.f32.mrf.mxu0
        %v12183 = vpop.f32.mrf.mxu0
        %12184 = vdwg.mxu0
        %12185 = vmatprep.subr.bf16.mxu0 0
        %12186 = vmatpush1.bf16.msra.mxu0 %v8544
        %12187 = vmatprep.subr.bf16.mxu0 0
        %12188 = vmatpush1.bf16.msra.mxu0 %v8543
        %12189 = vmatprep.subr.bf16.mxu0 0
        %12190 = vmatpush1.bf16.msra.mxu0 %v8542
        %12191 = vmatprep.subr.bf16.mxu0 0
        %12192 = vmatpush1.bf16.msra.mxu0 %v8541
        %12193 = vmatprep.subr.bf16.mxu0 0
        %12194 = vmatpush1.bf16.msra.mxu0 %v8540
        %12195 = vmatprep.subr.bf16.mxu0 0
        %12196 = vmatpush1.bf16.msra.mxu0 %v8539
        %12197 = vmatprep.subr.bf16.mxu0 0
        %12198 = vmatpush1.bf16.msra.mxu0 %v8538
        %12199 = vmatprep.subr.bf16.mxu0 0
        %12200 = vmatpush1.bf16.msra.mxu0 %v8537
        %12201 = vmatprep.subr.bf16.mxu0 0
        %12202 = vmatpush2.bf16.msra.mxu0 %v8552
        %12203 = vmatprep.subr.bf16.mxu0 0
        %12204 = vmatpush2.bf16.msra.mxu0 %v8551
        %12205 = vmatprep.subr.bf16.mxu0 0
        %12206 = vmatpush2.bf16.msra.mxu0 %v8550
        %12207 = vmatprep.subr.bf16.mxu0 0
        %12208 = vmatpush2.bf16.msra.mxu0 %v8549
        %12209 = vmatprep.subr.bf16.mxu0 0
        %12210 = vmatpush2.bf16.msra.mxu0 %v8548
        %12211 = vmatprep.subr.bf16.mxu0 0
        %12212 = vmatpush2.bf16.msra.mxu0 %v8547
        %12213 = vmatprep.subr.bf16.mxu0 0
        %12214 = vmatpush2.bf16.msra.mxu0 %v8546
        %12215 = vmatprep.subr.bf16.mxu0 0
        %12216 = vmatpush2.bf16.msra.mxu0 %v8545
        %12217 = vmatprep.mubr.bf16.mxu0 %v3154
        %12218 = vmatmul.mubr.bf16.gmra.mxu0 %v3147
        %v12219 = vpop.f32.mrf.mxu0
        %v12220 = vadd.f32 %v12180, %v12219
        %v12221 = vpop.f32.mrf.mxu0
        %v12222 = vpop.f32.mrf.mxu0
        %v12223 = vpop.f32.mrf.mxu0
        %12224 = vdwg.mxu0
        %12225 = vmatprep.subr.bf16.mxu0 0
        %12226 = vmatpush1.bf16.msra.mxu0 %v8560
        %12227 = vmatprep.subr.bf16.mxu0 0
        %12228 = vmatpush1.bf16.msra.mxu0 %v8559
        %12229 = vmatprep.subr.bf16.mxu0 0
        %12230 = vmatpush1.bf16.msra.mxu0 %v8558
        %12231 = vmatprep.subr.bf16.mxu0 0
        %12232 = vmatpush1.bf16.msra.mxu0 %v8557
        %12233 = vmatprep.subr.bf16.mxu0 0
        %12234 = vmatpush1.bf16.msra.mxu0 %v8556
        %12235 = vmatprep.subr.bf16.mxu0 0
        %12236 = vmatpush1.bf16.msra.mxu0 %v8555
        %12237 = vmatprep.subr.bf16.mxu0 0
        %12238 = vmatpush1.bf16.msra.mxu0 %v8554
        %12239 = vmatprep.subr.bf16.mxu0 0
        %12240 = vmatpush1.bf16.msra.mxu0 %v8553
        %12241 = vmatprep.subr.bf16.mxu0 0
        %12242 = vmatpush2.bf16.msra.mxu0 %v8568
        %12243 = vmatprep.subr.bf16.mxu0 0
        %12244 = vmatpush2.bf16.msra.mxu0 %v8567
        %12245 = vmatprep.subr.bf16.mxu0 0
        %12246 = vmatpush2.bf16.msra.mxu0 %v8566
        %12247 = vmatprep.subr.bf16.mxu0 0
        %12248 = vmatpush2.bf16.msra.mxu0 %v8565
        %12249 = vmatprep.subr.bf16.mxu0 0
        %12250 = vmatpush2.bf16.msra.mxu0 %v8564
        %12251 = vmatprep.subr.bf16.mxu0 0
        %12252 = vmatpush2.bf16.msra.mxu0 %v8563
        %12253 = vmatprep.subr.bf16.mxu0 0
        %12254 = vmatpush2.bf16.msra.mxu0 %v8562
        %12255 = vmatprep.subr.bf16.mxu0 0
        %12256 = vmatpush2.bf16.msra.mxu0 %v8561
        %12257 = vmatprep.mubr.bf16.mxu0 %v3156
        %12258 = vmatmul.mubr.bf16.gmra.mxu0 %v3155
        %v12259 = vpop.f32.mrf.mxu0
        %v12260 = vadd.f32 %v12220, %v12259
        %v12261 = vpop.f32.mrf.mxu0
        %v12262 = vpop.f32.mrf.mxu0
        %v12263 = vpop.f32.mrf.mxu0
        %12264 = vdwg.mxu0
        %v12265 = vadd.f32 %v202, %v12260
        %12266 = vst [vmem:[%s3] sm:$0x3] %v12265
        %p12267 = scmp.eq.s32.totalorder %s17, 15
        // Predicated region
        $region41: #{fc_only_forward.1} parent=31 // pred_check
          %p12268 = pneg %p12267
        $region42: #{fc_only_forward.1} parent=31 // pred_check_branch
          %12270 = sbr.rel (%p12268) target = $region44
        $region43: #{fc_only_forward.1} parent=31 // pred_region
          %v12271 = vld [vmem:[%s3] sm:$0x3]
          %v12272 = vld [vmem:[%s2] sm:$0x1]
          %v12274 = vlaneseq
          %v12275 = vshrl.u32 %v12274, 7
          %v12276 = vsub.s32 0, %v12275
          %v12277 = vrot.slane %v12272, %v12276
          %v12279 = vadd.f32 %v12271, %v12277
          %v12280 = vmax.f32 %v12279, 0.0
          %12281 = vst [vmem:[%s3] sm:$0x3] %v12280
        $region44: #{fc_only_forward.1} parent=31 // pred_fallthru
          _
        // Predicated region
        $region45: #{fc_only_forward.1} parent=31 // pred_check
          %p12282 = pneg %p103
        $region46: #{fc_only_forward.1} parent=31 // pred_check_branch
          %12284 = sbr.rel (%p12282) target = $region48
        $region47: #{fc_only_forward.1} parent=31 // pred_region
          _
        $region48: #{fc_only_forward.1} parent=31 // pred_fallthru
          _
        // Predicated region
        $region49: #{fc_only_forward.1} parent=31 // pred_check
          %p12285 = pneg %p103
        $region50: #{fc_only_forward.1} parent=31 // pred_check_branch
          %12287 = sbr.rel (%p12285) target = $region52
        $region51: #{fc_only_forward.1} parent=31 // pred_region
          _
        $region52: #{fc_only_forward.1} parent=31 // pred_fallthru
          _
      $region32: #{fc_only_forward.1} parent=5 // pred_fallthru
        _
      %p12288 = scmp.le.s32.totalorder 2, %s12
      // Predicated region
      $region53: #{fc_only_forward.1} parent=5 // pred_check
        %p12289 = pneg %p12288
      $region54: #{fc_only_forward.1} parent=5 // pred_check_branch
        %12291 = sbr.rel (%p12289) target = $region56
      $region55: #{fc_only_forward.1} parent=5 // pred_region
        %s12292 = ssub.s32 %s12, 2
      $region56: #{fc_only_forward.1} parent=5 // pred_fallthru
        _
    $region6: #{fc_only_forward.1} parent=1 // loop_footer
      %s16 = sadd.s32 1, %s12
    $region7: #{fc_only_forward.1} parent=1 // loop_footer_branch
      %11 = sbr.rel target = $region3
    $region8: #{fc_only_forward.1} parent=1 // loop_exit
      _
    %12293 = vsyncpa [#allocation3], 1
    %s12294 = scalar_lea.sflag [#allocation3], 1
    %12295 = vsyncpa %s12294, 1

</llo_original>
